<compile_context>
chip_gen: v5e
topology: v5e:2x2
jax: 0.10.0
libtpu: 0.0.40
codegen_flags: <defaults>
</compile_context>

<pallas_src>
import functools

import jax
import jax.numpy as jnp
from jax import lax
from jax.experimental import pallas as pl
from jax.experimental.pallas import tpu as pltpu

EPS = 1e-5  # PyTorch GroupNorm default eps


def _tfcm_stack_kernel(x_ref, demb_ref, w1_ref, w2_ref, dw_ref, vec_ref,
                       out_ref, *, L, F, T, C, NB):
    """Fused forward of all L TFCM blocks for NB batch samples.

    Shapes (channels-last, lane-dense; TC = T*C):
      x_ref    : (NB, F, TC)   activation slab (f32)
      demb_ref : (NB, L, TC)   precomputed Dense_0(SiLU(temb)) per layer (f32)
      w1_ref   : (L, TC, TC)   block-diagonal pconv1 weights kron(I_T, W1), bf16
      w2_ref   : (L, TC, TC)   block-diagonal pconv2 weights kron(I_T, W2), bf16
      dw_ref   : (L, 9, TC)    depthwise 3x3 weights, tiled along T (f32)
      vec_ref  : (L, 9, TC)    [b1, g1, be1, a1, b_dw, g2, be2, a2, b2] tiled
    """
    TC = T * C
    BF = NB * F

    x2 = x_ref[...].reshape(BF, TC)              # f32 residual, lane-dense
    db = demb_ref[...]                           # (NB, L, TC)

    # ---- constants hoisted out of the fully unrolled loops ----------------
    lane_pos = lax.broadcasted_iota(jnp.int32, (1, TC), 1)
    f_pos = lax.broadcasted_iota(jnp.int32, (F, 1), 0)
    f_keep_dn = f_pos >= 1                       # valid rows of the (f-1) tap
    f_keep_up = f_pos < (F - 1)                  # valid rows of the (f+1) tap
    lane_keep = {}                               # causal masks per time lag
    for l in range(L):
        d = 2 ** l
        for lag in (d, 2 * d):
            if lag < T and lag not in lane_keep:
                lane_keep[lag] = lane_pos >= (lag * C)

    def gn_prelu(v, gamma, beta, alpha):
        # GroupNorm(num_groups=1) over one sample's (F, TC) block, two-pass
        # statistics in f32, followed by per-channel PReLU.
        mu = jnp.mean(v)
        d_ = v - mu
        var = jnp.mean(d_ * d_)
        vn = d_ * lax.rsqrt(var + EPS) * gamma + beta
        return jnp.where(vn > 0, vn, alpha * vn)

    for l in range(L):                           # unrolled: dila is static
        dila = 2 ** l
        vl = vec_ref[l]          # (9, TC): b1,g1,be1,a1,bdc,g2,be2,a2,b2
        dwl = dw_ref[l]          # (9, TC): depthwise tap (kh*3 + kw)

        # ---- pconv1: 1x1 conv == bf16 MXU matmul over fused batch*F rows --
        y_all = jnp.dot(x2.astype(jnp.bfloat16), w1_ref[l],
                        preferred_element_type=jnp.float32) + vl[0]

        zs = []
        for s in range(NB):                      # per-sample GN / depthwise
            y = gn_prelu(y_all[s * F:(s + 1) * F, :], vl[1], vl[2], vl[3])
            y = y + db[s, l, :]                  # + Dense_0(SiLU(temb))

            # ---- causal dilated depthwise (3,3) conv, groups = C ----------
            # time taps: XLU lane roll + causal mask; lag >= T reads only
            # left padding -> contribution is exactly zero and is skipped.
            ts = [None, None, y]                 # j=0,1,2 -> lag=2*dila,dila,0
            for j in range(2):
                lag = (2 - j) * dila
                if lag < T:
                    r = pltpu.roll(y, shift=lag * C, axis=1)
                    ts[j] = jnp.where(lane_keep[lag], r, 0.0)
            # fold time taps per frequency tap (VPU)
            inner = []
            for i in range(3):
                term = dwl[3 * i + 2] * ts[2]
                for j in range(2):
                    if ts[j] is not None:
                        term = term + dwl[3 * i + j] * ts[j]
                inner.append(term)
            # frequency taps: acc[f] = inner0[f-1] + inner1[f] + inner2[f+1]
            acc = inner[1]
            acc = acc + jnp.where(f_keep_dn,
                                  pltpu.roll(inner[0], 1, axis=0), 0.0)
            acc = acc + jnp.where(f_keep_up,
                                  pltpu.roll(inner[2], F - 1, axis=0), 0.0)
            acc = acc + vl[4]                    # depthwise bias

            zs.append(gn_prelu(acc, vl[5], vl[6], vl[7]))

        z_all = zs[0] if NB == 1 else jnp.concatenate(zs, axis=0)

        # ---- pconv2 (1x1 conv, bf16 MXU) + residual -----------------------
        x2 = jnp.dot(z_all.astype(jnp.bfloat16), w2_ref[l],
                     preferred_element_type=jnp.float32) + vl[8] + x2

    out_ref[...] = x2.reshape(NB, F, TC)


def _samples_per_block(batch: int) -> int:
    """How many samples are folded into one grid step (the matmul M dim).

    Single-TensorCore chips (v5e/v6e): fold the whole batch -> one grid step,
    larger M, fewer tiny MXU fill/drains.  v7x has two TensorCores, so keep
    >= 2 grid steps and let the 'parallel' batch axis feed both cores.
    """
    try:
        kind = jax.devices()[0].device_kind.lower()
        two_cores = ("v7" in kind) or ("7x" in kind)
    except Exception:
        two_cores = False
    if two_cores and batch >= 2 and batch % 2 == 0:
        return batch // 2
    return batch


@functools.partial(jax.jit, static_argnums=(3,))
def _tfcm_forward(x_ncft, temb, layer_params, nb):
    B, C, F, T = x_ncft.shape
    L = len(layer_params)
    TC = T * C
    # channels-last, lane-dense activation: (B, F, T*C), channel fastest
    x = jnp.transpose(x_ncft, (0, 2, 3, 1)).reshape(B, F, TC)

    # ---- pack parameters (wrapper-side plain JAX, fused under jit) --------
    eye_t = jnp.eye(T, dtype=jnp.float32)
    ta = temb * jax.nn.sigmoid(temb)                       # SiLU(temb)
    w1b, w2b, dwt, vecs, demb = [], [], [], [], []
    for p in layer_params:
        # 1x1 convs become (TC, TC) block-diagonal matmuls; stored in bf16 so
        # the dominant weight DMA / VMEM footprint is halved and the MXU runs
        # its native bf16 path (f32 accumulation inside the kernel).
        w1b.append(jnp.kron(eye_t, p["w1"]).astype(jnp.bfloat16))
        w2b.append(jnp.kron(eye_t, p["w2"]).astype(jnp.bfloat16))
        dwt.append(jnp.tile(p["wdc"], (1, T)))             # (9, TC)
        vecs.append(jnp.stack([jnp.tile(v, T) for v in (
            p["b1"], p["g1"], p["be1"], p["a1"], p["bdc"],
            p["g2"], p["be2"], p["a2"], p["b2"])]))         # (9, TC)
        demb.append(jnp.tile(ta @ p["wde"] + p["bde"], (1, T)))   # (B, TC)
    w1b = jnp.stack(w1b)            # (L, TC, TC) bf16
    w2b = jnp.stack(w2b)            # (L, TC, TC) bf16
    dwt = jnp.stack(dwt)            # (L, 9, TC) f32
    vecs = jnp.stack(vecs)          # (L, 9, TC) f32
    demb = jnp.stack(demb, axis=1)  # (B, L, TC) f32

    kern = functools.partial(_tfcm_stack_kernel, L=L, F=F, T=T, C=C, NB=nb)
    flops = B * L * (4 * F * TC * TC + 60 * F * TC)
    bytes_accessed = (2 * L * TC * TC * 2                       # bf16 weights
                      + 4 * (2 * B * F * TC + 2 * L * 9 * TC + B * L * TC))

    out = pl.pallas_call(
        kern,
        out_shape=jax.ShapeDtypeStruct((B, F, TC), jnp.float32),
        grid_spec=pltpu.PrefetchScalarGridSpec(
            num_scalar_prefetch=0,
            grid=(B // nb,),
            in_specs=[
                pl.BlockSpec((nb, F, TC), lambda b: (b, 0, 0)),   # activation
                pl.BlockSpec((nb, L, TC), lambda b: (b, 0, 0)),   # temb term
                pl.BlockSpec((L, TC, TC), lambda b: (0, 0, 0)),   # pconv1 (bd)
                pl.BlockSpec((L, TC, TC), lambda b: (0, 0, 0)),   # pconv2 (bd)
                pl.BlockSpec((L, 9, TC), lambda b: (0, 0, 0)),    # depthwise w
                pl.BlockSpec((L, 9, TC), lambda b: (0, 0, 0)),    # packed vecs
                # TODO(synk): if TC or L grow, mark the four grid-invariant
                # weight inputs with pipeline_mode=pl.Buffered(1) and set
                # vmem_limit_bytes so the kron weights fit v7x's 64 MiB VMEM.
            ],
            out_specs=pl.BlockSpec((nb, F, TC), lambda b: (b, 0, 0)),
        ),
        compiler_params=pltpu.CompilerParams(
            dimension_semantics=("parallel",)),
        cost_estimate=pl.CostEstimate(flops=flops, transcendentals=0,
                                      bytes_accessed=bytes_accessed),
    )(x, demb, w1b, w2b, dwt, vecs)

    return jnp.transpose(out.reshape(B, F, T, C), (0, 3, 1, 2))


def tfcm_forward(x_ncft, temb, layer_params):
    """x_ncft: (B, C, F, T) as in PyTorch; temb: (B, temb_dim)."""
    return _tfcm_forward(x_ncft, temb, layer_params,
                         _samples_per_block(x_ncft.shape[0]))


def init_params(key, n_layers, cin, temb_dim):
    params = []
    for i in range(n_layers):
        ks = jax.random.split(jax.random.fold_in(key, i), 7)
        sc = 1.0 / jnp.sqrt(jnp.float32(cin))
        params.append(dict(
            w1=sc * jax.random.normal(ks[0], (cin, cin), jnp.float32),
            b1=0.1 * jax.random.normal(ks[1], (cin,), jnp.float32),
            g1=jnp.ones((cin,), jnp.float32),
            be1=jnp.zeros((cin,), jnp.float32),
            a1=jnp.full((cin,), 0.25, jnp.float32),
            wde=(1.0 / jnp.sqrt(jnp.float32(temb_dim)))
                * jax.random.normal(ks[2], (temb_dim, cin), jnp.float32),
            bde=jnp.zeros((cin,), jnp.float32),          # nn.init.zeros_(bias)
            wdc=(1.0 / 3.0) * jax.random.normal(ks[3], (9, cin), jnp.float32),
            bdc=0.1 * jax.random.normal(ks[4], (cin,), jnp.float32),
            g2=jnp.ones((cin,), jnp.float32),
            be2=jnp.zeros((cin,), jnp.float32),
            a2=jnp.full((cin,), 0.25, jnp.float32),
            w2=sc * jax.random.normal(ks[5], (cin, cin), jnp.float32),
            b2=0.1 * jax.random.normal(ks[6], (cin,), jnp.float32),
        ))
    return params


# ---------------- pure-JAX reference (channels-last) for validation ---------
def _ref_block(x, temb, p, dila, matmul_dtype):
    """Reference TFCM block.  `matmul_dtype=bf16` matches the kernel's
    explicit bf16 MXU precision (f32 accumulation); GN/PReLU/depthwise f32."""
    B, F, T, C = x.shape
    y = jnp.einsum("bftc,co->bfto", x.astype(matmul_dtype),
                   p["w1"].astype(matmul_dtype),
                   preferred_element_type=jnp.float32) + p["b1"]
    mu = jnp.mean(y, axis=(1, 2, 3), keepdims=True)
    var = jnp.mean((y - mu) ** 2, axis=(1, 2, 3), keepdims=True)
    y = (y - mu) / jnp.sqrt(var + EPS) * p["g1"] + p["be1"]
    y = jnp.where(y > 0, y, p["a1"] * y)
    ta = temb * jax.nn.sigmoid(temb)
    d = ta @ p["wde"] + p["bde"]
    y = y + d[:, None, None, :]
    dp = 2 * dila
    yp = jnp.pad(y, ((0, 0), (1, 1), (dp, 0), (0, 0)))
    acc = jnp.zeros_like(y)
    for i in range(3):
        for j in range(3):
            acc = acc + p["wdc"][3 * i + j] * yp[:, i:i + F,
                                                 j * dila:j * dila + T, :]
    acc = acc + p["bdc"]
    mu = jnp.mean(acc, axis=(1, 2, 3), keepdims=True)
    var = jnp.mean((acc - mu) ** 2, axis=(1, 2, 3), keepdims=True)
    z = (acc - mu) / jnp.sqrt(var + EPS) * p["g2"] + p["be2"]
    z = jnp.where(z > 0, z, p["a2"] * z)
    o = jnp.einsum("bftc,co->bfto", z.astype(matmul_dtype),
                   p["w2"].astype(matmul_dtype),
                   preferred_element_type=jnp.float32) + p["b2"]
    return o + x


if __name__ == "__main__":
    key = jax.random.PRNGKey(0)
    B, C, F, T, temb_dim = 2, 8, 16, 16, 32    # T*C = 128 -> lane-dense
    n_layers = 6

    k1, k2, k3 = jax.random.split(key, 3)
    x = jax.random.normal(k1, (B, C, F, T), jnp.float32)   # PyTorch: B,C,F,T
    temb = jax.random.normal(k2, (B, temb_dim), jnp.float32)
    params = init_params(k3, n_layers, C, temb_dim)

    out = tfcm_forward(x, temb, params)
    out = jax.block_until_ready(out)
    assert out.shape == (B, C, F, T)

    # 1) exactness check vs a precision-matched (bf16-matmul, f32-accum) ref
    xr = jnp.transpose(x, (0, 2, 3, 1))
    for idx, p in enumerate(params):
        xr = _ref_block(xr, temb, p, 2 ** idx, jnp.bfloat16)
    ref_bf16 = jnp.transpose(xr, (0, 3, 1, 2))
    if not jnp.allclose(out, ref_bf16, atol=2e-2, rtol=2e-2):
        raise SystemExit(
            "mismatch vs precision-matched reference: max abs err "
            f"{float(jnp.max(jnp.abs(out - ref_bf16)))}")

    # 2) bounded-error sanity check vs the full-f32 reference
    xr = jnp.transpose(x, (0, 2, 3, 1))
    for idx, p in enumerate(params):
        xr = _ref_block(xr, temb, p, 2 ** idx, jnp.float32)
    ref_f32 = jnp.transpose(xr, (0, 3, 1, 2))
    rel = float(jnp.linalg.norm(out - ref_f32) / jnp.linalg.norm(ref_f32))
    if rel > 1e-1:
        raise SystemExit(f"relative error vs f32 reference too large: {rel}")

    print("KERNEL_OK")
</pallas_src>

<mosaic_0001>
module attributes {stable_mosaic.version = 11 : i64} {
  func.func @_tfcm_stack_kernel(%arg0: i32, %arg1: memref<2x16x128xf32, #tpu.memory_space<vmem>>, %arg2: memref<2x6x128xf32, #tpu.memory_space<vmem>>, %arg3: memref<6x128x128xbf16, #tpu.memory_space<vmem>>, %arg4: memref<6x128x128xbf16, #tpu.memory_space<vmem>>, %arg5: memref<6x9x128xf32, #tpu.memory_space<vmem>>, %arg6: memref<6x9x128xf32, #tpu.memory_space<vmem>>, %arg7: memref<2x16x128xf32, #tpu.memory_space<vmem>>) attributes {dimension_semantics = [#tpu.dimension_semantics<parallel>], iteration_bounds = array<i64: 1>, scalar_prefetch = 0 : i64, scratch_operands = 0 : i64, tpu.core_type = #tpu.core_type<tc>, window_params = [{transform_indices = @transform_0, window_bounds = array<i64: 2, 16, 128>}, {transform_indices = @transform_1, window_bounds = array<i64: 2, 6, 128>}, {pipeline_mode = #tpu.pipeline_mode<synchronous>, transform_indices = @transform_2, window_bounds = array<i64: 6, 128, 128>}, {pipeline_mode = #tpu.pipeline_mode<synchronous>, transform_indices = @transform_3, window_bounds = array<i64: 6, 128, 128>}, {pipeline_mode = #tpu.pipeline_mode<synchronous>, transform_indices = @transform_4, window_bounds = array<i64: 6, 9, 128>}, {pipeline_mode = #tpu.pipeline_mode<synchronous>, transform_indices = @transform_5, window_bounds = array<i64: 6, 9, 128>}, {transform_indices = @transform_6, window_bounds = array<i64: 2, 16, 128>}]} {
    %c0 = arith.constant 0 : index
    %c0_0 = arith.constant 0 : index
    %c0_1 = arith.constant 0 : index
    %0 = vector.load %arg1[%c0, %c0_0, %c0_1] : memref<2x16x128xf32, #tpu.memory_space<vmem>>, vector<2x16x128xf32>
    %1 = vector.shape_cast %0 : vector<2x16x128xf32> to vector<32x128xf32>
    %c0_2 = arith.constant 0 : index
    %c0_3 = arith.constant 0 : index
    %c0_4 = arith.constant 0 : index
    %2 = vector.load %arg2[%c0_2, %c0_3, %c0_4] : memref<2x6x128xf32, #tpu.memory_space<vmem>>, vector<2x6x128xf32>
    %3 = tpu.iota {dimensions = array<i32: 1>} : vector<1x128xi32>
    %4 = tpu.iota {dimensions = array<i32: 0>} : vector<16x1xi32>
    %c1_i32 = arith.constant 1 : i32
    %5 = vector.broadcast %c1_i32 : i32 to vector<16x1xi32>
    %6 = arith.cmpi sge, %4, %5 : vector<16x1xi32>
    %c15_i32 = arith.constant 15 : i32
    %7 = vector.broadcast %c15_i32 : i32 to vector<16x1xi32>
    %8 = arith.cmpi slt, %4, %7 : vector<16x1xi32>
    %c8_i32 = arith.constant 8 : i32
    %9 = vector.broadcast %c8_i32 : i32 to vector<1x128xi32>
    %10 = arith.cmpi sge, %3, %9 : vector<1x128xi32>
    %c16_i32 = arith.constant 16 : i32
    %11 = vector.broadcast %c16_i32 : i32 to vector<1x128xi32>
    %12 = arith.cmpi sge, %3, %11 : vector<1x128xi32>
    %c32_i32 = arith.constant 32 : i32
    %13 = vector.broadcast %c32_i32 : i32 to vector<1x128xi32>
    %14 = arith.cmpi sge, %3, %13 : vector<1x128xi32>
    %c64_i32 = arith.constant 64 : i32
    %15 = vector.broadcast %c64_i32 : i32 to vector<1x128xi32>
    %16 = arith.cmpi sge, %3, %15 : vector<1x128xi32>
    %c0_5 = arith.constant 0 : index
    %c0_6 = arith.constant 0 : index
    %c0_7 = arith.constant 0 : index
    %17 = vector.load %arg6[%c0_5, %c0_6, %c0_7] : memref<6x9x128xf32, #tpu.memory_space<vmem>>, vector<1x9x128xf32>
    %18 = vector.shape_cast %17 : vector<1x9x128xf32> to vector<9x128xf32>
    %c0_8 = arith.constant 0 : index
    %c0_9 = arith.constant 0 : index
    %c0_10 = arith.constant 0 : index
    %19 = vector.load %arg5[%c0_8, %c0_9, %c0_10] : memref<6x9x128xf32, #tpu.memory_space<vmem>>, vector<1x9x128xf32>
    %20 = vector.shape_cast %19 : vector<1x9x128xf32> to vector<9x128xf32>
    %21 = arith.truncf %1 : vector<32x128xf32> to vector<32x128xbf16>
    %c0_11 = arith.constant 0 : index
    %c0_12 = arith.constant 0 : index
    %c0_13 = arith.constant 0 : index
    %22 = vector.load %arg3[%c0_11, %c0_12, %c0_13] : memref<6x128x128xbf16, #tpu.memory_space<vmem>>, vector<1x128x128xbf16>
    %23 = vector.shape_cast %22 : vector<1x128x128xbf16> to vector<128x128xbf16>
    %cst = arith.constant dense<0.000000e+00> : vector<32x128xf32>
    %24 = tpu.matmul %21, %23, %cst {dimension_numbers = #tpu.dot_dimension_numbers<[1], [0], [0], [1], [0, 0, 1, 1], [], []>} : vector<32x128xbf16>, vector<128x128xbf16>, vector<32x128xf32> -> vector<32x128xf32>
    %25 = vector.extract_strided_slice %18 {offsets = [0, 0], sizes = [1, 128], strides = [1, 1]} : vector<9x128xf32> to vector<1x128xf32>
    %26 = vector.shape_cast %25 : vector<1x128xf32> to vector<128xf32>
    %27 = vector.shape_cast %26 : vector<128xf32> to vector<1x128xf32>
    %28 = vector.broadcast %27 : vector<1x128xf32> to vector<32x128xf32>
    %29 = arith.addf %24, %28 : vector<32x128xf32>
    %30 = vector.extract_strided_slice %29 {offsets = [0, 0], sizes = [16, 128], strides = [1, 1]} : vector<32x128xf32> to vector<16x128xf32>
    %31 = vector.extract_strided_slice %18 {offsets = [1, 0], sizes = [1, 128], strides = [1, 1]} : vector<9x128xf32> to vector<1x128xf32>
    %32 = vector.shape_cast %31 : vector<1x128xf32> to vector<128xf32>
    %33 = vector.extract_strided_slice %18 {offsets = [2, 0], sizes = [1, 128], strides = [1, 1]} : vector<9x128xf32> to vector<1x128xf32>
    %34 = vector.shape_cast %33 : vector<1x128xf32> to vector<128xf32>
    %35 = vector.extract_strided_slice %18 {offsets = [3, 0], sizes = [1, 128], strides = [1, 1]} : vector<9x128xf32> to vector<1x128xf32>
    %36 = vector.shape_cast %35 : vector<1x128xf32> to vector<128xf32>
    %37 = vector.shape_cast %30 : vector<16x128xf32> to vector<1x16x128xf32>
    %cst_14 = arith.constant dense<0.000000e+00> : vector<1xf32>
    %38 = vector.multi_reduction <add>, %37, %cst_14 [1, 2] : vector<1x16x128xf32> to vector<1xf32>
    %39 = vector.shape_cast %38 : vector<1xf32> to vector<1x1x1xf32>
    %40 = vector.extract %39[0, 0, 0] : f32 from vector<1x1x1xf32>
    %cst_15 = arith.constant 2.048000e+03 : f32
    %41 = arith.divf %40, %cst_15 : f32
    %42 = vector.broadcast %41 : f32 to vector<16x128xf32>
    %43 = arith.subf %30, %42 : vector<16x128xf32>
    %44 = arith.mulf %43, %43 : vector<16x128xf32>
    %45 = vector.shape_cast %44 : vector<16x128xf32> to vector<1x16x128xf32>
    %cst_16 = arith.constant dense<0.000000e+00> : vector<1xf32>
    %46 = vector.multi_reduction <add>, %45, %cst_16 [1, 2] : vector<1x16x128xf32> to vector<1xf32>
    %47 = vector.shape_cast %46 : vector<1xf32> to vector<1x1x1xf32>
    %48 = vector.extract %47[0, 0, 0] : f32 from vector<1x1x1xf32>
    %cst_17 = arith.constant 2.048000e+03 : f32
    %49 = arith.divf %48, %cst_17 : f32
    %cst_18 = arith.constant 9.99999974E-6 : f32
    %50 = arith.addf %49, %cst_18 : f32
    %51 = math.rsqrt %50 : f32
    %52 = vector.broadcast %51 : f32 to vector<16x128xf32>
    %53 = arith.mulf %43, %52 : vector<16x128xf32>
    %54 = vector.shape_cast %32 : vector<128xf32> to vector<1x128xf32>
    %55 = vector.broadcast %54 : vector<1x128xf32> to vector<16x128xf32>
    %56 = arith.mulf %53, %55 : vector<16x128xf32>
    %57 = vector.shape_cast %34 : vector<128xf32> to vector<1x128xf32>
    %58 = vector.broadcast %57 : vector<1x128xf32> to vector<16x128xf32>
    %59 = arith.addf %56, %58 : vector<16x128xf32>
    %cst_19 = arith.constant 0.000000e+00 : f32
    %60 = vector.broadcast %cst_19 : f32 to vector<16x128xf32>
    %61 = arith.cmpf ogt, %59, %60 : vector<16x128xf32>
    %62 = vector.shape_cast %36 : vector<128xf32> to vector<1x128xf32>
    %63 = vector.broadcast %62 : vector<1x128xf32> to vector<16x128xf32>
    %64 = arith.mulf %63, %59 : vector<16x128xf32>
    %65 = arith.select %61, %59, %64 : vector<16x128xi1>, vector<16x128xf32>
    %66 = vector.extract_strided_slice %2 {offsets = [0, 0, 0], sizes = [1, 1, 128], strides = [1, 1, 1]} : vector<2x6x128xf32> to vector<1x1x128xf32>
    %67 = vector.shape_cast %66 : vector<1x1x128xf32> to vector<128xf32>
    %68 = vector.shape_cast %67 : vector<128xf32> to vector<1x128xf32>
    %69 = vector.broadcast %68 : vector<1x128xf32> to vector<16x128xf32>
    %70 = arith.addf %65, %69 : vector<16x128xf32>
    %c16_i32_20 = arith.constant 16 : i32
    %71 = tpu.dynamic_rotate %70 by %c16_i32_20 dim 1 : vector<16x128xf32>, i32 -> vector<16x128xf32>
    %cst_21 = arith.constant 0.000000e+00 : f32
    %72 = vector.shape_cast %12 : vector<1x128xi1> to vector<1x128xi1>
    %73 = vector.broadcast %72 : vector<1x128xi1> to vector<16x128xi1>
    %74 = vector.broadcast %cst_21 : f32 to vector<16x128xf32>
    %75 = arith.select %73, %71, %74 : vector<16x128xi1>, vector<16x128xf32>
    %c8_i32_22 = arith.constant 8 : i32
    %76 = tpu.dynamic_rotate %70 by %c8_i32_22 dim 1 : vector<16x128xf32>, i32 -> vector<16x128xf32>
    %cst_23 = arith.constant 0.000000e+00 : f32
    %77 = vector.shape_cast %10 : vector<1x128xi1> to vector<1x128xi1>
    %78 = vector.broadcast %77 : vector<1x128xi1> to vector<16x128xi1>
    %79 = vector.broadcast %cst_23 : f32 to vector<16x128xf32>
    %80 = arith.select %78, %76, %79 : vector<16x128xi1>, vector<16x128xf32>
    %81 = vector.extract_strided_slice %20 {offsets = [2, 0], sizes = [1, 128], strides = [1, 1]} : vector<9x128xf32> to vector<1x128xf32>
    %82 = vector.shape_cast %81 : vector<1x128xf32> to vector<128xf32>
    %83 = vector.shape_cast %82 : vector<128xf32> to vector<1x128xf32>
    %84 = vector.broadcast %83 : vector<1x128xf32> to vector<16x128xf32>
    %85 = arith.mulf %84, %70 : vector<16x128xf32>
    %86 = vector.extract_strided_slice %20 {offsets = [0, 0], sizes = [1, 128], strides = [1, 1]} : vector<9x128xf32> to vector<1x128xf32>
    %87 = vector.shape_cast %86 : vector<1x128xf32> to vector<128xf32>
    %88 = vector.shape_cast %87 : vector<128xf32> to vector<1x128xf32>
    %89 = vector.broadcast %88 : vector<1x128xf32> to vector<16x128xf32>
    %90 = arith.mulf %89, %75 : vector<16x128xf32>
    %91 = arith.addf %85, %90 : vector<16x128xf32>
    %92 = vector.extract_strided_slice %20 {offsets = [1, 0], sizes = [1, 128], strides = [1, 1]} : vector<9x128xf32> to vector<1x128xf32>
    %93 = vector.shape_cast %92 : vector<1x128xf32> to vector<128xf32>
    %94 = vector.shape_cast %93 : vector<128xf32> to vector<1x128xf32>
    %95 = vector.broadcast %94 : vector<1x128xf32> to vector<16x128xf32>
    %96 = arith.mulf %95, %80 : vector<16x128xf32>
    %97 = arith.addf %91, %96 : vector<16x128xf32>
    %98 = vector.extract_strided_slice %20 {offsets = [5, 0], sizes = [1, 128], strides = [1, 1]} : vector<9x128xf32> to vector<1x128xf32>
    %99 = vector.shape_cast %98 : vector<1x128xf32> to vector<128xf32>
    %100 = vector.shape_cast %99 : vector<128xf32> to vector<1x128xf32>
    %101 = vector.broadcast %100 : vector<1x128xf32> to vector<16x128xf32>
    %102 = arith.mulf %101, %70 : vector<16x128xf32>
    %103 = vector.extract_strided_slice %20 {offsets = [3, 0], sizes = [1, 128], strides = [1, 1]} : vector<9x128xf32> to vector<1x128xf32>
    %104 = vector.shape_cast %103 : vector<1x128xf32> to vector<128xf32>
    %105 = vector.shape_cast %104 : vector<128xf32> to vector<1x128xf32>
    %106 = vector.broadcast %105 : vector<1x128xf32> to vector<16x128xf32>
    %107 = arith.mulf %106, %75 : vector<16x128xf32>
    %108 = arith.addf %102, %107 : vector<16x128xf32>
    %109 = vector.extract_strided_slice %20 {offsets = [4, 0], sizes = [1, 128], strides = [1, 1]} : vector<9x128xf32> to vector<1x128xf32>
    %110 = vector.shape_cast %109 : vector<1x128xf32> to vector<128xf32>
    %111 = vector.shape_cast %110 : vector<128xf32> to vector<1x128xf32>
    %112 = vector.broadcast %111 : vector<1x128xf32> to vector<16x128xf32>
    %113 = arith.mulf %112, %80 : vector<16x128xf32>
    %114 = arith.addf %108, %113 : vector<16x128xf32>
    %115 = vector.extract_strided_slice %20 {offsets = [8, 0], sizes = [1, 128], strides = [1, 1]} : vector<9x128xf32> to vector<1x128xf32>
    %116 = vector.shape_cast %115 : vector<1x128xf32> to vector<128xf32>
    %117 = vector.shape_cast %116 : vector<128xf32> to vector<1x128xf32>
    %118 = vector.broadcast %117 : vector<1x128xf32> to vector<16x128xf32>
    %119 = arith.mulf %118, %70 : vector<16x128xf32>
    %120 = vector.extract_strided_slice %20 {offsets = [6, 0], sizes = [1, 128], strides = [1, 1]} : vector<9x128xf32> to vector<1x128xf32>
    %121 = vector.shape_cast %120 : vector<1x128xf32> to vector<128xf32>
    %122 = vector.shape_cast %121 : vector<128xf32> to vector<1x128xf32>
    %123 = vector.broadcast %122 : vector<1x128xf32> to vector<16x128xf32>
    %124 = arith.mulf %123, %75 : vector<16x128xf32>
    %125 = arith.addf %119, %124 : vector<16x128xf32>
    %126 = vector.extract_strided_slice %20 {offsets = [7, 0], sizes = [1, 128], strides = [1, 1]} : vector<9x128xf32> to vector<1x128xf32>
    %127 = vector.shape_cast %126 : vector<1x128xf32> to vector<128xf32>
    %128 = vector.shape_cast %127 : vector<128xf32> to vector<1x128xf32>
    %129 = vector.broadcast %128 : vector<1x128xf32> to vector<16x128xf32>
    %130 = arith.mulf %129, %80 : vector<16x128xf32>
    %131 = arith.addf %125, %130 : vector<16x128xf32>
    %c1_i32_24 = arith.constant 1 : i32
    %132 = tpu.dynamic_rotate %97 by %c1_i32_24 dim 0 : vector<16x128xf32>, i32 -> vector<16x128xf32>
    %cst_25 = arith.constant 0.000000e+00 : f32
    %133 = vector.shape_cast %6 : vector<16x1xi1> to vector<16x1xi1>
    %134 = vector.broadcast %133 : vector<16x1xi1> to vector<16x128xi1>
    %135 = vector.broadcast %cst_25 : f32 to vector<16x128xf32>
    %136 = arith.select %134, %132, %135 : vector<16x128xi1>, vector<16x128xf32>
    %137 = arith.addf %114, %136 : vector<16x128xf32>
    %c15_i32_26 = arith.constant 15 : i32
    %138 = tpu.dynamic_rotate %131 by %c15_i32_26 dim 0 : vector<16x128xf32>, i32 -> vector<16x128xf32>
    %cst_27 = arith.constant 0.000000e+00 : f32
    %139 = vector.shape_cast %8 : vector<16x1xi1> to vector<16x1xi1>
    %140 = vector.broadcast %139 : vector<16x1xi1> to vector<16x128xi1>
    %141 = vector.broadcast %cst_27 : f32 to vector<16x128xf32>
    %142 = arith.select %140, %138, %141 : vector<16x128xi1>, vector<16x128xf32>
    %143 = arith.addf %137, %142 : vector<16x128xf32>
    %144 = vector.extract_strided_slice %18 {offsets = [4, 0], sizes = [1, 128], strides = [1, 1]} : vector<9x128xf32> to vector<1x128xf32>
    %145 = vector.shape_cast %144 : vector<1x128xf32> to vector<128xf32>
    %146 = vector.shape_cast %145 : vector<128xf32> to vector<1x128xf32>
    %147 = vector.broadcast %146 : vector<1x128xf32> to vector<16x128xf32>
    %148 = arith.addf %143, %147 : vector<16x128xf32>
    %149 = vector.extract_strided_slice %18 {offsets = [5, 0], sizes = [1, 128], strides = [1, 1]} : vector<9x128xf32> to vector<1x128xf32>
    %150 = vector.shape_cast %149 : vector<1x128xf32> to vector<128xf32>
    %151 = vector.extract_strided_slice %18 {offsets = [6, 0], sizes = [1, 128], strides = [1, 1]} : vector<9x128xf32> to vector<1x128xf32>
    %152 = vector.shape_cast %151 : vector<1x128xf32> to vector<128xf32>
    %153 = vector.extract_strided_slice %18 {offsets = [7, 0], sizes = [1, 128], strides = [1, 1]} : vector<9x128xf32> to vector<1x128xf32>
    %154 = vector.shape_cast %153 : vector<1x128xf32> to vector<128xf32>
    %155 = vector.shape_cast %148 : vector<16x128xf32> to vector<1x16x128xf32>
    %cst_28 = arith.constant dense<0.000000e+00> : vector<1xf32>
    %156 = vector.multi_reduction <add>, %155, %cst_28 [1, 2] : vector<1x16x128xf32> to vector<1xf32>
    %157 = vector.shape_cast %156 : vector<1xf32> to vector<1x1x1xf32>
    %158 = vector.extract %157[0, 0, 0] : f32 from vector<1x1x1xf32>
    %cst_29 = arith.constant 2.048000e+03 : f32
    %159 = arith.divf %158, %cst_29 : f32
    %160 = vector.broadcast %159 : f32 to vector<16x128xf32>
    %161 = arith.subf %148, %160 : vector<16x128xf32>
    %162 = arith.mulf %161, %161 : vector<16x128xf32>
    %163 = vector.shape_cast %162 : vector<16x128xf32> to vector<1x16x128xf32>
    %cst_30 = arith.constant dense<0.000000e+00> : vector<1xf32>
    %164 = vector.multi_reduction <add>, %163, %cst_30 [1, 2] : vector<1x16x128xf32> to vector<1xf32>
    %165 = vector.shape_cast %164 : vector<1xf32> to vector<1x1x1xf32>
    %166 = vector.extract %165[0, 0, 0] : f32 from vector<1x1x1xf32>
    %cst_31 = arith.constant 2.048000e+03 : f32
    %167 = arith.divf %166, %cst_31 : f32
    %cst_32 = arith.constant 9.99999974E-6 : f32
    %168 = arith.addf %167, %cst_32 : f32
    %169 = math.rsqrt %168 : f32
    %170 = vector.broadcast %169 : f32 to vector<16x128xf32>
    %171 = arith.mulf %161, %170 : vector<16x128xf32>
    %172 = vector.shape_cast %150 : vector<128xf32> to vector<1x128xf32>
    %173 = vector.broadcast %172 : vector<1x128xf32> to vector<16x128xf32>
    %174 = arith.mulf %171, %173 : vector<16x128xf32>
    %175 = vector.shape_cast %152 : vector<128xf32> to vector<1x128xf32>
    %176 = vector.broadcast %175 : vector<1x128xf32> to vector<16x128xf32>
    %177 = arith.addf %174, %176 : vector<16x128xf32>
    %cst_33 = arith.constant 0.000000e+00 : f32
    %178 = vector.broadcast %cst_33 : f32 to vector<16x128xf32>
    %179 = arith.cmpf ogt, %177, %178 : vector<16x128xf32>
    %180 = vector.shape_cast %154 : vector<128xf32> to vector<1x128xf32>
    %181 = vector.broadcast %180 : vector<1x128xf32> to vector<16x128xf32>
    %182 = arith.mulf %181, %177 : vector<16x128xf32>
    %183 = arith.select %179, %177, %182 : vector<16x128xi1>, vector<16x128xf32>
    %184 = vector.extract_strided_slice %29 {offsets = [16, 0], sizes = [16, 128], strides = [1, 1]} : vector<32x128xf32> to vector<16x128xf32>
    %185 = vector.extract_strided_slice %18 {offsets = [1, 0], sizes = [1, 128], strides = [1, 1]} : vector<9x128xf32> to vector<1x128xf32>
    %186 = vector.shape_cast %185 : vector<1x128xf32> to vector<128xf32>
    %187 = vector.extract_strided_slice %18 {offsets = [2, 0], sizes = [1, 128], strides = [1, 1]} : vector<9x128xf32> to vector<1x128xf32>
    %188 = vector.shape_cast %187 : vector<1x128xf32> to vector<128xf32>
    %189 = vector.extract_strided_slice %18 {offsets = [3, 0], sizes = [1, 128], strides = [1, 1]} : vector<9x128xf32> to vector<1x128xf32>
    %190 = vector.shape_cast %189 : vector<1x128xf32> to vector<128xf32>
    %191 = vector.shape_cast %184 : vector<16x128xf32> to vector<1x16x128xf32>
    %cst_34 = arith.constant dense<0.000000e+00> : vector<1xf32>
    %192 = vector.multi_reduction <add>, %191, %cst_34 [1, 2] : vector<1x16x128xf32> to vector<1xf32>
    %193 = vector.shape_cast %192 : vector<1xf32> to vector<1x1x1xf32>
    %194 = vector.extract %193[0, 0, 0] : f32 from vector<1x1x1xf32>
    %cst_35 = arith.constant 2.048000e+03 : f32
    %195 = arith.divf %194, %cst_35 : f32
    %196 = vector.broadcast %195 : f32 to vector<16x128xf32>
    %197 = arith.subf %184, %196 : vector<16x128xf32>
    %198 = arith.mulf %197, %197 : vector<16x128xf32>
    %199 = vector.shape_cast %198 : vector<16x128xf32> to vector<1x16x128xf32>
    %cst_36 = arith.constant dense<0.000000e+00> : vector<1xf32>
    %200 = vector.multi_reduction <add>, %199, %cst_36 [1, 2] : vector<1x16x128xf32> to vector<1xf32>
    %201 = vector.shape_cast %200 : vector<1xf32> to vector<1x1x1xf32>
    %202 = vector.extract %201[0, 0, 0] : f32 from vector<1x1x1xf32>
    %cst_37 = arith.constant 2.048000e+03 : f32
    %203 = arith.divf %202, %cst_37 : f32
    %cst_38 = arith.constant 9.99999974E-6 : f32
    %204 = arith.addf %203, %cst_38 : f32
    %205 = math.rsqrt %204 : f32
    %206 = vector.broadcast %205 : f32 to vector<16x128xf32>
    %207 = arith.mulf %197, %206 : vector<16x128xf32>
    %208 = vector.shape_cast %186 : vector<128xf32> to vector<1x128xf32>
    %209 = vector.broadcast %208 : vector<1x128xf32> to vector<16x128xf32>
    %210 = arith.mulf %207, %209 : vector<16x128xf32>
    %211 = vector.shape_cast %188 : vector<128xf32> to vector<1x128xf32>
    %212 = vector.broadcast %211 : vector<1x128xf32> to vector<16x128xf32>
    %213 = arith.addf %210, %212 : vector<16x128xf32>
    %cst_39 = arith.constant 0.000000e+00 : f32
    %214 = vector.broadcast %cst_39 : f32 to vector<16x128xf32>
    %215 = arith.cmpf ogt, %213, %214 : vector<16x128xf32>
    %216 = vector.shape_cast %190 : vector<128xf32> to vector<1x128xf32>
    %217 = vector.broadcast %216 : vector<1x128xf32> to vector<16x128xf32>
    %218 = arith.mulf %217, %213 : vector<16x128xf32>
    %219 = arith.select %215, %213, %218 : vector<16x128xi1>, vector<16x128xf32>
    %220 = vector.extract_strided_slice %2 {offsets = [1, 0, 0], sizes = [1, 1, 128], strides = [1, 1, 1]} : vector<2x6x128xf32> to vector<1x1x128xf32>
    %221 = vector.shape_cast %220 : vector<1x1x128xf32> to vector<128xf32>
    %222 = vector.shape_cast %221 : vector<128xf32> to vector<1x128xf32>
    %223 = vector.broadcast %222 : vector<1x128xf32> to vector<16x128xf32>
    %224 = arith.addf %219, %223 : vector<16x128xf32>
    %c16_i32_40 = arith.constant 16 : i32
    %225 = tpu.dynamic_rotate %224 by %c16_i32_40 dim 1 : vector<16x128xf32>, i32 -> vector<16x128xf32>
    %cst_41 = arith.constant 0.000000e+00 : f32
    %226 = vector.shape_cast %12 : vector<1x128xi1> to vector<1x128xi1>
    %227 = vector.broadcast %226 : vector<1x128xi1> to vector<16x128xi1>
    %228 = vector.broadcast %cst_41 : f32 to vector<16x128xf32>
    %229 = arith.select %227, %225, %228 : vector<16x128xi1>, vector<16x128xf32>
    %c8_i32_42 = arith.constant 8 : i32
    %230 = tpu.dynamic_rotate %224 by %c8_i32_42 dim 1 : vector<16x128xf32>, i32 -> vector<16x128xf32>
    %cst_43 = arith.constant 0.000000e+00 : f32
    %231 = vector.shape_cast %10 : vector<1x128xi1> to vector<1x128xi1>
    %232 = vector.broadcast %231 : vector<1x128xi1> to vector<16x128xi1>
    %233 = vector.broadcast %cst_43 : f32 to vector<16x128xf32>
    %234 = arith.select %232, %230, %233 : vector<16x128xi1>, vector<16x128xf32>
    %235 = vector.extract_strided_slice %20 {offsets = [2, 0], sizes = [1, 128], strides = [1, 1]} : vector<9x128xf32> to vector<1x128xf32>
    %236 = vector.shape_cast %235 : vector<1x128xf32> to vector<128xf32>
    %237 = vector.shape_cast %236 : vector<128xf32> to vector<1x128xf32>
    %238 = vector.broadcast %237 : vector<1x128xf32> to vector<16x128xf32>
    %239 = arith.mulf %238, %224 : vector<16x128xf32>
    %240 = vector.extract_strided_slice %20 {offsets = [0, 0], sizes = [1, 128], strides = [1, 1]} : vector<9x128xf32> to vector<1x128xf32>
    %241 = vector.shape_cast %240 : vector<1x128xf32> to vector<128xf32>
    %242 = vector.shape_cast %241 : vector<128xf32> to vector<1x128xf32>
    %243 = vector.broadcast %242 : vector<1x128xf32> to vector<16x128xf32>
    %244 = arith.mulf %243, %229 : vector<16x128xf32>
    %245 = arith.addf %239, %244 : vector<16x128xf32>
    %246 = vector.extract_strided_slice %20 {offsets = [1, 0], sizes = [1, 128], strides = [1, 1]} : vector<9x128xf32> to vector<1x128xf32>
    %247 = vector.shape_cast %246 : vector<1x128xf32> to vector<128xf32>
    %248 = vector.shape_cast %247 : vector<128xf32> to vector<1x128xf32>
    %249 = vector.broadcast %248 : vector<1x128xf32> to vector<16x128xf32>
    %250 = arith.mulf %249, %234 : vector<16x128xf32>
    %251 = arith.addf %245, %250 : vector<16x128xf32>
    %252 = vector.extract_strided_slice %20 {offsets = [5, 0], sizes = [1, 128], strides = [1, 1]} : vector<9x128xf32> to vector<1x128xf32>
    %253 = vector.shape_cast %252 : vector<1x128xf32> to vector<128xf32>
    %254 = vector.shape_cast %253 : vector<128xf32> to vector<1x128xf32>
    %255 = vector.broadcast %254 : vector<1x128xf32> to vector<16x128xf32>
    %256 = arith.mulf %255, %224 : vector<16x128xf32>
    %257 = vector.extract_strided_slice %20 {offsets = [3, 0], sizes = [1, 128], strides = [1, 1]} : vector<9x128xf32> to vector<1x128xf32>
    %258 = vector.shape_cast %257 : vector<1x128xf32> to vector<128xf32>
    %259 = vector.shape_cast %258 : vector<128xf32> to vector<1x128xf32>
    %260 = vector.broadcast %259 : vector<1x128xf32> to vector<16x128xf32>
    %261 = arith.mulf %260, %229 : vector<16x128xf32>
    %262 = arith.addf %256, %261 : vector<16x128xf32>
    %263 = vector.extract_strided_slice %20 {offsets = [4, 0], sizes = [1, 128], strides = [1, 1]} : vector<9x128xf32> to vector<1x128xf32>
    %264 = vector.shape_cast %263 : vector<1x128xf32> to vector<128xf32>
    %265 = vector.shape_cast %264 : vector<128xf32> to vector<1x128xf32>
    %266 = vector.broadcast %265 : vector<1x128xf32> to vector<16x128xf32>
    %267 = arith.mulf %266, %234 : vector<16x128xf32>
    %268 = arith.addf %262, %267 : vector<16x128xf32>
    %269 = vector.extract_strided_slice %20 {offsets = [8, 0], sizes = [1, 128], strides = [1, 1]} : vector<9x128xf32> to vector<1x128xf32>
    %270 = vector.shape_cast %269 : vector<1x128xf32> to vector<128xf32>
    %271 = vector.shape_cast %270 : vector<128xf32> to vector<1x128xf32>
    %272 = vector.broadcast %271 : vector<1x128xf32> to vector<16x128xf32>
    %273 = arith.mulf %272, %224 : vector<16x128xf32>
    %274 = vector.extract_strided_slice %20 {offsets = [6, 0], sizes = [1, 128], strides = [1, 1]} : vector<9x128xf32> to vector<1x128xf32>
    %275 = vector.shape_cast %274 : vector<1x128xf32> to vector<128xf32>
    %276 = vector.shape_cast %275 : vector<128xf32> to vector<1x128xf32>
    %277 = vector.broadcast %276 : vector<1x128xf32> to vector<16x128xf32>
    %278 = arith.mulf %277, %229 : vector<16x128xf32>
    %279 = arith.addf %273, %278 : vector<16x128xf32>
    %280 = vector.extract_strided_slice %20 {offsets = [7, 0], sizes = [1, 128], strides = [1, 1]} : vector<9x128xf32> to vector<1x128xf32>
    %281 = vector.shape_cast %280 : vector<1x128xf32> to vector<128xf32>
    %282 = vector.shape_cast %281 : vector<128xf32> to vector<1x128xf32>
    %283 = vector.broadcast %282 : vector<1x128xf32> to vector<16x128xf32>
    %284 = arith.mulf %283, %234 : vector<16x128xf32>
    %285 = arith.addf %279, %284 : vector<16x128xf32>
    %c1_i32_44 = arith.constant 1 : i32
    %286 = tpu.dynamic_rotate %251 by %c1_i32_44 dim 0 : vector<16x128xf32>, i32 -> vector<16x128xf32>
    %cst_45 = arith.constant 0.000000e+00 : f32
    %287 = vector.shape_cast %6 : vector<16x1xi1> to vector<16x1xi1>
    %288 = vector.broadcast %287 : vector<16x1xi1> to vector<16x128xi1>
    %289 = vector.broadcast %cst_45 : f32 to vector<16x128xf32>
    %290 = arith.select %288, %286, %289 : vector<16x128xi1>, vector<16x128xf32>
    %291 = arith.addf %268, %290 : vector<16x128xf32>
    %c15_i32_46 = arith.constant 15 : i32
    %292 = tpu.dynamic_rotate %285 by %c15_i32_46 dim 0 : vector<16x128xf32>, i32 -> vector<16x128xf32>
    %cst_47 = arith.constant 0.000000e+00 : f32
    %293 = vector.shape_cast %8 : vector<16x1xi1> to vector<16x1xi1>
    %294 = vector.broadcast %293 : vector<16x1xi1> to vector<16x128xi1>
    %295 = vector.broadcast %cst_47 : f32 to vector<16x128xf32>
    %296 = arith.select %294, %292, %295 : vector<16x128xi1>, vector<16x128xf32>
    %297 = arith.addf %291, %296 : vector<16x128xf32>
    %298 = vector.extract_strided_slice %18 {offsets = [4, 0], sizes = [1, 128], strides = [1, 1]} : vector<9x128xf32> to vector<1x128xf32>
    %299 = vector.shape_cast %298 : vector<1x128xf32> to vector<128xf32>
    %300 = vector.shape_cast %299 : vector<128xf32> to vector<1x128xf32>
    %301 = vector.broadcast %300 : vector<1x128xf32> to vector<16x128xf32>
    %302 = arith.addf %297, %301 : vector<16x128xf32>
    %303 = vector.extract_strided_slice %18 {offsets = [5, 0], sizes = [1, 128], strides = [1, 1]} : vector<9x128xf32> to vector<1x128xf32>
    %304 = vector.shape_cast %303 : vector<1x128xf32> to vector<128xf32>
    %305 = vector.extract_strided_slice %18 {offsets = [6, 0], sizes = [1, 128], strides = [1, 1]} : vector<9x128xf32> to vector<1x128xf32>
    %306 = vector.shape_cast %305 : vector<1x128xf32> to vector<128xf32>
    %307 = vector.extract_strided_slice %18 {offsets = [7, 0], sizes = [1, 128], strides = [1, 1]} : vector<9x128xf32> to vector<1x128xf32>
    %308 = vector.shape_cast %307 : vector<1x128xf32> to vector<128xf32>
    %309 = vector.shape_cast %302 : vector<16x128xf32> to vector<1x16x128xf32>
    %cst_48 = arith.constant dense<0.000000e+00> : vector<1xf32>
    %310 = vector.multi_reduction <add>, %309, %cst_48 [1, 2] : vector<1x16x128xf32> to vector<1xf32>
    %311 = vector.shape_cast %310 : vector<1xf32> to vector<1x1x1xf32>
    %312 = vector.extract %311[0, 0, 0] : f32 from vector<1x1x1xf32>
    %cst_49 = arith.constant 2.048000e+03 : f32
    %313 = arith.divf %312, %cst_49 : f32
    %314 = vector.broadcast %313 : f32 to vector<16x128xf32>
    %315 = arith.subf %302, %314 : vector<16x128xf32>
    %316 = arith.mulf %315, %315 : vector<16x128xf32>
    %317 = vector.shape_cast %316 : vector<16x128xf32> to vector<1x16x128xf32>
    %cst_50 = arith.constant dense<0.000000e+00> : vector<1xf32>
    %318 = vector.multi_reduction <add>, %317, %cst_50 [1, 2] : vector<1x16x128xf32> to vector<1xf32>
    %319 = vector.shape_cast %318 : vector<1xf32> to vector<1x1x1xf32>
    %320 = vector.extract %319[0, 0, 0] : f32 from vector<1x1x1xf32>
    %cst_51 = arith.constant 2.048000e+03 : f32
    %321 = arith.divf %320, %cst_51 : f32
    %cst_52 = arith.constant 9.99999974E-6 : f32
    %322 = arith.addf %321, %cst_52 : f32
    %323 = math.rsqrt %322 : f32
    %324 = vector.broadcast %323 : f32 to vector<16x128xf32>
    %325 = arith.mulf %315, %324 : vector<16x128xf32>
    %326 = vector.shape_cast %304 : vector<128xf32> to vector<1x128xf32>
    %327 = vector.broadcast %326 : vector<1x128xf32> to vector<16x128xf32>
    %328 = arith.mulf %325, %327 : vector<16x128xf32>
    %329 = vector.shape_cast %306 : vector<128xf32> to vector<1x128xf32>
    %330 = vector.broadcast %329 : vector<1x128xf32> to vector<16x128xf32>
    %331 = arith.addf %328, %330 : vector<16x128xf32>
    %cst_53 = arith.constant 0.000000e+00 : f32
    %332 = vector.broadcast %cst_53 : f32 to vector<16x128xf32>
    %333 = arith.cmpf ogt, %331, %332 : vector<16x128xf32>
    %334 = vector.shape_cast %308 : vector<128xf32> to vector<1x128xf32>
    %335 = vector.broadcast %334 : vector<1x128xf32> to vector<16x128xf32>
    %336 = arith.mulf %335, %331 : vector<16x128xf32>
    %337 = arith.select %333, %331, %336 : vector<16x128xi1>, vector<16x128xf32>
    %338 = tpu.concatenate %183, %337 in 0 : vector<16x128xf32>, vector<16x128xf32> -> vector<32x128xf32>
    %339 = arith.truncf %338 : vector<32x128xf32> to vector<32x128xbf16>
    %c0_54 = arith.constant 0 : index
    %c0_55 = arith.constant 0 : index
    %c0_56 = arith.constant 0 : index
    %340 = vector.load %arg4[%c0_54, %c0_55, %c0_56] : memref<6x128x128xbf16, #tpu.memory_space<vmem>>, vector<1x128x128xbf16>
    %341 = vector.shape_cast %340 : vector<1x128x128xbf16> to vector<128x128xbf16>
    %cst_57 = arith.constant dense<0.000000e+00> : vector<32x128xf32>
    %342 = tpu.matmul %339, %341, %cst_57 {dimension_numbers = #tpu.dot_dimension_numbers<[1], [0], [0], [1], [0, 0, 1, 1], [], []>} : vector<32x128xbf16>, vector<128x128xbf16>, vector<32x128xf32> -> vector<32x128xf32>
    %343 = vector.extract_strided_slice %18 {offsets = [8, 0], sizes = [1, 128], strides = [1, 1]} : vector<9x128xf32> to vector<1x128xf32>
    %344 = vector.shape_cast %343 : vector<1x128xf32> to vector<128xf32>
    %345 = vector.shape_cast %344 : vector<128xf32> to vector<1x128xf32>
    %346 = vector.broadcast %345 : vector<1x128xf32> to vector<32x128xf32>
    %347 = arith.addf %342, %346 : vector<32x128xf32>
    %348 = arith.addf %347, %1 : vector<32x128xf32>
    %c1 = arith.constant 1 : index
    %c0_58 = arith.constant 0 : index
    %c0_59 = arith.constant 0 : index
    %349 = vector.load %arg6[%c1, %c0_58, %c0_59] : memref<6x9x128xf32, #tpu.memory_space<vmem>>, vector<1x9x128xf32>
    %350 = vector.shape_cast %349 : vector<1x9x128xf32> to vector<9x128xf32>
    %c1_60 = arith.constant 1 : index
    %c0_61 = arith.constant 0 : index
    %c0_62 = arith.constant 0 : index
    %351 = vector.load %arg5[%c1_60, %c0_61, %c0_62] : memref<6x9x128xf32, #tpu.memory_space<vmem>>, vector<1x9x128xf32>
    %352 = vector.shape_cast %351 : vector<1x9x128xf32> to vector<9x128xf32>
    %353 = arith.truncf %348 : vector<32x128xf32> to vector<32x128xbf16>
    %c1_63 = arith.constant 1 : index
    %c0_64 = arith.constant 0 : index
    %c0_65 = arith.constant 0 : index
    %354 = vector.load %arg3[%c1_63, %c0_64, %c0_65] : memref<6x128x128xbf16, #tpu.memory_space<vmem>>, vector<1x128x128xbf16>
    %355 = vector.shape_cast %354 : vector<1x128x128xbf16> to vector<128x128xbf16>
    %cst_66 = arith.constant dense<0.000000e+00> : vector<32x128xf32>
    %356 = tpu.matmul %353, %355, %cst_66 {dimension_numbers = #tpu.dot_dimension_numbers<[1], [0], [0], [1], [0, 0, 1, 1], [], []>} : vector<32x128xbf16>, vector<128x128xbf16>, vector<32x128xf32> -> vector<32x128xf32>
    %357 = vector.extract_strided_slice %350 {offsets = [0, 0], sizes = [1, 128], strides = [1, 1]} : vector<9x128xf32> to vector<1x128xf32>
    %358 = vector.shape_cast %357 : vector<1x128xf32> to vector<128xf32>
    %359 = vector.shape_cast %358 : vector<128xf32> to vector<1x128xf32>
    %360 = vector.broadcast %359 : vector<1x128xf32> to vector<32x128xf32>
    %361 = arith.addf %356, %360 : vector<32x128xf32>
    %362 = vector.extract_strided_slice %361 {offsets = [0, 0], sizes = [16, 128], strides = [1, 1]} : vector<32x128xf32> to vector<16x128xf32>
    %363 = vector.extract_strided_slice %350 {offsets = [1, 0], sizes = [1, 128], strides = [1, 1]} : vector<9x128xf32> to vector<1x128xf32>
    %364 = vector.shape_cast %363 : vector<1x128xf32> to vector<128xf32>
    %365 = vector.extract_strided_slice %350 {offsets = [2, 0], sizes = [1, 128], strides = [1, 1]} : vector<9x128xf32> to vector<1x128xf32>
    %366 = vector.shape_cast %365 : vector<1x128xf32> to vector<128xf32>
    %367 = vector.extract_strided_slice %350 {offsets = [3, 0], sizes = [1, 128], strides = [1, 1]} : vector<9x128xf32> to vector<1x128xf32>
    %368 = vector.shape_cast %367 : vector<1x128xf32> to vector<128xf32>
    %369 = vector.shape_cast %362 : vector<16x128xf32> to vector<1x16x128xf32>
    %cst_67 = arith.constant dense<0.000000e+00> : vector<1xf32>
    %370 = vector.multi_reduction <add>, %369, %cst_67 [1, 2] : vector<1x16x128xf32> to vector<1xf32>
    %371 = vector.shape_cast %370 : vector<1xf32> to vector<1x1x1xf32>
    %372 = vector.extract %371[0, 0, 0] : f32 from vector<1x1x1xf32>
    %cst_68 = arith.constant 2.048000e+03 : f32
    %373 = arith.divf %372, %cst_68 : f32
    %374 = vector.broadcast %373 : f32 to vector<16x128xf32>
    %375 = arith.subf %362, %374 : vector<16x128xf32>
    %376 = arith.mulf %375, %375 : vector<16x128xf32>
    %377 = vector.shape_cast %376 : vector<16x128xf32> to vector<1x16x128xf32>
    %cst_69 = arith.constant dense<0.000000e+00> : vector<1xf32>
    %378 = vector.multi_reduction <add>, %377, %cst_69 [1, 2] : vector<1x16x128xf32> to vector<1xf32>
    %379 = vector.shape_cast %378 : vector<1xf32> to vector<1x1x1xf32>
    %380 = vector.extract %379[0, 0, 0] : f32 from vector<1x1x1xf32>
    %cst_70 = arith.constant 2.048000e+03 : f32
    %381 = arith.divf %380, %cst_70 : f32
    %cst_71 = arith.constant 9.99999974E-6 : f32
    %382 = arith.addf %381, %cst_71 : f32
    %383 = math.rsqrt %382 : f32
    %384 = vector.broadcast %383 : f32 to vector<16x128xf32>
    %385 = arith.mulf %375, %384 : vector<16x128xf32>
    %386 = vector.shape_cast %364 : vector<128xf32> to vector<1x128xf32>
    %387 = vector.broadcast %386 : vector<1x128xf32> to vector<16x128xf32>
    %388 = arith.mulf %385, %387 : vector<16x128xf32>
    %389 = vector.shape_cast %366 : vector<128xf32> to vector<1x128xf32>
    %390 = vector.broadcast %389 : vector<1x128xf32> to vector<16x128xf32>
    %391 = arith.addf %388, %390 : vector<16x128xf32>
    %cst_72 = arith.constant 0.000000e+00 : f32
    %392 = vector.broadcast %cst_72 : f32 to vector<16x128xf32>
    %393 = arith.cmpf ogt, %391, %392 : vector<16x128xf32>
    %394 = vector.shape_cast %368 : vector<128xf32> to vector<1x128xf32>
    %395 = vector.broadcast %394 : vector<1x128xf32> to vector<16x128xf32>
    %396 = arith.mulf %395, %391 : vector<16x128xf32>
    %397 = arith.select %393, %391, %396 : vector<16x128xi1>, vector<16x128xf32>
    %398 = vector.extract_strided_slice %2 {offsets = [0, 1, 0], sizes = [1, 1, 128], strides = [1, 1, 1]} : vector<2x6x128xf32> to vector<1x1x128xf32>
    %399 = vector.shape_cast %398 : vector<1x1x128xf32> to vector<128xf32>
    %400 = vector.shape_cast %399 : vector<128xf32> to vector<1x128xf32>
    %401 = vector.broadcast %400 : vector<1x128xf32> to vector<16x128xf32>
    %402 = arith.addf %397, %401 : vector<16x128xf32>
    %c32_i32_73 = arith.constant 32 : i32
    %403 = tpu.dynamic_rotate %402 by %c32_i32_73 dim 1 : vector<16x128xf32>, i32 -> vector<16x128xf32>
    %cst_74 = arith.constant 0.000000e+00 : f32
    %404 = vector.shape_cast %14 : vector<1x128xi1> to vector<1x128xi1>
    %405 = vector.broadcast %404 : vector<1x128xi1> to vector<16x128xi1>
    %406 = vector.broadcast %cst_74 : f32 to vector<16x128xf32>
    %407 = arith.select %405, %403, %406 : vector<16x128xi1>, vector<16x128xf32>
    %c16_i32_75 = arith.constant 16 : i32
    %408 = tpu.dynamic_rotate %402 by %c16_i32_75 dim 1 : vector<16x128xf32>, i32 -> vector<16x128xf32>
    %cst_76 = arith.constant 0.000000e+00 : f32
    %409 = vector.shape_cast %12 : vector<1x128xi1> to vector<1x128xi1>
    %410 = vector.broadcast %409 : vector<1x128xi1> to vector<16x128xi1>
    %411 = vector.broadcast %cst_76 : f32 to vector<16x128xf32>
    %412 = arith.select %410, %408, %411 : vector<16x128xi1>, vector<16x128xf32>
    %413 = vector.extract_strided_slice %352 {offsets = [2, 0], sizes = [1, 128], strides = [1, 1]} : vector<9x128xf32> to vector<1x128xf32>
    %414 = vector.shape_cast %413 : vector<1x128xf32> to vector<128xf32>
    %415 = vector.shape_cast %414 : vector<128xf32> to vector<1x128xf32>
    %416 = vector.broadcast %415 : vector<1x128xf32> to vector<16x128xf32>
    %417 = arith.mulf %416, %402 : vector<16x128xf32>
    %418 = vector.extract_strided_slice %352 {offsets = [0, 0], sizes = [1, 128], strides = [1, 1]} : vector<9x128xf32> to vector<1x128xf32>
    %419 = vector.shape_cast %418 : vector<1x128xf32> to vector<128xf32>
    %420 = vector.shape_cast %419 : vector<128xf32> to vector<1x128xf32>
    %421 = vector.broadcast %420 : vector<1x128xf32> to vector<16x128xf32>
    %422 = arith.mulf %421, %407 : vector<16x128xf32>
    %423 = arith.addf %417, %422 : vector<16x128xf32>
    %424 = vector.extract_strided_slice %352 {offsets = [1, 0], sizes = [1, 128], strides = [1, 1]} : vector<9x128xf32> to vector<1x128xf32>
    %425 = vector.shape_cast %424 : vector<1x128xf32> to vector<128xf32>
    %426 = vector.shape_cast %425 : vector<128xf32> to vector<1x128xf32>
    %427 = vector.broadcast %426 : vector<1x128xf32> to vector<16x128xf32>
    %428 = arith.mulf %427, %412 : vector<16x128xf32>
    %429 = arith.addf %423, %428 : vector<16x128xf32>
    %430 = vector.extract_strided_slice %352 {offsets = [5, 0], sizes = [1, 128], strides = [1, 1]} : vector<9x128xf32> to vector<1x128xf32>
    %431 = vector.shape_cast %430 : vector<1x128xf32> to vector<128xf32>
    %432 = vector.shape_cast %431 : vector<128xf32> to vector<1x128xf32>
    %433 = vector.broadcast %432 : vector<1x128xf32> to vector<16x128xf32>
    %434 = arith.mulf %433, %402 : vector<16x128xf32>
    %435 = vector.extract_strided_slice %352 {offsets = [3, 0], sizes = [1, 128], strides = [1, 1]} : vector<9x128xf32> to vector<1x128xf32>
    %436 = vector.shape_cast %435 : vector<1x128xf32> to vector<128xf32>
    %437 = vector.shape_cast %436 : vector<128xf32> to vector<1x128xf32>
    %438 = vector.broadcast %437 : vector<1x128xf32> to vector<16x128xf32>
    %439 = arith.mulf %438, %407 : vector<16x128xf32>
    %440 = arith.addf %434, %439 : vector<16x128xf32>
    %441 = vector.extract_strided_slice %352 {offsets = [4, 0], sizes = [1, 128], strides = [1, 1]} : vector<9x128xf32> to vector<1x128xf32>
    %442 = vector.shape_cast %441 : vector<1x128xf32> to vector<128xf32>
    %443 = vector.shape_cast %442 : vector<128xf32> to vector<1x128xf32>
    %444 = vector.broadcast %443 : vector<1x128xf32> to vector<16x128xf32>
    %445 = arith.mulf %444, %412 : vector<16x128xf32>
    %446 = arith.addf %440, %445 : vector<16x128xf32>
    %447 = vector.extract_strided_slice %352 {offsets = [8, 0], sizes = [1, 128], strides = [1, 1]} : vector<9x128xf32> to vector<1x128xf32>
    %448 = vector.shape_cast %447 : vector<1x128xf32> to vector<128xf32>
    %449 = vector.shape_cast %448 : vector<128xf32> to vector<1x128xf32>
    %450 = vector.broadcast %449 : vector<1x128xf32> to vector<16x128xf32>
    %451 = arith.mulf %450, %402 : vector<16x128xf32>
    %452 = vector.extract_strided_slice %352 {offsets = [6, 0], sizes = [1, 128], strides = [1, 1]} : vector<9x128xf32> to vector<1x128xf32>
    %453 = vector.shape_cast %452 : vector<1x128xf32> to vector<128xf32>
    %454 = vector.shape_cast %453 : vector<128xf32> to vector<1x128xf32>
    %455 = vector.broadcast %454 : vector<1x128xf32> to vector<16x128xf32>
    %456 = arith.mulf %455, %407 : vector<16x128xf32>
    %457 = arith.addf %451, %456 : vector<16x128xf32>
    %458 = vector.extract_strided_slice %352 {offsets = [7, 0], sizes = [1, 128], strides = [1, 1]} : vector<9x128xf32> to vector<1x128xf32>
    %459 = vector.shape_cast %458 : vector<1x128xf32> to vector<128xf32>
    %460 = vector.shape_cast %459 : vector<128xf32> to vector<1x128xf32>
    %461 = vector.broadcast %460 : vector<1x128xf32> to vector<16x128xf32>
    %462 = arith.mulf %461, %412 : vector<16x128xf32>
    %463 = arith.addf %457, %462 : vector<16x128xf32>
    %c1_i32_77 = arith.constant 1 : i32
    %464 = tpu.dynamic_rotate %429 by %c1_i32_77 dim 0 : vector<16x128xf32>, i32 -> vector<16x128xf32>
    %cst_78 = arith.constant 0.000000e+00 : f32
    %465 = vector.shape_cast %6 : vector<16x1xi1> to vector<16x1xi1>
    %466 = vector.broadcast %465 : vector<16x1xi1> to vector<16x128xi1>
    %467 = vector.broadcast %cst_78 : f32 to vector<16x128xf32>
    %468 = arith.select %466, %464, %467 : vector<16x128xi1>, vector<16x128xf32>
    %469 = arith.addf %446, %468 : vector<16x128xf32>
    %c15_i32_79 = arith.constant 15 : i32
    %470 = tpu.dynamic_rotate %463 by %c15_i32_79 dim 0 : vector<16x128xf32>, i32 -> vector<16x128xf32>
    %cst_80 = arith.constant 0.000000e+00 : f32
    %471 = vector.shape_cast %8 : vector<16x1xi1> to vector<16x1xi1>
    %472 = vector.broadcast %471 : vector<16x1xi1> to vector<16x128xi1>
    %473 = vector.broadcast %cst_80 : f32 to vector<16x128xf32>
    %474 = arith.select %472, %470, %473 : vector<16x128xi1>, vector<16x128xf32>
    %475 = arith.addf %469, %474 : vector<16x128xf32>
    %476 = vector.extract_strided_slice %350 {offsets = [4, 0], sizes = [1, 128], strides = [1, 1]} : vector<9x128xf32> to vector<1x128xf32>
    %477 = vector.shape_cast %476 : vector<1x128xf32> to vector<128xf32>
    %478 = vector.shape_cast %477 : vector<128xf32> to vector<1x128xf32>
    %479 = vector.broadcast %478 : vector<1x128xf32> to vector<16x128xf32>
    %480 = arith.addf %475, %479 : vector<16x128xf32>
    %481 = vector.extract_strided_slice %350 {offsets = [5, 0], sizes = [1, 128], strides = [1, 1]} : vector<9x128xf32> to vector<1x128xf32>
    %482 = vector.shape_cast %481 : vector<1x128xf32> to vector<128xf32>
    %483 = vector.extract_strided_slice %350 {offsets = [6, 0], sizes = [1, 128], strides = [1, 1]} : vector<9x128xf32> to vector<1x128xf32>
    %484 = vector.shape_cast %483 : vector<1x128xf32> to vector<128xf32>
    %485 = vector.extract_strided_slice %350 {offsets = [7, 0], sizes = [1, 128], strides = [1, 1]} : vector<9x128xf32> to vector<1x128xf32>
    %486 = vector.shape_cast %485 : vector<1x128xf32> to vector<128xf32>
    %487 = vector.shape_cast %480 : vector<16x128xf32> to vector<1x16x128xf32>
    %cst_81 = arith.constant dense<0.000000e+00> : vector<1xf32>
    %488 = vector.multi_reduction <add>, %487, %cst_81 [1, 2] : vector<1x16x128xf32> to vector<1xf32>
    %489 = vector.shape_cast %488 : vector<1xf32> to vector<1x1x1xf32>
    %490 = vector.extract %489[0, 0, 0] : f32 from vector<1x1x1xf32>
    %cst_82 = arith.constant 2.048000e+03 : f32
    %491 = arith.divf %490, %cst_82 : f32
    %492 = vector.broadcast %491 : f32 to vector<16x128xf32>
    %493 = arith.subf %480, %492 : vector<16x128xf32>
    %494 = arith.mulf %493, %493 : vector<16x128xf32>
    %495 = vector.shape_cast %494 : vector<16x128xf32> to vector<1x16x128xf32>
    %cst_83 = arith.constant dense<0.000000e+00> : vector<1xf32>
    %496 = vector.multi_reduction <add>, %495, %cst_83 [1, 2] : vector<1x16x128xf32> to vector<1xf32>
    %497 = vector.shape_cast %496 : vector<1xf32> to vector<1x1x1xf32>
    %498 = vector.extract %497[0, 0, 0] : f32 from vector<1x1x1xf32>
    %cst_84 = arith.constant 2.048000e+03 : f32
    %499 = arith.divf %498, %cst_84 : f32
    %cst_85 = arith.constant 9.99999974E-6 : f32
    %500 = arith.addf %499, %cst_85 : f32
    %501 = math.rsqrt %500 : f32
    %502 = vector.broadcast %501 : f32 to vector<16x128xf32>
    %503 = arith.mulf %493, %502 : vector<16x128xf32>
    %504 = vector.shape_cast %482 : vector<128xf32> to vector<1x128xf32>
    %505 = vector.broadcast %504 : vector<1x128xf32> to vector<16x128xf32>
    %506 = arith.mulf %503, %505 : vector<16x128xf32>
    %507 = vector.shape_cast %484 : vector<128xf32> to vector<1x128xf32>
    %508 = vector.broadcast %507 : vector<1x128xf32> to vector<16x128xf32>
    %509 = arith.addf %506, %508 : vector<16x128xf32>
    %cst_86 = arith.constant 0.000000e+00 : f32
    %510 = vector.broadcast %cst_86 : f32 to vector<16x128xf32>
    %511 = arith.cmpf ogt, %509, %510 : vector<16x128xf32>
    %512 = vector.shape_cast %486 : vector<128xf32> to vector<1x128xf32>
    %513 = vector.broadcast %512 : vector<1x128xf32> to vector<16x128xf32>
    %514 = arith.mulf %513, %509 : vector<16x128xf32>
    %515 = arith.select %511, %509, %514 : vector<16x128xi1>, vector<16x128xf32>
    %516 = vector.extract_strided_slice %361 {offsets = [16, 0], sizes = [16, 128], strides = [1, 1]} : vector<32x128xf32> to vector<16x128xf32>
    %517 = vector.extract_strided_slice %350 {offsets = [1, 0], sizes = [1, 128], strides = [1, 1]} : vector<9x128xf32> to vector<1x128xf32>
    %518 = vector.shape_cast %517 : vector<1x128xf32> to vector<128xf32>
    %519 = vector.extract_strided_slice %350 {offsets = [2, 0], sizes = [1, 128], strides = [1, 1]} : vector<9x128xf32> to vector<1x128xf32>
    %520 = vector.shape_cast %519 : vector<1x128xf32> to vector<128xf32>
    %521 = vector.extract_strided_slice %350 {offsets = [3, 0], sizes = [1, 128], strides = [1, 1]} : vector<9x128xf32> to vector<1x128xf32>
    %522 = vector.shape_cast %521 : vector<1x128xf32> to vector<128xf32>
    %523 = vector.shape_cast %516 : vector<16x128xf32> to vector<1x16x128xf32>
    %cst_87 = arith.constant dense<0.000000e+00> : vector<1xf32>
    %524 = vector.multi_reduction <add>, %523, %cst_87 [1, 2] : vector<1x16x128xf32> to vector<1xf32>
    %525 = vector.shape_cast %524 : vector<1xf32> to vector<1x1x1xf32>
    %526 = vector.extract %525[0, 0, 0] : f32 from vector<1x1x1xf32>
    %cst_88 = arith.constant 2.048000e+03 : f32
    %527 = arith.divf %526, %cst_88 : f32
    %528 = vector.broadcast %527 : f32 to vector<16x128xf32>
    %529 = arith.subf %516, %528 : vector<16x128xf32>
    %530 = arith.mulf %529, %529 : vector<16x128xf32>
    %531 = vector.shape_cast %530 : vector<16x128xf32> to vector<1x16x128xf32>
    %cst_89 = arith.constant dense<0.000000e+00> : vector<1xf32>
    %532 = vector.multi_reduction <add>, %531, %cst_89 [1, 2] : vector<1x16x128xf32> to vector<1xf32>
    %533 = vector.shape_cast %532 : vector<1xf32> to vector<1x1x1xf32>
    %534 = vector.extract %533[0, 0, 0] : f32 from vector<1x1x1xf32>
    %cst_90 = arith.constant 2.048000e+03 : f32
    %535 = arith.divf %534, %cst_90 : f32
    %cst_91 = arith.constant 9.99999974E-6 : f32
    %536 = arith.addf %535, %cst_91 : f32
    %537 = math.rsqrt %536 : f32
    %538 = vector.broadcast %537 : f32 to vector<16x128xf32>
    %539 = arith.mulf %529, %538 : vector<16x128xf32>
    %540 = vector.shape_cast %518 : vector<128xf32> to vector<1x128xf32>
    %541 = vector.broadcast %540 : vector<1x128xf32> to vector<16x128xf32>
    %542 = arith.mulf %539, %541 : vector<16x128xf32>
    %543 = vector.shape_cast %520 : vector<128xf32> to vector<1x128xf32>
    %544 = vector.broadcast %543 : vector<1x128xf32> to vector<16x128xf32>
    %545 = arith.addf %542, %544 : vector<16x128xf32>
    %cst_92 = arith.constant 0.000000e+00 : f32
    %546 = vector.broadcast %cst_92 : f32 to vector<16x128xf32>
    %547 = arith.cmpf ogt, %545, %546 : vector<16x128xf32>
    %548 = vector.shape_cast %522 : vector<128xf32> to vector<1x128xf32>
    %549 = vector.broadcast %548 : vector<1x128xf32> to vector<16x128xf32>
    %550 = arith.mulf %549, %545 : vector<16x128xf32>
    %551 = arith.select %547, %545, %550 : vector<16x128xi1>, vector<16x128xf32>
    %552 = vector.extract_strided_slice %2 {offsets = [1, 1, 0], sizes = [1, 1, 128], strides = [1, 1, 1]} : vector<2x6x128xf32> to vector<1x1x128xf32>
    %553 = vector.shape_cast %552 : vector<1x1x128xf32> to vector<128xf32>
    %554 = vector.shape_cast %553 : vector<128xf32> to vector<1x128xf32>
    %555 = vector.broadcast %554 : vector<1x128xf32> to vector<16x128xf32>
    %556 = arith.addf %551, %555 : vector<16x128xf32>
    %c32_i32_93 = arith.constant 32 : i32
    %557 = tpu.dynamic_rotate %556 by %c32_i32_93 dim 1 : vector<16x128xf32>, i32 -> vector<16x128xf32>
    %cst_94 = arith.constant 0.000000e+00 : f32
    %558 = vector.shape_cast %14 : vector<1x128xi1> to vector<1x128xi1>
    %559 = vector.broadcast %558 : vector<1x128xi1> to vector<16x128xi1>
    %560 = vector.broadcast %cst_94 : f32 to vector<16x128xf32>
    %561 = arith.select %559, %557, %560 : vector<16x128xi1>, vector<16x128xf32>
    %c16_i32_95 = arith.constant 16 : i32
    %562 = tpu.dynamic_rotate %556 by %c16_i32_95 dim 1 : vector<16x128xf32>, i32 -> vector<16x128xf32>
    %cst_96 = arith.constant 0.000000e+00 : f32
    %563 = vector.shape_cast %12 : vector<1x128xi1> to vector<1x128xi1>
    %564 = vector.broadcast %563 : vector<1x128xi1> to vector<16x128xi1>
    %565 = vector.broadcast %cst_96 : f32 to vector<16x128xf32>
    %566 = arith.select %564, %562, %565 : vector<16x128xi1>, vector<16x128xf32>
    %567 = vector.extract_strided_slice %352 {offsets = [2, 0], sizes = [1, 128], strides = [1, 1]} : vector<9x128xf32> to vector<1x128xf32>
    %568 = vector.shape_cast %567 : vector<1x128xf32> to vector<128xf32>
    %569 = vector.shape_cast %568 : vector<128xf32> to vector<1x128xf32>
    %570 = vector.broadcast %569 : vector<1x128xf32> to vector<16x128xf32>
    %571 = arith.mulf %570, %556 : vector<16x128xf32>
    %572 = vector.extract_strided_slice %352 {offsets = [0, 0], sizes = [1, 128], strides = [1, 1]} : vector<9x128xf32> to vector<1x128xf32>
    %573 = vector.shape_cast %572 : vector<1x128xf32> to vector<128xf32>
    %574 = vector.shape_cast %573 : vector<128xf32> to vector<1x128xf32>
    %575 = vector.broadcast %574 : vector<1x128xf32> to vector<16x128xf32>
    %576 = arith.mulf %575, %561 : vector<16x128xf32>
    %577 = arith.addf %571, %576 : vector<16x128xf32>
    %578 = vector.extract_strided_slice %352 {offsets = [1, 0], sizes = [1, 128], strides = [1, 1]} : vector<9x128xf32> to vector<1x128xf32>
    %579 = vector.shape_cast %578 : vector<1x128xf32> to vector<128xf32>
    %580 = vector.shape_cast %579 : vector<128xf32> to vector<1x128xf32>
    %581 = vector.broadcast %580 : vector<1x128xf32> to vector<16x128xf32>
    %582 = arith.mulf %581, %566 : vector<16x128xf32>
    %583 = arith.addf %577, %582 : vector<16x128xf32>
    %584 = vector.extract_strided_slice %352 {offsets = [5, 0], sizes = [1, 128], strides = [1, 1]} : vector<9x128xf32> to vector<1x128xf32>
    %585 = vector.shape_cast %584 : vector<1x128xf32> to vector<128xf32>
    %586 = vector.shape_cast %585 : vector<128xf32> to vector<1x128xf32>
    %587 = vector.broadcast %586 : vector<1x128xf32> to vector<16x128xf32>
    %588 = arith.mulf %587, %556 : vector<16x128xf32>
    %589 = vector.extract_strided_slice %352 {offsets = [3, 0], sizes = [1, 128], strides = [1, 1]} : vector<9x128xf32> to vector<1x128xf32>
    %590 = vector.shape_cast %589 : vector<1x128xf32> to vector<128xf32>
    %591 = vector.shape_cast %590 : vector<128xf32> to vector<1x128xf32>
    %592 = vector.broadcast %591 : vector<1x128xf32> to vector<16x128xf32>
    %593 = arith.mulf %592, %561 : vector<16x128xf32>
    %594 = arith.addf %588, %593 : vector<16x128xf32>
    %595 = vector.extract_strided_slice %352 {offsets = [4, 0], sizes = [1, 128], strides = [1, 1]} : vector<9x128xf32> to vector<1x128xf32>
    %596 = vector.shape_cast %595 : vector<1x128xf32> to vector<128xf32>
    %597 = vector.shape_cast %596 : vector<128xf32> to vector<1x128xf32>
    %598 = vector.broadcast %597 : vector<1x128xf32> to vector<16x128xf32>
    %599 = arith.mulf %598, %566 : vector<16x128xf32>
    %600 = arith.addf %594, %599 : vector<16x128xf32>
    %601 = vector.extract_strided_slice %352 {offsets = [8, 0], sizes = [1, 128], strides = [1, 1]} : vector<9x128xf32> to vector<1x128xf32>
    %602 = vector.shape_cast %601 : vector<1x128xf32> to vector<128xf32>
    %603 = vector.shape_cast %602 : vector<128xf32> to vector<1x128xf32>
    %604 = vector.broadcast %603 : vector<1x128xf32> to vector<16x128xf32>
    %605 = arith.mulf %604, %556 : vector<16x128xf32>
    %606 = vector.extract_strided_slice %352 {offsets = [6, 0], sizes = [1, 128], strides = [1, 1]} : vector<9x128xf32> to vector<1x128xf32>
    %607 = vector.shape_cast %606 : vector<1x128xf32> to vector<128xf32>
    %608 = vector.shape_cast %607 : vector<128xf32> to vector<1x128xf32>
    %609 = vector.broadcast %608 : vector<1x128xf32> to vector<16x128xf32>
    %610 = arith.mulf %609, %561 : vector<16x128xf32>
    %611 = arith.addf %605, %610 : vector<16x128xf32>
    %612 = vector.extract_strided_slice %352 {offsets = [7, 0], sizes = [1, 128], strides = [1, 1]} : vector<9x128xf32> to vector<1x128xf32>
    %613 = vector.shape_cast %612 : vector<1x128xf32> to vector<128xf32>
    %614 = vector.shape_cast %613 : vector<128xf32> to vector<1x128xf32>
    %615 = vector.broadcast %614 : vector<1x128xf32> to vector<16x128xf32>
    %616 = arith.mulf %615, %566 : vector<16x128xf32>
    %617 = arith.addf %611, %616 : vector<16x128xf32>
    %c1_i32_97 = arith.constant 1 : i32
    %618 = tpu.dynamic_rotate %583 by %c1_i32_97 dim 0 : vector<16x128xf32>, i32 -> vector<16x128xf32>
    %cst_98 = arith.constant 0.000000e+00 : f32
    %619 = vector.shape_cast %6 : vector<16x1xi1> to vector<16x1xi1>
    %620 = vector.broadcast %619 : vector<16x1xi1> to vector<16x128xi1>
    %621 = vector.broadcast %cst_98 : f32 to vector<16x128xf32>
    %622 = arith.select %620, %618, %621 : vector<16x128xi1>, vector<16x128xf32>
    %623 = arith.addf %600, %622 : vector<16x128xf32>
    %c15_i32_99 = arith.constant 15 : i32
    %624 = tpu.dynamic_rotate %617 by %c15_i32_99 dim 0 : vector<16x128xf32>, i32 -> vector<16x128xf32>
    %cst_100 = arith.constant 0.000000e+00 : f32
    %625 = vector.shape_cast %8 : vector<16x1xi1> to vector<16x1xi1>
    %626 = vector.broadcast %625 : vector<16x1xi1> to vector<16x128xi1>
    %627 = vector.broadcast %cst_100 : f32 to vector<16x128xf32>
    %628 = arith.select %626, %624, %627 : vector<16x128xi1>, vector<16x128xf32>
    %629 = arith.addf %623, %628 : vector<16x128xf32>
    %630 = vector.extract_strided_slice %350 {offsets = [4, 0], sizes = [1, 128], strides = [1, 1]} : vector<9x128xf32> to vector<1x128xf32>
    %631 = vector.shape_cast %630 : vector<1x128xf32> to vector<128xf32>
    %632 = vector.shape_cast %631 : vector<128xf32> to vector<1x128xf32>
    %633 = vector.broadcast %632 : vector<1x128xf32> to vector<16x128xf32>
    %634 = arith.addf %629, %633 : vector<16x128xf32>
    %635 = vector.extract_strided_slice %350 {offsets = [5, 0], sizes = [1, 128], strides = [1, 1]} : vector<9x128xf32> to vector<1x128xf32>
    %636 = vector.shape_cast %635 : vector<1x128xf32> to vector<128xf32>
    %637 = vector.extract_strided_slice %350 {offsets = [6, 0], sizes = [1, 128], strides = [1, 1]} : vector<9x128xf32> to vector<1x128xf32>
    %638 = vector.shape_cast %637 : vector<1x128xf32> to vector<128xf32>
    %639 = vector.extract_strided_slice %350 {offsets = [7, 0], sizes = [1, 128], strides = [1, 1]} : vector<9x128xf32> to vector<1x128xf32>
    %640 = vector.shape_cast %639 : vector<1x128xf32> to vector<128xf32>
    %641 = vector.shape_cast %634 : vector<16x128xf32> to vector<1x16x128xf32>
    %cst_101 = arith.constant dense<0.000000e+00> : vector<1xf32>
    %642 = vector.multi_reduction <add>, %641, %cst_101 [1, 2] : vector<1x16x128xf32> to vector<1xf32>
    %643 = vector.shape_cast %642 : vector<1xf32> to vector<1x1x1xf32>
    %644 = vector.extract %643[0, 0, 0] : f32 from vector<1x1x1xf32>
    %cst_102 = arith.constant 2.048000e+03 : f32
    %645 = arith.divf %644, %cst_102 : f32
    %646 = vector.broadcast %645 : f32 to vector<16x128xf32>
    %647 = arith.subf %634, %646 : vector<16x128xf32>
    %648 = arith.mulf %647, %647 : vector<16x128xf32>
    %649 = vector.shape_cast %648 : vector<16x128xf32> to vector<1x16x128xf32>
    %cst_103 = arith.constant dense<0.000000e+00> : vector<1xf32>
    %650 = vector.multi_reduction <add>, %649, %cst_103 [1, 2] : vector<1x16x128xf32> to vector<1xf32>
    %651 = vector.shape_cast %650 : vector<1xf32> to vector<1x1x1xf32>
    %652 = vector.extract %651[0, 0, 0] : f32 from vector<1x1x1xf32>
    %cst_104 = arith.constant 2.048000e+03 : f32
    %653 = arith.divf %652, %cst_104 : f32
    %cst_105 = arith.constant 9.99999974E-6 : f32
    %654 = arith.addf %653, %cst_105 : f32
    %655 = math.rsqrt %654 : f32
    %656 = vector.broadcast %655 : f32 to vector<16x128xf32>
    %657 = arith.mulf %647, %656 : vector<16x128xf32>
    %658 = vector.shape_cast %636 : vector<128xf32> to vector<1x128xf32>
    %659 = vector.broadcast %658 : vector<1x128xf32> to vector<16x128xf32>
    %660 = arith.mulf %657, %659 : vector<16x128xf32>
    %661 = vector.shape_cast %638 : vector<128xf32> to vector<1x128xf32>
    %662 = vector.broadcast %661 : vector<1x128xf32> to vector<16x128xf32>
    %663 = arith.addf %660, %662 : vector<16x128xf32>
    %cst_106 = arith.constant 0.000000e+00 : f32
    %664 = vector.broadcast %cst_106 : f32 to vector<16x128xf32>
    %665 = arith.cmpf ogt, %663, %664 : vector<16x128xf32>
    %666 = vector.shape_cast %640 : vector<128xf32> to vector<1x128xf32>
    %667 = vector.broadcast %666 : vector<1x128xf32> to vector<16x128xf32>
    %668 = arith.mulf %667, %663 : vector<16x128xf32>
    %669 = arith.select %665, %663, %668 : vector<16x128xi1>, vector<16x128xf32>
    %670 = tpu.concatenate %515, %669 in 0 : vector<16x128xf32>, vector<16x128xf32> -> vector<32x128xf32>
    %671 = arith.truncf %670 : vector<32x128xf32> to vector<32x128xbf16>
    %c1_107 = arith.constant 1 : index
    %c0_108 = arith.constant 0 : index
    %c0_109 = arith.constant 0 : index
    %672 = vector.load %arg4[%c1_107, %c0_108, %c0_109] : memref<6x128x128xbf16, #tpu.memory_space<vmem>>, vector<1x128x128xbf16>
    %673 = vector.shape_cast %672 : vector<1x128x128xbf16> to vector<128x128xbf16>
    %cst_110 = arith.constant dense<0.000000e+00> : vector<32x128xf32>
    %674 = tpu.matmul %671, %673, %cst_110 {dimension_numbers = #tpu.dot_dimension_numbers<[1], [0], [0], [1], [0, 0, 1, 1], [], []>} : vector<32x128xbf16>, vector<128x128xbf16>, vector<32x128xf32> -> vector<32x128xf32>
    %675 = vector.extract_strided_slice %350 {offsets = [8, 0], sizes = [1, 128], strides = [1, 1]} : vector<9x128xf32> to vector<1x128xf32>
    %676 = vector.shape_cast %675 : vector<1x128xf32> to vector<128xf32>
    %677 = vector.shape_cast %676 : vector<128xf32> to vector<1x128xf32>
    %678 = vector.broadcast %677 : vector<1x128xf32> to vector<32x128xf32>
    %679 = arith.addf %674, %678 : vector<32x128xf32>
    %680 = arith.addf %679, %348 : vector<32x128xf32>
    %c2 = arith.constant 2 : index
    %c0_111 = arith.constant 0 : index
    %c0_112 = arith.constant 0 : index
    %681 = vector.load %arg6[%c2, %c0_111, %c0_112] : memref<6x9x128xf32, #tpu.memory_space<vmem>>, vector<1x9x128xf32>
    %682 = vector.shape_cast %681 : vector<1x9x128xf32> to vector<9x128xf32>
    %c2_113 = arith.constant 2 : index
    %c0_114 = arith.constant 0 : index
    %c0_115 = arith.constant 0 : index
    %683 = vector.load %arg5[%c2_113, %c0_114, %c0_115] : memref<6x9x128xf32, #tpu.memory_space<vmem>>, vector<1x9x128xf32>
    %684 = vector.shape_cast %683 : vector<1x9x128xf32> to vector<9x128xf32>
    %685 = arith.truncf %680 : vector<32x128xf32> to vector<32x128xbf16>
    %c2_116 = arith.constant 2 : index
    %c0_117 = arith.constant 0 : index
    %c0_118 = arith.constant 0 : index
    %686 = vector.load %arg3[%c2_116, %c0_117, %c0_118] : memref<6x128x128xbf16, #tpu.memory_space<vmem>>, vector<1x128x128xbf16>
    %687 = vector.shape_cast %686 : vector<1x128x128xbf16> to vector<128x128xbf16>
    %cst_119 = arith.constant dense<0.000000e+00> : vector<32x128xf32>
    %688 = tpu.matmul %685, %687, %cst_119 {dimension_numbers = #tpu.dot_dimension_numbers<[1], [0], [0], [1], [0, 0, 1, 1], [], []>} : vector<32x128xbf16>, vector<128x128xbf16>, vector<32x128xf32> -> vector<32x128xf32>
    %689 = vector.extract_strided_slice %682 {offsets = [0, 0], sizes = [1, 128], strides = [1, 1]} : vector<9x128xf32> to vector<1x128xf32>
    %690 = vector.shape_cast %689 : vector<1x128xf32> to vector<128xf32>
    %691 = vector.shape_cast %690 : vector<128xf32> to vector<1x128xf32>
    %692 = vector.broadcast %691 : vector<1x128xf32> to vector<32x128xf32>
    %693 = arith.addf %688, %692 : vector<32x128xf32>
    %694 = vector.extract_strided_slice %693 {offsets = [0, 0], sizes = [16, 128], strides = [1, 1]} : vector<32x128xf32> to vector<16x128xf32>
    %695 = vector.extract_strided_slice %682 {offsets = [1, 0], sizes = [1, 128], strides = [1, 1]} : vector<9x128xf32> to vector<1x128xf32>
    %696 = vector.shape_cast %695 : vector<1x128xf32> to vector<128xf32>
    %697 = vector.extract_strided_slice %682 {offsets = [2, 0], sizes = [1, 128], strides = [1, 1]} : vector<9x128xf32> to vector<1x128xf32>
    %698 = vector.shape_cast %697 : vector<1x128xf32> to vector<128xf32>
    %699 = vector.extract_strided_slice %682 {offsets = [3, 0], sizes = [1, 128], strides = [1, 1]} : vector<9x128xf32> to vector<1x128xf32>
    %700 = vector.shape_cast %699 : vector<1x128xf32> to vector<128xf32>
    %701 = vector.shape_cast %694 : vector<16x128xf32> to vector<1x16x128xf32>
    %cst_120 = arith.constant dense<0.000000e+00> : vector<1xf32>
    %702 = vector.multi_reduction <add>, %701, %cst_120 [1, 2] : vector<1x16x128xf32> to vector<1xf32>
    %703 = vector.shape_cast %702 : vector<1xf32> to vector<1x1x1xf32>
    %704 = vector.extract %703[0, 0, 0] : f32 from vector<1x1x1xf32>
    %cst_121 = arith.constant 2.048000e+03 : f32
    %705 = arith.divf %704, %cst_121 : f32
    %706 = vector.broadcast %705 : f32 to vector<16x128xf32>
    %707 = arith.subf %694, %706 : vector<16x128xf32>
    %708 = arith.mulf %707, %707 : vector<16x128xf32>
    %709 = vector.shape_cast %708 : vector<16x128xf32> to vector<1x16x128xf32>
    %cst_122 = arith.constant dense<0.000000e+00> : vector<1xf32>
    %710 = vector.multi_reduction <add>, %709, %cst_122 [1, 2] : vector<1x16x128xf32> to vector<1xf32>
    %711 = vector.shape_cast %710 : vector<1xf32> to vector<1x1x1xf32>
    %712 = vector.extract %711[0, 0, 0] : f32 from vector<1x1x1xf32>
    %cst_123 = arith.constant 2.048000e+03 : f32
    %713 = arith.divf %712, %cst_123 : f32
    %cst_124 = arith.constant 9.99999974E-6 : f32
    %714 = arith.addf %713, %cst_124 : f32
    %715 = math.rsqrt %714 : f32
    %716 = vector.broadcast %715 : f32 to vector<16x128xf32>
    %717 = arith.mulf %707, %716 : vector<16x128xf32>
    %718 = vector.shape_cast %696 : vector<128xf32> to vector<1x128xf32>
    %719 = vector.broadcast %718 : vector<1x128xf32> to vector<16x128xf32>
    %720 = arith.mulf %717, %719 : vector<16x128xf32>
    %721 = vector.shape_cast %698 : vector<128xf32> to vector<1x128xf32>
    %722 = vector.broadcast %721 : vector<1x128xf32> to vector<16x128xf32>
    %723 = arith.addf %720, %722 : vector<16x128xf32>
    %cst_125 = arith.constant 0.000000e+00 : f32
    %724 = vector.broadcast %cst_125 : f32 to vector<16x128xf32>
    %725 = arith.cmpf ogt, %723, %724 : vector<16x128xf32>
    %726 = vector.shape_cast %700 : vector<128xf32> to vector<1x128xf32>
    %727 = vector.broadcast %726 : vector<1x128xf32> to vector<16x128xf32>
    %728 = arith.mulf %727, %723 : vector<16x128xf32>
    %729 = arith.select %725, %723, %728 : vector<16x128xi1>, vector<16x128xf32>
    %730 = vector.extract_strided_slice %2 {offsets = [0, 2, 0], sizes = [1, 1, 128], strides = [1, 1, 1]} : vector<2x6x128xf32> to vector<1x1x128xf32>
    %731 = vector.shape_cast %730 : vector<1x1x128xf32> to vector<128xf32>
    %732 = vector.shape_cast %731 : vector<128xf32> to vector<1x128xf32>
    %733 = vector.broadcast %732 : vector<1x128xf32> to vector<16x128xf32>
    %734 = arith.addf %729, %733 : vector<16x128xf32>
    %c64_i32_126 = arith.constant 64 : i32
    %735 = tpu.dynamic_rotate %734 by %c64_i32_126 dim 1 : vector<16x128xf32>, i32 -> vector<16x128xf32>
    %cst_127 = arith.constant 0.000000e+00 : f32
    %736 = vector.shape_cast %16 : vector<1x128xi1> to vector<1x128xi1>
    %737 = vector.broadcast %736 : vector<1x128xi1> to vector<16x128xi1>
    %738 = vector.broadcast %cst_127 : f32 to vector<16x128xf32>
    %739 = arith.select %737, %735, %738 : vector<16x128xi1>, vector<16x128xf32>
    %c32_i32_128 = arith.constant 32 : i32
    %740 = tpu.dynamic_rotate %734 by %c32_i32_128 dim 1 : vector<16x128xf32>, i32 -> vector<16x128xf32>
    %cst_129 = arith.constant 0.000000e+00 : f32
    %741 = vector.shape_cast %14 : vector<1x128xi1> to vector<1x128xi1>
    %742 = vector.broadcast %741 : vector<1x128xi1> to vector<16x128xi1>
    %743 = vector.broadcast %cst_129 : f32 to vector<16x128xf32>
    %744 = arith.select %742, %740, %743 : vector<16x128xi1>, vector<16x128xf32>
    %745 = vector.extract_strided_slice %684 {offsets = [2, 0], sizes = [1, 128], strides = [1, 1]} : vector<9x128xf32> to vector<1x128xf32>
    %746 = vector.shape_cast %745 : vector<1x128xf32> to vector<128xf32>
    %747 = vector.shape_cast %746 : vector<128xf32> to vector<1x128xf32>
    %748 = vector.broadcast %747 : vector<1x128xf32> to vector<16x128xf32>
    %749 = arith.mulf %748, %734 : vector<16x128xf32>
    %750 = vector.extract_strided_slice %684 {offsets = [0, 0], sizes = [1, 128], strides = [1, 1]} : vector<9x128xf32> to vector<1x128xf32>
    %751 = vector.shape_cast %750 : vector<1x128xf32> to vector<128xf32>
    %752 = vector.shape_cast %751 : vector<128xf32> to vector<1x128xf32>
    %753 = vector.broadcast %752 : vector<1x128xf32> to vector<16x128xf32>
    %754 = arith.mulf %753, %739 : vector<16x128xf32>
    %755 = arith.addf %749, %754 : vector<16x128xf32>
    %756 = vector.extract_strided_slice %684 {offsets = [1, 0], sizes = [1, 128], strides = [1, 1]} : vector<9x128xf32> to vector<1x128xf32>
    %757 = vector.shape_cast %756 : vector<1x128xf32> to vector<128xf32>
    %758 = vector.shape_cast %757 : vector<128xf32> to vector<1x128xf32>
    %759 = vector.broadcast %758 : vector<1x128xf32> to vector<16x128xf32>
    %760 = arith.mulf %759, %744 : vector<16x128xf32>
    %761 = arith.addf %755, %760 : vector<16x128xf32>
    %762 = vector.extract_strided_slice %684 {offsets = [5, 0], sizes = [1, 128], strides = [1, 1]} : vector<9x128xf32> to vector<1x128xf32>
    %763 = vector.shape_cast %762 : vector<1x128xf32> to vector<128xf32>
    %764 = vector.shape_cast %763 : vector<128xf32> to vector<1x128xf32>
    %765 = vector.broadcast %764 : vector<1x128xf32> to vector<16x128xf32>
    %766 = arith.mulf %765, %734 : vector<16x128xf32>
    %767 = vector.extract_strided_slice %684 {offsets = [3, 0], sizes = [1, 128], strides = [1, 1]} : vector<9x128xf32> to vector<1x128xf32>
    %768 = vector.shape_cast %767 : vector<1x128xf32> to vector<128xf32>
    %769 = vector.shape_cast %768 : vector<128xf32> to vector<1x128xf32>
    %770 = vector.broadcast %769 : vector<1x128xf32> to vector<16x128xf32>
    %771 = arith.mulf %770, %739 : vector<16x128xf32>
    %772 = arith.addf %766, %771 : vector<16x128xf32>
    %773 = vector.extract_strided_slice %684 {offsets = [4, 0], sizes = [1, 128], strides = [1, 1]} : vector<9x128xf32> to vector<1x128xf32>
    %774 = vector.shape_cast %773 : vector<1x128xf32> to vector<128xf32>
    %775 = vector.shape_cast %774 : vector<128xf32> to vector<1x128xf32>
    %776 = vector.broadcast %775 : vector<1x128xf32> to vector<16x128xf32>
    %777 = arith.mulf %776, %744 : vector<16x128xf32>
    %778 = arith.addf %772, %777 : vector<16x128xf32>
    %779 = vector.extract_strided_slice %684 {offsets = [8, 0], sizes = [1, 128], strides = [1, 1]} : vector<9x128xf32> to vector<1x128xf32>
    %780 = vector.shape_cast %779 : vector<1x128xf32> to vector<128xf32>
    %781 = vector.shape_cast %780 : vector<128xf32> to vector<1x128xf32>
    %782 = vector.broadcast %781 : vector<1x128xf32> to vector<16x128xf32>
    %783 = arith.mulf %782, %734 : vector<16x128xf32>
    %784 = vector.extract_strided_slice %684 {offsets = [6, 0], sizes = [1, 128], strides = [1, 1]} : vector<9x128xf32> to vector<1x128xf32>
    %785 = vector.shape_cast %784 : vector<1x128xf32> to vector<128xf32>
    %786 = vector.shape_cast %785 : vector<128xf32> to vector<1x128xf32>
    %787 = vector.broadcast %786 : vector<1x128xf32> to vector<16x128xf32>
    %788 = arith.mulf %787, %739 : vector<16x128xf32>
    %789 = arith.addf %783, %788 : vector<16x128xf32>
    %790 = vector.extract_strided_slice %684 {offsets = [7, 0], sizes = [1, 128], strides = [1, 1]} : vector<9x128xf32> to vector<1x128xf32>
    %791 = vector.shape_cast %790 : vector<1x128xf32> to vector<128xf32>
    %792 = vector.shape_cast %791 : vector<128xf32> to vector<1x128xf32>
    %793 = vector.broadcast %792 : vector<1x128xf32> to vector<16x128xf32>
    %794 = arith.mulf %793, %744 : vector<16x128xf32>
    %795 = arith.addf %789, %794 : vector<16x128xf32>
    %c1_i32_130 = arith.constant 1 : i32
    %796 = tpu.dynamic_rotate %761 by %c1_i32_130 dim 0 : vector<16x128xf32>, i32 -> vector<16x128xf32>
    %cst_131 = arith.constant 0.000000e+00 : f32
    %797 = vector.shape_cast %6 : vector<16x1xi1> to vector<16x1xi1>
    %798 = vector.broadcast %797 : vector<16x1xi1> to vector<16x128xi1>
    %799 = vector.broadcast %cst_131 : f32 to vector<16x128xf32>
    %800 = arith.select %798, %796, %799 : vector<16x128xi1>, vector<16x128xf32>
    %801 = arith.addf %778, %800 : vector<16x128xf32>
    %c15_i32_132 = arith.constant 15 : i32
    %802 = tpu.dynamic_rotate %795 by %c15_i32_132 dim 0 : vector<16x128xf32>, i32 -> vector<16x128xf32>
    %cst_133 = arith.constant 0.000000e+00 : f32
    %803 = vector.shape_cast %8 : vector<16x1xi1> to vector<16x1xi1>
    %804 = vector.broadcast %803 : vector<16x1xi1> to vector<16x128xi1>
    %805 = vector.broadcast %cst_133 : f32 to vector<16x128xf32>
    %806 = arith.select %804, %802, %805 : vector<16x128xi1>, vector<16x128xf32>
    %807 = arith.addf %801, %806 : vector<16x128xf32>
    %808 = vector.extract_strided_slice %682 {offsets = [4, 0], sizes = [1, 128], strides = [1, 1]} : vector<9x128xf32> to vector<1x128xf32>
    %809 = vector.shape_cast %808 : vector<1x128xf32> to vector<128xf32>
    %810 = vector.shape_cast %809 : vector<128xf32> to vector<1x128xf32>
    %811 = vector.broadcast %810 : vector<1x128xf32> to vector<16x128xf32>
    %812 = arith.addf %807, %811 : vector<16x128xf32>
    %813 = vector.extract_strided_slice %682 {offsets = [5, 0], sizes = [1, 128], strides = [1, 1]} : vector<9x128xf32> to vector<1x128xf32>
    %814 = vector.shape_cast %813 : vector<1x128xf32> to vector<128xf32>
    %815 = vector.extract_strided_slice %682 {offsets = [6, 0], sizes = [1, 128], strides = [1, 1]} : vector<9x128xf32> to vector<1x128xf32>
    %816 = vector.shape_cast %815 : vector<1x128xf32> to vector<128xf32>
    %817 = vector.extract_strided_slice %682 {offsets = [7, 0], sizes = [1, 128], strides = [1, 1]} : vector<9x128xf32> to vector<1x128xf32>
    %818 = vector.shape_cast %817 : vector<1x128xf32> to vector<128xf32>
    %819 = vector.shape_cast %812 : vector<16x128xf32> to vector<1x16x128xf32>
    %cst_134 = arith.constant dense<0.000000e+00> : vector<1xf32>
    %820 = vector.multi_reduction <add>, %819, %cst_134 [1, 2] : vector<1x16x128xf32> to vector<1xf32>
    %821 = vector.shape_cast %820 : vector<1xf32> to vector<1x1x1xf32>
    %822 = vector.extract %821[0, 0, 0] : f32 from vector<1x1x1xf32>
    %cst_135 = arith.constant 2.048000e+03 : f32
    %823 = arith.divf %822, %cst_135 : f32
    %824 = vector.broadcast %823 : f32 to vector<16x128xf32>
    %825 = arith.subf %812, %824 : vector<16x128xf32>
    %826 = arith.mulf %825, %825 : vector<16x128xf32>
    %827 = vector.shape_cast %826 : vector<16x128xf32> to vector<1x16x128xf32>
    %cst_136 = arith.constant dense<0.000000e+00> : vector<1xf32>
    %828 = vector.multi_reduction <add>, %827, %cst_136 [1, 2] : vector<1x16x128xf32> to vector<1xf32>
    %829 = vector.shape_cast %828 : vector<1xf32> to vector<1x1x1xf32>
    %830 = vector.extract %829[0, 0, 0] : f32 from vector<1x1x1xf32>
    %cst_137 = arith.constant 2.048000e+03 : f32
    %831 = arith.divf %830, %cst_137 : f32
    %cst_138 = arith.constant 9.99999974E-6 : f32
    %832 = arith.addf %831, %cst_138 : f32
    %833 = math.rsqrt %832 : f32
    %834 = vector.broadcast %833 : f32 to vector<16x128xf32>
    %835 = arith.mulf %825, %834 : vector<16x128xf32>
    %836 = vector.shape_cast %814 : vector<128xf32> to vector<1x128xf32>
    %837 = vector.broadcast %836 : vector<1x128xf32> to vector<16x128xf32>
    %838 = arith.mulf %835, %837 : vector<16x128xf32>
    %839 = vector.shape_cast %816 : vector<128xf32> to vector<1x128xf32>
    %840 = vector.broadcast %839 : vector<1x128xf32> to vector<16x128xf32>
    %841 = arith.addf %838, %840 : vector<16x128xf32>
    %cst_139 = arith.constant 0.000000e+00 : f32
    %842 = vector.broadcast %cst_139 : f32 to vector<16x128xf32>
    %843 = arith.cmpf ogt, %841, %842 : vector<16x128xf32>
    %844 = vector.shape_cast %818 : vector<128xf32> to vector<1x128xf32>
    %845 = vector.broadcast %844 : vector<1x128xf32> to vector<16x128xf32>
    %846 = arith.mulf %845, %841 : vector<16x128xf32>
    %847 = arith.select %843, %841, %846 : vector<16x128xi1>, vector<16x128xf32>
    %848 = vector.extract_strided_slice %693 {offsets = [16, 0], sizes = [16, 128], strides = [1, 1]} : vector<32x128xf32> to vector<16x128xf32>
    %849 = vector.extract_strided_slice %682 {offsets = [1, 0], sizes = [1, 128], strides = [1, 1]} : vector<9x128xf32> to vector<1x128xf32>
    %850 = vector.shape_cast %849 : vector<1x128xf32> to vector<128xf32>
    %851 = vector.extract_strided_slice %682 {offsets = [2, 0], sizes = [1, 128], strides = [1, 1]} : vector<9x128xf32> to vector<1x128xf32>
    %852 = vector.shape_cast %851 : vector<1x128xf32> to vector<128xf32>
    %853 = vector.extract_strided_slice %682 {offsets = [3, 0], sizes = [1, 128], strides = [1, 1]} : vector<9x128xf32> to vector<1x128xf32>
    %854 = vector.shape_cast %853 : vector<1x128xf32> to vector<128xf32>
    %855 = vector.shape_cast %848 : vector<16x128xf32> to vector<1x16x128xf32>
    %cst_140 = arith.constant dense<0.000000e+00> : vector<1xf32>
    %856 = vector.multi_reduction <add>, %855, %cst_140 [1, 2] : vector<1x16x128xf32> to vector<1xf32>
    %857 = vector.shape_cast %856 : vector<1xf32> to vector<1x1x1xf32>
    %858 = vector.extract %857[0, 0, 0] : f32 from vector<1x1x1xf32>
    %cst_141 = arith.constant 2.048000e+03 : f32
    %859 = arith.divf %858, %cst_141 : f32
    %860 = vector.broadcast %859 : f32 to vector<16x128xf32>
    %861 = arith.subf %848, %860 : vector<16x128xf32>
    %862 = arith.mulf %861, %861 : vector<16x128xf32>
    %863 = vector.shape_cast %862 : vector<16x128xf32> to vector<1x16x128xf32>
    %cst_142 = arith.constant dense<0.000000e+00> : vector<1xf32>
    %864 = vector.multi_reduction <add>, %863, %cst_142 [1, 2] : vector<1x16x128xf32> to vector<1xf32>
    %865 = vector.shape_cast %864 : vector<1xf32> to vector<1x1x1xf32>
    %866 = vector.extract %865[0, 0, 0] : f32 from vector<1x1x1xf32>
    %cst_143 = arith.constant 2.048000e+03 : f32
    %867 = arith.divf %866, %cst_143 : f32
    %cst_144 = arith.constant 9.99999974E-6 : f32
    %868 = arith.addf %867, %cst_144 : f32
    %869 = math.rsqrt %868 : f32
    %870 = vector.broadcast %869 : f32 to vector<16x128xf32>
    %871 = arith.mulf %861, %870 : vector<16x128xf32>
    %872 = vector.shape_cast %850 : vector<128xf32> to vector<1x128xf32>
    %873 = vector.broadcast %872 : vector<1x128xf32> to vector<16x128xf32>
    %874 = arith.mulf %871, %873 : vector<16x128xf32>
    %875 = vector.shape_cast %852 : vector<128xf32> to vector<1x128xf32>
    %876 = vector.broadcast %875 : vector<1x128xf32> to vector<16x128xf32>
    %877 = arith.addf %874, %876 : vector<16x128xf32>
    %cst_145 = arith.constant 0.000000e+00 : f32
    %878 = vector.broadcast %cst_145 : f32 to vector<16x128xf32>
    %879 = arith.cmpf ogt, %877, %878 : vector<16x128xf32>
    %880 = vector.shape_cast %854 : vector<128xf32> to vector<1x128xf32>
    %881 = vector.broadcast %880 : vector<1x128xf32> to vector<16x128xf32>
    %882 = arith.mulf %881, %877 : vector<16x128xf32>
    %883 = arith.select %879, %877, %882 : vector<16x128xi1>, vector<16x128xf32>
    %884 = vector.extract_strided_slice %2 {offsets = [1, 2, 0], sizes = [1, 1, 128], strides = [1, 1, 1]} : vector<2x6x128xf32> to vector<1x1x128xf32>
    %885 = vector.shape_cast %884 : vector<1x1x128xf32> to vector<128xf32>
    %886 = vector.shape_cast %885 : vector<128xf32> to vector<1x128xf32>
    %887 = vector.broadcast %886 : vector<1x128xf32> to vector<16x128xf32>
    %888 = arith.addf %883, %887 : vector<16x128xf32>
    %c64_i32_146 = arith.constant 64 : i32
    %889 = tpu.dynamic_rotate %888 by %c64_i32_146 dim 1 : vector<16x128xf32>, i32 -> vector<16x128xf32>
    %cst_147 = arith.constant 0.000000e+00 : f32
    %890 = vector.shape_cast %16 : vector<1x128xi1> to vector<1x128xi1>
    %891 = vector.broadcast %890 : vector<1x128xi1> to vector<16x128xi1>
    %892 = vector.broadcast %cst_147 : f32 to vector<16x128xf32>
    %893 = arith.select %891, %889, %892 : vector<16x128xi1>, vector<16x128xf32>
    %c32_i32_148 = arith.constant 32 : i32
    %894 = tpu.dynamic_rotate %888 by %c32_i32_148 dim 1 : vector<16x128xf32>, i32 -> vector<16x128xf32>
    %cst_149 = arith.constant 0.000000e+00 : f32
    %895 = vector.shape_cast %14 : vector<1x128xi1> to vector<1x128xi1>
    %896 = vector.broadcast %895 : vector<1x128xi1> to vector<16x128xi1>
    %897 = vector.broadcast %cst_149 : f32 to vector<16x128xf32>
    %898 = arith.select %896, %894, %897 : vector<16x128xi1>, vector<16x128xf32>
    %899 = vector.extract_strided_slice %684 {offsets = [2, 0], sizes = [1, 128], strides = [1, 1]} : vector<9x128xf32> to vector<1x128xf32>
    %900 = vector.shape_cast %899 : vector<1x128xf32> to vector<128xf32>
    %901 = vector.shape_cast %900 : vector<128xf32> to vector<1x128xf32>
    %902 = vector.broadcast %901 : vector<1x128xf32> to vector<16x128xf32>
    %903 = arith.mulf %902, %888 : vector<16x128xf32>
    %904 = vector.extract_strided_slice %684 {offsets = [0, 0], sizes = [1, 128], strides = [1, 1]} : vector<9x128xf32> to vector<1x128xf32>
    %905 = vector.shape_cast %904 : vector<1x128xf32> to vector<128xf32>
    %906 = vector.shape_cast %905 : vector<128xf32> to vector<1x128xf32>
    %907 = vector.broadcast %906 : vector<1x128xf32> to vector<16x128xf32>
    %908 = arith.mulf %907, %893 : vector<16x128xf32>
    %909 = arith.addf %903, %908 : vector<16x128xf32>
    %910 = vector.extract_strided_slice %684 {offsets = [1, 0], sizes = [1, 128], strides = [1, 1]} : vector<9x128xf32> to vector<1x128xf32>
    %911 = vector.shape_cast %910 : vector<1x128xf32> to vector<128xf32>
    %912 = vector.shape_cast %911 : vector<128xf32> to vector<1x128xf32>
    %913 = vector.broadcast %912 : vector<1x128xf32> to vector<16x128xf32>
    %914 = arith.mulf %913, %898 : vector<16x128xf32>
    %915 = arith.addf %909, %914 : vector<16x128xf32>
    %916 = vector.extract_strided_slice %684 {offsets = [5, 0], sizes = [1, 128], strides = [1, 1]} : vector<9x128xf32> to vector<1x128xf32>
    %917 = vector.shape_cast %916 : vector<1x128xf32> to vector<128xf32>
    %918 = vector.shape_cast %917 : vector<128xf32> to vector<1x128xf32>
    %919 = vector.broadcast %918 : vector<1x128xf32> to vector<16x128xf32>
    %920 = arith.mulf %919, %888 : vector<16x128xf32>
    %921 = vector.extract_strided_slice %684 {offsets = [3, 0], sizes = [1, 128], strides = [1, 1]} : vector<9x128xf32> to vector<1x128xf32>
    %922 = vector.shape_cast %921 : vector<1x128xf32> to vector<128xf32>
    %923 = vector.shape_cast %922 : vector<128xf32> to vector<1x128xf32>
    %924 = vector.broadcast %923 : vector<1x128xf32> to vector<16x128xf32>
    %925 = arith.mulf %924, %893 : vector<16x128xf32>
    %926 = arith.addf %920, %925 : vector<16x128xf32>
    %927 = vector.extract_strided_slice %684 {offsets = [4, 0], sizes = [1, 128], strides = [1, 1]} : vector<9x128xf32> to vector<1x128xf32>
    %928 = vector.shape_cast %927 : vector<1x128xf32> to vector<128xf32>
    %929 = vector.shape_cast %928 : vector<128xf32> to vector<1x128xf32>
    %930 = vector.broadcast %929 : vector<1x128xf32> to vector<16x128xf32>
    %931 = arith.mulf %930, %898 : vector<16x128xf32>
    %932 = arith.addf %926, %931 : vector<16x128xf32>
    %933 = vector.extract_strided_slice %684 {offsets = [8, 0], sizes = [1, 128], strides = [1, 1]} : vector<9x128xf32> to vector<1x128xf32>
    %934 = vector.shape_cast %933 : vector<1x128xf32> to vector<128xf32>
    %935 = vector.shape_cast %934 : vector<128xf32> to vector<1x128xf32>
    %936 = vector.broadcast %935 : vector<1x128xf32> to vector<16x128xf32>
    %937 = arith.mulf %936, %888 : vector<16x128xf32>
    %938 = vector.extract_strided_slice %684 {offsets = [6, 0], sizes = [1, 128], strides = [1, 1]} : vector<9x128xf32> to vector<1x128xf32>
    %939 = vector.shape_cast %938 : vector<1x128xf32> to vector<128xf32>
    %940 = vector.shape_cast %939 : vector<128xf32> to vector<1x128xf32>
    %941 = vector.broadcast %940 : vector<1x128xf32> to vector<16x128xf32>
    %942 = arith.mulf %941, %893 : vector<16x128xf32>
    %943 = arith.addf %937, %942 : vector<16x128xf32>
    %944 = vector.extract_strided_slice %684 {offsets = [7, 0], sizes = [1, 128], strides = [1, 1]} : vector<9x128xf32> to vector<1x128xf32>
    %945 = vector.shape_cast %944 : vector<1x128xf32> to vector<128xf32>
    %946 = vector.shape_cast %945 : vector<128xf32> to vector<1x128xf32>
    %947 = vector.broadcast %946 : vector<1x128xf32> to vector<16x128xf32>
    %948 = arith.mulf %947, %898 : vector<16x128xf32>
    %949 = arith.addf %943, %948 : vector<16x128xf32>
    %c1_i32_150 = arith.constant 1 : i32
    %950 = tpu.dynamic_rotate %915 by %c1_i32_150 dim 0 : vector<16x128xf32>, i32 -> vector<16x128xf32>
    %cst_151 = arith.constant 0.000000e+00 : f32
    %951 = vector.shape_cast %6 : vector<16x1xi1> to vector<16x1xi1>
    %952 = vector.broadcast %951 : vector<16x1xi1> to vector<16x128xi1>
    %953 = vector.broadcast %cst_151 : f32 to vector<16x128xf32>
    %954 = arith.select %952, %950, %953 : vector<16x128xi1>, vector<16x128xf32>
    %955 = arith.addf %932, %954 : vector<16x128xf32>
    %c15_i32_152 = arith.constant 15 : i32
    %956 = tpu.dynamic_rotate %949 by %c15_i32_152 dim 0 : vector<16x128xf32>, i32 -> vector<16x128xf32>
    %cst_153 = arith.constant 0.000000e+00 : f32
    %957 = vector.shape_cast %8 : vector<16x1xi1> to vector<16x1xi1>
    %958 = vector.broadcast %957 : vector<16x1xi1> to vector<16x128xi1>
    %959 = vector.broadcast %cst_153 : f32 to vector<16x128xf32>
    %960 = arith.select %958, %956, %959 : vector<16x128xi1>, vector<16x128xf32>
    %961 = arith.addf %955, %960 : vector<16x128xf32>
    %962 = vector.extract_strided_slice %682 {offsets = [4, 0], sizes = [1, 128], strides = [1, 1]} : vector<9x128xf32> to vector<1x128xf32>
    %963 = vector.shape_cast %962 : vector<1x128xf32> to vector<128xf32>
    %964 = vector.shape_cast %963 : vector<128xf32> to vector<1x128xf32>
    %965 = vector.broadcast %964 : vector<1x128xf32> to vector<16x128xf32>
    %966 = arith.addf %961, %965 : vector<16x128xf32>
    %967 = vector.extract_strided_slice %682 {offsets = [5, 0], sizes = [1, 128], strides = [1, 1]} : vector<9x128xf32> to vector<1x128xf32>
    %968 = vector.shape_cast %967 : vector<1x128xf32> to vector<128xf32>
    %969 = vector.extract_strided_slice %682 {offsets = [6, 0], sizes = [1, 128], strides = [1, 1]} : vector<9x128xf32> to vector<1x128xf32>
    %970 = vector.shape_cast %969 : vector<1x128xf32> to vector<128xf32>
    %971 = vector.extract_strided_slice %682 {offsets = [7, 0], sizes = [1, 128], strides = [1, 1]} : vector<9x128xf32> to vector<1x128xf32>
    %972 = vector.shape_cast %971 : vector<1x128xf32> to vector<128xf32>
    %973 = vector.shape_cast %966 : vector<16x128xf32> to vector<1x16x128xf32>
    %cst_154 = arith.constant dense<0.000000e+00> : vector<1xf32>
    %974 = vector.multi_reduction <add>, %973, %cst_154 [1, 2] : vector<1x16x128xf32> to vector<1xf32>
    %975 = vector.shape_cast %974 : vector<1xf32> to vector<1x1x1xf32>
    %976 = vector.extract %975[0, 0, 0] : f32 from vector<1x1x1xf32>
    %cst_155 = arith.constant 2.048000e+03 : f32
    %977 = arith.divf %976, %cst_155 : f32
    %978 = vector.broadcast %977 : f32 to vector<16x128xf32>
    %979 = arith.subf %966, %978 : vector<16x128xf32>
    %980 = arith.mulf %979, %979 : vector<16x128xf32>
    %981 = vector.shape_cast %980 : vector<16x128xf32> to vector<1x16x128xf32>
    %cst_156 = arith.constant dense<0.000000e+00> : vector<1xf32>
    %982 = vector.multi_reduction <add>, %981, %cst_156 [1, 2] : vector<1x16x128xf32> to vector<1xf32>
    %983 = vector.shape_cast %982 : vector<1xf32> to vector<1x1x1xf32>
    %984 = vector.extract %983[0, 0, 0] : f32 from vector<1x1x1xf32>
    %cst_157 = arith.constant 2.048000e+03 : f32
    %985 = arith.divf %984, %cst_157 : f32
    %cst_158 = arith.constant 9.99999974E-6 : f32
    %986 = arith.addf %985, %cst_158 : f32
    %987 = math.rsqrt %986 : f32
    %988 = vector.broadcast %987 : f32 to vector<16x128xf32>
    %989 = arith.mulf %979, %988 : vector<16x128xf32>
    %990 = vector.shape_cast %968 : vector<128xf32> to vector<1x128xf32>
    %991 = vector.broadcast %990 : vector<1x128xf32> to vector<16x128xf32>
    %992 = arith.mulf %989, %991 : vector<16x128xf32>
    %993 = vector.shape_cast %970 : vector<128xf32> to vector<1x128xf32>
    %994 = vector.broadcast %993 : vector<1x128xf32> to vector<16x128xf32>
    %995 = arith.addf %992, %994 : vector<16x128xf32>
    %cst_159 = arith.constant 0.000000e+00 : f32
    %996 = vector.broadcast %cst_159 : f32 to vector<16x128xf32>
    %997 = arith.cmpf ogt, %995, %996 : vector<16x128xf32>
    %998 = vector.shape_cast %972 : vector<128xf32> to vector<1x128xf32>
    %999 = vector.broadcast %998 : vector<1x128xf32> to vector<16x128xf32>
    %1000 = arith.mulf %999, %995 : vector<16x128xf32>
    %1001 = arith.select %997, %995, %1000 : vector<16x128xi1>, vector<16x128xf32>
    %1002 = tpu.concatenate %847, %1001 in 0 : vector<16x128xf32>, vector<16x128xf32> -> vector<32x128xf32>
    %1003 = arith.truncf %1002 : vector<32x128xf32> to vector<32x128xbf16>
    %c2_160 = arith.constant 2 : index
    %c0_161 = arith.constant 0 : index
    %c0_162 = arith.constant 0 : index
    %1004 = vector.load %arg4[%c2_160, %c0_161, %c0_162] : memref<6x128x128xbf16, #tpu.memory_space<vmem>>, vector<1x128x128xbf16>
    %1005 = vector.shape_cast %1004 : vector<1x128x128xbf16> to vector<128x128xbf16>
    %cst_163 = arith.constant dense<0.000000e+00> : vector<32x128xf32>
    %1006 = tpu.matmul %1003, %1005, %cst_163 {dimension_numbers = #tpu.dot_dimension_numbers<[1], [0], [0], [1], [0, 0, 1, 1], [], []>} : vector<32x128xbf16>, vector<128x128xbf16>, vector<32x128xf32> -> vector<32x128xf32>
    %1007 = vector.extract_strided_slice %682 {offsets = [8, 0], sizes = [1, 128], strides = [1, 1]} : vector<9x128xf32> to vector<1x128xf32>
    %1008 = vector.shape_cast %1007 : vector<1x128xf32> to vector<128xf32>
    %1009 = vector.shape_cast %1008 : vector<128xf32> to vector<1x128xf32>
    %1010 = vector.broadcast %1009 : vector<1x128xf32> to vector<32x128xf32>
    %1011 = arith.addf %1006, %1010 : vector<32x128xf32>
    %1012 = arith.addf %1011, %680 : vector<32x128xf32>
    %c3 = arith.constant 3 : index
    %c0_164 = arith.constant 0 : index
    %c0_165 = arith.constant 0 : index
    %1013 = vector.load %arg6[%c3, %c0_164, %c0_165] : memref<6x9x128xf32, #tpu.memory_space<vmem>>, vector<1x9x128xf32>
    %1014 = vector.shape_cast %1013 : vector<1x9x128xf32> to vector<9x128xf32>
    %c3_166 = arith.constant 3 : index
    %c0_167 = arith.constant 0 : index
    %c0_168 = arith.constant 0 : index
    %1015 = vector.load %arg5[%c3_166, %c0_167, %c0_168] : memref<6x9x128xf32, #tpu.memory_space<vmem>>, vector<1x9x128xf32>
    %1016 = vector.shape_cast %1015 : vector<1x9x128xf32> to vector<9x128xf32>
    %1017 = arith.truncf %1012 : vector<32x128xf32> to vector<32x128xbf16>
    %c3_169 = arith.constant 3 : index
    %c0_170 = arith.constant 0 : index
    %c0_171 = arith.constant 0 : index
    %1018 = vector.load %arg3[%c3_169, %c0_170, %c0_171] : memref<6x128x128xbf16, #tpu.memory_space<vmem>>, vector<1x128x128xbf16>
    %1019 = vector.shape_cast %1018 : vector<1x128x128xbf16> to vector<128x128xbf16>
    %cst_172 = arith.constant dense<0.000000e+00> : vector<32x128xf32>
    %1020 = tpu.matmul %1017, %1019, %cst_172 {dimension_numbers = #tpu.dot_dimension_numbers<[1], [0], [0], [1], [0, 0, 1, 1], [], []>} : vector<32x128xbf16>, vector<128x128xbf16>, vector<32x128xf32> -> vector<32x128xf32>
    %1021 = vector.extract_strided_slice %1014 {offsets = [0, 0], sizes = [1, 128], strides = [1, 1]} : vector<9x128xf32> to vector<1x128xf32>
    %1022 = vector.shape_cast %1021 : vector<1x128xf32> to vector<128xf32>
    %1023 = vector.shape_cast %1022 : vector<128xf32> to vector<1x128xf32>
    %1024 = vector.broadcast %1023 : vector<1x128xf32> to vector<32x128xf32>
    %1025 = arith.addf %1020, %1024 : vector<32x128xf32>
    %1026 = vector.extract_strided_slice %1025 {offsets = [0, 0], sizes = [16, 128], strides = [1, 1]} : vector<32x128xf32> to vector<16x128xf32>
    %1027 = vector.extract_strided_slice %1014 {offsets = [1, 0], sizes = [1, 128], strides = [1, 1]} : vector<9x128xf32> to vector<1x128xf32>
    %1028 = vector.shape_cast %1027 : vector<1x128xf32> to vector<128xf32>
    %1029 = vector.extract_strided_slice %1014 {offsets = [2, 0], sizes = [1, 128], strides = [1, 1]} : vector<9x128xf32> to vector<1x128xf32>
    %1030 = vector.shape_cast %1029 : vector<1x128xf32> to vector<128xf32>
    %1031 = vector.extract_strided_slice %1014 {offsets = [3, 0], sizes = [1, 128], strides = [1, 1]} : vector<9x128xf32> to vector<1x128xf32>
    %1032 = vector.shape_cast %1031 : vector<1x128xf32> to vector<128xf32>
    %1033 = vector.shape_cast %1026 : vector<16x128xf32> to vector<1x16x128xf32>
    %cst_173 = arith.constant dense<0.000000e+00> : vector<1xf32>
    %1034 = vector.multi_reduction <add>, %1033, %cst_173 [1, 2] : vector<1x16x128xf32> to vector<1xf32>
    %1035 = vector.shape_cast %1034 : vector<1xf32> to vector<1x1x1xf32>
    %1036 = vector.extract %1035[0, 0, 0] : f32 from vector<1x1x1xf32>
    %cst_174 = arith.constant 2.048000e+03 : f32
    %1037 = arith.divf %1036, %cst_174 : f32
    %1038 = vector.broadcast %1037 : f32 to vector<16x128xf32>
    %1039 = arith.subf %1026, %1038 : vector<16x128xf32>
    %1040 = arith.mulf %1039, %1039 : vector<16x128xf32>
    %1041 = vector.shape_cast %1040 : vector<16x128xf32> to vector<1x16x128xf32>
    %cst_175 = arith.constant dense<0.000000e+00> : vector<1xf32>
    %1042 = vector.multi_reduction <add>, %1041, %cst_175 [1, 2] : vector<1x16x128xf32> to vector<1xf32>
    %1043 = vector.shape_cast %1042 : vector<1xf32> to vector<1x1x1xf32>
    %1044 = vector.extract %1043[0, 0, 0] : f32 from vector<1x1x1xf32>
    %cst_176 = arith.constant 2.048000e+03 : f32
    %1045 = arith.divf %1044, %cst_176 : f32
    %cst_177 = arith.constant 9.99999974E-6 : f32
    %1046 = arith.addf %1045, %cst_177 : f32
    %1047 = math.rsqrt %1046 : f32
    %1048 = vector.broadcast %1047 : f32 to vector<16x128xf32>
    %1049 = arith.mulf %1039, %1048 : vector<16x128xf32>
    %1050 = vector.shape_cast %1028 : vector<128xf32> to vector<1x128xf32>
    %1051 = vector.broadcast %1050 : vector<1x128xf32> to vector<16x128xf32>
    %1052 = arith.mulf %1049, %1051 : vector<16x128xf32>
    %1053 = vector.shape_cast %1030 : vector<128xf32> to vector<1x128xf32>
    %1054 = vector.broadcast %1053 : vector<1x128xf32> to vector<16x128xf32>
    %1055 = arith.addf %1052, %1054 : vector<16x128xf32>
    %cst_178 = arith.constant 0.000000e+00 : f32
    %1056 = vector.broadcast %cst_178 : f32 to vector<16x128xf32>
    %1057 = arith.cmpf ogt, %1055, %1056 : vector<16x128xf32>
    %1058 = vector.shape_cast %1032 : vector<128xf32> to vector<1x128xf32>
    %1059 = vector.broadcast %1058 : vector<1x128xf32> to vector<16x128xf32>
    %1060 = arith.mulf %1059, %1055 : vector<16x128xf32>
    %1061 = arith.select %1057, %1055, %1060 : vector<16x128xi1>, vector<16x128xf32>
    %1062 = vector.extract_strided_slice %2 {offsets = [0, 3, 0], sizes = [1, 1, 128], strides = [1, 1, 1]} : vector<2x6x128xf32> to vector<1x1x128xf32>
    %1063 = vector.shape_cast %1062 : vector<1x1x128xf32> to vector<128xf32>
    %1064 = vector.shape_cast %1063 : vector<128xf32> to vector<1x128xf32>
    %1065 = vector.broadcast %1064 : vector<1x128xf32> to vector<16x128xf32>
    %1066 = arith.addf %1061, %1065 : vector<16x128xf32>
    %c64_i32_179 = arith.constant 64 : i32
    %1067 = tpu.dynamic_rotate %1066 by %c64_i32_179 dim 1 : vector<16x128xf32>, i32 -> vector<16x128xf32>
    %cst_180 = arith.constant 0.000000e+00 : f32
    %1068 = vector.shape_cast %16 : vector<1x128xi1> to vector<1x128xi1>
    %1069 = vector.broadcast %1068 : vector<1x128xi1> to vector<16x128xi1>
    %1070 = vector.broadcast %cst_180 : f32 to vector<16x128xf32>
    %1071 = arith.select %1069, %1067, %1070 : vector<16x128xi1>, vector<16x128xf32>
    %1072 = vector.extract_strided_slice %1016 {offsets = [2, 0], sizes = [1, 128], strides = [1, 1]} : vector<9x128xf32> to vector<1x128xf32>
    %1073 = vector.shape_cast %1072 : vector<1x128xf32> to vector<128xf32>
    %1074 = vector.shape_cast %1073 : vector<128xf32> to vector<1x128xf32>
    %1075 = vector.broadcast %1074 : vector<1x128xf32> to vector<16x128xf32>
    %1076 = arith.mulf %1075, %1066 : vector<16x128xf32>
    %1077 = vector.extract_strided_slice %1016 {offsets = [1, 0], sizes = [1, 128], strides = [1, 1]} : vector<9x128xf32> to vector<1x128xf32>
    %1078 = vector.shape_cast %1077 : vector<1x128xf32> to vector<128xf32>
    %1079 = vector.shape_cast %1078 : vector<128xf32> to vector<1x128xf32>
    %1080 = vector.broadcast %1079 : vector<1x128xf32> to vector<16x128xf32>
    %1081 = arith.mulf %1080, %1071 : vector<16x128xf32>
    %1082 = arith.addf %1076, %1081 : vector<16x128xf32>
    %1083 = vector.extract_strided_slice %1016 {offsets = [5, 0], sizes = [1, 128], strides = [1, 1]} : vector<9x128xf32> to vector<1x128xf32>
    %1084 = vector.shape_cast %1083 : vector<1x128xf32> to vector<128xf32>
    %1085 = vector.shape_cast %1084 : vector<128xf32> to vector<1x128xf32>
    %1086 = vector.broadcast %1085 : vector<1x128xf32> to vector<16x128xf32>
    %1087 = arith.mulf %1086, %1066 : vector<16x128xf32>
    %1088 = vector.extract_strided_slice %1016 {offsets = [4, 0], sizes = [1, 128], strides = [1, 1]} : vector<9x128xf32> to vector<1x128xf32>
    %1089 = vector.shape_cast %1088 : vector<1x128xf32> to vector<128xf32>
    %1090 = vector.shape_cast %1089 : vector<128xf32> to vector<1x128xf32>
    %1091 = vector.broadcast %1090 : vector<1x128xf32> to vector<16x128xf32>
    %1092 = arith.mulf %1091, %1071 : vector<16x128xf32>
    %1093 = arith.addf %1087, %1092 : vector<16x128xf32>
    %1094 = vector.extract_strided_slice %1016 {offsets = [8, 0], sizes = [1, 128], strides = [1, 1]} : vector<9x128xf32> to vector<1x128xf32>
    %1095 = vector.shape_cast %1094 : vector<1x128xf32> to vector<128xf32>
    %1096 = vector.shape_cast %1095 : vector<128xf32> to vector<1x128xf32>
    %1097 = vector.broadcast %1096 : vector<1x128xf32> to vector<16x128xf32>
    %1098 = arith.mulf %1097, %1066 : vector<16x128xf32>
    %1099 = vector.extract_strided_slice %1016 {offsets = [7, 0], sizes = [1, 128], strides = [1, 1]} : vector<9x128xf32> to vector<1x128xf32>
    %1100 = vector.shape_cast %1099 : vector<1x128xf32> to vector<128xf32>
    %1101 = vector.shape_cast %1100 : vector<128xf32> to vector<1x128xf32>
    %1102 = vector.broadcast %1101 : vector<1x128xf32> to vector<16x128xf32>
    %1103 = arith.mulf %1102, %1071 : vector<16x128xf32>
    %1104 = arith.addf %1098, %1103 : vector<16x128xf32>
    %c1_i32_181 = arith.constant 1 : i32
    %1105 = tpu.dynamic_rotate %1082 by %c1_i32_181 dim 0 : vector<16x128xf32>, i32 -> vector<16x128xf32>
    %cst_182 = arith.constant 0.000000e+00 : f32
    %1106 = vector.shape_cast %6 : vector<16x1xi1> to vector<16x1xi1>
    %1107 = vector.broadcast %1106 : vector<16x1xi1> to vector<16x128xi1>
    %1108 = vector.broadcast %cst_182 : f32 to vector<16x128xf32>
    %1109 = arith.select %1107, %1105, %1108 : vector<16x128xi1>, vector<16x128xf32>
    %1110 = arith.addf %1093, %1109 : vector<16x128xf32>
    %c15_i32_183 = arith.constant 15 : i32
    %1111 = tpu.dynamic_rotate %1104 by %c15_i32_183 dim 0 : vector<16x128xf32>, i32 -> vector<16x128xf32>
    %cst_184 = arith.constant 0.000000e+00 : f32
    %1112 = vector.shape_cast %8 : vector<16x1xi1> to vector<16x1xi1>
    %1113 = vector.broadcast %1112 : vector<16x1xi1> to vector<16x128xi1>
    %1114 = vector.broadcast %cst_184 : f32 to vector<16x128xf32>
    %1115 = arith.select %1113, %1111, %1114 : vector<16x128xi1>, vector<16x128xf32>
    %1116 = arith.addf %1110, %1115 : vector<16x128xf32>
    %1117 = vector.extract_strided_slice %1014 {offsets = [4, 0], sizes = [1, 128], strides = [1, 1]} : vector<9x128xf32> to vector<1x128xf32>
    %1118 = vector.shape_cast %1117 : vector<1x128xf32> to vector<128xf32>
    %1119 = vector.shape_cast %1118 : vector<128xf32> to vector<1x128xf32>
    %1120 = vector.broadcast %1119 : vector<1x128xf32> to vector<16x128xf32>
    %1121 = arith.addf %1116, %1120 : vector<16x128xf32>
    %1122 = vector.extract_strided_slice %1014 {offsets = [5, 0], sizes = [1, 128], strides = [1, 1]} : vector<9x128xf32> to vector<1x128xf32>
    %1123 = vector.shape_cast %1122 : vector<1x128xf32> to vector<128xf32>
    %1124 = vector.extract_strided_slice %1014 {offsets = [6, 0], sizes = [1, 128], strides = [1, 1]} : vector<9x128xf32> to vector<1x128xf32>
    %1125 = vector.shape_cast %1124 : vector<1x128xf32> to vector<128xf32>
    %1126 = vector.extract_strided_slice %1014 {offsets = [7, 0], sizes = [1, 128], strides = [1, 1]} : vector<9x128xf32> to vector<1x128xf32>
    %1127 = vector.shape_cast %1126 : vector<1x128xf32> to vector<128xf32>
    %1128 = vector.shape_cast %1121 : vector<16x128xf32> to vector<1x16x128xf32>
    %cst_185 = arith.constant dense<0.000000e+00> : vector<1xf32>
    %1129 = vector.multi_reduction <add>, %1128, %cst_185 [1, 2] : vector<1x16x128xf32> to vector<1xf32>
    %1130 = vector.shape_cast %1129 : vector<1xf32> to vector<1x1x1xf32>
    %1131 = vector.extract %1130[0, 0, 0] : f32 from vector<1x1x1xf32>
    %cst_186 = arith.constant 2.048000e+03 : f32
    %1132 = arith.divf %1131, %cst_186 : f32
    %1133 = vector.broadcast %1132 : f32 to vector<16x128xf32>
    %1134 = arith.subf %1121, %1133 : vector<16x128xf32>
    %1135 = arith.mulf %1134, %1134 : vector<16x128xf32>
    %1136 = vector.shape_cast %1135 : vector<16x128xf32> to vector<1x16x128xf32>
    %cst_187 = arith.constant dense<0.000000e+00> : vector<1xf32>
    %1137 = vector.multi_reduction <add>, %1136, %cst_187 [1, 2] : vector<1x16x128xf32> to vector<1xf32>
    %1138 = vector.shape_cast %1137 : vector<1xf32> to vector<1x1x1xf32>
    %1139 = vector.extract %1138[0, 0, 0] : f32 from vector<1x1x1xf32>
    %cst_188 = arith.constant 2.048000e+03 : f32
    %1140 = arith.divf %1139, %cst_188 : f32
    %cst_189 = arith.constant 9.99999974E-6 : f32
    %1141 = arith.addf %1140, %cst_189 : f32
    %1142 = math.rsqrt %1141 : f32
    %1143 = vector.broadcast %1142 : f32 to vector<16x128xf32>
    %1144 = arith.mulf %1134, %1143 : vector<16x128xf32>
    %1145 = vector.shape_cast %1123 : vector<128xf32> to vector<1x128xf32>
    %1146 = vector.broadcast %1145 : vector<1x128xf32> to vector<16x128xf32>
    %1147 = arith.mulf %1144, %1146 : vector<16x128xf32>
    %1148 = vector.shape_cast %1125 : vector<128xf32> to vector<1x128xf32>
    %1149 = vector.broadcast %1148 : vector<1x128xf32> to vector<16x128xf32>
    %1150 = arith.addf %1147, %1149 : vector<16x128xf32>
    %cst_190 = arith.constant 0.000000e+00 : f32
    %1151 = vector.broadcast %cst_190 : f32 to vector<16x128xf32>
    %1152 = arith.cmpf ogt, %1150, %1151 : vector<16x128xf32>
    %1153 = vector.shape_cast %1127 : vector<128xf32> to vector<1x128xf32>
    %1154 = vector.broadcast %1153 : vector<1x128xf32> to vector<16x128xf32>
    %1155 = arith.mulf %1154, %1150 : vector<16x128xf32>
    %1156 = arith.select %1152, %1150, %1155 : vector<16x128xi1>, vector<16x128xf32>
    %1157 = vector.extract_strided_slice %1025 {offsets = [16, 0], sizes = [16, 128], strides = [1, 1]} : vector<32x128xf32> to vector<16x128xf32>
    %1158 = vector.extract_strided_slice %1014 {offsets = [1, 0], sizes = [1, 128], strides = [1, 1]} : vector<9x128xf32> to vector<1x128xf32>
    %1159 = vector.shape_cast %1158 : vector<1x128xf32> to vector<128xf32>
    %1160 = vector.extract_strided_slice %1014 {offsets = [2, 0], sizes = [1, 128], strides = [1, 1]} : vector<9x128xf32> to vector<1x128xf32>
    %1161 = vector.shape_cast %1160 : vector<1x128xf32> to vector<128xf32>
    %1162 = vector.extract_strided_slice %1014 {offsets = [3, 0], sizes = [1, 128], strides = [1, 1]} : vector<9x128xf32> to vector<1x128xf32>
    %1163 = vector.shape_cast %1162 : vector<1x128xf32> to vector<128xf32>
    %1164 = vector.shape_cast %1157 : vector<16x128xf32> to vector<1x16x128xf32>
    %cst_191 = arith.constant dense<0.000000e+00> : vector<1xf32>
    %1165 = vector.multi_reduction <add>, %1164, %cst_191 [1, 2] : vector<1x16x128xf32> to vector<1xf32>
    %1166 = vector.shape_cast %1165 : vector<1xf32> to vector<1x1x1xf32>
    %1167 = vector.extract %1166[0, 0, 0] : f32 from vector<1x1x1xf32>
    %cst_192 = arith.constant 2.048000e+03 : f32
    %1168 = arith.divf %1167, %cst_192 : f32
    %1169 = vector.broadcast %1168 : f32 to vector<16x128xf32>
    %1170 = arith.subf %1157, %1169 : vector<16x128xf32>
    %1171 = arith.mulf %1170, %1170 : vector<16x128xf32>
    %1172 = vector.shape_cast %1171 : vector<16x128xf32> to vector<1x16x128xf32>
    %cst_193 = arith.constant dense<0.000000e+00> : vector<1xf32>
    %1173 = vector.multi_reduction <add>, %1172, %cst_193 [1, 2] : vector<1x16x128xf32> to vector<1xf32>
    %1174 = vector.shape_cast %1173 : vector<1xf32> to vector<1x1x1xf32>
    %1175 = vector.extract %1174[0, 0, 0] : f32 from vector<1x1x1xf32>
    %cst_194 = arith.constant 2.048000e+03 : f32
    %1176 = arith.divf %1175, %cst_194 : f32
    %cst_195 = arith.constant 9.99999974E-6 : f32
    %1177 = arith.addf %1176, %cst_195 : f32
    %1178 = math.rsqrt %1177 : f32
    %1179 = vector.broadcast %1178 : f32 to vector<16x128xf32>
    %1180 = arith.mulf %1170, %1179 : vector<16x128xf32>
    %1181 = vector.shape_cast %1159 : vector<128xf32> to vector<1x128xf32>
    %1182 = vector.broadcast %1181 : vector<1x128xf32> to vector<16x128xf32>
    %1183 = arith.mulf %1180, %1182 : vector<16x128xf32>
    %1184 = vector.shape_cast %1161 : vector<128xf32> to vector<1x128xf32>
    %1185 = vector.broadcast %1184 : vector<1x128xf32> to vector<16x128xf32>
    %1186 = arith.addf %1183, %1185 : vector<16x128xf32>
    %cst_196 = arith.constant 0.000000e+00 : f32
    %1187 = vector.broadcast %cst_196 : f32 to vector<16x128xf32>
    %1188 = arith.cmpf ogt, %1186, %1187 : vector<16x128xf32>
    %1189 = vector.shape_cast %1163 : vector<128xf32> to vector<1x128xf32>
    %1190 = vector.broadcast %1189 : vector<1x128xf32> to vector<16x128xf32>
    %1191 = arith.mulf %1190, %1186 : vector<16x128xf32>
    %1192 = arith.select %1188, %1186, %1191 : vector<16x128xi1>, vector<16x128xf32>
    %1193 = vector.extract_strided_slice %2 {offsets = [1, 3, 0], sizes = [1, 1, 128], strides = [1, 1, 1]} : vector<2x6x128xf32> to vector<1x1x128xf32>
    %1194 = vector.shape_cast %1193 : vector<1x1x128xf32> to vector<128xf32>
    %1195 = vector.shape_cast %1194 : vector<128xf32> to vector<1x128xf32>
    %1196 = vector.broadcast %1195 : vector<1x128xf32> to vector<16x128xf32>
    %1197 = arith.addf %1192, %1196 : vector<16x128xf32>
    %c64_i32_197 = arith.constant 64 : i32
    %1198 = tpu.dynamic_rotate %1197 by %c64_i32_197 dim 1 : vector<16x128xf32>, i32 -> vector<16x128xf32>
    %cst_198 = arith.constant 0.000000e+00 : f32
    %1199 = vector.shape_cast %16 : vector<1x128xi1> to vector<1x128xi1>
    %1200 = vector.broadcast %1199 : vector<1x128xi1> to vector<16x128xi1>
    %1201 = vector.broadcast %cst_198 : f32 to vector<16x128xf32>
    %1202 = arith.select %1200, %1198, %1201 : vector<16x128xi1>, vector<16x128xf32>
    %1203 = vector.extract_strided_slice %1016 {offsets = [2, 0], sizes = [1, 128], strides = [1, 1]} : vector<9x128xf32> to vector<1x128xf32>
    %1204 = vector.shape_cast %1203 : vector<1x128xf32> to vector<128xf32>
    %1205 = vector.shape_cast %1204 : vector<128xf32> to vector<1x128xf32>
    %1206 = vector.broadcast %1205 : vector<1x128xf32> to vector<16x128xf32>
    %1207 = arith.mulf %1206, %1197 : vector<16x128xf32>
    %1208 = vector.extract_strided_slice %1016 {offsets = [1, 0], sizes = [1, 128], strides = [1, 1]} : vector<9x128xf32> to vector<1x128xf32>
    %1209 = vector.shape_cast %1208 : vector<1x128xf32> to vector<128xf32>
    %1210 = vector.shape_cast %1209 : vector<128xf32> to vector<1x128xf32>
    %1211 = vector.broadcast %1210 : vector<1x128xf32> to vector<16x128xf32>
    %1212 = arith.mulf %1211, %1202 : vector<16x128xf32>
    %1213 = arith.addf %1207, %1212 : vector<16x128xf32>
    %1214 = vector.extract_strided_slice %1016 {offsets = [5, 0], sizes = [1, 128], strides = [1, 1]} : vector<9x128xf32> to vector<1x128xf32>
    %1215 = vector.shape_cast %1214 : vector<1x128xf32> to vector<128xf32>
    %1216 = vector.shape_cast %1215 : vector<128xf32> to vector<1x128xf32>
    %1217 = vector.broadcast %1216 : vector<1x128xf32> to vector<16x128xf32>
    %1218 = arith.mulf %1217, %1197 : vector<16x128xf32>
    %1219 = vector.extract_strided_slice %1016 {offsets = [4, 0], sizes = [1, 128], strides = [1, 1]} : vector<9x128xf32> to vector<1x128xf32>
    %1220 = vector.shape_cast %1219 : vector<1x128xf32> to vector<128xf32>
    %1221 = vector.shape_cast %1220 : vector<128xf32> to vector<1x128xf32>
    %1222 = vector.broadcast %1221 : vector<1x128xf32> to vector<16x128xf32>
    %1223 = arith.mulf %1222, %1202 : vector<16x128xf32>
    %1224 = arith.addf %1218, %1223 : vector<16x128xf32>
    %1225 = vector.extract_strided_slice %1016 {offsets = [8, 0], sizes = [1, 128], strides = [1, 1]} : vector<9x128xf32> to vector<1x128xf32>
    %1226 = vector.shape_cast %1225 : vector<1x128xf32> to vector<128xf32>
    %1227 = vector.shape_cast %1226 : vector<128xf32> to vector<1x128xf32>
    %1228 = vector.broadcast %1227 : vector<1x128xf32> to vector<16x128xf32>
    %1229 = arith.mulf %1228, %1197 : vector<16x128xf32>
    %1230 = vector.extract_strided_slice %1016 {offsets = [7, 0], sizes = [1, 128], strides = [1, 1]} : vector<9x128xf32> to vector<1x128xf32>
    %1231 = vector.shape_cast %1230 : vector<1x128xf32> to vector<128xf32>
    %1232 = vector.shape_cast %1231 : vector<128xf32> to vector<1x128xf32>
    %1233 = vector.broadcast %1232 : vector<1x128xf32> to vector<16x128xf32>
    %1234 = arith.mulf %1233, %1202 : vector<16x128xf32>
    %1235 = arith.addf %1229, %1234 : vector<16x128xf32>
    %c1_i32_199 = arith.constant 1 : i32
    %1236 = tpu.dynamic_rotate %1213 by %c1_i32_199 dim 0 : vector<16x128xf32>, i32 -> vector<16x128xf32>
    %cst_200 = arith.constant 0.000000e+00 : f32
    %1237 = vector.shape_cast %6 : vector<16x1xi1> to vector<16x1xi1>
    %1238 = vector.broadcast %1237 : vector<16x1xi1> to vector<16x128xi1>
    %1239 = vector.broadcast %cst_200 : f32 to vector<16x128xf32>
    %1240 = arith.select %1238, %1236, %1239 : vector<16x128xi1>, vector<16x128xf32>
    %1241 = arith.addf %1224, %1240 : vector<16x128xf32>
    %c15_i32_201 = arith.constant 15 : i32
    %1242 = tpu.dynamic_rotate %1235 by %c15_i32_201 dim 0 : vector<16x128xf32>, i32 -> vector<16x128xf32>
    %cst_202 = arith.constant 0.000000e+00 : f32
    %1243 = vector.shape_cast %8 : vector<16x1xi1> to vector<16x1xi1>
    %1244 = vector.broadcast %1243 : vector<16x1xi1> to vector<16x128xi1>
    %1245 = vector.broadcast %cst_202 : f32 to vector<16x128xf32>
    %1246 = arith.select %1244, %1242, %1245 : vector<16x128xi1>, vector<16x128xf32>
    %1247 = arith.addf %1241, %1246 : vector<16x128xf32>
    %1248 = vector.extract_strided_slice %1014 {offsets = [4, 0], sizes = [1, 128], strides = [1, 1]} : vector<9x128xf32> to vector<1x128xf32>
    %1249 = vector.shape_cast %1248 : vector<1x128xf32> to vector<128xf32>
    %1250 = vector.shape_cast %1249 : vector<128xf32> to vector<1x128xf32>
    %1251 = vector.broadcast %1250 : vector<1x128xf32> to vector<16x128xf32>
    %1252 = arith.addf %1247, %1251 : vector<16x128xf32>
    %1253 = vector.extract_strided_slice %1014 {offsets = [5, 0], sizes = [1, 128], strides = [1, 1]} : vector<9x128xf32> to vector<1x128xf32>
    %1254 = vector.shape_cast %1253 : vector<1x128xf32> to vector<128xf32>
    %1255 = vector.extract_strided_slice %1014 {offsets = [6, 0], sizes = [1, 128], strides = [1, 1]} : vector<9x128xf32> to vector<1x128xf32>
    %1256 = vector.shape_cast %1255 : vector<1x128xf32> to vector<128xf32>
    %1257 = vector.extract_strided_slice %1014 {offsets = [7, 0], sizes = [1, 128], strides = [1, 1]} : vector<9x128xf32> to vector<1x128xf32>
    %1258 = vector.shape_cast %1257 : vector<1x128xf32> to vector<128xf32>
    %1259 = vector.shape_cast %1252 : vector<16x128xf32> to vector<1x16x128xf32>
    %cst_203 = arith.constant dense<0.000000e+00> : vector<1xf32>
    %1260 = vector.multi_reduction <add>, %1259, %cst_203 [1, 2] : vector<1x16x128xf32> to vector<1xf32>
    %1261 = vector.shape_cast %1260 : vector<1xf32> to vector<1x1x1xf32>
    %1262 = vector.extract %1261[0, 0, 0] : f32 from vector<1x1x1xf32>
    %cst_204 = arith.constant 2.048000e+03 : f32
    %1263 = arith.divf %1262, %cst_204 : f32
    %1264 = vector.broadcast %1263 : f32 to vector<16x128xf32>
    %1265 = arith.subf %1252, %1264 : vector<16x128xf32>
    %1266 = arith.mulf %1265, %1265 : vector<16x128xf32>
    %1267 = vector.shape_cast %1266 : vector<16x128xf32> to vector<1x16x128xf32>
    %cst_205 = arith.constant dense<0.000000e+00> : vector<1xf32>
    %1268 = vector.multi_reduction <add>, %1267, %cst_205 [1, 2] : vector<1x16x128xf32> to vector<1xf32>
    %1269 = vector.shape_cast %1268 : vector<1xf32> to vector<1x1x1xf32>
    %1270 = vector.extract %1269[0, 0, 0] : f32 from vector<1x1x1xf32>
    %cst_206 = arith.constant 2.048000e+03 : f32
    %1271 = arith.divf %1270, %cst_206 : f32
    %cst_207 = arith.constant 9.99999974E-6 : f32
    %1272 = arith.addf %1271, %cst_207 : f32
    %1273 = math.rsqrt %1272 : f32
    %1274 = vector.broadcast %1273 : f32 to vector<16x128xf32>
    %1275 = arith.mulf %1265, %1274 : vector<16x128xf32>
    %1276 = vector.shape_cast %1254 : vector<128xf32> to vector<1x128xf32>
    %1277 = vector.broadcast %1276 : vector<1x128xf32> to vector<16x128xf32>
    %1278 = arith.mulf %1275, %1277 : vector<16x128xf32>
    %1279 = vector.shape_cast %1256 : vector<128xf32> to vector<1x128xf32>
    %1280 = vector.broadcast %1279 : vector<1x128xf32> to vector<16x128xf32>
    %1281 = arith.addf %1278, %1280 : vector<16x128xf32>
    %cst_208 = arith.constant 0.000000e+00 : f32
    %1282 = vector.broadcast %cst_208 : f32 to vector<16x128xf32>
    %1283 = arith.cmpf ogt, %1281, %1282 : vector<16x128xf32>
    %1284 = vector.shape_cast %1258 : vector<128xf32> to vector<1x128xf32>
    %1285 = vector.broadcast %1284 : vector<1x128xf32> to vector<16x128xf32>
    %1286 = arith.mulf %1285, %1281 : vector<16x128xf32>
    %1287 = arith.select %1283, %1281, %1286 : vector<16x128xi1>, vector<16x128xf32>
    %1288 = tpu.concatenate %1156, %1287 in 0 : vector<16x128xf32>, vector<16x128xf32> -> vector<32x128xf32>
    %1289 = arith.truncf %1288 : vector<32x128xf32> to vector<32x128xbf16>
    %c3_209 = arith.constant 3 : index
    %c0_210 = arith.constant 0 : index
    %c0_211 = arith.constant 0 : index
    %1290 = vector.load %arg4[%c3_209, %c0_210, %c0_211] : memref<6x128x128xbf16, #tpu.memory_space<vmem>>, vector<1x128x128xbf16>
    %1291 = vector.shape_cast %1290 : vector<1x128x128xbf16> to vector<128x128xbf16>
    %cst_212 = arith.constant dense<0.000000e+00> : vector<32x128xf32>
    %1292 = tpu.matmul %1289, %1291, %cst_212 {dimension_numbers = #tpu.dot_dimension_numbers<[1], [0], [0], [1], [0, 0, 1, 1], [], []>} : vector<32x128xbf16>, vector<128x128xbf16>, vector<32x128xf32> -> vector<32x128xf32>
    %1293 = vector.extract_strided_slice %1014 {offsets = [8, 0], sizes = [1, 128], strides = [1, 1]} : vector<9x128xf32> to vector<1x128xf32>
    %1294 = vector.shape_cast %1293 : vector<1x128xf32> to vector<128xf32>
    %1295 = vector.shape_cast %1294 : vector<128xf32> to vector<1x128xf32>
    %1296 = vector.broadcast %1295 : vector<1x128xf32> to vector<32x128xf32>
    %1297 = arith.addf %1292, %1296 : vector<32x128xf32>
    %1298 = arith.addf %1297, %1012 : vector<32x128xf32>
    %c4 = arith.constant 4 : index
    %c0_213 = arith.constant 0 : index
    %c0_214 = arith.constant 0 : index
    %1299 = vector.load %arg6[%c4, %c0_213, %c0_214] : memref<6x9x128xf32, #tpu.memory_space<vmem>>, vector<1x9x128xf32>
    %1300 = vector.shape_cast %1299 : vector<1x9x128xf32> to vector<9x128xf32>
    %c4_215 = arith.constant 4 : index
    %c0_216 = arith.constant 0 : index
    %c0_217 = arith.constant 0 : index
    %1301 = vector.load %arg5[%c4_215, %c0_216, %c0_217] : memref<6x9x128xf32, #tpu.memory_space<vmem>>, vector<1x9x128xf32>
    %1302 = vector.shape_cast %1301 : vector<1x9x128xf32> to vector<9x128xf32>
    %1303 = arith.truncf %1298 : vector<32x128xf32> to vector<32x128xbf16>
    %c4_218 = arith.constant 4 : index
    %c0_219 = arith.constant 0 : index
    %c0_220 = arith.constant 0 : index
    %1304 = vector.load %arg3[%c4_218, %c0_219, %c0_220] : memref<6x128x128xbf16, #tpu.memory_space<vmem>>, vector<1x128x128xbf16>
    %1305 = vector.shape_cast %1304 : vector<1x128x128xbf16> to vector<128x128xbf16>
    %cst_221 = arith.constant dense<0.000000e+00> : vector<32x128xf32>
    %1306 = tpu.matmul %1303, %1305, %cst_221 {dimension_numbers = #tpu.dot_dimension_numbers<[1], [0], [0], [1], [0, 0, 1, 1], [], []>} : vector<32x128xbf16>, vector<128x128xbf16>, vector<32x128xf32> -> vector<32x128xf32>
    %1307 = vector.extract_strided_slice %1300 {offsets = [0, 0], sizes = [1, 128], strides = [1, 1]} : vector<9x128xf32> to vector<1x128xf32>
    %1308 = vector.shape_cast %1307 : vector<1x128xf32> to vector<128xf32>
    %1309 = vector.shape_cast %1308 : vector<128xf32> to vector<1x128xf32>
    %1310 = vector.broadcast %1309 : vector<1x128xf32> to vector<32x128xf32>
    %1311 = arith.addf %1306, %1310 : vector<32x128xf32>
    %1312 = vector.extract_strided_slice %1311 {offsets = [0, 0], sizes = [16, 128], strides = [1, 1]} : vector<32x128xf32> to vector<16x128xf32>
    %1313 = vector.extract_strided_slice %1300 {offsets = [1, 0], sizes = [1, 128], strides = [1, 1]} : vector<9x128xf32> to vector<1x128xf32>
    %1314 = vector.shape_cast %1313 : vector<1x128xf32> to vector<128xf32>
    %1315 = vector.extract_strided_slice %1300 {offsets = [2, 0], sizes = [1, 128], strides = [1, 1]} : vector<9x128xf32> to vector<1x128xf32>
    %1316 = vector.shape_cast %1315 : vector<1x128xf32> to vector<128xf32>
    %1317 = vector.extract_strided_slice %1300 {offsets = [3, 0], sizes = [1, 128], strides = [1, 1]} : vector<9x128xf32> to vector<1x128xf32>
    %1318 = vector.shape_cast %1317 : vector<1x128xf32> to vector<128xf32>
    %1319 = vector.shape_cast %1312 : vector<16x128xf32> to vector<1x16x128xf32>
    %cst_222 = arith.constant dense<0.000000e+00> : vector<1xf32>
    %1320 = vector.multi_reduction <add>, %1319, %cst_222 [1, 2] : vector<1x16x128xf32> to vector<1xf32>
    %1321 = vector.shape_cast %1320 : vector<1xf32> to vector<1x1x1xf32>
    %1322 = vector.extract %1321[0, 0, 0] : f32 from vector<1x1x1xf32>
    %cst_223 = arith.constant 2.048000e+03 : f32
    %1323 = arith.divf %1322, %cst_223 : f32
    %1324 = vector.broadcast %1323 : f32 to vector<16x128xf32>
    %1325 = arith.subf %1312, %1324 : vector<16x128xf32>
    %1326 = arith.mulf %1325, %1325 : vector<16x128xf32>
    %1327 = vector.shape_cast %1326 : vector<16x128xf32> to vector<1x16x128xf32>
    %cst_224 = arith.constant dense<0.000000e+00> : vector<1xf32>
    %1328 = vector.multi_reduction <add>, %1327, %cst_224 [1, 2] : vector<1x16x128xf32> to vector<1xf32>
    %1329 = vector.shape_cast %1328 : vector<1xf32> to vector<1x1x1xf32>
    %1330 = vector.extract %1329[0, 0, 0] : f32 from vector<1x1x1xf32>
    %cst_225 = arith.constant 2.048000e+03 : f32
    %1331 = arith.divf %1330, %cst_225 : f32
    %cst_226 = arith.constant 9.99999974E-6 : f32
    %1332 = arith.addf %1331, %cst_226 : f32
    %1333 = math.rsqrt %1332 : f32
    %1334 = vector.broadcast %1333 : f32 to vector<16x128xf32>
    %1335 = arith.mulf %1325, %1334 : vector<16x128xf32>
    %1336 = vector.shape_cast %1314 : vector<128xf32> to vector<1x128xf32>
    %1337 = vector.broadcast %1336 : vector<1x128xf32> to vector<16x128xf32>
    %1338 = arith.mulf %1335, %1337 : vector<16x128xf32>
    %1339 = vector.shape_cast %1316 : vector<128xf32> to vector<1x128xf32>
    %1340 = vector.broadcast %1339 : vector<1x128xf32> to vector<16x128xf32>
    %1341 = arith.addf %1338, %1340 : vector<16x128xf32>
    %cst_227 = arith.constant 0.000000e+00 : f32
    %1342 = vector.broadcast %cst_227 : f32 to vector<16x128xf32>
    %1343 = arith.cmpf ogt, %1341, %1342 : vector<16x128xf32>
    %1344 = vector.shape_cast %1318 : vector<128xf32> to vector<1x128xf32>
    %1345 = vector.broadcast %1344 : vector<1x128xf32> to vector<16x128xf32>
    %1346 = arith.mulf %1345, %1341 : vector<16x128xf32>
    %1347 = arith.select %1343, %1341, %1346 : vector<16x128xi1>, vector<16x128xf32>
    %1348 = vector.extract_strided_slice %2 {offsets = [0, 4, 0], sizes = [1, 1, 128], strides = [1, 1, 1]} : vector<2x6x128xf32> to vector<1x1x128xf32>
    %1349 = vector.shape_cast %1348 : vector<1x1x128xf32> to vector<128xf32>
    %1350 = vector.shape_cast %1349 : vector<128xf32> to vector<1x128xf32>
    %1351 = vector.broadcast %1350 : vector<1x128xf32> to vector<16x128xf32>
    %1352 = arith.addf %1347, %1351 : vector<16x128xf32>
    %1353 = vector.extract_strided_slice %1302 {offsets = [2, 0], sizes = [1, 128], strides = [1, 1]} : vector<9x128xf32> to vector<1x128xf32>
    %1354 = vector.shape_cast %1353 : vector<1x128xf32> to vector<128xf32>
    %1355 = vector.shape_cast %1354 : vector<128xf32> to vector<1x128xf32>
    %1356 = vector.broadcast %1355 : vector<1x128xf32> to vector<16x128xf32>
    %1357 = arith.mulf %1356, %1352 : vector<16x128xf32>
    %1358 = vector.extract_strided_slice %1302 {offsets = [5, 0], sizes = [1, 128], strides = [1, 1]} : vector<9x128xf32> to vector<1x128xf32>
    %1359 = vector.shape_cast %1358 : vector<1x128xf32> to vector<128xf32>
    %1360 = vector.shape_cast %1359 : vector<128xf32> to vector<1x128xf32>
    %1361 = vector.broadcast %1360 : vector<1x128xf32> to vector<16x128xf32>
    %1362 = arith.mulf %1361, %1352 : vector<16x128xf32>
    %1363 = vector.extract_strided_slice %1302 {offsets = [8, 0], sizes = [1, 128], strides = [1, 1]} : vector<9x128xf32> to vector<1x128xf32>
    %1364 = vector.shape_cast %1363 : vector<1x128xf32> to vector<128xf32>
    %1365 = vector.shape_cast %1364 : vector<128xf32> to vector<1x128xf32>
    %1366 = vector.broadcast %1365 : vector<1x128xf32> to vector<16x128xf32>
    %1367 = arith.mulf %1366, %1352 : vector<16x128xf32>
    %c1_i32_228 = arith.constant 1 : i32
    %1368 = tpu.dynamic_rotate %1357 by %c1_i32_228 dim 0 : vector<16x128xf32>, i32 -> vector<16x128xf32>
    %cst_229 = arith.constant 0.000000e+00 : f32
    %1369 = vector.shape_cast %6 : vector<16x1xi1> to vector<16x1xi1>
    %1370 = vector.broadcast %1369 : vector<16x1xi1> to vector<16x128xi1>
    %1371 = vector.broadcast %cst_229 : f32 to vector<16x128xf32>
    %1372 = arith.select %1370, %1368, %1371 : vector<16x128xi1>, vector<16x128xf32>
    %1373 = arith.addf %1362, %1372 : vector<16x128xf32>
    %c15_i32_230 = arith.constant 15 : i32
    %1374 = tpu.dynamic_rotate %1367 by %c15_i32_230 dim 0 : vector<16x128xf32>, i32 -> vector<16x128xf32>
    %cst_231 = arith.constant 0.000000e+00 : f32
    %1375 = vector.shape_cast %8 : vector<16x1xi1> to vector<16x1xi1>
    %1376 = vector.broadcast %1375 : vector<16x1xi1> to vector<16x128xi1>
    %1377 = vector.broadcast %cst_231 : f32 to vector<16x128xf32>
    %1378 = arith.select %1376, %1374, %1377 : vector<16x128xi1>, vector<16x128xf32>
    %1379 = arith.addf %1373, %1378 : vector<16x128xf32>
    %1380 = vector.extract_strided_slice %1300 {offsets = [4, 0], sizes = [1, 128], strides = [1, 1]} : vector<9x128xf32> to vector<1x128xf32>
    %1381 = vector.shape_cast %1380 : vector<1x128xf32> to vector<128xf32>
    %1382 = vector.shape_cast %1381 : vector<128xf32> to vector<1x128xf32>
    %1383 = vector.broadcast %1382 : vector<1x128xf32> to vector<16x128xf32>
    %1384 = arith.addf %1379, %1383 : vector<16x128xf32>
    %1385 = vector.extract_strided_slice %1300 {offsets = [5, 0], sizes = [1, 128], strides = [1, 1]} : vector<9x128xf32> to vector<1x128xf32>
    %1386 = vector.shape_cast %1385 : vector<1x128xf32> to vector<128xf32>
    %1387 = vector.extract_strided_slice %1300 {offsets = [6, 0], sizes = [1, 128], strides = [1, 1]} : vector<9x128xf32> to vector<1x128xf32>
    %1388 = vector.shape_cast %1387 : vector<1x128xf32> to vector<128xf32>
    %1389 = vector.extract_strided_slice %1300 {offsets = [7, 0], sizes = [1, 128], strides = [1, 1]} : vector<9x128xf32> to vector<1x128xf32>
    %1390 = vector.shape_cast %1389 : vector<1x128xf32> to vector<128xf32>
    %1391 = vector.shape_cast %1384 : vector<16x128xf32> to vector<1x16x128xf32>
    %cst_232 = arith.constant dense<0.000000e+00> : vector<1xf32>
    %1392 = vector.multi_reduction <add>, %1391, %cst_232 [1, 2] : vector<1x16x128xf32> to vector<1xf32>
    %1393 = vector.shape_cast %1392 : vector<1xf32> to vector<1x1x1xf32>
    %1394 = vector.extract %1393[0, 0, 0] : f32 from vector<1x1x1xf32>
    %cst_233 = arith.constant 2.048000e+03 : f32
    %1395 = arith.divf %1394, %cst_233 : f32
    %1396 = vector.broadcast %1395 : f32 to vector<16x128xf32>
    %1397 = arith.subf %1384, %1396 : vector<16x128xf32>
    %1398 = arith.mulf %1397, %1397 : vector<16x128xf32>
    %1399 = vector.shape_cast %1398 : vector<16x128xf32> to vector<1x16x128xf32>
    %cst_234 = arith.constant dense<0.000000e+00> : vector<1xf32>
    %1400 = vector.multi_reduction <add>, %1399, %cst_234 [1, 2] : vector<1x16x128xf32> to vector<1xf32>
    %1401 = vector.shape_cast %1400 : vector<1xf32> to vector<1x1x1xf32>
    %1402 = vector.extract %1401[0, 0, 0] : f32 from vector<1x1x1xf32>
    %cst_235 = arith.constant 2.048000e+03 : f32
    %1403 = arith.divf %1402, %cst_235 : f32
    %cst_236 = arith.constant 9.99999974E-6 : f32
    %1404 = arith.addf %1403, %cst_236 : f32
    %1405 = math.rsqrt %1404 : f32
    %1406 = vector.broadcast %1405 : f32 to vector<16x128xf32>
    %1407 = arith.mulf %1397, %1406 : vector<16x128xf32>
    %1408 = vector.shape_cast %1386 : vector<128xf32> to vector<1x128xf32>
    %1409 = vector.broadcast %1408 : vector<1x128xf32> to vector<16x128xf32>
    %1410 = arith.mulf %1407, %1409 : vector<16x128xf32>
    %1411 = vector.shape_cast %1388 : vector<128xf32> to vector<1x128xf32>
    %1412 = vector.broadcast %1411 : vector<1x128xf32> to vector<16x128xf32>
    %1413 = arith.addf %1410, %1412 : vector<16x128xf32>
    %cst_237 = arith.constant 0.000000e+00 : f32
    %1414 = vector.broadcast %cst_237 : f32 to vector<16x128xf32>
    %1415 = arith.cmpf ogt, %1413, %1414 : vector<16x128xf32>
    %1416 = vector.shape_cast %1390 : vector<128xf32> to vector<1x128xf32>
    %1417 = vector.broadcast %1416 : vector<1x128xf32> to vector<16x128xf32>
    %1418 = arith.mulf %1417, %1413 : vector<16x128xf32>
    %1419 = arith.select %1415, %1413, %1418 : vector<16x128xi1>, vector<16x128xf32>
    %1420 = vector.extract_strided_slice %1311 {offsets = [16, 0], sizes = [16, 128], strides = [1, 1]} : vector<32x128xf32> to vector<16x128xf32>
    %1421 = vector.extract_strided_slice %1300 {offsets = [1, 0], sizes = [1, 128], strides = [1, 1]} : vector<9x128xf32> to vector<1x128xf32>
    %1422 = vector.shape_cast %1421 : vector<1x128xf32> to vector<128xf32>
    %1423 = vector.extract_strided_slice %1300 {offsets = [2, 0], sizes = [1, 128], strides = [1, 1]} : vector<9x128xf32> to vector<1x128xf32>
    %1424 = vector.shape_cast %1423 : vector<1x128xf32> to vector<128xf32>
    %1425 = vector.extract_strided_slice %1300 {offsets = [3, 0], sizes = [1, 128], strides = [1, 1]} : vector<9x128xf32> to vector<1x128xf32>
    %1426 = vector.shape_cast %1425 : vector<1x128xf32> to vector<128xf32>
    %1427 = vector.shape_cast %1420 : vector<16x128xf32> to vector<1x16x128xf32>
    %cst_238 = arith.constant dense<0.000000e+00> : vector<1xf32>
    %1428 = vector.multi_reduction <add>, %1427, %cst_238 [1, 2] : vector<1x16x128xf32> to vector<1xf32>
    %1429 = vector.shape_cast %1428 : vector<1xf32> to vector<1x1x1xf32>
    %1430 = vector.extract %1429[0, 0, 0] : f32 from vector<1x1x1xf32>
    %cst_239 = arith.constant 2.048000e+03 : f32
    %1431 = arith.divf %1430, %cst_239 : f32
    %1432 = vector.broadcast %1431 : f32 to vector<16x128xf32>
    %1433 = arith.subf %1420, %1432 : vector<16x128xf32>
    %1434 = arith.mulf %1433, %1433 : vector<16x128xf32>
    %1435 = vector.shape_cast %1434 : vector<16x128xf32> to vector<1x16x128xf32>
    %cst_240 = arith.constant dense<0.000000e+00> : vector<1xf32>
    %1436 = vector.multi_reduction <add>, %1435, %cst_240 [1, 2] : vector<1x16x128xf32> to vector<1xf32>
    %1437 = vector.shape_cast %1436 : vector<1xf32> to vector<1x1x1xf32>
    %1438 = vector.extract %1437[0, 0, 0] : f32 from vector<1x1x1xf32>
    %cst_241 = arith.constant 2.048000e+03 : f32
    %1439 = arith.divf %1438, %cst_241 : f32
    %cst_242 = arith.constant 9.99999974E-6 : f32
    %1440 = arith.addf %1439, %cst_242 : f32
    %1441 = math.rsqrt %1440 : f32
    %1442 = vector.broadcast %1441 : f32 to vector<16x128xf32>
    %1443 = arith.mulf %1433, %1442 : vector<16x128xf32>
    %1444 = vector.shape_cast %1422 : vector<128xf32> to vector<1x128xf32>
    %1445 = vector.broadcast %1444 : vector<1x128xf32> to vector<16x128xf32>
    %1446 = arith.mulf %1443, %1445 : vector<16x128xf32>
    %1447 = vector.shape_cast %1424 : vector<128xf32> to vector<1x128xf32>
    %1448 = vector.broadcast %1447 : vector<1x128xf32> to vector<16x128xf32>
    %1449 = arith.addf %1446, %1448 : vector<16x128xf32>
    %cst_243 = arith.constant 0.000000e+00 : f32
    %1450 = vector.broadcast %cst_243 : f32 to vector<16x128xf32>
    %1451 = arith.cmpf ogt, %1449, %1450 : vector<16x128xf32>
    %1452 = vector.shape_cast %1426 : vector<128xf32> to vector<1x128xf32>
    %1453 = vector.broadcast %1452 : vector<1x128xf32> to vector<16x128xf32>
    %1454 = arith.mulf %1453, %1449 : vector<16x128xf32>
    %1455 = arith.select %1451, %1449, %1454 : vector<16x128xi1>, vector<16x128xf32>
    %1456 = vector.extract_strided_slice %2 {offsets = [1, 4, 0], sizes = [1, 1, 128], strides = [1, 1, 1]} : vector<2x6x128xf32> to vector<1x1x128xf32>
    %1457 = vector.shape_cast %1456 : vector<1x1x128xf32> to vector<128xf32>
    %1458 = vector.shape_cast %1457 : vector<128xf32> to vector<1x128xf32>
    %1459 = vector.broadcast %1458 : vector<1x128xf32> to vector<16x128xf32>
    %1460 = arith.addf %1455, %1459 : vector<16x128xf32>
    %1461 = vector.extract_strided_slice %1302 {offsets = [2, 0], sizes = [1, 128], strides = [1, 1]} : vector<9x128xf32> to vector<1x128xf32>
    %1462 = vector.shape_cast %1461 : vector<1x128xf32> to vector<128xf32>
    %1463 = vector.shape_cast %1462 : vector<128xf32> to vector<1x128xf32>
    %1464 = vector.broadcast %1463 : vector<1x128xf32> to vector<16x128xf32>
    %1465 = arith.mulf %1464, %1460 : vector<16x128xf32>
    %1466 = vector.extract_strided_slice %1302 {offsets = [5, 0], sizes = [1, 128], strides = [1, 1]} : vector<9x128xf32> to vector<1x128xf32>
    %1467 = vector.shape_cast %1466 : vector<1x128xf32> to vector<128xf32>
    %1468 = vector.shape_cast %1467 : vector<128xf32> to vector<1x128xf32>
    %1469 = vector.broadcast %1468 : vector<1x128xf32> to vector<16x128xf32>
    %1470 = arith.mulf %1469, %1460 : vector<16x128xf32>
    %1471 = vector.extract_strided_slice %1302 {offsets = [8, 0], sizes = [1, 128], strides = [1, 1]} : vector<9x128xf32> to vector<1x128xf32>
    %1472 = vector.shape_cast %1471 : vector<1x128xf32> to vector<128xf32>
    %1473 = vector.shape_cast %1472 : vector<128xf32> to vector<1x128xf32>
    %1474 = vector.broadcast %1473 : vector<1x128xf32> to vector<16x128xf32>
    %1475 = arith.mulf %1474, %1460 : vector<16x128xf32>
    %c1_i32_244 = arith.constant 1 : i32
    %1476 = tpu.dynamic_rotate %1465 by %c1_i32_244 dim 0 : vector<16x128xf32>, i32 -> vector<16x128xf32>
    %cst_245 = arith.constant 0.000000e+00 : f32
    %1477 = vector.shape_cast %6 : vector<16x1xi1> to vector<16x1xi1>
    %1478 = vector.broadcast %1477 : vector<16x1xi1> to vector<16x128xi1>
    %1479 = vector.broadcast %cst_245 : f32 to vector<16x128xf32>
    %1480 = arith.select %1478, %1476, %1479 : vector<16x128xi1>, vector<16x128xf32>
    %1481 = arith.addf %1470, %1480 : vector<16x128xf32>
    %c15_i32_246 = arith.constant 15 : i32
    %1482 = tpu.dynamic_rotate %1475 by %c15_i32_246 dim 0 : vector<16x128xf32>, i32 -> vector<16x128xf32>
    %cst_247 = arith.constant 0.000000e+00 : f32
    %1483 = vector.shape_cast %8 : vector<16x1xi1> to vector<16x1xi1>
    %1484 = vector.broadcast %1483 : vector<16x1xi1> to vector<16x128xi1>
    %1485 = vector.broadcast %cst_247 : f32 to vector<16x128xf32>
    %1486 = arith.select %1484, %1482, %1485 : vector<16x128xi1>, vector<16x128xf32>
    %1487 = arith.addf %1481, %1486 : vector<16x128xf32>
    %1488 = vector.extract_strided_slice %1300 {offsets = [4, 0], sizes = [1, 128], strides = [1, 1]} : vector<9x128xf32> to vector<1x128xf32>
    %1489 = vector.shape_cast %1488 : vector<1x128xf32> to vector<128xf32>
    %1490 = vector.shape_cast %1489 : vector<128xf32> to vector<1x128xf32>
    %1491 = vector.broadcast %1490 : vector<1x128xf32> to vector<16x128xf32>
    %1492 = arith.addf %1487, %1491 : vector<16x128xf32>
    %1493 = vector.extract_strided_slice %1300 {offsets = [5, 0], sizes = [1, 128], strides = [1, 1]} : vector<9x128xf32> to vector<1x128xf32>
    %1494 = vector.shape_cast %1493 : vector<1x128xf32> to vector<128xf32>
    %1495 = vector.extract_strided_slice %1300 {offsets = [6, 0], sizes = [1, 128], strides = [1, 1]} : vector<9x128xf32> to vector<1x128xf32>
    %1496 = vector.shape_cast %1495 : vector<1x128xf32> to vector<128xf32>
    %1497 = vector.extract_strided_slice %1300 {offsets = [7, 0], sizes = [1, 128], strides = [1, 1]} : vector<9x128xf32> to vector<1x128xf32>
    %1498 = vector.shape_cast %1497 : vector<1x128xf32> to vector<128xf32>
    %1499 = vector.shape_cast %1492 : vector<16x128xf32> to vector<1x16x128xf32>
    %cst_248 = arith.constant dense<0.000000e+00> : vector<1xf32>
    %1500 = vector.multi_reduction <add>, %1499, %cst_248 [1, 2] : vector<1x16x128xf32> to vector<1xf32>
    %1501 = vector.shape_cast %1500 : vector<1xf32> to vector<1x1x1xf32>
    %1502 = vector.extract %1501[0, 0, 0] : f32 from vector<1x1x1xf32>
    %cst_249 = arith.constant 2.048000e+03 : f32
    %1503 = arith.divf %1502, %cst_249 : f32
    %1504 = vector.broadcast %1503 : f32 to vector<16x128xf32>
    %1505 = arith.subf %1492, %1504 : vector<16x128xf32>
    %1506 = arith.mulf %1505, %1505 : vector<16x128xf32>
    %1507 = vector.shape_cast %1506 : vector<16x128xf32> to vector<1x16x128xf32>
    %cst_250 = arith.constant dense<0.000000e+00> : vector<1xf32>
    %1508 = vector.multi_reduction <add>, %1507, %cst_250 [1, 2] : vector<1x16x128xf32> to vector<1xf32>
    %1509 = vector.shape_cast %1508 : vector<1xf32> to vector<1x1x1xf32>
    %1510 = vector.extract %1509[0, 0, 0] : f32 from vector<1x1x1xf32>
    %cst_251 = arith.constant 2.048000e+03 : f32
    %1511 = arith.divf %1510, %cst_251 : f32
    %cst_252 = arith.constant 9.99999974E-6 : f32
    %1512 = arith.addf %1511, %cst_252 : f32
    %1513 = math.rsqrt %1512 : f32
    %1514 = vector.broadcast %1513 : f32 to vector<16x128xf32>
    %1515 = arith.mulf %1505, %1514 : vector<16x128xf32>
    %1516 = vector.shape_cast %1494 : vector<128xf32> to vector<1x128xf32>
    %1517 = vector.broadcast %1516 : vector<1x128xf32> to vector<16x128xf32>
    %1518 = arith.mulf %1515, %1517 : vector<16x128xf32>
    %1519 = vector.shape_cast %1496 : vector<128xf32> to vector<1x128xf32>
    %1520 = vector.broadcast %1519 : vector<1x128xf32> to vector<16x128xf32>
    %1521 = arith.addf %1518, %1520 : vector<16x128xf32>
    %cst_253 = arith.constant 0.000000e+00 : f32
    %1522 = vector.broadcast %cst_253 : f32 to vector<16x128xf32>
    %1523 = arith.cmpf ogt, %1521, %1522 : vector<16x128xf32>
    %1524 = vector.shape_cast %1498 : vector<128xf32> to vector<1x128xf32>
    %1525 = vector.broadcast %1524 : vector<1x128xf32> to vector<16x128xf32>
    %1526 = arith.mulf %1525, %1521 : vector<16x128xf32>
    %1527 = arith.select %1523, %1521, %1526 : vector<16x128xi1>, vector<16x128xf32>
    %1528 = tpu.concatenate %1419, %1527 in 0 : vector<16x128xf32>, vector<16x128xf32> -> vector<32x128xf32>
    %1529 = arith.truncf %1528 : vector<32x128xf32> to vector<32x128xbf16>
    %c4_254 = arith.constant 4 : index
    %c0_255 = arith.constant 0 : index
    %c0_256 = arith.constant 0 : index
    %1530 = vector.load %arg4[%c4_254, %c0_255, %c0_256] : memref<6x128x128xbf16, #tpu.memory_space<vmem>>, vector<1x128x128xbf16>
    %1531 = vector.shape_cast %1530 : vector<1x128x128xbf16> to vector<128x128xbf16>
    %cst_257 = arith.constant dense<0.000000e+00> : vector<32x128xf32>
    %1532 = tpu.matmul %1529, %1531, %cst_257 {dimension_numbers = #tpu.dot_dimension_numbers<[1], [0], [0], [1], [0, 0, 1, 1], [], []>} : vector<32x128xbf16>, vector<128x128xbf16>, vector<32x128xf32> -> vector<32x128xf32>
    %1533 = vector.extract_strided_slice %1300 {offsets = [8, 0], sizes = [1, 128], strides = [1, 1]} : vector<9x128xf32> to vector<1x128xf32>
    %1534 = vector.shape_cast %1533 : vector<1x128xf32> to vector<128xf32>
    %1535 = vector.shape_cast %1534 : vector<128xf32> to vector<1x128xf32>
    %1536 = vector.broadcast %1535 : vector<1x128xf32> to vector<32x128xf32>
    %1537 = arith.addf %1532, %1536 : vector<32x128xf32>
    %1538 = arith.addf %1537, %1298 : vector<32x128xf32>
    %c5 = arith.constant 5 : index
    %c0_258 = arith.constant 0 : index
    %c0_259 = arith.constant 0 : index
    %1539 = vector.load %arg6[%c5, %c0_258, %c0_259] : memref<6x9x128xf32, #tpu.memory_space<vmem>>, vector<1x9x128xf32>
    %1540 = vector.shape_cast %1539 : vector<1x9x128xf32> to vector<9x128xf32>
    %c5_260 = arith.constant 5 : index
    %c0_261 = arith.constant 0 : index
    %c0_262 = arith.constant 0 : index
    %1541 = vector.load %arg5[%c5_260, %c0_261, %c0_262] : memref<6x9x128xf32, #tpu.memory_space<vmem>>, vector<1x9x128xf32>
    %1542 = vector.shape_cast %1541 : vector<1x9x128xf32> to vector<9x128xf32>
    %1543 = arith.truncf %1538 : vector<32x128xf32> to vector<32x128xbf16>
    %c5_263 = arith.constant 5 : index
    %c0_264 = arith.constant 0 : index
    %c0_265 = arith.constant 0 : index
    %1544 = vector.load %arg3[%c5_263, %c0_264, %c0_265] : memref<6x128x128xbf16, #tpu.memory_space<vmem>>, vector<1x128x128xbf16>
    %1545 = vector.shape_cast %1544 : vector<1x128x128xbf16> to vector<128x128xbf16>
    %cst_266 = arith.constant dense<0.000000e+00> : vector<32x128xf32>
    %1546 = tpu.matmul %1543, %1545, %cst_266 {dimension_numbers = #tpu.dot_dimension_numbers<[1], [0], [0], [1], [0, 0, 1, 1], [], []>} : vector<32x128xbf16>, vector<128x128xbf16>, vector<32x128xf32> -> vector<32x128xf32>
    %1547 = vector.extract_strided_slice %1540 {offsets = [0, 0], sizes = [1, 128], strides = [1, 1]} : vector<9x128xf32> to vector<1x128xf32>
    %1548 = vector.shape_cast %1547 : vector<1x128xf32> to vector<128xf32>
    %1549 = vector.shape_cast %1548 : vector<128xf32> to vector<1x128xf32>
    %1550 = vector.broadcast %1549 : vector<1x128xf32> to vector<32x128xf32>
    %1551 = arith.addf %1546, %1550 : vector<32x128xf32>
    %1552 = vector.extract_strided_slice %1551 {offsets = [0, 0], sizes = [16, 128], strides = [1, 1]} : vector<32x128xf32> to vector<16x128xf32>
    %1553 = vector.extract_strided_slice %1540 {offsets = [1, 0], sizes = [1, 128], strides = [1, 1]} : vector<9x128xf32> to vector<1x128xf32>
    %1554 = vector.shape_cast %1553 : vector<1x128xf32> to vector<128xf32>
    %1555 = vector.extract_strided_slice %1540 {offsets = [2, 0], sizes = [1, 128], strides = [1, 1]} : vector<9x128xf32> to vector<1x128xf32>
    %1556 = vector.shape_cast %1555 : vector<1x128xf32> to vector<128xf32>
    %1557 = vector.extract_strided_slice %1540 {offsets = [3, 0], sizes = [1, 128], strides = [1, 1]} : vector<9x128xf32> to vector<1x128xf32>
    %1558 = vector.shape_cast %1557 : vector<1x128xf32> to vector<128xf32>
    %1559 = vector.shape_cast %1552 : vector<16x128xf32> to vector<1x16x128xf32>
    %cst_267 = arith.constant dense<0.000000e+00> : vector<1xf32>
    %1560 = vector.multi_reduction <add>, %1559, %cst_267 [1, 2] : vector<1x16x128xf32> to vector<1xf32>
    %1561 = vector.shape_cast %1560 : vector<1xf32> to vector<1x1x1xf32>
    %1562 = vector.extract %1561[0, 0, 0] : f32 from vector<1x1x1xf32>
    %cst_268 = arith.constant 2.048000e+03 : f32
    %1563 = arith.divf %1562, %cst_268 : f32
    %1564 = vector.broadcast %1563 : f32 to vector<16x128xf32>
    %1565 = arith.subf %1552, %1564 : vector<16x128xf32>
    %1566 = arith.mulf %1565, %1565 : vector<16x128xf32>
    %1567 = vector.shape_cast %1566 : vector<16x128xf32> to vector<1x16x128xf32>
    %cst_269 = arith.constant dense<0.000000e+00> : vector<1xf32>
    %1568 = vector.multi_reduction <add>, %1567, %cst_269 [1, 2] : vector<1x16x128xf32> to vector<1xf32>
    %1569 = vector.shape_cast %1568 : vector<1xf32> to vector<1x1x1xf32>
    %1570 = vector.extract %1569[0, 0, 0] : f32 from vector<1x1x1xf32>
    %cst_270 = arith.constant 2.048000e+03 : f32
    %1571 = arith.divf %1570, %cst_270 : f32
    %cst_271 = arith.constant 9.99999974E-6 : f32
    %1572 = arith.addf %1571, %cst_271 : f32
    %1573 = math.rsqrt %1572 : f32
    %1574 = vector.broadcast %1573 : f32 to vector<16x128xf32>
    %1575 = arith.mulf %1565, %1574 : vector<16x128xf32>
    %1576 = vector.shape_cast %1554 : vector<128xf32> to vector<1x128xf32>
    %1577 = vector.broadcast %1576 : vector<1x128xf32> to vector<16x128xf32>
    %1578 = arith.mulf %1575, %1577 : vector<16x128xf32>
    %1579 = vector.shape_cast %1556 : vector<128xf32> to vector<1x128xf32>
    %1580 = vector.broadcast %1579 : vector<1x128xf32> to vector<16x128xf32>
    %1581 = arith.addf %1578, %1580 : vector<16x128xf32>
    %cst_272 = arith.constant 0.000000e+00 : f32
    %1582 = vector.broadcast %cst_272 : f32 to vector<16x128xf32>
    %1583 = arith.cmpf ogt, %1581, %1582 : vector<16x128xf32>
    %1584 = vector.shape_cast %1558 : vector<128xf32> to vector<1x128xf32>
    %1585 = vector.broadcast %1584 : vector<1x128xf32> to vector<16x128xf32>
    %1586 = arith.mulf %1585, %1581 : vector<16x128xf32>
    %1587 = arith.select %1583, %1581, %1586 : vector<16x128xi1>, vector<16x128xf32>
    %1588 = vector.extract_strided_slice %2 {offsets = [0, 5, 0], sizes = [1, 1, 128], strides = [1, 1, 1]} : vector<2x6x128xf32> to vector<1x1x128xf32>
    %1589 = vector.shape_cast %1588 : vector<1x1x128xf32> to vector<128xf32>
    %1590 = vector.shape_cast %1589 : vector<128xf32> to vector<1x128xf32>
    %1591 = vector.broadcast %1590 : vector<1x128xf32> to vector<16x128xf32>
    %1592 = arith.addf %1587, %1591 : vector<16x128xf32>
    %1593 = vector.extract_strided_slice %1542 {offsets = [2, 0], sizes = [1, 128], strides = [1, 1]} : vector<9x128xf32> to vector<1x128xf32>
    %1594 = vector.shape_cast %1593 : vector<1x128xf32> to vector<128xf32>
    %1595 = vector.shape_cast %1594 : vector<128xf32> to vector<1x128xf32>
    %1596 = vector.broadcast %1595 : vector<1x128xf32> to vector<16x128xf32>
    %1597 = arith.mulf %1596, %1592 : vector<16x128xf32>
    %1598 = vector.extract_strided_slice %1542 {offsets = [5, 0], sizes = [1, 128], strides = [1, 1]} : vector<9x128xf32> to vector<1x128xf32>
    %1599 = vector.shape_cast %1598 : vector<1x128xf32> to vector<128xf32>
    %1600 = vector.shape_cast %1599 : vector<128xf32> to vector<1x128xf32>
    %1601 = vector.broadcast %1600 : vector<1x128xf32> to vector<16x128xf32>
    %1602 = arith.mulf %1601, %1592 : vector<16x128xf32>
    %1603 = vector.extract_strided_slice %1542 {offsets = [8, 0], sizes = [1, 128], strides = [1, 1]} : vector<9x128xf32> to vector<1x128xf32>
    %1604 = vector.shape_cast %1603 : vector<1x128xf32> to vector<128xf32>
    %1605 = vector.shape_cast %1604 : vector<128xf32> to vector<1x128xf32>
    %1606 = vector.broadcast %1605 : vector<1x128xf32> to vector<16x128xf32>
    %1607 = arith.mulf %1606, %1592 : vector<16x128xf32>
    %c1_i32_273 = arith.constant 1 : i32
    %1608 = tpu.dynamic_rotate %1597 by %c1_i32_273 dim 0 : vector<16x128xf32>, i32 -> vector<16x128xf32>
    %cst_274 = arith.constant 0.000000e+00 : f32
    %1609 = vector.shape_cast %6 : vector<16x1xi1> to vector<16x1xi1>
    %1610 = vector.broadcast %1609 : vector<16x1xi1> to vector<16x128xi1>
    %1611 = vector.broadcast %cst_274 : f32 to vector<16x128xf32>
    %1612 = arith.select %1610, %1608, %1611 : vector<16x128xi1>, vector<16x128xf32>
    %1613 = arith.addf %1602, %1612 : vector<16x128xf32>
    %c15_i32_275 = arith.constant 15 : i32
    %1614 = tpu.dynamic_rotate %1607 by %c15_i32_275 dim 0 : vector<16x128xf32>, i32 -> vector<16x128xf32>
    %cst_276 = arith.constant 0.000000e+00 : f32
    %1615 = vector.shape_cast %8 : vector<16x1xi1> to vector<16x1xi1>
    %1616 = vector.broadcast %1615 : vector<16x1xi1> to vector<16x128xi1>
    %1617 = vector.broadcast %cst_276 : f32 to vector<16x128xf32>
    %1618 = arith.select %1616, %1614, %1617 : vector<16x128xi1>, vector<16x128xf32>
    %1619 = arith.addf %1613, %1618 : vector<16x128xf32>
    %1620 = vector.extract_strided_slice %1540 {offsets = [4, 0], sizes = [1, 128], strides = [1, 1]} : vector<9x128xf32> to vector<1x128xf32>
    %1621 = vector.shape_cast %1620 : vector<1x128xf32> to vector<128xf32>
    %1622 = vector.shape_cast %1621 : vector<128xf32> to vector<1x128xf32>
    %1623 = vector.broadcast %1622 : vector<1x128xf32> to vector<16x128xf32>
    %1624 = arith.addf %1619, %1623 : vector<16x128xf32>
    %1625 = vector.extract_strided_slice %1540 {offsets = [5, 0], sizes = [1, 128], strides = [1, 1]} : vector<9x128xf32> to vector<1x128xf32>
    %1626 = vector.shape_cast %1625 : vector<1x128xf32> to vector<128xf32>
    %1627 = vector.extract_strided_slice %1540 {offsets = [6, 0], sizes = [1, 128], strides = [1, 1]} : vector<9x128xf32> to vector<1x128xf32>
    %1628 = vector.shape_cast %1627 : vector<1x128xf32> to vector<128xf32>
    %1629 = vector.extract_strided_slice %1540 {offsets = [7, 0], sizes = [1, 128], strides = [1, 1]} : vector<9x128xf32> to vector<1x128xf32>
    %1630 = vector.shape_cast %1629 : vector<1x128xf32> to vector<128xf32>
    %1631 = vector.shape_cast %1624 : vector<16x128xf32> to vector<1x16x128xf32>
    %cst_277 = arith.constant dense<0.000000e+00> : vector<1xf32>
    %1632 = vector.multi_reduction <add>, %1631, %cst_277 [1, 2] : vector<1x16x128xf32> to vector<1xf32>
    %1633 = vector.shape_cast %1632 : vector<1xf32> to vector<1x1x1xf32>
    %1634 = vector.extract %1633[0, 0, 0] : f32 from vector<1x1x1xf32>
    %cst_278 = arith.constant 2.048000e+03 : f32
    %1635 = arith.divf %1634, %cst_278 : f32
    %1636 = vector.broadcast %1635 : f32 to vector<16x128xf32>
    %1637 = arith.subf %1624, %1636 : vector<16x128xf32>
    %1638 = arith.mulf %1637, %1637 : vector<16x128xf32>
    %1639 = vector.shape_cast %1638 : vector<16x128xf32> to vector<1x16x128xf32>
    %cst_279 = arith.constant dense<0.000000e+00> : vector<1xf32>
    %1640 = vector.multi_reduction <add>, %1639, %cst_279 [1, 2] : vector<1x16x128xf32> to vector<1xf32>
    %1641 = vector.shape_cast %1640 : vector<1xf32> to vector<1x1x1xf32>
    %1642 = vector.extract %1641[0, 0, 0] : f32 from vector<1x1x1xf32>
    %cst_280 = arith.constant 2.048000e+03 : f32
    %1643 = arith.divf %1642, %cst_280 : f32
    %cst_281 = arith.constant 9.99999974E-6 : f32
    %1644 = arith.addf %1643, %cst_281 : f32
    %1645 = math.rsqrt %1644 : f32
    %1646 = vector.broadcast %1645 : f32 to vector<16x128xf32>
    %1647 = arith.mulf %1637, %1646 : vector<16x128xf32>
    %1648 = vector.shape_cast %1626 : vector<128xf32> to vector<1x128xf32>
    %1649 = vector.broadcast %1648 : vector<1x128xf32> to vector<16x128xf32>
    %1650 = arith.mulf %1647, %1649 : vector<16x128xf32>
    %1651 = vector.shape_cast %1628 : vector<128xf32> to vector<1x128xf32>
    %1652 = vector.broadcast %1651 : vector<1x128xf32> to vector<16x128xf32>
    %1653 = arith.addf %1650, %1652 : vector<16x128xf32>
    %cst_282 = arith.constant 0.000000e+00 : f32
    %1654 = vector.broadcast %cst_282 : f32 to vector<16x128xf32>
    %1655 = arith.cmpf ogt, %1653, %1654 : vector<16x128xf32>
    %1656 = vector.shape_cast %1630 : vector<128xf32> to vector<1x128xf32>
    %1657 = vector.broadcast %1656 : vector<1x128xf32> to vector<16x128xf32>
    %1658 = arith.mulf %1657, %1653 : vector<16x128xf32>
    %1659 = arith.select %1655, %1653, %1658 : vector<16x128xi1>, vector<16x128xf32>
    %1660 = vector.extract_strided_slice %1551 {offsets = [16, 0], sizes = [16, 128], strides = [1, 1]} : vector<32x128xf32> to vector<16x128xf32>
    %1661 = vector.extract_strided_slice %1540 {offsets = [1, 0], sizes = [1, 128], strides = [1, 1]} : vector<9x128xf32> to vector<1x128xf32>
    %1662 = vector.shape_cast %1661 : vector<1x128xf32> to vector<128xf32>
    %1663 = vector.extract_strided_slice %1540 {offsets = [2, 0], sizes = [1, 128], strides = [1, 1]} : vector<9x128xf32> to vector<1x128xf32>
    %1664 = vector.shape_cast %1663 : vector<1x128xf32> to vector<128xf32>
    %1665 = vector.extract_strided_slice %1540 {offsets = [3, 0], sizes = [1, 128], strides = [1, 1]} : vector<9x128xf32> to vector<1x128xf32>
    %1666 = vector.shape_cast %1665 : vector<1x128xf32> to vector<128xf32>
    %1667 = vector.shape_cast %1660 : vector<16x128xf32> to vector<1x16x128xf32>
    %cst_283 = arith.constant dense<0.000000e+00> : vector<1xf32>
    %1668 = vector.multi_reduction <add>, %1667, %cst_283 [1, 2] : vector<1x16x128xf32> to vector<1xf32>
    %1669 = vector.shape_cast %1668 : vector<1xf32> to vector<1x1x1xf32>
    %1670 = vector.extract %1669[0, 0, 0] : f32 from vector<1x1x1xf32>
    %cst_284 = arith.constant 2.048000e+03 : f32
    %1671 = arith.divf %1670, %cst_284 : f32
    %1672 = vector.broadcast %1671 : f32 to vector<16x128xf32>
    %1673 = arith.subf %1660, %1672 : vector<16x128xf32>
    %1674 = arith.mulf %1673, %1673 : vector<16x128xf32>
    %1675 = vector.shape_cast %1674 : vector<16x128xf32> to vector<1x16x128xf32>
    %cst_285 = arith.constant dense<0.000000e+00> : vector<1xf32>
    %1676 = vector.multi_reduction <add>, %1675, %cst_285 [1, 2] : vector<1x16x128xf32> to vector<1xf32>
    %1677 = vector.shape_cast %1676 : vector<1xf32> to vector<1x1x1xf32>
    %1678 = vector.extract %1677[0, 0, 0] : f32 from vector<1x1x1xf32>
    %cst_286 = arith.constant 2.048000e+03 : f32
    %1679 = arith.divf %1678, %cst_286 : f32
    %cst_287 = arith.constant 9.99999974E-6 : f32
    %1680 = arith.addf %1679, %cst_287 : f32
    %1681 = math.rsqrt %1680 : f32
    %1682 = vector.broadcast %1681 : f32 to vector<16x128xf32>
    %1683 = arith.mulf %1673, %1682 : vector<16x128xf32>
    %1684 = vector.shape_cast %1662 : vector<128xf32> to vector<1x128xf32>
    %1685 = vector.broadcast %1684 : vector<1x128xf32> to vector<16x128xf32>
    %1686 = arith.mulf %1683, %1685 : vector<16x128xf32>
    %1687 = vector.shape_cast %1664 : vector<128xf32> to vector<1x128xf32>
    %1688 = vector.broadcast %1687 : vector<1x128xf32> to vector<16x128xf32>
    %1689 = arith.addf %1686, %1688 : vector<16x128xf32>
    %cst_288 = arith.constant 0.000000e+00 : f32
    %1690 = vector.broadcast %cst_288 : f32 to vector<16x128xf32>
    %1691 = arith.cmpf ogt, %1689, %1690 : vector<16x128xf32>
    %1692 = vector.shape_cast %1666 : vector<128xf32> to vector<1x128xf32>
    %1693 = vector.broadcast %1692 : vector<1x128xf32> to vector<16x128xf32>
    %1694 = arith.mulf %1693, %1689 : vector<16x128xf32>
    %1695 = arith.select %1691, %1689, %1694 : vector<16x128xi1>, vector<16x128xf32>
    %1696 = vector.extract_strided_slice %2 {offsets = [1, 5, 0], sizes = [1, 1, 128], strides = [1, 1, 1]} : vector<2x6x128xf32> to vector<1x1x128xf32>
    %1697 = vector.shape_cast %1696 : vector<1x1x128xf32> to vector<128xf32>
    %1698 = vector.shape_cast %1697 : vector<128xf32> to vector<1x128xf32>
    %1699 = vector.broadcast %1698 : vector<1x128xf32> to vector<16x128xf32>
    %1700 = arith.addf %1695, %1699 : vector<16x128xf32>
    %1701 = vector.extract_strided_slice %1542 {offsets = [2, 0], sizes = [1, 128], strides = [1, 1]} : vector<9x128xf32> to vector<1x128xf32>
    %1702 = vector.shape_cast %1701 : vector<1x128xf32> to vector<128xf32>
    %1703 = vector.shape_cast %1702 : vector<128xf32> to vector<1x128xf32>
    %1704 = vector.broadcast %1703 : vector<1x128xf32> to vector<16x128xf32>
    %1705 = arith.mulf %1704, %1700 : vector<16x128xf32>
    %1706 = vector.extract_strided_slice %1542 {offsets = [5, 0], sizes = [1, 128], strides = [1, 1]} : vector<9x128xf32> to vector<1x128xf32>
    %1707 = vector.shape_cast %1706 : vector<1x128xf32> to vector<128xf32>
    %1708 = vector.shape_cast %1707 : vector<128xf32> to vector<1x128xf32>
    %1709 = vector.broadcast %1708 : vector<1x128xf32> to vector<16x128xf32>
    %1710 = arith.mulf %1709, %1700 : vector<16x128xf32>
    %1711 = vector.extract_strided_slice %1542 {offsets = [8, 0], sizes = [1, 128], strides = [1, 1]} : vector<9x128xf32> to vector<1x128xf32>
    %1712 = vector.shape_cast %1711 : vector<1x128xf32> to vector<128xf32>
    %1713 = vector.shape_cast %1712 : vector<128xf32> to vector<1x128xf32>
    %1714 = vector.broadcast %1713 : vector<1x128xf32> to vector<16x128xf32>
    %1715 = arith.mulf %1714, %1700 : vector<16x128xf32>
    %c1_i32_289 = arith.constant 1 : i32
    %1716 = tpu.dynamic_rotate %1705 by %c1_i32_289 dim 0 : vector<16x128xf32>, i32 -> vector<16x128xf32>
    %cst_290 = arith.constant 0.000000e+00 : f32
    %1717 = vector.shape_cast %6 : vector<16x1xi1> to vector<16x1xi1>
    %1718 = vector.broadcast %1717 : vector<16x1xi1> to vector<16x128xi1>
    %1719 = vector.broadcast %cst_290 : f32 to vector<16x128xf32>
    %1720 = arith.select %1718, %1716, %1719 : vector<16x128xi1>, vector<16x128xf32>
    %1721 = arith.addf %1710, %1720 : vector<16x128xf32>
    %c15_i32_291 = arith.constant 15 : i32
    %1722 = tpu.dynamic_rotate %1715 by %c15_i32_291 dim 0 : vector<16x128xf32>, i32 -> vector<16x128xf32>
    %cst_292 = arith.constant 0.000000e+00 : f32
    %1723 = vector.shape_cast %8 : vector<16x1xi1> to vector<16x1xi1>
    %1724 = vector.broadcast %1723 : vector<16x1xi1> to vector<16x128xi1>
    %1725 = vector.broadcast %cst_292 : f32 to vector<16x128xf32>
    %1726 = arith.select %1724, %1722, %1725 : vector<16x128xi1>, vector<16x128xf32>
    %1727 = arith.addf %1721, %1726 : vector<16x128xf32>
    %1728 = vector.extract_strided_slice %1540 {offsets = [4, 0], sizes = [1, 128], strides = [1, 1]} : vector<9x128xf32> to vector<1x128xf32>
    %1729 = vector.shape_cast %1728 : vector<1x128xf32> to vector<128xf32>
    %1730 = vector.shape_cast %1729 : vector<128xf32> to vector<1x128xf32>
    %1731 = vector.broadcast %1730 : vector<1x128xf32> to vector<16x128xf32>
    %1732 = arith.addf %1727, %1731 : vector<16x128xf32>
    %1733 = vector.extract_strided_slice %1540 {offsets = [5, 0], sizes = [1, 128], strides = [1, 1]} : vector<9x128xf32> to vector<1x128xf32>
    %1734 = vector.shape_cast %1733 : vector<1x128xf32> to vector<128xf32>
    %1735 = vector.extract_strided_slice %1540 {offsets = [6, 0], sizes = [1, 128], strides = [1, 1]} : vector<9x128xf32> to vector<1x128xf32>
    %1736 = vector.shape_cast %1735 : vector<1x128xf32> to vector<128xf32>
    %1737 = vector.extract_strided_slice %1540 {offsets = [7, 0], sizes = [1, 128], strides = [1, 1]} : vector<9x128xf32> to vector<1x128xf32>
    %1738 = vector.shape_cast %1737 : vector<1x128xf32> to vector<128xf32>
    %1739 = vector.shape_cast %1732 : vector<16x128xf32> to vector<1x16x128xf32>
    %cst_293 = arith.constant dense<0.000000e+00> : vector<1xf32>
    %1740 = vector.multi_reduction <add>, %1739, %cst_293 [1, 2] : vector<1x16x128xf32> to vector<1xf32>
    %1741 = vector.shape_cast %1740 : vector<1xf32> to vector<1x1x1xf32>
    %1742 = vector.extract %1741[0, 0, 0] : f32 from vector<1x1x1xf32>
    %cst_294 = arith.constant 2.048000e+03 : f32
    %1743 = arith.divf %1742, %cst_294 : f32
    %1744 = vector.broadcast %1743 : f32 to vector<16x128xf32>
    %1745 = arith.subf %1732, %1744 : vector<16x128xf32>
    %1746 = arith.mulf %1745, %1745 : vector<16x128xf32>
    %1747 = vector.shape_cast %1746 : vector<16x128xf32> to vector<1x16x128xf32>
    %cst_295 = arith.constant dense<0.000000e+00> : vector<1xf32>
    %1748 = vector.multi_reduction <add>, %1747, %cst_295 [1, 2] : vector<1x16x128xf32> to vector<1xf32>
    %1749 = vector.shape_cast %1748 : vector<1xf32> to vector<1x1x1xf32>
    %1750 = vector.extract %1749[0, 0, 0] : f32 from vector<1x1x1xf32>
    %cst_296 = arith.constant 2.048000e+03 : f32
    %1751 = arith.divf %1750, %cst_296 : f32
    %cst_297 = arith.constant 9.99999974E-6 : f32
    %1752 = arith.addf %1751, %cst_297 : f32
    %1753 = math.rsqrt %1752 : f32
    %1754 = vector.broadcast %1753 : f32 to vector<16x128xf32>
    %1755 = arith.mulf %1745, %1754 : vector<16x128xf32>
    %1756 = vector.shape_cast %1734 : vector<128xf32> to vector<1x128xf32>
    %1757 = vector.broadcast %1756 : vector<1x128xf32> to vector<16x128xf32>
    %1758 = arith.mulf %1755, %1757 : vector<16x128xf32>
    %1759 = vector.shape_cast %1736 : vector<128xf32> to vector<1x128xf32>
    %1760 = vector.broadcast %1759 : vector<1x128xf32> to vector<16x128xf32>
    %1761 = arith.addf %1758, %1760 : vector<16x128xf32>
    %cst_298 = arith.constant 0.000000e+00 : f32
    %1762 = vector.broadcast %cst_298 : f32 to vector<16x128xf32>
    %1763 = arith.cmpf ogt, %1761, %1762 : vector<16x128xf32>
    %1764 = vector.shape_cast %1738 : vector<128xf32> to vector<1x128xf32>
    %1765 = vector.broadcast %1764 : vector<1x128xf32> to vector<16x128xf32>
    %1766 = arith.mulf %1765, %1761 : vector<16x128xf32>
    %1767 = arith.select %1763, %1761, %1766 : vector<16x128xi1>, vector<16x128xf32>
    %1768 = tpu.concatenate %1659, %1767 in 0 : vector<16x128xf32>, vector<16x128xf32> -> vector<32x128xf32>
    %1769 = arith.truncf %1768 : vector<32x128xf32> to vector<32x128xbf16>
    %c5_299 = arith.constant 5 : index
    %c0_300 = arith.constant 0 : index
    %c0_301 = arith.constant 0 : index
    %1770 = vector.load %arg4[%c5_299, %c0_300, %c0_301] : memref<6x128x128xbf16, #tpu.memory_space<vmem>>, vector<1x128x128xbf16>
    %1771 = vector.shape_cast %1770 : vector<1x128x128xbf16> to vector<128x128xbf16>
    %cst_302 = arith.constant dense<0.000000e+00> : vector<32x128xf32>
    %1772 = tpu.matmul %1769, %1771, %cst_302 {dimension_numbers = #tpu.dot_dimension_numbers<[1], [0], [0], [1], [0, 0, 1, 1], [], []>} : vector<32x128xbf16>, vector<128x128xbf16>, vector<32x128xf32> -> vector<32x128xf32>
    %1773 = vector.extract_strided_slice %1540 {offsets = [8, 0], sizes = [1, 128], strides = [1, 1]} : vector<9x128xf32> to vector<1x128xf32>
    %1774 = vector.shape_cast %1773 : vector<1x128xf32> to vector<128xf32>
    %1775 = vector.shape_cast %1774 : vector<128xf32> to vector<1x128xf32>
    %1776 = vector.broadcast %1775 : vector<1x128xf32> to vector<32x128xf32>
    %1777 = arith.addf %1772, %1776 : vector<32x128xf32>
    %1778 = arith.addf %1777, %1538 : vector<32x128xf32>
    %1779 = vector.shape_cast %1778 : vector<32x128xf32> to vector<2x16x128xf32>
    %c0_303 = arith.constant 0 : index
    %c0_304 = arith.constant 0 : index
    %c0_305 = arith.constant 0 : index
    %1780 = vector.load %arg7[%c0_303, %c0_304, %c0_305] : memref<2x16x128xf32, #tpu.memory_space<vmem>>, vector<2x16x128xf32>
    tpu.vector_store %arg7[%c0_303, %c0_304, %c0_305], %1779 {strides = array<i32>} : memref<2x16x128xf32, #tpu.memory_space<vmem>>, vector<2x16x128xf32>,
    return
  }
  func.func @transform_0(%arg0: i32) -> (i32, i32, i32) {
    %c0_i32 = arith.constant 0 : i32
    %c0_i32_0 = arith.constant 0 : i32
    %c0_i32_1 = arith.constant 0 : i32
    return %arg0, %c0_i32, %c0_i32_0 : i32, i32, i32
  }
  func.func @transform_1(%arg0: i32) -> (i32, i32, i32) {
    %c0_i32 = arith.constant 0 : i32
    %c0_i32_0 = arith.constant 0 : i32
    %c0_i32_1 = arith.constant 0 : i32
    return %arg0, %c0_i32, %c0_i32_0 : i32, i32, i32
  }
  func.func @transform_2(%arg0: i32) -> (i32, i32, i32) {
    %c0_i32 = arith.constant 0 : i32
    %c0_i32_0 = arith.constant 0 : i32
    %c0_i32_1 = arith.constant 0 : i32
    %c0_i32_2 = arith.constant 0 : i32
    return %c0_i32, %c0_i32_0, %c0_i32_1 : i32, i32, i32
  }
  func.func @transform_3(%arg0: i32) -> (i32, i32, i32) {
    %c0_i32 = arith.constant 0 : i32
    %c0_i32_0 = arith.constant 0 : i32
    %c0_i32_1 = arith.constant 0 : i32
    %c0_i32_2 = arith.constant 0 : i32
    return %c0_i32, %c0_i32_0, %c0_i32_1 : i32, i32, i32
  }
  func.func @transform_4(%arg0: i32) -> (i32, i32, i32) {
    %c0_i32 = arith.constant 0 : i32
    %c0_i32_0 = arith.constant 0 : i32
    %c0_i32_1 = arith.constant 0 : i32
    %c0_i32_2 = arith.constant 0 : i32
    return %c0_i32, %c0_i32_0, %c0_i32_1 : i32, i32, i32
  }
  func.func @transform_5(%arg0: i32) -> (i32, i32, i32) {
    %c0_i32 = arith.constant 0 : i32
    %c0_i32_0 = arith.constant 0 : i32
    %c0_i32_1 = arith.constant 0 : i32
    %c0_i32_2 = arith.constant 0 : i32
    return %c0_i32, %c0_i32_0, %c0_i32_1 : i32, i32, i32
  }
  func.func @transform_6(%arg0: i32) -> (i32, i32, i32) {
    %c0_i32 = arith.constant 0 : i32
    %c0_i32_0 = arith.constant 0 : i32
    %c0_i32_1 = arith.constant 0 : i32
    return %arg0, %c0_i32, %c0_i32_0 : i32, i32, i32
  }
}

</mosaic_0001>

<llo_original>
// kernel: tile.337
$region0: #{tile.337}
  #allocation0 [shape = 's32[1]{0}', space=sflag, size = 0x4, scoped, tag = 'scoped memory for tile.337']
  %s0 = inlined_call_operand.vmem [shape: f32[8], index: 0, kind: input, shape index: {}]
  %s1 = inlined_call_operand.vmem [shape: f32[16,8], index: 1, kind: output, shape index: {}]
  // Predicated region
  $region2: #{tile.337} parent=0 // pred_check
    _
  $region3: #{tile.337} parent=0 // pred_check_branch
    %3 = sbr.rel (0) target = $region5
  $region4: #{tile.337} parent=0 // pred_region
    _
  $region5: #{tile.337} parent=0 // pred_fallthru
    _
  %v4 = vld [vmem:[%s0] ss:$0 sm:$0xff]
  %5 = vst [vmem:[%s1] sm:$0xff] %v4
  %s6 = scalar_lea.vmem %s1, 8
  %7 = vst [vmem:[%s6] sm:$0xff] %v4

// kernel: tile.370
$region0: #{tile.370}
  %s0 = inlined_call_operand.vmem [shape: f32[16,8], index: 0, kind: input, shape index: {}]
  %s1 = inlined_call_operand.vmem [shape: f32[1,128], index: 1, kind: output, shape index: {}]
  $region1: #{tile.370} parent=0
    #allocation0 [shape = 'u8[4096]{0}', space=vmem, size = 0x1000, scoped, tag = 'scoped mem for output reshape']
    %v2 = vld [vmem:[%s0] sm:$0x1]
    %vm3 = vcmask 64512
    %4 = vst.msk [vmem:[#allocation0] sm:$0x1] %vm3, %v2
    %s5 = scalar_lea.vmem %s0, 15
    %v6 = vld [vmem:[%s5] sm:$0x1]
    %7 = vrot.lane.b32.xlu0 %v6, 120
    %v8 = vpop.permute.xlu0 %7
    %vm9 = vcmask 1048512
    %10 = vst.msk [vmem:[#allocation0] sm:$0x1] %vm9, %v8
    %s11 = scalar_lea.vmem %s0, 14
    %v12 = vld [vmem:[%s11] sm:$0x1]
    %13 = vrot.lane.b32.xlu0 %v12, 112
    %v14 = vpop.permute.xlu0 %13
    %vm15 = vcmask 982912
    %16 = vst.msk [vmem:[#allocation0] sm:$0x1] %vm15, %v14
    %s17 = scalar_lea.vmem %s0, 13
    %v18 = vld [vmem:[%s17] sm:$0x1]
    %19 = vrot.lane.b32.xlu0 %v18, 104
    %v20 = vpop.permute.xlu0 %19
    %vm21 = vcmask 917312
    %22 = vst.msk [vmem:[#allocation0] sm:$0x1] %vm21, %v20
    %s23 = scalar_lea.vmem %s0, 12
    %v24 = vld [vmem:[%s23] sm:$0x1]
    %25 = vrot.lane.b32.xlu0 %v24, 96
    %v26 = vpop.permute.xlu0 %25
    %vm27 = vcmask 851712
    %28 = vst.msk [vmem:[#allocation0] sm:$0x1] %vm27, %v26
    %s29 = scalar_lea.vmem %s0, 11
    %v30 = vld [vmem:[%s29] sm:$0x1]
    %31 = vrot.lane.b32.xlu0 %v30, 88
    %v32 = vpop.permute.xlu0 %31
    %vm33 = vcmask 786112
    %34 = vst.msk [vmem:[#allocation0] sm:$0x1] %vm33, %v32
    %s35 = scalar_lea.vmem %s0, 10
    %v36 = vld [vmem:[%s35] sm:$0x1]
    %37 = vrot.lane.b32.xlu0 %v36, 80
    %v38 = vpop.permute.xlu0 %37
    %vm39 = vcmask 720512
    %40 = vst.msk [vmem:[#allocation0] sm:$0x1] %vm39, %v38
    %s41 = scalar_lea.vmem %s0, 9
    %v42 = vld [vmem:[%s41] sm:$0x1]
    %43 = vrot.lane.b32.xlu0 %v42, 72
    %v44 = vpop.permute.xlu0 %43
    %vm45 = vcmask 654912
    %46 = vst.msk [vmem:[#allocation0] sm:$0x1] %vm45, %v44
    %s47 = scalar_lea.vmem %s0, 8
    %v48 = vld [vmem:[%s47] sm:$0x1]
    %49 = vrot.lane.b32.xlu0 %v48, 64
    %v50 = vpop.permute.xlu0 %49
    %vm51 = vcmask 589312
    %52 = vst.msk [vmem:[#allocation0] sm:$0x1] %vm51, %v50
    %s53 = scalar_lea.vmem %s0, 7
    %v54 = vld [vmem:[%s53] sm:$0x1]
    %55 = vrot.lane.b32.xlu0 %v54, 56
    %v56 = vpop.permute.xlu0 %55
    %vm57 = vcmask 523712
    %58 = vst.msk [vmem:[#allocation0] sm:$0x1] %vm57, %v56
    %s59 = scalar_lea.vmem %s0, 6
    %v60 = vld [vmem:[%s59] sm:$0x1]
    %61 = vrot.lane.b32.xlu0 %v60, 48
    %v62 = vpop.permute.xlu0 %61
    %vm63 = vcmask 458112
    %64 = vst.msk [vmem:[#allocation0] sm:$0x1] %vm63, %v62
    %s65 = scalar_lea.vmem %s0, 5
    %v66 = vld [vmem:[%s65] sm:$0x1]
    %67 = vrot.lane.b32.xlu0 %v66, 40
    %v68 = vpop.permute.xlu0 %67
    %vm69 = vcmask 392512
    %70 = vst.msk [vmem:[#allocation0] sm:$0x1] %vm69, %v68
    %s71 = scalar_lea.vmem %s0, 4
    %v72 = vld [vmem:[%s71] sm:$0x1]
    %73 = vrot.lane.b32.xlu0 %v72, 32
    %v74 = vpop.permute.xlu0 %73
    %vm75 = vcmask 326912
    %76 = vst.msk [vmem:[#allocation0] sm:$0x1] %vm75, %v74
    %s77 = scalar_lea.vmem %s0, 3
    %v78 = vld [vmem:[%s77] sm:$0x1]
    %79 = vrot.lane.b32.xlu0 %v78, 24
    %v80 = vpop.permute.xlu0 %79
    %vm81 = vcmask 261312
    %82 = vst.msk [vmem:[#allocation0] sm:$0x1] %vm81, %v80
    %s83 = scalar_lea.vmem %s0, 2
    %v84 = vld [vmem:[%s83] sm:$0x1]
    %85 = vrot.lane.b32.xlu0 %v84, 16
    %v86 = vpop.permute.xlu0 %85
    %vm87 = vcmask 195712
    %88 = vst.msk [vmem:[#allocation0] sm:$0x1] %vm87, %v86
    %s89 = scalar_lea.vmem %s0, 1
    %v90 = vld [vmem:[%s89] sm:$0x1]
    %91 = vrot.lane.b32.xlu0 %v90, 8
    %v92 = vpop.permute.xlu0 %91
    %vm93 = vcmask 130112
    %94 = vst.msk [vmem:[#allocation0] sm:$0x1] %vm93, %v92
    %s96 = ssub.s32 2, 1
    %v97 = vld [vmem:[#allocation0] sm:%s96]
    %s99 = ssub.s32 2, 1
    %100 = vst [vmem:[%s1] sm:%s99] %v97

// kernel: _tfcm_forward.1
$region0: #{_tfcm_forward.1}
  #allocation0 [shape = 'u32[]', space=smem, size = 0x4, offset = 0x4, fixed_abs, tag = 'smem constant byte address 0x4 - core index']
  #allocation1 [shape = 'u32[72,128]{1,0:T(1,128)}', space=vmem, size = 0x9000, scoped, tag = 'internal scratch']
  %s0 = inlined_call_operand.vmem [shape: f32[2,16,128], index: 0, kind: input, shape index: {}]
  %s1 = inlined_call_operand.vmem [shape: f32[2,6,128], index: 1, kind: input, shape index: {}]
  %s2 = inlined_call_operand.vmem [shape: bf16[6,128,128], index: 2, kind: input, shape index: {}]
  %s3 = inlined_call_operand.vmem [shape: bf16[6,128,128], index: 3, kind: input, shape index: {}]
  %s4 = inlined_call_operand.vmem [shape: f32[6,9,128], index: 4, kind: input, shape index: {}]
  %s5 = inlined_call_operand.vmem [shape: f32[6,9,128], index: 5, kind: input, shape index: {}]
  %s6 = inlined_call_operand.vmem [shape: f32[2,16,128], index: 6, kind: output, shape index: {}]
  %s7 = sld [smem:[#allocation0]]
  $region34: #{_tfcm_forward.1} parent=0
    _
  %s9 = ssub.s32 1, %s7
  %s10 = scalar_select 0, %s9, %s7
  // Predicated region
  $region2: #{_tfcm_forward.1} parent=0 // pred_check
    _
  $region3: #{_tfcm_forward.1} parent=0 // pred_check_branch
    %12 = sbr.rel (0) target = $region5
  $region4: #{_tfcm_forward.1} parent=0 // pred_region
    _
  $region5: #{_tfcm_forward.1} parent=0 // pred_fallthru
    _
  // Predicated region
  $region6: #{_tfcm_forward.1} parent=0 // pred_check
    _
  $region7: #{_tfcm_forward.1} parent=0 // pred_check_branch
    %14 = sbr.rel (0) target = $region9
  $region8: #{_tfcm_forward.1} parent=0 // pred_region
    _
  $region9: #{_tfcm_forward.1} parent=0 // pred_fallthru
    _
  // Predicated region
  $region10: #{_tfcm_forward.1} parent=0 // pred_check
    _
  $region11: #{_tfcm_forward.1} parent=0 // pred_check_branch
    %16 = sbr.rel (0) target = $region13
  $region12: #{_tfcm_forward.1} parent=0 // pred_region
    _
  $region13: #{_tfcm_forward.1} parent=0 // pred_fallthru
    _
  // Predicated region
  $region14: #{_tfcm_forward.1} parent=0 // pred_check
    _
  $region15: #{_tfcm_forward.1} parent=0 // pred_check_branch
    %18 = sbr.rel (0) target = $region17
  $region16: #{_tfcm_forward.1} parent=0 // pred_region
    _
  $region17: #{_tfcm_forward.1} parent=0 // pred_fallthru
    _
  // Predicated region
  $region18: #{_tfcm_forward.1} parent=0 // pred_check
    _
  $region19: #{_tfcm_forward.1} parent=0 // pred_check_branch
    %20 = sbr.rel (0) target = $region21
  $region20: #{_tfcm_forward.1} parent=0 // pred_region
    _
  $region21: #{_tfcm_forward.1} parent=0 // pred_fallthru
    _
  // Predicated region
  $region22: #{_tfcm_forward.1} parent=0 // pred_check
    _
  $region23: #{_tfcm_forward.1} parent=0 // pred_check_branch
    %22 = sbr.rel (0) target = $region25
  $region24: #{_tfcm_forward.1} parent=0 // pred_region
    _
  $region25: #{_tfcm_forward.1} parent=0 // pred_fallthru
    _
  %v23 = vld [vmem:[%s0] sm:$0xff]
  %v24 = vld [vmem:[%s0 + $0x8] sm:$0xff]
  %v25 = vld [vmem:[%s0 + $0x10] sm:$0xff]
  %v26 = vld [vmem:[%s0 + $0x18] sm:$0xff]
  %v27 = vld [vmem:[%s1] sm:$0x3f]
  %v28 = vld [vmem:[%s1 + $0x8] sm:$0x3f]
  %v29 = vlaneseq
  %v30 = vand.u32 %v29, 127
  %v31 = vlaneseq
  %v32 = vshrl.u32 %v31, 7
  %v33 = vadd.s32 %v32, 8
  %vm34 = vcmp.ge.s32.totalorder %v32, 1
  %vm35 = vcmp.ge.s32.totalorder %v33, 1
  %vm36 = vcmp.lt.s32.totalorder %v32, 15
  %vm37 = vcmp.lt.s32.totalorder %v33, 15
  %vm38 = vcmp.ge.s32.totalorder %v30, 8
  %vm39 = vcmp.ge.s32.totalorder %v30, 16
  %vm40 = vcmp.ge.s32.totalorder %v30, 32
  %vm41 = vcmp.ge.s32.totalorder %v30, 64
  %v42 = vld [vmem:[%s5] sm:$0xff]
  %v43 = vld [vmem:[%s5 + $0x8] sm:$0x1]
  %v44 = vld [vmem:[%s4] sm:$0xff]
  %v45 = vld [vmem:[%s4 + $0x8] sm:$0x1]
  %v46 = vpack.c.bf16 %v24, %v23
  %v47 = vpack.c.bf16 %v26, %v25
  %v48 = vld [vmem:[%s2] sm:$0xf]
  %v49 = vld [vmem:[%s2 + $0x4] sm:$0xf]
  %v50 = vld [vmem:[%s2 + $0x8] sm:$0xf]
  %v51 = vld [vmem:[%s2 + $0xc] sm:$0xf]
  %v52 = vld [vmem:[%s2 + $0x10] sm:$0xf]
  %v53 = vld [vmem:[%s2 + $0x14] sm:$0xf]
  %v54 = vld [vmem:[%s2 + $0x18] sm:$0xf]
  %v55 = vld [vmem:[%s2 + $0x1c] sm:$0xf]
  %v56 = vld [vmem:[%s2 + $0x20] sm:$0xf]
  %v57 = vld [vmem:[%s2 + $0x24] sm:$0xf]
  %v58 = vld [vmem:[%s2 + $0x28] sm:$0xf]
  %v59 = vld [vmem:[%s2 + $0x2c] sm:$0xf]
  %v60 = vld [vmem:[%s2 + $0x30] sm:$0xf]
  %v61 = vld [vmem:[%s2 + $0x34] sm:$0xf]
  %v62 = vld [vmem:[%s2 + $0x38] sm:$0xf]
  %v63 = vld [vmem:[%s2 + $0x3c] sm:$0xf]
  %v64 = vperm.slane %v42, 0
  %v81 = vunpack.c.l.b16 %v48
  %v82 = vunpack.c.l.b16 %v49
  %v83 = vunpack.c.l.b16 %v50
  %v84 = vunpack.c.l.b16 %v51
  %v85 = vunpack.c.l.b16 %v52
  %v86 = vunpack.c.l.b16 %v53
  %v87 = vunpack.c.l.b16 %v54
  %v88 = vunpack.c.l.b16 %v55
  %v89 = vunpack.c.l.b16 %v56
  %v90 = vunpack.c.l.b16 %v57
  %v91 = vunpack.c.l.b16 %v58
  %v92 = vunpack.c.l.b16 %v59
  %v93 = vunpack.c.l.b16 %v60
  %v94 = vunpack.c.l.b16 %v61
  %v95 = vunpack.c.l.b16 %v62
  %v96 = vunpack.c.l.b16 %v63
  %v97 = vpack.c.b16 %v82, %v81
  %v98 = vpack.c.b16 %v84, %v83
  %v99 = vpack.c.b16 %v86, %v85
  %v100 = vpack.c.b16 %v88, %v87
  %v101 = vpack.c.b16 %v90, %v89
  %v102 = vpack.c.b16 %v92, %v91
  %v103 = vpack.c.b16 %v94, %v93
  %v104 = vpack.c.b16 %v96, %v95
  %113 = vmatpush.bf16.msra.mxu0 %v104
  %114 = vmatpush.bf16.msra.mxu0 %v103
  %115 = vmatpush.bf16.msra.mxu0 %v102
  %116 = vmatpush.bf16.msra.mxu0 %v101
  %117 = vmatpush.bf16.msra.mxu0 %v100
  %118 = vmatpush.bf16.msra.mxu0 %v99
  %119 = vmatpush.bf16.msra.mxu0 %v98
  %120 = vmatpush.bf16.msra.mxu0 %v97
  %121 = vmatmul.bf16.gmra.mxu0 %v46
  %v122 = vpop.f32.mrf.mxu0
  %v123 = vadd.f32 %v64, %v122
  %v124 = vpop.f32.mrf.mxu0
  %v125 = vadd.f32 %v64, %v124
  %126 = vmatmul.bf16.gmra.mxu0 %v47
  %v127 = vpop.f32.mrf.mxu0
  %v128 = vadd.f32 %v64, %v127
  %v129 = vpop.f32.mrf.mxu0
  %v130 = vadd.f32 %v64, %v129
  %131 = vdwg.mxu0
  %v132 = vadd.f32 %v123, %v125
  %133 = vadd.xlane.f32.xlu0 %v132
  %v134 = vpop.xlane.xlu0 %133
  %v135 = vrot.slane %v134, 4
  %v136 = vadd.f32 %v134, %v135
  %v137 = vrot.slane %v136, 2
  %v138 = vadd.f32 %v136, %v137
  %v139 = vrot.slane %v138, 1
  %v140 = vadd.f32 %v138, %v139
  %s141 = vtos %v140
  %v142 = vrcp.pop 2048.0
  %v143 = vmul.f32 2048.0, %v142
  %v144 = vsub.f32 1.0, %v143
  %v145 = vmul.f32 %v142, %v144
  %v146 = vadd.f32 %v142, %v145
  %vm147 = vweird.f32 %v142
  %v148 = vsel %vm147, %v142, %v146
  %s149 = vtos %v148
  %s150 = smul.f32 %s141, %s149
  %v151 = vstv %s150
  %v152 = vsub.f32 %v123, %v151
  %v153 = vsub.f32 %v125, %v151
  %v154 = vmul.f32 %v152, %v152
  %v155 = vmul.f32 %v153, %v153
  %v156 = vadd.f32 %v154, %v155
  %157 = vadd.xlane.f32.xlu0 %v156
  %v158 = vpop.xlane.xlu0 %157
  %v159 = vrot.slane %v158, 4
  %v160 = vadd.f32 %v158, %v159
  %v161 = vrot.slane %v160, 2
  %v162 = vadd.f32 %v160, %v161
  %v163 = vrot.slane %v162, 1
  %v164 = vadd.f32 %v162, %v163
  %s165 = vtos %v164
  %v166 = vrcp.pop 2048.0
  %v167 = vmul.f32 2048.0, %v166
  %v168 = vsub.f32 1.0, %v167
  %v169 = vmul.f32 %v166, %v168
  %v170 = vadd.f32 %v166, %v169
  %vm171 = vweird.f32 %v166
  %v172 = vsel %vm171, %v166, %v170
  %s173 = vtos %v172
  %s174 = smul.f32 %s165, %s173
  %s175 = sadd.f32 %s174, 1e-05
  %v176 = vstv %s175
  %v177 = vrsqrt.pop %v176
  %v178 = vmul.f32 %v177, %v176
  %v179 = vmul.f32 %v178, %v177
  %v180 = vmul.f32 0.5, %v179
  %v181 = vsub.f32 1.5, %v180
  %v182 = vmul.f32 %v177, %v181
  %vm183 = vweird.f32 %v176
  %vm184 = vweird.f32 %v177
  %vm185 = vmor %vm183, %vm184
  %v186 = vsel %vm185, %v177, %v182
  %s187 = vtos %v186
  %v188 = vstv %s187
  %v189 = vmul.f32 %v152, %v188
  %v190 = vmul.f32 %v153, %v188
  %v191 = vperm.slane %v42, 1
  %v192 = vmul.f32 %v189, %v191
  %v193 = vmul.f32 %v190, %v191
  %v194 = vperm.slane %v42, 2
  %v195 = vadd.f32 %v192, %v194
  %v196 = vadd.f32 %v193, %v194
  %vm197 = vcmp.gt.f32.partialorder %v195, 0.0
  %vm198 = vcmp.gt.f32.partialorder %v196, 0.0
  %v199 = vperm.slane %v42, 3
  %v200 = vmul.f32 %v199, %v195
  %v201 = vmul.f32 %v199, %v196
  %v202 = vsel %vm197, %v195, %v200
  %v203 = vsel %vm198, %v196, %v201
  %v204 = vperm.slane %v27, 0
  %v205 = vadd.f32 %v202, %v204
  %v206 = vadd.f32 %v203, %v204
  %207 = vrot.lane.b32.xlu0 %v205, 16
  %v208 = vpop.permute.xlu0 %207
  %209 = vrot.lane.b32.xlu0 %v206, 16
  %v210 = vpop.permute.xlu0 %209
  %v211 = vsel %vm39, 1, 0
  %vm212 = vcmp.eq.s32.totalorder %v211, 1
  %v213 = vsel %vm212, %v208, 0.0
  %v214 = vsel %vm212, %v210, 0.0
  %215 = vrot.lane.b32.xlu0 %v205, 8
  %v216 = vpop.permute.xlu0 %215
  %217 = vrot.lane.b32.xlu0 %v206, 8
  %v218 = vpop.permute.xlu0 %217
  %v219 = vsel %vm38, 1, 0
  %vm220 = vcmp.eq.s32.totalorder %v219, 1
  %v221 = vsel %vm220, %v216, 0.0
  %v222 = vsel %vm220, %v218, 0.0
  %v223 = vperm.slane %v44, 2
  %v224 = vmul.f32 %v223, %v205
  %v225 = vmul.f32 %v223, %v206
  %v226 = vperm.slane %v44, 0
  %v227 = vmul.f32 %v226, %v213
  %v228 = vmul.f32 %v226, %v214
  %v229 = vadd.f32 %v224, %v227
  %v230 = vadd.f32 %v225, %v228
  %v231 = vperm.slane %v44, 1
  %v232 = vmul.f32 %v231, %v221
  %v233 = vmul.f32 %v231, %v222
  %v234 = vadd.f32 %v229, %v232
  %v235 = vadd.f32 %v230, %v233
  %v236 = vperm.slane %v44, 5
  %v237 = vmul.f32 %v236, %v205
  %v238 = vmul.f32 %v236, %v206
  %v239 = vperm.slane %v44, 3
  %v240 = vmul.f32 %v239, %v213
  %v241 = vmul.f32 %v239, %v214
  %v242 = vadd.f32 %v237, %v240
  %v243 = vadd.f32 %v238, %v241
  %v244 = vperm.slane %v44, 4
  %v245 = vmul.f32 %v244, %v221
  %v246 = vmul.f32 %v244, %v222
  %v247 = vadd.f32 %v242, %v245
  %v248 = vadd.f32 %v243, %v246
  %v249 = vperm.slane %v45, 0
  %v250 = vmul.f32 %v249, %v205
  %v251 = vmul.f32 %v249, %v206
  %v252 = vperm.slane %v44, 6
  %v253 = vmul.f32 %v252, %v213
  %v254 = vmul.f32 %v252, %v214
  %v255 = vadd.f32 %v250, %v253
  %v256 = vadd.f32 %v251, %v254
  %v257 = vperm.slane %v44, 7
  %v258 = vmul.f32 %v257, %v221
  %v259 = vmul.f32 %v257, %v222
  %v260 = vadd.f32 %v255, %v258
  %v261 = vadd.f32 %v256, %v259
  %v262 = vrot.slane %v234, 7
  %v263 = vrot.slane %v235, 7
  %vm264 = vcmp.lt.s32.totalorder %v32, 1
  %v265 = vsel %vm264, %v262, %v263
  %v266 = vsel %vm264, %v263, %v262
  %v267 = vsel %vm34, 1, 0
  %v268 = vsel %vm35, 1, 0
  %vm269 = vcmp.eq.s32.totalorder %v267, 1
  %vm270 = vcmp.eq.s32.totalorder %v268, 1
  %v271 = vsel %vm269, %v266, 0.0
  %v272 = vsel %vm270, %v265, 0.0
  %v273 = vadd.f32 %v247, %v271
  %v274 = vadd.f32 %v248, %v272
  %v275 = vrot.slane %v260, 1
  %v276 = vrot.slane %v261, 1
  %vm277 = vcmp.lt.s32.totalorder %v32, 7
  %v278 = vsel %vm277, %v275, %v276
  %v279 = vsel %vm277, %v276, %v275
  %v280 = vsel %vm36, 1, 0
  %v281 = vsel %vm37, 1, 0
  %vm282 = vcmp.eq.s32.totalorder %v280, 1
  %vm283 = vcmp.eq.s32.totalorder %v281, 1
  %v284 = vsel %vm282, %v278, 0.0
  %v285 = vsel %vm283, %v279, 0.0
  %v286 = vadd.f32 %v273, %v284
  %v287 = vadd.f32 %v274, %v285
  %v288 = vperm.slane %v42, 4
  %v289 = vadd.f32 %v286, %v288
  %v290 = vadd.f32 %v287, %v288
  %v291 = vadd.f32 %v289, %v290
  %292 = vadd.xlane.f32.xlu0 %v291
  %v293 = vpop.xlane.xlu0 %292
  %v294 = vrot.slane %v293, 4
  %v295 = vadd.f32 %v293, %v294
  %v296 = vrot.slane %v295, 2
  %v297 = vadd.f32 %v295, %v296
  %v298 = vrot.slane %v297, 1
  %v299 = vadd.f32 %v297, %v298
  %s300 = vtos %v299
  %v301 = vrcp.pop 2048.0
  %v302 = vmul.f32 2048.0, %v301
  %v303 = vsub.f32 1.0, %v302
  %v304 = vmul.f32 %v301, %v303
  %v305 = vadd.f32 %v301, %v304
  %vm306 = vweird.f32 %v301
  %v307 = vsel %vm306, %v301, %v305
  %s308 = vtos %v307
  %s309 = smul.f32 %s300, %s308
  %v310 = vstv %s309
  %v311 = vsub.f32 %v289, %v310
  %v312 = vsub.f32 %v290, %v310
  %v313 = vmul.f32 %v311, %v311
  %v314 = vmul.f32 %v312, %v312
  %v315 = vadd.f32 %v313, %v314
  %316 = vadd.xlane.f32.xlu0 %v315
  %v317 = vpop.xlane.xlu0 %316
  %v318 = vrot.slane %v317, 4
  %v319 = vadd.f32 %v317, %v318
  %v320 = vrot.slane %v319, 2
  %v321 = vadd.f32 %v319, %v320
  %v322 = vrot.slane %v321, 1
  %v323 = vadd.f32 %v321, %v322
  %s324 = vtos %v323
  %v325 = vrcp.pop 2048.0
  %v326 = vmul.f32 2048.0, %v325
  %v327 = vsub.f32 1.0, %v326
  %v328 = vmul.f32 %v325, %v327
  %v329 = vadd.f32 %v325, %v328
  %vm330 = vweird.f32 %v325
  %v331 = vsel %vm330, %v325, %v329
  %s332 = vtos %v331
  %s333 = smul.f32 %s324, %s332
  %s334 = sadd.f32 %s333, 1e-05
  %v335 = vstv %s334
  %v336 = vrsqrt.pop %v335
  %v337 = vmul.f32 %v336, %v335
  %v338 = vmul.f32 %v337, %v336
  %v339 = vmul.f32 0.5, %v338
  %v340 = vsub.f32 1.5, %v339
  %v341 = vmul.f32 %v336, %v340
  %vm342 = vweird.f32 %v335
  %vm343 = vweird.f32 %v336
  %vm344 = vmor %vm342, %vm343
  %v345 = vsel %vm344, %v336, %v341
  %s346 = vtos %v345
  %v347 = vstv %s346
  %v348 = vmul.f32 %v311, %v347
  %v349 = vmul.f32 %v312, %v347
  %v350 = vperm.slane %v42, 5
  %v351 = vmul.f32 %v348, %v350
  %v352 = vmul.f32 %v349, %v350
  %v353 = vperm.slane %v42, 6
  %v354 = vadd.f32 %v351, %v353
  %v355 = vadd.f32 %v352, %v353
  %vm356 = vcmp.gt.f32.partialorder %v354, 0.0
  %vm357 = vcmp.gt.f32.partialorder %v355, 0.0
  %v358 = vperm.slane %v42, 7
  %v359 = vmul.f32 %v358, %v354
  %v360 = vmul.f32 %v358, %v355
  %v361 = vsel %vm356, %v354, %v359
  %v362 = vsel %vm357, %v355, %v360
  %v363 = vadd.f32 %v128, %v130
  %364 = vadd.xlane.f32.xlu0 %v363
  %v365 = vpop.xlane.xlu0 %364
  %v366 = vrot.slane %v365, 4
  %v367 = vadd.f32 %v365, %v366
  %v368 = vrot.slane %v367, 2
  %v369 = vadd.f32 %v367, %v368
  %v370 = vrot.slane %v369, 1
  %v371 = vadd.f32 %v369, %v370
  %s372 = vtos %v371
  %v373 = vrcp.pop 2048.0
  %v374 = vmul.f32 2048.0, %v373
  %v375 = vsub.f32 1.0, %v374
  %v376 = vmul.f32 %v373, %v375
  %v377 = vadd.f32 %v373, %v376
  %vm378 = vweird.f32 %v373
  %v379 = vsel %vm378, %v373, %v377
  %s380 = vtos %v379
  %s381 = smul.f32 %s372, %s380
  %v382 = vstv %s381
  %v383 = vsub.f32 %v128, %v382
  %v384 = vsub.f32 %v130, %v382
  %v385 = vmul.f32 %v383, %v383
  %v386 = vmul.f32 %v384, %v384
  %v387 = vadd.f32 %v385, %v386
  %388 = vadd.xlane.f32.xlu0 %v387
  %v389 = vpop.xlane.xlu0 %388
  %v390 = vrot.slane %v389, 4
  %v391 = vadd.f32 %v389, %v390
  %v392 = vrot.slane %v391, 2
  %v393 = vadd.f32 %v391, %v392
  %v394 = vrot.slane %v393, 1
  %v395 = vadd.f32 %v393, %v394
  %s396 = vtos %v395
  %v397 = vrcp.pop 2048.0
  %v398 = vmul.f32 2048.0, %v397
  %v399 = vsub.f32 1.0, %v398
  %v400 = vmul.f32 %v397, %v399
  %v401 = vadd.f32 %v397, %v400
  %vm402 = vweird.f32 %v397
  %v403 = vsel %vm402, %v397, %v401
  %s404 = vtos %v403
  %s405 = smul.f32 %s396, %s404
  %s406 = sadd.f32 %s405, 1e-05
  %v407 = vstv %s406
  %v408 = vrsqrt.pop %v407
  %v409 = vmul.f32 %v408, %v407
  %v410 = vmul.f32 %v409, %v408
  %v411 = vmul.f32 0.5, %v410
  %v412 = vsub.f32 1.5, %v411
  %v413 = vmul.f32 %v408, %v412
  %vm414 = vweird.f32 %v407
  %vm415 = vweird.f32 %v408
  %vm416 = vmor %vm414, %vm415
  %v417 = vsel %vm416, %v408, %v413
  %s418 = vtos %v417
  %v419 = vstv %s418
  %v420 = vmul.f32 %v383, %v419
  %v421 = vmul.f32 %v384, %v419
  %v422 = vmul.f32 %v420, %v191
  %v423 = vmul.f32 %v421, %v191
  %v424 = vadd.f32 %v422, %v194
  %v425 = vadd.f32 %v423, %v194
  %vm426 = vcmp.gt.f32.partialorder %v424, 0.0
  %vm427 = vcmp.gt.f32.partialorder %v425, 0.0
  %v428 = vmul.f32 %v199, %v424
  %v429 = vmul.f32 %v199, %v425
  %v430 = vsel %vm426, %v424, %v428
  %v431 = vsel %vm427, %v425, %v429
  %v432 = vperm.slane %v28, 0
  %v433 = vadd.f32 %v430, %v432
  %v434 = vadd.f32 %v431, %v432
  %435 = vrot.lane.b32.xlu0 %v433, 16
  %v436 = vpop.permute.xlu0 %435
  %437 = vrot.lane.b32.xlu0 %v434, 16
  %v438 = vpop.permute.xlu0 %437
  %v439 = vsel %vm212, %v436, 0.0
  %v440 = vsel %vm212, %v438, 0.0
  %441 = vrot.lane.b32.xlu0 %v433, 8
  %v442 = vpop.permute.xlu0 %441
  %443 = vrot.lane.b32.xlu0 %v434, 8
  %v444 = vpop.permute.xlu0 %443
  %v445 = vsel %vm220, %v442, 0.0
  %v446 = vsel %vm220, %v444, 0.0
  %v447 = vmul.f32 %v223, %v433
  %v448 = vmul.f32 %v223, %v434
  %v449 = vmul.f32 %v226, %v439
  %v450 = vmul.f32 %v226, %v440
  %v451 = vadd.f32 %v447, %v449
  %v452 = vadd.f32 %v448, %v450
  %v453 = vmul.f32 %v231, %v445
  %v454 = vmul.f32 %v231, %v446
  %v455 = vadd.f32 %v451, %v453
  %v456 = vadd.f32 %v452, %v454
  %v457 = vmul.f32 %v236, %v433
  %v458 = vmul.f32 %v236, %v434
  %v459 = vmul.f32 %v239, %v439
  %v460 = vmul.f32 %v239, %v440
  %v461 = vadd.f32 %v457, %v459
  %v462 = vadd.f32 %v458, %v460
  %v463 = vmul.f32 %v244, %v445
  %v464 = vmul.f32 %v244, %v446
  %v465 = vadd.f32 %v461, %v463
  %v466 = vadd.f32 %v462, %v464
  %v467 = vmul.f32 %v249, %v433
  %v468 = vmul.f32 %v249, %v434
  %v469 = vmul.f32 %v252, %v439
  %v470 = vmul.f32 %v252, %v440
  %v471 = vadd.f32 %v467, %v469
  %v472 = vadd.f32 %v468, %v470
  %v473 = vmul.f32 %v257, %v445
  %v474 = vmul.f32 %v257, %v446
  %v475 = vadd.f32 %v471, %v473
  %v476 = vadd.f32 %v472, %v474
  %v477 = vrot.slane %v455, 7
  %v478 = vrot.slane %v456, 7
  %v479 = vsel %vm264, %v477, %v478
  %v480 = vsel %vm264, %v478, %v477
  %v481 = vsel %vm269, %v480, 0.0
  %v482 = vsel %vm270, %v479, 0.0
  %v483 = vadd.f32 %v465, %v481
  %v484 = vadd.f32 %v466, %v482
  %v485 = vrot.slane %v475, 1
  %v486 = vrot.slane %v476, 1
  %v487 = vsel %vm277, %v485, %v486
  %v488 = vsel %vm277, %v486, %v485
  %v489 = vsel %vm282, %v487, 0.0
  %v490 = vsel %vm283, %v488, 0.0
  %v491 = vadd.f32 %v483, %v489
  %v492 = vadd.f32 %v484, %v490
  %v493 = vadd.f32 %v491, %v288
  %v494 = vadd.f32 %v492, %v288
  %v495 = vadd.f32 %v493, %v494
  %496 = vadd.xlane.f32.xlu0 %v495
  %v497 = vpop.xlane.xlu0 %496
  %v498 = vrot.slane %v497, 4
  %v499 = vadd.f32 %v497, %v498
  %v500 = vrot.slane %v499, 2
  %v501 = vadd.f32 %v499, %v500
  %v502 = vrot.slane %v501, 1
  %v503 = vadd.f32 %v501, %v502
  %s504 = vtos %v503
  %v505 = vrcp.pop 2048.0
  %v506 = vmul.f32 2048.0, %v505
  %v507 = vsub.f32 1.0, %v506
  %v508 = vmul.f32 %v505, %v507
  %v509 = vadd.f32 %v505, %v508
  %vm510 = vweird.f32 %v505
  %v511 = vsel %vm510, %v505, %v509
  %s512 = vtos %v511
  %s513 = smul.f32 %s504, %s512
  %v514 = vstv %s513
  %v515 = vsub.f32 %v493, %v514
  %v516 = vsub.f32 %v494, %v514
  %v517 = vmul.f32 %v515, %v515
  %v518 = vmul.f32 %v516, %v516
  %v519 = vadd.f32 %v517, %v518
  %520 = vadd.xlane.f32.xlu0 %v519
  %v521 = vpop.xlane.xlu0 %520
  %v522 = vrot.slane %v521, 4
  %v523 = vadd.f32 %v521, %v522
  %v524 = vrot.slane %v523, 2
  %v525 = vadd.f32 %v523, %v524
  %v526 = vrot.slane %v525, 1
  %v527 = vadd.f32 %v525, %v526
  %s528 = vtos %v527
  %v529 = vrcp.pop 2048.0
  %v530 = vmul.f32 2048.0, %v529
  %v531 = vsub.f32 1.0, %v530
  %v532 = vmul.f32 %v529, %v531
  %v533 = vadd.f32 %v529, %v532
  %vm534 = vweird.f32 %v529
  %v535 = vsel %vm534, %v529, %v533
  %s536 = vtos %v535
  %s537 = smul.f32 %s528, %s536
  %s538 = sadd.f32 %s537, 1e-05
  %v539 = vstv %s538
  %v540 = vrsqrt.pop %v539
  %v541 = vmul.f32 %v540, %v539
  %v542 = vmul.f32 %v541, %v540
  %v543 = vmul.f32 0.5, %v542
  %v544 = vsub.f32 1.5, %v543
  %v545 = vmul.f32 %v540, %v544
  %vm546 = vweird.f32 %v539
  %vm547 = vweird.f32 %v540
  %vm548 = vmor %vm546, %vm547
  %v549 = vsel %vm548, %v540, %v545
  %s550 = vtos %v549
  %v551 = vstv %s550
  %v552 = vmul.f32 %v515, %v551
  %v553 = vmul.f32 %v516, %v551
  %v554 = vmul.f32 %v552, %v350
  %v555 = vmul.f32 %v553, %v350
  %v556 = vadd.f32 %v554, %v353
  %v557 = vadd.f32 %v555, %v353
  %vm558 = vcmp.gt.f32.partialorder %v556, 0.0
  %vm559 = vcmp.gt.f32.partialorder %v557, 0.0
  %v560 = vmul.f32 %v358, %v556
  %v561 = vmul.f32 %v358, %v557
  %v562 = vsel %vm558, %v556, %v560
  %v563 = vsel %vm559, %v557, %v561
  %v564 = vpack.c.bf16 %v362, %v361
  %v565 = vpack.c.bf16 %v563, %v562
  %v566 = vld [vmem:[%s3] sm:$0xf]
  %v567 = vld [vmem:[%s3 + $0x4] sm:$0xf]
  %v568 = vld [vmem:[%s3 + $0x8] sm:$0xf]
  %v569 = vld [vmem:[%s3 + $0xc] sm:$0xf]
  %v570 = vld [vmem:[%s3 + $0x10] sm:$0xf]
  %v571 = vld [vmem:[%s3 + $0x14] sm:$0xf]
  %v572 = vld [vmem:[%s3 + $0x18] sm:$0xf]
  %v573 = vld [vmem:[%s3 + $0x1c] sm:$0xf]
  %v574 = vld [vmem:[%s3 + $0x20] sm:$0xf]
  %v575 = vld [vmem:[%s3 + $0x24] sm:$0xf]
  %v576 = vld [vmem:[%s3 + $0x28] sm:$0xf]
  %v577 = vld [vmem:[%s3 + $0x2c] sm:$0xf]
  %v578 = vld [vmem:[%s3 + $0x30] sm:$0xf]
  %v579 = vld [vmem:[%s3 + $0x34] sm:$0xf]
  %v580 = vld [vmem:[%s3 + $0x38] sm:$0xf]
  %v581 = vld [vmem:[%s3 + $0x3c] sm:$0xf]
  %v582 = vperm.slane %v43, 0
  %v599 = vunpack.c.l.b16 %v566
  %v600 = vunpack.c.l.b16 %v567
  %v601 = vunpack.c.l.b16 %v568
  %v602 = vunpack.c.l.b16 %v569
  %v603 = vunpack.c.l.b16 %v570
  %v604 = vunpack.c.l.b16 %v571
  %v605 = vunpack.c.l.b16 %v572
  %v606 = vunpack.c.l.b16 %v573
  %v607 = vunpack.c.l.b16 %v574
  %v608 = vunpack.c.l.b16 %v575
  %v609 = vunpack.c.l.b16 %v576
  %v610 = vunpack.c.l.b16 %v577
  %v611 = vunpack.c.l.b16 %v578
  %v612 = vunpack.c.l.b16 %v579
  %v613 = vunpack.c.l.b16 %v580
  %v614 = vunpack.c.l.b16 %v581
  %v615 = vpack.c.b16 %v600, %v599
  %v616 = vpack.c.b16 %v602, %v601
  %v617 = vpack.c.b16 %v604, %v603
  %v618 = vpack.c.b16 %v606, %v605
  %v619 = vpack.c.b16 %v608, %v607
  %v620 = vpack.c.b16 %v610, %v609
  %v621 = vpack.c.b16 %v612, %v611
  %v622 = vpack.c.b16 %v614, %v613
  %631 = vmatpush.bf16.msra.mxu0 %v622
  %632 = vmatpush.bf16.msra.mxu0 %v621
  %633 = vmatpush.bf16.msra.mxu0 %v620
  %634 = vmatpush.bf16.msra.mxu0 %v619
  %635 = vmatpush.bf16.msra.mxu0 %v618
  %636 = vmatpush.bf16.msra.mxu0 %v617
  %637 = vmatpush.bf16.msra.mxu0 %v616
  %638 = vmatpush.bf16.msra.mxu0 %v615
  %639 = vmatmul.bf16.gmra.mxu0 %v564
  %v640 = vpop.f32.mrf.mxu0
  %v641 = vadd.f32 %v582, %v640
  %v642 = vpop.f32.mrf.mxu0
  %v643 = vadd.f32 %v582, %v642
  %644 = vmatmul.bf16.gmra.mxu0 %v565
  %v645 = vpop.f32.mrf.mxu0
  %v646 = vadd.f32 %v582, %v645
  %v647 = vpop.f32.mrf.mxu0
  %v648 = vadd.f32 %v582, %v647
  %649 = vdwg.mxu0
  %v650 = vadd.f32 %v641, %v23
  %v651 = vadd.f32 %v643, %v24
  %v652 = vadd.f32 %v646, %v25
  %v653 = vadd.f32 %v648, %v26
  %s654 = scalar_lea.vmem %s5, 16
  %v655 = vld [vmem:[%s654] sm:$0xff]
  %v656 = vld [vmem:[%s654 + $0x8] sm:$0x1]
  %s657 = scalar_lea.vmem %s4, 16
  %v658 = vld [vmem:[%s657] sm:$0xff]
  %v659 = vld [vmem:[%s657 + $0x8] sm:$0x1]
  %v660 = vpack.c.bf16 %v651, %v650
  %v661 = vpack.c.bf16 %v653, %v652
  %s662 = scalar_lea.vmem %s2, 64
  %v663 = vld [vmem:[%s662] sm:$0xf]
  %v664 = vld [vmem:[%s662 + $0x4] sm:$0xf]
  %v665 = vld [vmem:[%s662 + $0x8] sm:$0xf]
  %v666 = vld [vmem:[%s662 + $0xc] sm:$0xf]
  %v667 = vld [vmem:[%s662 + $0x10] sm:$0xf]
  %v668 = vld [vmem:[%s662 + $0x14] sm:$0xf]
  %v669 = vld [vmem:[%s662 + $0x18] sm:$0xf]
  %v670 = vld [vmem:[%s662 + $0x1c] sm:$0xf]
  %v671 = vld [vmem:[%s662 + $0x20] sm:$0xf]
  %v672 = vld [vmem:[%s662 + $0x24] sm:$0xf]
  %v673 = vld [vmem:[%s662 + $0x28] sm:$0xf]
  %v674 = vld [vmem:[%s662 + $0x2c] sm:$0xf]
  %v675 = vld [vmem:[%s662 + $0x30] sm:$0xf]
  %v676 = vld [vmem:[%s662 + $0x34] sm:$0xf]
  %v677 = vld [vmem:[%s662 + $0x38] sm:$0xf]
  %v678 = vld [vmem:[%s662 + $0x3c] sm:$0xf]
  %v679 = vperm.slane %v655, 0
  %v696 = vunpack.c.l.b16 %v663
  %v697 = vunpack.c.l.b16 %v664
  %v698 = vunpack.c.l.b16 %v665
  %v699 = vunpack.c.l.b16 %v666
  %v700 = vunpack.c.l.b16 %v667
  %v701 = vunpack.c.l.b16 %v668
  %v702 = vunpack.c.l.b16 %v669
  %v703 = vunpack.c.l.b16 %v670
  %v704 = vunpack.c.l.b16 %v671
  %v705 = vunpack.c.l.b16 %v672
  %v706 = vunpack.c.l.b16 %v673
  %v707 = vunpack.c.l.b16 %v674
  %v708 = vunpack.c.l.b16 %v675
  %v709 = vunpack.c.l.b16 %v676
  %v710 = vunpack.c.l.b16 %v677
  %v711 = vunpack.c.l.b16 %v678
  %v712 = vpack.c.b16 %v697, %v696
  %v713 = vpack.c.b16 %v699, %v698
  %v714 = vpack.c.b16 %v701, %v700
  %v715 = vpack.c.b16 %v703, %v702
  %v716 = vpack.c.b16 %v705, %v704
  %v717 = vpack.c.b16 %v707, %v706
  %v718 = vpack.c.b16 %v709, %v708
  %v719 = vpack.c.b16 %v711, %v710
  %728 = vmatpush.bf16.msra.mxu0 %v719
  %729 = vmatpush.bf16.msra.mxu0 %v718
  %730 = vmatpush.bf16.msra.mxu0 %v717
  %731 = vmatpush.bf16.msra.mxu0 %v716
  %732 = vmatpush.bf16.msra.mxu0 %v715
  %733 = vmatpush.bf16.msra.mxu0 %v714
  %734 = vmatpush.bf16.msra.mxu0 %v713
  %735 = vmatpush.bf16.msra.mxu0 %v712
  %736 = vmatmul.bf16.gmra.mxu0 %v660
  %v737 = vpop.f32.mrf.mxu0
  %v738 = vadd.f32 %v679, %v737
  %v739 = vpop.f32.mrf.mxu0
  %v740 = vadd.f32 %v679, %v739
  %741 = vmatmul.bf16.gmra.mxu0 %v661
  %v742 = vpop.f32.mrf.mxu0
  %v743 = vadd.f32 %v679, %v742
  %v744 = vpop.f32.mrf.mxu0
  %v745 = vadd.f32 %v679, %v744
  %746 = vdwg.mxu0
  %v747 = vadd.f32 %v738, %v740
  %748 = vadd.xlane.f32.xlu0 %v747
  %v749 = vpop.xlane.xlu0 %748
  %v750 = vrot.slane %v749, 4
  %v751 = vadd.f32 %v749, %v750
  %v752 = vrot.slane %v751, 2
  %v753 = vadd.f32 %v751, %v752
  %v754 = vrot.slane %v753, 1
  %v755 = vadd.f32 %v753, %v754
  %s756 = vtos %v755
  %v757 = vrcp.pop 2048.0
  %v758 = vmul.f32 2048.0, %v757
  %v759 = vsub.f32 1.0, %v758
  %v760 = vmul.f32 %v757, %v759
  %v761 = vadd.f32 %v757, %v760
  %vm762 = vweird.f32 %v757
  %v763 = vsel %vm762, %v757, %v761
  %s764 = vtos %v763
  %s765 = smul.f32 %s756, %s764
  %v766 = vstv %s765
  %v767 = vsub.f32 %v738, %v766
  %v768 = vsub.f32 %v740, %v766
  %v769 = vmul.f32 %v767, %v767
  %v770 = vmul.f32 %v768, %v768
  %v771 = vadd.f32 %v769, %v770
  %772 = vadd.xlane.f32.xlu0 %v771
  %v773 = vpop.xlane.xlu0 %772
  %v774 = vrot.slane %v773, 4
  %v775 = vadd.f32 %v773, %v774
  %v776 = vrot.slane %v775, 2
  %v777 = vadd.f32 %v775, %v776
  %v778 = vrot.slane %v777, 1
  %v779 = vadd.f32 %v777, %v778
  %s780 = vtos %v779
  %v781 = vrcp.pop 2048.0
  %v782 = vmul.f32 2048.0, %v781
  %v783 = vsub.f32 1.0, %v782
  %v784 = vmul.f32 %v781, %v783
  %v785 = vadd.f32 %v781, %v784
  %vm786 = vweird.f32 %v781
  %v787 = vsel %vm786, %v781, %v785
  %s788 = vtos %v787
  %s789 = smul.f32 %s780, %s788
  %s790 = sadd.f32 %s789, 1e-05
  %v791 = vstv %s790
  %v792 = vrsqrt.pop %v791
  %v793 = vmul.f32 %v792, %v791
  %v794 = vmul.f32 %v793, %v792
  %v795 = vmul.f32 0.5, %v794
  %v796 = vsub.f32 1.5, %v795
  %v797 = vmul.f32 %v792, %v796
  %vm798 = vweird.f32 %v791
  %vm799 = vweird.f32 %v792
  %vm800 = vmor %vm798, %vm799
  %v801 = vsel %vm800, %v792, %v797
  %s802 = vtos %v801
  %v803 = vstv %s802
  %v804 = vmul.f32 %v767, %v803
  %v805 = vmul.f32 %v768, %v803
  %v806 = vperm.slane %v655, 1
  %v807 = vmul.f32 %v804, %v806
  %v808 = vmul.f32 %v805, %v806
  %v809 = vperm.slane %v655, 2
  %v810 = vadd.f32 %v807, %v809
  %v811 = vadd.f32 %v808, %v809
  %vm812 = vcmp.gt.f32.partialorder %v810, 0.0
  %vm813 = vcmp.gt.f32.partialorder %v811, 0.0
  %v814 = vperm.slane %v655, 3
  %v815 = vmul.f32 %v814, %v810
  %v816 = vmul.f32 %v814, %v811
  %v817 = vsel %vm812, %v810, %v815
  %v818 = vsel %vm813, %v811, %v816
  %v819 = vperm.slane %v27, 1
  %v820 = vadd.f32 %v817, %v819
  %v821 = vadd.f32 %v818, %v819
  %822 = vrot.lane.b32.xlu0 %v820, 32
  %v823 = vpop.permute.xlu0 %822
  %824 = vrot.lane.b32.xlu0 %v821, 32
  %v825 = vpop.permute.xlu0 %824
  %v826 = vsel %vm40, 1, 0
  %vm827 = vcmp.eq.s32.totalorder %v826, 1
  %v828 = vsel %vm827, %v823, 0.0
  %v829 = vsel %vm827, %v825, 0.0
  %830 = vrot.lane.b32.xlu0 %v820, 16
  %v831 = vpop.permute.xlu0 %830
  %832 = vrot.lane.b32.xlu0 %v821, 16
  %v833 = vpop.permute.xlu0 %832
  %v834 = vsel %vm212, %v831, 0.0
  %v835 = vsel %vm212, %v833, 0.0
  %v836 = vperm.slane %v658, 2
  %v837 = vmul.f32 %v836, %v820
  %v838 = vmul.f32 %v836, %v821
  %v839 = vperm.slane %v658, 0
  %v840 = vmul.f32 %v839, %v828
  %v841 = vmul.f32 %v839, %v829
  %v842 = vadd.f32 %v837, %v840
  %v843 = vadd.f32 %v838, %v841
  %v844 = vperm.slane %v658, 1
  %v845 = vmul.f32 %v844, %v834
  %v846 = vmul.f32 %v844, %v835
  %v847 = vadd.f32 %v842, %v845
  %v848 = vadd.f32 %v843, %v846
  %v849 = vperm.slane %v658, 5
  %v850 = vmul.f32 %v849, %v820
  %v851 = vmul.f32 %v849, %v821
  %v852 = vperm.slane %v658, 3
  %v853 = vmul.f32 %v852, %v828
  %v854 = vmul.f32 %v852, %v829
  %v855 = vadd.f32 %v850, %v853
  %v856 = vadd.f32 %v851, %v854
  %v857 = vperm.slane %v658, 4
  %v858 = vmul.f32 %v857, %v834
  %v859 = vmul.f32 %v857, %v835
  %v860 = vadd.f32 %v855, %v858
  %v861 = vadd.f32 %v856, %v859
  %v862 = vperm.slane %v659, 0
  %v863 = vmul.f32 %v862, %v820
  %v864 = vmul.f32 %v862, %v821
  %v865 = vperm.slane %v658, 6
  %v866 = vmul.f32 %v865, %v828
  %v867 = vmul.f32 %v865, %v829
  %v868 = vadd.f32 %v863, %v866
  %v869 = vadd.f32 %v864, %v867
  %v870 = vperm.slane %v658, 7
  %v871 = vmul.f32 %v870, %v834
  %v872 = vmul.f32 %v870, %v835
  %v873 = vadd.f32 %v868, %v871
  %v874 = vadd.f32 %v869, %v872
  %v875 = vrot.slane %v847, 7
  %v876 = vrot.slane %v848, 7
  %v877 = vsel %vm264, %v875, %v876
  %v878 = vsel %vm264, %v876, %v875
  %v879 = vsel %vm269, %v878, 0.0
  %v880 = vsel %vm270, %v877, 0.0
  %v881 = vadd.f32 %v860, %v879
  %v882 = vadd.f32 %v861, %v880
  %v883 = vrot.slane %v873, 1
  %v884 = vrot.slane %v874, 1
  %v885 = vsel %vm277, %v883, %v884
  %v886 = vsel %vm277, %v884, %v883
  %v887 = vsel %vm282, %v885, 0.0
  %v888 = vsel %vm283, %v886, 0.0
  %v889 = vadd.f32 %v881, %v887
  %v890 = vadd.f32 %v882, %v888
  %v891 = vperm.slane %v655, 4
  %v892 = vadd.f32 %v889, %v891
  %v893 = vadd.f32 %v890, %v891
  %v894 = vadd.f32 %v892, %v893
  %895 = vadd.xlane.f32.xlu0 %v894
  %v896 = vpop.xlane.xlu0 %895
  %v897 = vrot.slane %v896, 4
  %v898 = vadd.f32 %v896, %v897
  %v899 = vrot.slane %v898, 2
  %v900 = vadd.f32 %v898, %v899
  %v901 = vrot.slane %v900, 1
  %v902 = vadd.f32 %v900, %v901
  %s903 = vtos %v902
  %v904 = vrcp.pop 2048.0
  %v905 = vmul.f32 2048.0, %v904
  %v906 = vsub.f32 1.0, %v905
  %v907 = vmul.f32 %v904, %v906
  %v908 = vadd.f32 %v904, %v907
  %vm909 = vweird.f32 %v904
  %v910 = vsel %vm909, %v904, %v908
  %s911 = vtos %v910
  %s912 = smul.f32 %s903, %s911
  %v913 = vstv %s912
  %v914 = vsub.f32 %v892, %v913
  %v915 = vsub.f32 %v893, %v913
  %v916 = vmul.f32 %v914, %v914
  %v917 = vmul.f32 %v915, %v915
  %v918 = vadd.f32 %v916, %v917
  %919 = vadd.xlane.f32.xlu0 %v918
  %v920 = vpop.xlane.xlu0 %919
  %v921 = vrot.slane %v920, 4
  %v922 = vadd.f32 %v920, %v921
  %v923 = vrot.slane %v922, 2
  %v924 = vadd.f32 %v922, %v923
  %v925 = vrot.slane %v924, 1
  %v926 = vadd.f32 %v924, %v925
  %s927 = vtos %v926
  %v928 = vrcp.pop 2048.0
  %v929 = vmul.f32 2048.0, %v928
  %v930 = vsub.f32 1.0, %v929
  %v931 = vmul.f32 %v928, %v930
  %v932 = vadd.f32 %v928, %v931
  %vm933 = vweird.f32 %v928
  %v934 = vsel %vm933, %v928, %v932
  %s935 = vtos %v934
  %s936 = smul.f32 %s927, %s935
  %s937 = sadd.f32 %s936, 1e-05
  %v938 = vstv %s937
  %v939 = vrsqrt.pop %v938
  %v940 = vmul.f32 %v939, %v938
  %v941 = vmul.f32 %v940, %v939
  %v942 = vmul.f32 0.5, %v941
  %v943 = vsub.f32 1.5, %v942
  %v944 = vmul.f32 %v939, %v943
  %vm945 = vweird.f32 %v938
  %vm946 = vweird.f32 %v939
  %vm947 = vmor %vm945, %vm946
  %v948 = vsel %vm947, %v939, %v944
  %s949 = vtos %v948
  %v950 = vstv %s949
  %v951 = vmul.f32 %v914, %v950
  %v952 = vmul.f32 %v915, %v950
  %v953 = vperm.slane %v655, 5
  %v954 = vmul.f32 %v951, %v953
  %v955 = vmul.f32 %v952, %v953
  %v956 = vperm.slane %v655, 6
  %v957 = vadd.f32 %v954, %v956
  %v958 = vadd.f32 %v955, %v956
  %vm959 = vcmp.gt.f32.partialorder %v957, 0.0
  %vm960 = vcmp.gt.f32.partialorder %v958, 0.0
  %v961 = vperm.slane %v655, 7
  %v962 = vmul.f32 %v961, %v957
  %v963 = vmul.f32 %v961, %v958
  %v964 = vsel %vm959, %v957, %v962
  %v965 = vsel %vm960, %v958, %v963
  %v966 = vadd.f32 %v743, %v745
  %967 = vadd.xlane.f32.xlu0 %v966
  %v968 = vpop.xlane.xlu0 %967
  %v969 = vrot.slane %v968, 4
  %v970 = vadd.f32 %v968, %v969
  %v971 = vrot.slane %v970, 2
  %v972 = vadd.f32 %v970, %v971
  %v973 = vrot.slane %v972, 1
  %v974 = vadd.f32 %v972, %v973
  %s975 = vtos %v974
  %v976 = vrcp.pop 2048.0
  %v977 = vmul.f32 2048.0, %v976
  %v978 = vsub.f32 1.0, %v977
  %v979 = vmul.f32 %v976, %v978
  %v980 = vadd.f32 %v976, %v979
  %vm981 = vweird.f32 %v976
  %v982 = vsel %vm981, %v976, %v980
  %s983 = vtos %v982
  %s984 = smul.f32 %s975, %s983
  %v985 = vstv %s984
  %v986 = vsub.f32 %v743, %v985
  %v987 = vsub.f32 %v745, %v985
  %v988 = vmul.f32 %v986, %v986
  %v989 = vmul.f32 %v987, %v987
  %v990 = vadd.f32 %v988, %v989
  %991 = vadd.xlane.f32.xlu0 %v990
  %v992 = vpop.xlane.xlu0 %991
  %v993 = vrot.slane %v992, 4
  %v994 = vadd.f32 %v992, %v993
  %v995 = vrot.slane %v994, 2
  %v996 = vadd.f32 %v994, %v995
  %v997 = vrot.slane %v996, 1
  %v998 = vadd.f32 %v996, %v997
  %s999 = vtos %v998
  %v1000 = vrcp.pop 2048.0
  %v1001 = vmul.f32 2048.0, %v1000
  %v1002 = vsub.f32 1.0, %v1001
  %v1003 = vmul.f32 %v1000, %v1002
  %v1004 = vadd.f32 %v1000, %v1003
  %vm1005 = vweird.f32 %v1000
  %v1006 = vsel %vm1005, %v1000, %v1004
  %s1007 = vtos %v1006
  %s1008 = smul.f32 %s999, %s1007
  %s1009 = sadd.f32 %s1008, 1e-05
  %v1010 = vstv %s1009
  %v1011 = vrsqrt.pop %v1010
  %v1012 = vmul.f32 %v1011, %v1010
  %v1013 = vmul.f32 %v1012, %v1011
  %v1014 = vmul.f32 0.5, %v1013
  %v1015 = vsub.f32 1.5, %v1014
  %v1016 = vmul.f32 %v1011, %v1015
  %vm1017 = vweird.f32 %v1010
  %vm1018 = vweird.f32 %v1011
  %vm1019 = vmor %vm1017, %vm1018
  %v1020 = vsel %vm1019, %v1011, %v1016
  %s1021 = vtos %v1020
  %v1022 = vstv %s1021
  %v1023 = vmul.f32 %v986, %v1022
  %v1024 = vmul.f32 %v987, %v1022
  %v1025 = vmul.f32 %v1023, %v806
  %v1026 = vmul.f32 %v1024, %v806
  %v1027 = vadd.f32 %v1025, %v809
  %v1028 = vadd.f32 %v1026, %v809
  %vm1029 = vcmp.gt.f32.partialorder %v1027, 0.0
  %vm1030 = vcmp.gt.f32.partialorder %v1028, 0.0
  %v1031 = vmul.f32 %v814, %v1027
  %v1032 = vmul.f32 %v814, %v1028
  %v1033 = vsel %vm1029, %v1027, %v1031
  %v1034 = vsel %vm1030, %v1028, %v1032
  %v1035 = vperm.slane %v28, 1
  %v1036 = vadd.f32 %v1033, %v1035
  %v1037 = vadd.f32 %v1034, %v1035
  %1038 = vrot.lane.b32.xlu0 %v1036, 32
  %v1039 = vpop.permute.xlu0 %1038
  %1040 = vrot.lane.b32.xlu0 %v1037, 32
  %v1041 = vpop.permute.xlu0 %1040
  %v1042 = vsel %vm827, %v1039, 0.0
  %v1043 = vsel %vm827, %v1041, 0.0
  %1044 = vrot.lane.b32.xlu0 %v1036, 16
  %v1045 = vpop.permute.xlu0 %1044
  %1046 = vrot.lane.b32.xlu0 %v1037, 16
  %v1047 = vpop.permute.xlu0 %1046
  %v1048 = vsel %vm212, %v1045, 0.0
  %v1049 = vsel %vm212, %v1047, 0.0
  %v1050 = vmul.f32 %v836, %v1036
  %v1051 = vmul.f32 %v836, %v1037
  %v1052 = vmul.f32 %v839, %v1042
  %v1053 = vmul.f32 %v839, %v1043
  %v1054 = vadd.f32 %v1050, %v1052
  %v1055 = vadd.f32 %v1051, %v1053
  %v1056 = vmul.f32 %v844, %v1048
  %v1057 = vmul.f32 %v844, %v1049
  %v1058 = vadd.f32 %v1054, %v1056
  %v1059 = vadd.f32 %v1055, %v1057
  %v1060 = vmul.f32 %v849, %v1036
  %v1061 = vmul.f32 %v849, %v1037
  %v1062 = vmul.f32 %v852, %v1042
  %v1063 = vmul.f32 %v852, %v1043
  %v1064 = vadd.f32 %v1060, %v1062
  %v1065 = vadd.f32 %v1061, %v1063
  %v1066 = vmul.f32 %v857, %v1048
  %v1067 = vmul.f32 %v857, %v1049
  %v1068 = vadd.f32 %v1064, %v1066
  %v1069 = vadd.f32 %v1065, %v1067
  %v1070 = vmul.f32 %v862, %v1036
  %v1071 = vmul.f32 %v862, %v1037
  %v1072 = vmul.f32 %v865, %v1042
  %v1073 = vmul.f32 %v865, %v1043
  %v1074 = vadd.f32 %v1070, %v1072
  %v1075 = vadd.f32 %v1071, %v1073
  %v1076 = vmul.f32 %v870, %v1048
  %v1077 = vmul.f32 %v870, %v1049
  %v1078 = vadd.f32 %v1074, %v1076
  %v1079 = vadd.f32 %v1075, %v1077
  %v1080 = vrot.slane %v1058, 7
  %v1081 = vrot.slane %v1059, 7
  %v1082 = vsel %vm264, %v1080, %v1081
  %v1083 = vsel %vm264, %v1081, %v1080
  %v1084 = vsel %vm269, %v1083, 0.0
  %v1085 = vsel %vm270, %v1082, 0.0
  %v1086 = vadd.f32 %v1068, %v1084
  %v1087 = vadd.f32 %v1069, %v1085
  %v1088 = vrot.slane %v1078, 1
  %v1089 = vrot.slane %v1079, 1
  %v1090 = vsel %vm277, %v1088, %v1089
  %v1091 = vsel %vm277, %v1089, %v1088
  %v1092 = vsel %vm282, %v1090, 0.0
  %v1093 = vsel %vm283, %v1091, 0.0
  %v1094 = vadd.f32 %v1086, %v1092
  %v1095 = vadd.f32 %v1087, %v1093
  %v1096 = vadd.f32 %v1094, %v891
  %v1097 = vadd.f32 %v1095, %v891
  %v1098 = vadd.f32 %v1096, %v1097
  %1099 = vadd.xlane.f32.xlu0 %v1098
  %v1100 = vpop.xlane.xlu0 %1099
  %v1101 = vrot.slane %v1100, 4
  %v1102 = vadd.f32 %v1100, %v1101
  %v1103 = vrot.slane %v1102, 2
  %v1104 = vadd.f32 %v1102, %v1103
  %v1105 = vrot.slane %v1104, 1
  %v1106 = vadd.f32 %v1104, %v1105
  %s1107 = vtos %v1106
  %v1108 = vrcp.pop 2048.0
  %v1109 = vmul.f32 2048.0, %v1108
  %v1110 = vsub.f32 1.0, %v1109
  %v1111 = vmul.f32 %v1108, %v1110
  %v1112 = vadd.f32 %v1108, %v1111
  %vm1113 = vweird.f32 %v1108
  %v1114 = vsel %vm1113, %v1108, %v1112
  %s1115 = vtos %v1114
  %s1116 = smul.f32 %s1107, %s1115
  %v1117 = vstv %s1116
  %v1118 = vsub.f32 %v1096, %v1117
  %v1119 = vsub.f32 %v1097, %v1117
  %v1120 = vmul.f32 %v1118, %v1118
  %v1121 = vmul.f32 %v1119, %v1119
  %v1122 = vadd.f32 %v1120, %v1121
  %1123 = vadd.xlane.f32.xlu0 %v1122
  %v1124 = vpop.xlane.xlu0 %1123
  %v1125 = vrot.slane %v1124, 4
  %v1126 = vadd.f32 %v1124, %v1125
  %v1127 = vrot.slane %v1126, 2
  %v1128 = vadd.f32 %v1126, %v1127
  %v1129 = vrot.slane %v1128, 1
  %v1130 = vadd.f32 %v1128, %v1129
  %s1131 = vtos %v1130
  %v1132 = vrcp.pop 2048.0
  %v1133 = vmul.f32 2048.0, %v1132
  %v1134 = vsub.f32 1.0, %v1133
  %v1135 = vmul.f32 %v1132, %v1134
  %v1136 = vadd.f32 %v1132, %v1135
  %vm1137 = vweird.f32 %v1132
  %v1138 = vsel %vm1137, %v1132, %v1136
  %s1139 = vtos %v1138
  %s1140 = smul.f32 %s1131, %s1139
  %s1141 = sadd.f32 %s1140, 1e-05
  %v1142 = vstv %s1141
  %v1143 = vrsqrt.pop %v1142
  %v1144 = vmul.f32 %v1143, %v1142
  %v1145 = vmul.f32 %v1144, %v1143
  %v1146 = vmul.f32 0.5, %v1145
  %v1147 = vsub.f32 1.5, %v1146
  %v1148 = vmul.f32 %v1143, %v1147
  %vm1149 = vweird.f32 %v1142
  %vm1150 = vweird.f32 %v1143
  %vm1151 = vmor %vm1149, %vm1150
  %v1152 = vsel %vm1151, %v1143, %v1148
  %s1153 = vtos %v1152
  %v1154 = vstv %s1153
  %v1155 = vmul.f32 %v1118, %v1154
  %v1156 = vmul.f32 %v1119, %v1154
  %v1157 = vmul.f32 %v1155, %v953
  %v1158 = vmul.f32 %v1156, %v953
  %v1159 = vadd.f32 %v1157, %v956
  %v1160 = vadd.f32 %v1158, %v956
  %vm1161 = vcmp.gt.f32.partialorder %v1159, 0.0
  %vm1162 = vcmp.gt.f32.partialorder %v1160, 0.0
  %v1163 = vmul.f32 %v961, %v1159
  %v1164 = vmul.f32 %v961, %v1160
  %v1165 = vsel %vm1161, %v1159, %v1163
  %v1166 = vsel %vm1162, %v1160, %v1164
  %v1167 = vpack.c.bf16 %v965, %v964
  %v1168 = vpack.c.bf16 %v1166, %v1165
  %s1169 = scalar_lea.vmem %s3, 64
  %v1170 = vld [vmem:[%s1169] sm:$0xf]
  %v1171 = vld [vmem:[%s1169 + $0x4] sm:$0xf]
  %v1172 = vld [vmem:[%s1169 + $0x8] sm:$0xf]
  %v1173 = vld [vmem:[%s1169 + $0xc] sm:$0xf]
  %v1174 = vld [vmem:[%s1169 + $0x10] sm:$0xf]
  %v1175 = vld [vmem:[%s1169 + $0x14] sm:$0xf]
  %v1176 = vld [vmem:[%s1169 + $0x18] sm:$0xf]
  %v1177 = vld [vmem:[%s1169 + $0x1c] sm:$0xf]
  %v1178 = vld [vmem:[%s1169 + $0x20] sm:$0xf]
  %v1179 = vld [vmem:[%s1169 + $0x24] sm:$0xf]
  %v1180 = vld [vmem:[%s1169 + $0x28] sm:$0xf]
  %v1181 = vld [vmem:[%s1169 + $0x2c] sm:$0xf]
  %v1182 = vld [vmem:[%s1169 + $0x30] sm:$0xf]
  %v1183 = vld [vmem:[%s1169 + $0x34] sm:$0xf]
  %v1184 = vld [vmem:[%s1169 + $0x38] sm:$0xf]
  %v1185 = vld [vmem:[%s1169 + $0x3c] sm:$0xf]
  %v1186 = vperm.slane %v656, 0
  %v1203 = vunpack.c.l.b16 %v1170
  %v1204 = vunpack.c.l.b16 %v1171
  %v1205 = vunpack.c.l.b16 %v1172
  %v1206 = vunpack.c.l.b16 %v1173
  %v1207 = vunpack.c.l.b16 %v1174
  %v1208 = vunpack.c.l.b16 %v1175
  %v1209 = vunpack.c.l.b16 %v1176
  %v1210 = vunpack.c.l.b16 %v1177
  %v1211 = vunpack.c.l.b16 %v1178
  %v1212 = vunpack.c.l.b16 %v1179
  %v1213 = vunpack.c.l.b16 %v1180
  %v1214 = vunpack.c.l.b16 %v1181
  %v1215 = vunpack.c.l.b16 %v1182
  %v1216 = vunpack.c.l.b16 %v1183
  %v1217 = vunpack.c.l.b16 %v1184
  %v1218 = vunpack.c.l.b16 %v1185
  %v1219 = vpack.c.b16 %v1204, %v1203
  %v1220 = vpack.c.b16 %v1206, %v1205
  %v1221 = vpack.c.b16 %v1208, %v1207
  %v1222 = vpack.c.b16 %v1210, %v1209
  %v1223 = vpack.c.b16 %v1212, %v1211
  %v1224 = vpack.c.b16 %v1214, %v1213
  %v1225 = vpack.c.b16 %v1216, %v1215
  %v1226 = vpack.c.b16 %v1218, %v1217
  %1235 = vmatpush.bf16.msra.mxu0 %v1226
  %1236 = vmatpush.bf16.msra.mxu0 %v1225
  %1237 = vmatpush.bf16.msra.mxu0 %v1224
  %1238 = vmatpush.bf16.msra.mxu0 %v1223
  %1239 = vmatpush.bf16.msra.mxu0 %v1222
  %1240 = vmatpush.bf16.msra.mxu0 %v1221
  %1241 = vmatpush.bf16.msra.mxu0 %v1220
  %1242 = vmatpush.bf16.msra.mxu0 %v1219
  %1243 = vmatmul.bf16.gmra.mxu0 %v1167
  %v1244 = vpop.f32.mrf.mxu0
  %v1245 = vadd.f32 %v1186, %v1244
  %v1246 = vpop.f32.mrf.mxu0
  %v1247 = vadd.f32 %v1186, %v1246
  %1248 = vmatmul.bf16.gmra.mxu0 %v1168
  %v1249 = vpop.f32.mrf.mxu0
  %v1250 = vadd.f32 %v1186, %v1249
  %v1251 = vpop.f32.mrf.mxu0
  %v1252 = vadd.f32 %v1186, %v1251
  %1253 = vdwg.mxu0
  %v1254 = vadd.f32 %v1245, %v650
  %v1255 = vadd.f32 %v1247, %v651
  %v1256 = vadd.f32 %v1250, %v652
  %v1257 = vadd.f32 %v1252, %v653
  %s1258 = scalar_lea.vmem %s5, 32
  %v1259 = vld [vmem:[%s1258] sm:$0xff]
  %v1260 = vld [vmem:[%s1258 + $0x8] sm:$0x1]
  %s1261 = scalar_lea.vmem %s4, 32
  %v1262 = vld [vmem:[%s1261] sm:$0xff]
  %v1263 = vld [vmem:[%s1261 + $0x8] sm:$0x1]
  %v1264 = vpack.c.bf16 %v1255, %v1254
  %v1265 = vpack.c.bf16 %v1257, %v1256
  %s1266 = scalar_lea.vmem %s2, 128
  %v1267 = vld [vmem:[%s1266] sm:$0xf]
  %v1268 = vld [vmem:[%s1266 + $0x4] sm:$0xf]
  %v1269 = vld [vmem:[%s1266 + $0x8] sm:$0xf]
  %v1270 = vld [vmem:[%s1266 + $0xc] sm:$0xf]
  %v1271 = vld [vmem:[%s1266 + $0x10] sm:$0xf]
  %v1272 = vld [vmem:[%s1266 + $0x14] sm:$0xf]
  %v1273 = vld [vmem:[%s1266 + $0x18] sm:$0xf]
  %v1274 = vld [vmem:[%s1266 + $0x1c] sm:$0xf]
  %v1275 = vld [vmem:[%s1266 + $0x20] sm:$0xf]
  %v1276 = vld [vmem:[%s1266 + $0x24] sm:$0xf]
  %v1277 = vld [vmem:[%s1266 + $0x28] sm:$0xf]
  %v1278 = vld [vmem:[%s1266 + $0x2c] sm:$0xf]
  %v1279 = vld [vmem:[%s1266 + $0x30] sm:$0xf]
  %v1280 = vld [vmem:[%s1266 + $0x34] sm:$0xf]
  %v1281 = vld [vmem:[%s1266 + $0x38] sm:$0xf]
  %v1282 = vld [vmem:[%s1266 + $0x3c] sm:$0xf]
  %v1283 = vperm.slane %v1259, 0
  %v1300 = vunpack.c.l.b16 %v1267
  %v1301 = vunpack.c.l.b16 %v1268
  %v1302 = vunpack.c.l.b16 %v1269
  %v1303 = vunpack.c.l.b16 %v1270
  %v1304 = vunpack.c.l.b16 %v1271
  %v1305 = vunpack.c.l.b16 %v1272
  %v1306 = vunpack.c.l.b16 %v1273
  %v1307 = vunpack.c.l.b16 %v1274
  %v1308 = vunpack.c.l.b16 %v1275
  %v1309 = vunpack.c.l.b16 %v1276
  %v1310 = vunpack.c.l.b16 %v1277
  %v1311 = vunpack.c.l.b16 %v1278
  %v1312 = vunpack.c.l.b16 %v1279
  %v1313 = vunpack.c.l.b16 %v1280
  %v1314 = vunpack.c.l.b16 %v1281
  %v1315 = vunpack.c.l.b16 %v1282
  %v1316 = vpack.c.b16 %v1301, %v1300
  %v1317 = vpack.c.b16 %v1303, %v1302
  %v1318 = vpack.c.b16 %v1305, %v1304
  %v1319 = vpack.c.b16 %v1307, %v1306
  %v1320 = vpack.c.b16 %v1309, %v1308
  %v1321 = vpack.c.b16 %v1311, %v1310
  %v1322 = vpack.c.b16 %v1313, %v1312
  %v1323 = vpack.c.b16 %v1315, %v1314
  %1332 = vmatpush.bf16.msra.mxu0 %v1323
  %1333 = vmatpush.bf16.msra.mxu0 %v1322
  %1334 = vmatpush.bf16.msra.mxu0 %v1321
  %1335 = vmatpush.bf16.msra.mxu0 %v1320
  %1336 = vmatpush.bf16.msra.mxu0 %v1319
  %1337 = vmatpush.bf16.msra.mxu0 %v1318
  %1338 = vmatpush.bf16.msra.mxu0 %v1317
  %1339 = vmatpush.bf16.msra.mxu0 %v1316
  %1340 = vmatmul.bf16.gmra.mxu0 %v1264
  %v1341 = vpop.f32.mrf.mxu0
  %v1342 = vadd.f32 %v1283, %v1341
  %v1343 = vpop.f32.mrf.mxu0
  %v1344 = vadd.f32 %v1283, %v1343
  %1345 = vmatmul.bf16.gmra.mxu0 %v1265
  %v1346 = vpop.f32.mrf.mxu0
  %v1347 = vadd.f32 %v1283, %v1346
  %v1348 = vpop.f32.mrf.mxu0
  %v1349 = vadd.f32 %v1283, %v1348
  %1350 = vdwg.mxu0
  %v1351 = vadd.f32 %v1342, %v1344
  %1352 = vadd.xlane.f32.xlu0 %v1351
  %v1353 = vpop.xlane.xlu0 %1352
  %v1354 = vrot.slane %v1353, 4
  %v1355 = vadd.f32 %v1353, %v1354
  %v1356 = vrot.slane %v1355, 2
  %v1357 = vadd.f32 %v1355, %v1356
  %v1358 = vrot.slane %v1357, 1
  %v1359 = vadd.f32 %v1357, %v1358
  %s1360 = vtos %v1359
  %v1361 = vrcp.pop 2048.0
  %v1362 = vmul.f32 2048.0, %v1361
  %v1363 = vsub.f32 1.0, %v1362
  %v1364 = vmul.f32 %v1361, %v1363
  %v1365 = vadd.f32 %v1361, %v1364
  %vm1366 = vweird.f32 %v1361
  %v1367 = vsel %vm1366, %v1361, %v1365
  %s1368 = vtos %v1367
  %s1369 = smul.f32 %s1360, %s1368
  %v1370 = vstv %s1369
  %v1371 = vsub.f32 %v1342, %v1370
  %v1372 = vsub.f32 %v1344, %v1370
  %v1373 = vmul.f32 %v1371, %v1371
  %v1374 = vmul.f32 %v1372, %v1372
  %v1375 = vadd.f32 %v1373, %v1374
  %1376 = vadd.xlane.f32.xlu0 %v1375
  %v1377 = vpop.xlane.xlu0 %1376
  %v1378 = vrot.slane %v1377, 4
  %v1379 = vadd.f32 %v1377, %v1378
  %v1380 = vrot.slane %v1379, 2
  %v1381 = vadd.f32 %v1379, %v1380
  %v1382 = vrot.slane %v1381, 1
  %v1383 = vadd.f32 %v1381, %v1382
  %s1384 = vtos %v1383
  %v1385 = vrcp.pop 2048.0
  %v1386 = vmul.f32 2048.0, %v1385
  %v1387 = vsub.f32 1.0, %v1386
  %v1388 = vmul.f32 %v1385, %v1387
  %v1389 = vadd.f32 %v1385, %v1388
  %vm1390 = vweird.f32 %v1385
  %v1391 = vsel %vm1390, %v1385, %v1389
  %s1392 = vtos %v1391
  %s1393 = smul.f32 %s1384, %s1392
  %s1394 = sadd.f32 %s1393, 1e-05
  %v1395 = vstv %s1394
  %v1396 = vrsqrt.pop %v1395
  %v1397 = vmul.f32 %v1396, %v1395
  %v1398 = vmul.f32 %v1397, %v1396
  %v1399 = vmul.f32 0.5, %v1398
  %v1400 = vsub.f32 1.5, %v1399
  %v1401 = vmul.f32 %v1396, %v1400
  %vm1402 = vweird.f32 %v1395
  %vm1403 = vweird.f32 %v1396
  %vm1404 = vmor %vm1402, %vm1403
  %v1405 = vsel %vm1404, %v1396, %v1401
  %s1406 = vtos %v1405
  %v1407 = vstv %s1406
  %v1408 = vmul.f32 %v1371, %v1407
  %v1409 = vmul.f32 %v1372, %v1407
  %v1410 = vperm.slane %v1259, 1
  %v1411 = vmul.f32 %v1408, %v1410
  %v1412 = vmul.f32 %v1409, %v1410
  %v1413 = vperm.slane %v1259, 2
  %v1414 = vadd.f32 %v1411, %v1413
  %v1415 = vadd.f32 %v1412, %v1413
  %vm1416 = vcmp.gt.f32.partialorder %v1414, 0.0
  %vm1417 = vcmp.gt.f32.partialorder %v1415, 0.0
  %v1418 = vperm.slane %v1259, 3
  %v1419 = vmul.f32 %v1418, %v1414
  %v1420 = vmul.f32 %v1418, %v1415
  %v1421 = vsel %vm1416, %v1414, %v1419
  %v1422 = vsel %vm1417, %v1415, %v1420
  %v1423 = vperm.slane %v27, 2
  %v1424 = vadd.f32 %v1421, %v1423
  %v1425 = vadd.f32 %v1422, %v1423
  %1426 = vrot.lane.b32.xlu0 %v1424, 64
  %v1427 = vpop.permute.xlu0 %1426
  %1428 = vrot.lane.b32.xlu0 %v1425, 64
  %v1429 = vpop.permute.xlu0 %1428
  %v1430 = vsel %vm41, 1, 0
  %vm1431 = vcmp.eq.s32.totalorder %v1430, 1
  %v1432 = vsel %vm1431, %v1427, 0.0
  %v1433 = vsel %vm1431, %v1429, 0.0
  %1434 = vrot.lane.b32.xlu0 %v1424, 32
  %v1435 = vpop.permute.xlu0 %1434
  %1436 = vrot.lane.b32.xlu0 %v1425, 32
  %v1437 = vpop.permute.xlu0 %1436
  %v1438 = vsel %vm827, %v1435, 0.0
  %v1439 = vsel %vm827, %v1437, 0.0
  %v1440 = vperm.slane %v1262, 2
  %v1441 = vmul.f32 %v1440, %v1424
  %v1442 = vmul.f32 %v1440, %v1425
  %v1443 = vperm.slane %v1262, 0
  %v1444 = vmul.f32 %v1443, %v1432
  %v1445 = vmul.f32 %v1443, %v1433
  %v1446 = vadd.f32 %v1441, %v1444
  %v1447 = vadd.f32 %v1442, %v1445
  %v1448 = vperm.slane %v1262, 1
  %v1449 = vmul.f32 %v1448, %v1438
  %v1450 = vmul.f32 %v1448, %v1439
  %v1451 = vadd.f32 %v1446, %v1449
  %v1452 = vadd.f32 %v1447, %v1450
  %v1453 = vperm.slane %v1262, 5
  %v1454 = vmul.f32 %v1453, %v1424
  %v1455 = vmul.f32 %v1453, %v1425
  %v1456 = vperm.slane %v1262, 3
  %v1457 = vmul.f32 %v1456, %v1432
  %v1458 = vmul.f32 %v1456, %v1433
  %v1459 = vadd.f32 %v1454, %v1457
  %v1460 = vadd.f32 %v1455, %v1458
  %v1461 = vperm.slane %v1262, 4
  %v1462 = vmul.f32 %v1461, %v1438
  %v1463 = vmul.f32 %v1461, %v1439
  %v1464 = vadd.f32 %v1459, %v1462
  %v1465 = vadd.f32 %v1460, %v1463
  %v1466 = vperm.slane %v1263, 0
  %v1467 = vmul.f32 %v1466, %v1424
  %v1468 = vmul.f32 %v1466, %v1425
  %v1469 = vperm.slane %v1262, 6
  %v1470 = vmul.f32 %v1469, %v1432
  %v1471 = vmul.f32 %v1469, %v1433
  %v1472 = vadd.f32 %v1467, %v1470
  %v1473 = vadd.f32 %v1468, %v1471
  %v1474 = vperm.slane %v1262, 7
  %v1475 = vmul.f32 %v1474, %v1438
  %v1476 = vmul.f32 %v1474, %v1439
  %v1477 = vadd.f32 %v1472, %v1475
  %v1478 = vadd.f32 %v1473, %v1476
  %v1479 = vrot.slane %v1451, 7
  %v1480 = vrot.slane %v1452, 7
  %v1481 = vsel %vm264, %v1479, %v1480
  %v1482 = vsel %vm264, %v1480, %v1479
  %v1483 = vsel %vm269, %v1482, 0.0
  %v1484 = vsel %vm270, %v1481, 0.0
  %v1485 = vadd.f32 %v1464, %v1483
  %v1486 = vadd.f32 %v1465, %v1484
  %v1487 = vrot.slane %v1477, 1
  %v1488 = vrot.slane %v1478, 1
  %v1489 = vsel %vm277, %v1487, %v1488
  %v1490 = vsel %vm277, %v1488, %v1487
  %v1491 = vsel %vm282, %v1489, 0.0
  %v1492 = vsel %vm283, %v1490, 0.0
  %v1493 = vadd.f32 %v1485, %v1491
  %v1494 = vadd.f32 %v1486, %v1492
  %v1495 = vperm.slane %v1259, 4
  %v1496 = vadd.f32 %v1493, %v1495
  %v1497 = vadd.f32 %v1494, %v1495
  %v1498 = vadd.f32 %v1496, %v1497
  %1499 = vadd.xlane.f32.xlu0 %v1498
  %v1500 = vpop.xlane.xlu0 %1499
  %v1501 = vrot.slane %v1500, 4
  %v1502 = vadd.f32 %v1500, %v1501
  %v1503 = vrot.slane %v1502, 2
  %v1504 = vadd.f32 %v1502, %v1503
  %v1505 = vrot.slane %v1504, 1
  %v1506 = vadd.f32 %v1504, %v1505
  %s1507 = vtos %v1506
  %v1508 = vrcp.pop 2048.0
  %v1509 = vmul.f32 2048.0, %v1508
  %v1510 = vsub.f32 1.0, %v1509
  %v1511 = vmul.f32 %v1508, %v1510
  %v1512 = vadd.f32 %v1508, %v1511
  %vm1513 = vweird.f32 %v1508
  %v1514 = vsel %vm1513, %v1508, %v1512
  %s1515 = vtos %v1514
  %s1516 = smul.f32 %s1507, %s1515
  %v1517 = vstv %s1516
  %v1518 = vsub.f32 %v1496, %v1517
  %v1519 = vsub.f32 %v1497, %v1517
  %v1520 = vmul.f32 %v1518, %v1518
  %v1521 = vmul.f32 %v1519, %v1519
  %v1522 = vadd.f32 %v1520, %v1521
  %1523 = vadd.xlane.f32.xlu0 %v1522
  %v1524 = vpop.xlane.xlu0 %1523
  %v1525 = vrot.slane %v1524, 4
  %v1526 = vadd.f32 %v1524, %v1525
  %v1527 = vrot.slane %v1526, 2
  %v1528 = vadd.f32 %v1526, %v1527
  %v1529 = vrot.slane %v1528, 1
  %v1530 = vadd.f32 %v1528, %v1529
  %s1531 = vtos %v1530
  %v1532 = vrcp.pop 2048.0
  %v1533 = vmul.f32 2048.0, %v1532
  %v1534 = vsub.f32 1.0, %v1533
  %v1535 = vmul.f32 %v1532, %v1534
  %v1536 = vadd.f32 %v1532, %v1535
  %vm1537 = vweird.f32 %v1532
  %v1538 = vsel %vm1537, %v1532, %v1536
  %s1539 = vtos %v1538
  %s1540 = smul.f32 %s1531, %s1539
  %s1541 = sadd.f32 %s1540, 1e-05
  %v1542 = vstv %s1541
  %v1543 = vrsqrt.pop %v1542
  %v1544 = vmul.f32 %v1543, %v1542
  %v1545 = vmul.f32 %v1544, %v1543
  %v1546 = vmul.f32 0.5, %v1545
  %v1547 = vsub.f32 1.5, %v1546
  %v1548 = vmul.f32 %v1543, %v1547
  %vm1549 = vweird.f32 %v1542
  %vm1550 = vweird.f32 %v1543
  %vm1551 = vmor %vm1549, %vm1550
  %v1552 = vsel %vm1551, %v1543, %v1548
  %s1553 = vtos %v1552
  %v1554 = vstv %s1553
  %v1555 = vmul.f32 %v1518, %v1554
  %v1556 = vmul.f32 %v1519, %v1554
  %v1557 = vperm.slane %v1259, 5
  %v1558 = vmul.f32 %v1555, %v1557
  %v1559 = vmul.f32 %v1556, %v1557
  %v1560 = vperm.slane %v1259, 6
  %v1561 = vadd.f32 %v1558, %v1560
  %v1562 = vadd.f32 %v1559, %v1560
  %vm1563 = vcmp.gt.f32.partialorder %v1561, 0.0
  %vm1564 = vcmp.gt.f32.partialorder %v1562, 0.0
  %v1565 = vperm.slane %v1259, 7
  %v1566 = vmul.f32 %v1565, %v1561
  %v1567 = vmul.f32 %v1565, %v1562
  %v1568 = vsel %vm1563, %v1561, %v1566
  %v1569 = vsel %vm1564, %v1562, %v1567
  %v1570 = vadd.f32 %v1347, %v1349
  %1571 = vadd.xlane.f32.xlu0 %v1570
  %v1572 = vpop.xlane.xlu0 %1571
  %v1573 = vrot.slane %v1572, 4
  %v1574 = vadd.f32 %v1572, %v1573
  %v1575 = vrot.slane %v1574, 2
  %v1576 = vadd.f32 %v1574, %v1575
  %v1577 = vrot.slane %v1576, 1
  %v1578 = vadd.f32 %v1576, %v1577
  %s1579 = vtos %v1578
  %v1580 = vrcp.pop 2048.0
  %v1581 = vmul.f32 2048.0, %v1580
  %v1582 = vsub.f32 1.0, %v1581
  %v1583 = vmul.f32 %v1580, %v1582
  %v1584 = vadd.f32 %v1580, %v1583
  %vm1585 = vweird.f32 %v1580
  %v1586 = vsel %vm1585, %v1580, %v1584
  %s1587 = vtos %v1586
  %s1588 = smul.f32 %s1579, %s1587
  %v1589 = vstv %s1588
  %v1590 = vsub.f32 %v1347, %v1589
  %v1591 = vsub.f32 %v1349, %v1589
  %v1592 = vmul.f32 %v1590, %v1590
  %v1593 = vmul.f32 %v1591, %v1591
  %v1594 = vadd.f32 %v1592, %v1593
  %1595 = vadd.xlane.f32.xlu0 %v1594
  %v1596 = vpop.xlane.xlu0 %1595
  %v1597 = vrot.slane %v1596, 4
  %v1598 = vadd.f32 %v1596, %v1597
  %v1599 = vrot.slane %v1598, 2
  %v1600 = vadd.f32 %v1598, %v1599
  %v1601 = vrot.slane %v1600, 1
  %v1602 = vadd.f32 %v1600, %v1601
  %s1603 = vtos %v1602
  %v1604 = vrcp.pop 2048.0
  %v1605 = vmul.f32 2048.0, %v1604
  %v1606 = vsub.f32 1.0, %v1605
  %v1607 = vmul.f32 %v1604, %v1606
  %v1608 = vadd.f32 %v1604, %v1607
  %vm1609 = vweird.f32 %v1604
  %v1610 = vsel %vm1609, %v1604, %v1608
  %s1611 = vtos %v1610
  %s1612 = smul.f32 %s1603, %s1611
  %s1613 = sadd.f32 %s1612, 1e-05
  %v1614 = vstv %s1613
  %v1615 = vrsqrt.pop %v1614
  %v1616 = vmul.f32 %v1615, %v1614
  %v1617 = vmul.f32 %v1616, %v1615
  %v1618 = vmul.f32 0.5, %v1617
  %v1619 = vsub.f32 1.5, %v1618
  %v1620 = vmul.f32 %v1615, %v1619
  %vm1621 = vweird.f32 %v1614
  %vm1622 = vweird.f32 %v1615
  %vm1623 = vmor %vm1621, %vm1622
  %v1624 = vsel %vm1623, %v1615, %v1620
  %s1625 = vtos %v1624
  %v1626 = vstv %s1625
  %v1627 = vmul.f32 %v1590, %v1626
  %v1628 = vmul.f32 %v1591, %v1626
  %v1629 = vmul.f32 %v1627, %v1410
  %v1630 = vmul.f32 %v1628, %v1410
  %v1631 = vadd.f32 %v1629, %v1413
  %v1632 = vadd.f32 %v1630, %v1413
  %vm1633 = vcmp.gt.f32.partialorder %v1631, 0.0
  %vm1634 = vcmp.gt.f32.partialorder %v1632, 0.0
  %v1635 = vmul.f32 %v1418, %v1631
  %v1636 = vmul.f32 %v1418, %v1632
  %v1637 = vsel %vm1633, %v1631, %v1635
  %v1638 = vsel %vm1634, %v1632, %v1636
  %v1639 = vperm.slane %v28, 2
  %v1640 = vadd.f32 %v1637, %v1639
  %v1641 = vadd.f32 %v1638, %v1639
  %1642 = vrot.lane.b32.xlu0 %v1640, 64
  %v1643 = vpop.permute.xlu0 %1642
  %1644 = vrot.lane.b32.xlu0 %v1641, 64
  %v1645 = vpop.permute.xlu0 %1644
  %v1646 = vsel %vm1431, %v1643, 0.0
  %v1647 = vsel %vm1431, %v1645, 0.0
  %1648 = vrot.lane.b32.xlu0 %v1640, 32
  %v1649 = vpop.permute.xlu0 %1648
  %1650 = vrot.lane.b32.xlu0 %v1641, 32
  %v1651 = vpop.permute.xlu0 %1650
  %v1652 = vsel %vm827, %v1649, 0.0
  %v1653 = vsel %vm827, %v1651, 0.0
  %v1654 = vmul.f32 %v1440, %v1640
  %v1655 = vmul.f32 %v1440, %v1641
  %v1656 = vmul.f32 %v1443, %v1646
  %v1657 = vmul.f32 %v1443, %v1647
  %v1658 = vadd.f32 %v1654, %v1656
  %v1659 = vadd.f32 %v1655, %v1657
  %v1660 = vmul.f32 %v1448, %v1652
  %v1661 = vmul.f32 %v1448, %v1653
  %v1662 = vadd.f32 %v1658, %v1660
  %v1663 = vadd.f32 %v1659, %v1661
  %v1664 = vmul.f32 %v1453, %v1640
  %v1665 = vmul.f32 %v1453, %v1641
  %v1666 = vmul.f32 %v1456, %v1646
  %v1667 = vmul.f32 %v1456, %v1647
  %v1668 = vadd.f32 %v1664, %v1666
  %v1669 = vadd.f32 %v1665, %v1667
  %v1670 = vmul.f32 %v1461, %v1652
  %v1671 = vmul.f32 %v1461, %v1653
  %v1672 = vadd.f32 %v1668, %v1670
  %v1673 = vadd.f32 %v1669, %v1671
  %v1674 = vmul.f32 %v1466, %v1640
  %v1675 = vmul.f32 %v1466, %v1641
  %v1676 = vmul.f32 %v1469, %v1646
  %v1677 = vmul.f32 %v1469, %v1647
  %v1678 = vadd.f32 %v1674, %v1676
  %v1679 = vadd.f32 %v1675, %v1677
  %v1680 = vmul.f32 %v1474, %v1652
  %v1681 = vmul.f32 %v1474, %v1653
  %v1682 = vadd.f32 %v1678, %v1680
  %v1683 = vadd.f32 %v1679, %v1681
  %v1684 = vrot.slane %v1662, 7
  %v1685 = vrot.slane %v1663, 7
  %v1686 = vsel %vm264, %v1684, %v1685
  %v1687 = vsel %vm264, %v1685, %v1684
  %v1688 = vsel %vm269, %v1687, 0.0
  %v1689 = vsel %vm270, %v1686, 0.0
  %v1690 = vadd.f32 %v1672, %v1688
  %v1691 = vadd.f32 %v1673, %v1689
  %v1692 = vrot.slane %v1682, 1
  %v1693 = vrot.slane %v1683, 1
  %v1694 = vsel %vm277, %v1692, %v1693
  %v1695 = vsel %vm277, %v1693, %v1692
  %v1696 = vsel %vm282, %v1694, 0.0
  %v1697 = vsel %vm283, %v1695, 0.0
  %v1698 = vadd.f32 %v1690, %v1696
  %v1699 = vadd.f32 %v1691, %v1697
  %v1700 = vadd.f32 %v1698, %v1495
  %v1701 = vadd.f32 %v1699, %v1495
  %v1702 = vadd.f32 %v1700, %v1701
  %1703 = vadd.xlane.f32.xlu0 %v1702
  %v1704 = vpop.xlane.xlu0 %1703
  %v1705 = vrot.slane %v1704, 4
  %v1706 = vadd.f32 %v1704, %v1705
  %v1707 = vrot.slane %v1706, 2
  %v1708 = vadd.f32 %v1706, %v1707
  %v1709 = vrot.slane %v1708, 1
  %v1710 = vadd.f32 %v1708, %v1709
  %s1711 = vtos %v1710
  %v1712 = vrcp.pop 2048.0
  %v1713 = vmul.f32 2048.0, %v1712
  %v1714 = vsub.f32 1.0, %v1713
  %v1715 = vmul.f32 %v1712, %v1714
  %v1716 = vadd.f32 %v1712, %v1715
  %vm1717 = vweird.f32 %v1712
  %v1718 = vsel %vm1717, %v1712, %v1716
  %s1719 = vtos %v1718
  %s1720 = smul.f32 %s1711, %s1719
  %v1721 = vstv %s1720
  %v1722 = vsub.f32 %v1700, %v1721
  %v1723 = vsub.f32 %v1701, %v1721
  %v1724 = vmul.f32 %v1722, %v1722
  %v1725 = vmul.f32 %v1723, %v1723
  %v1726 = vadd.f32 %v1724, %v1725
  %1727 = vadd.xlane.f32.xlu0 %v1726
  %v1728 = vpop.xlane.xlu0 %1727
  %v1729 = vrot.slane %v1728, 4
  %v1730 = vadd.f32 %v1728, %v1729
  %v1731 = vrot.slane %v1730, 2
  %v1732 = vadd.f32 %v1730, %v1731
  %v1733 = vrot.slane %v1732, 1
  %v1734 = vadd.f32 %v1732, %v1733
  %s1735 = vtos %v1734
  %v1736 = vrcp.pop 2048.0
  %v1737 = vmul.f32 2048.0, %v1736
  %v1738 = vsub.f32 1.0, %v1737
  %v1739 = vmul.f32 %v1736, %v1738
  %v1740 = vadd.f32 %v1736, %v1739
  %vm1741 = vweird.f32 %v1736
  %v1742 = vsel %vm1741, %v1736, %v1740
  %s1743 = vtos %v1742
  %s1744 = smul.f32 %s1735, %s1743
  %s1745 = sadd.f32 %s1744, 1e-05
  %v1746 = vstv %s1745
  %v1747 = vrsqrt.pop %v1746
  %v1748 = vmul.f32 %v1747, %v1746
  %v1749 = vmul.f32 %v1748, %v1747
  %v1750 = vmul.f32 0.5, %v1749
  %v1751 = vsub.f32 1.5, %v1750
  %v1752 = vmul.f32 %v1747, %v1751
  %vm1753 = vweird.f32 %v1746
  %vm1754 = vweird.f32 %v1747
  %vm1755 = vmor %vm1753, %vm1754
  %v1756 = vsel %vm1755, %v1747, %v1752
  %s1757 = vtos %v1756
  %v1758 = vstv %s1757
  %v1759 = vmul.f32 %v1722, %v1758
  %v1760 = vmul.f32 %v1723, %v1758
  %v1761 = vmul.f32 %v1759, %v1557
  %v1762 = vmul.f32 %v1760, %v1557
  %v1763 = vadd.f32 %v1761, %v1560
  %v1764 = vadd.f32 %v1762, %v1560
  %vm1765 = vcmp.gt.f32.partialorder %v1763, 0.0
  %vm1766 = vcmp.gt.f32.partialorder %v1764, 0.0
  %v1767 = vmul.f32 %v1565, %v1763
  %v1768 = vmul.f32 %v1565, %v1764
  %v1769 = vsel %vm1765, %v1763, %v1767
  %v1770 = vsel %vm1766, %v1764, %v1768
  %v1771 = vpack.c.bf16 %v1569, %v1568
  %v1772 = vpack.c.bf16 %v1770, %v1769
  %s1773 = scalar_lea.vmem %s3, 128
  %v1774 = vld [vmem:[%s1773] sm:$0xf]
  %v1775 = vld [vmem:[%s1773 + $0x4] sm:$0xf]
  %v1776 = vld [vmem:[%s1773 + $0x8] sm:$0xf]
  %v1777 = vld [vmem:[%s1773 + $0xc] sm:$0xf]
  %v1778 = vld [vmem:[%s1773 + $0x10] sm:$0xf]
  %v1779 = vld [vmem:[%s1773 + $0x14] sm:$0xf]
  %v1780 = vld [vmem:[%s1773 + $0x18] sm:$0xf]
  %v1781 = vld [vmem:[%s1773 + $0x1c] sm:$0xf]
  %v1782 = vld [vmem:[%s1773 + $0x20] sm:$0xf]
  %v1783 = vld [vmem:[%s1773 + $0x24] sm:$0xf]
  %v1784 = vld [vmem:[%s1773 + $0x28] sm:$0xf]
  %v1785 = vld [vmem:[%s1773 + $0x2c] sm:$0xf]
  %v1786 = vld [vmem:[%s1773 + $0x30] sm:$0xf]
  %v1787 = vld [vmem:[%s1773 + $0x34] sm:$0xf]
  %v1788 = vld [vmem:[%s1773 + $0x38] sm:$0xf]
  %v1789 = vld [vmem:[%s1773 + $0x3c] sm:$0xf]
  %v1790 = vperm.slane %v1260, 0
  %v1807 = vunpack.c.l.b16 %v1774
  %v1808 = vunpack.c.l.b16 %v1775
  %v1809 = vunpack.c.l.b16 %v1776
  %v1810 = vunpack.c.l.b16 %v1777
  %v1811 = vunpack.c.l.b16 %v1778
  %v1812 = vunpack.c.l.b16 %v1779
  %v1813 = vunpack.c.l.b16 %v1780
  %v1814 = vunpack.c.l.b16 %v1781
  %v1815 = vunpack.c.l.b16 %v1782
  %v1816 = vunpack.c.l.b16 %v1783
  %v1817 = vunpack.c.l.b16 %v1784
  %v1818 = vunpack.c.l.b16 %v1785
  %v1819 = vunpack.c.l.b16 %v1786
  %v1820 = vunpack.c.l.b16 %v1787
  %v1821 = vunpack.c.l.b16 %v1788
  %v1822 = vunpack.c.l.b16 %v1789
  %v1823 = vpack.c.b16 %v1808, %v1807
  %v1824 = vpack.c.b16 %v1810, %v1809
  %v1825 = vpack.c.b16 %v1812, %v1811
  %v1826 = vpack.c.b16 %v1814, %v1813
  %v1827 = vpack.c.b16 %v1816, %v1815
  %v1828 = vpack.c.b16 %v1818, %v1817
  %v1829 = vpack.c.b16 %v1820, %v1819
  %v1830 = vpack.c.b16 %v1822, %v1821
  %1839 = vmatpush.bf16.msra.mxu0 %v1830
  %1840 = vmatpush.bf16.msra.mxu0 %v1829
  %1841 = vmatpush.bf16.msra.mxu0 %v1828
  %1842 = vmatpush.bf16.msra.mxu0 %v1827
  %1843 = vmatpush.bf16.msra.mxu0 %v1826
  %1844 = vmatpush.bf16.msra.mxu0 %v1825
  %1845 = vmatpush.bf16.msra.mxu0 %v1824
  %1846 = vmatpush.bf16.msra.mxu0 %v1823
  %1847 = vmatmul.bf16.gmra.mxu0 %v1771
  %v1848 = vpop.f32.mrf.mxu0
  %v1849 = vadd.f32 %v1790, %v1848
  %v1850 = vpop.f32.mrf.mxu0
  %v1851 = vadd.f32 %v1790, %v1850
  %1852 = vmatmul.bf16.gmra.mxu0 %v1772
  %v1853 = vpop.f32.mrf.mxu0
  %v1854 = vadd.f32 %v1790, %v1853
  %v1855 = vpop.f32.mrf.mxu0
  %v1856 = vadd.f32 %v1790, %v1855
  %1857 = vdwg.mxu0
  %v1858 = vadd.f32 %v1849, %v1254
  %v1859 = vadd.f32 %v1851, %v1255
  %v1860 = vadd.f32 %v1854, %v1256
  %v1861 = vadd.f32 %v1856, %v1257
  %s1862 = scalar_lea.vmem %s5, 48
  %v1863 = vld [vmem:[%s1862] sm:$0xff]
  %v1864 = vld [vmem:[%s1862 + $0x8] sm:$0x1]
  %s1865 = scalar_lea.vmem %s4, 48
  %v1866 = vld [vmem:[%s1865] sm:$0xff]
  %v1867 = vld [vmem:[%s1865 + $0x8] sm:$0x1]
  %v1868 = vpack.c.bf16 %v1859, %v1858
  %v1869 = vpack.c.bf16 %v1861, %v1860
  %s1870 = scalar_lea.vmem %s2, 192
  %v1871 = vld [vmem:[%s1870] sm:$0xf]
  %v1872 = vld [vmem:[%s1870 + $0x4] sm:$0xf]
  %v1873 = vld [vmem:[%s1870 + $0x8] sm:$0xf]
  %v1874 = vld [vmem:[%s1870 + $0xc] sm:$0xf]
  %v1875 = vld [vmem:[%s1870 + $0x10] sm:$0xf]
  %v1876 = vld [vmem:[%s1870 + $0x14] sm:$0xf]
  %v1877 = vld [vmem:[%s1870 + $0x18] sm:$0xf]
  %v1878 = vld [vmem:[%s1870 + $0x1c] sm:$0xf]
  %v1879 = vld [vmem:[%s1870 + $0x20] sm:$0xf]
  %v1880 = vld [vmem:[%s1870 + $0x24] sm:$0xf]
  %v1881 = vld [vmem:[%s1870 + $0x28] sm:$0xf]
  %v1882 = vld [vmem:[%s1870 + $0x2c] sm:$0xf]
  %v1883 = vld [vmem:[%s1870 + $0x30] sm:$0xf]
  %v1884 = vld [vmem:[%s1870 + $0x34] sm:$0xf]
  %v1885 = vld [vmem:[%s1870 + $0x38] sm:$0xf]
  %v1886 = vld [vmem:[%s1870 + $0x3c] sm:$0xf]
  %v1887 = vperm.slane %v1863, 0
  %v1904 = vunpack.c.l.b16 %v1871
  %v1905 = vunpack.c.l.b16 %v1872
  %v1906 = vunpack.c.l.b16 %v1873
  %v1907 = vunpack.c.l.b16 %v1874
  %v1908 = vunpack.c.l.b16 %v1875
  %v1909 = vunpack.c.l.b16 %v1876
  %v1910 = vunpack.c.l.b16 %v1877
  %v1911 = vunpack.c.l.b16 %v1878
  %v1912 = vunpack.c.l.b16 %v1879
  %v1913 = vunpack.c.l.b16 %v1880
  %v1914 = vunpack.c.l.b16 %v1881
  %v1915 = vunpack.c.l.b16 %v1882
  %v1916 = vunpack.c.l.b16 %v1883
  %v1917 = vunpack.c.l.b16 %v1884
  %v1918 = vunpack.c.l.b16 %v1885
  %v1919 = vunpack.c.l.b16 %v1886
  %v1920 = vpack.c.b16 %v1905, %v1904
  %v1921 = vpack.c.b16 %v1907, %v1906
  %v1922 = vpack.c.b16 %v1909, %v1908
  %v1923 = vpack.c.b16 %v1911, %v1910
  %v1924 = vpack.c.b16 %v1913, %v1912
  %v1925 = vpack.c.b16 %v1915, %v1914
  %v1926 = vpack.c.b16 %v1917, %v1916
  %v1927 = vpack.c.b16 %v1919, %v1918
  %1936 = vmatpush.bf16.msra.mxu0 %v1927
  %1937 = vmatpush.bf16.msra.mxu0 %v1926
  %1938 = vmatpush.bf16.msra.mxu0 %v1925
  %1939 = vmatpush.bf16.msra.mxu0 %v1924
  %1940 = vmatpush.bf16.msra.mxu0 %v1923
  %1941 = vmatpush.bf16.msra.mxu0 %v1922
  %1942 = vmatpush.bf16.msra.mxu0 %v1921
  %1943 = vmatpush.bf16.msra.mxu0 %v1920
  %1944 = vmatmul.bf16.gmra.mxu0 %v1868
  %v1945 = vpop.f32.mrf.mxu0
  %v1946 = vadd.f32 %v1887, %v1945
  %v1947 = vpop.f32.mrf.mxu0
  %v1948 = vadd.f32 %v1887, %v1947
  %1949 = vmatmul.bf16.gmra.mxu0 %v1869
  %v1950 = vpop.f32.mrf.mxu0
  %v1951 = vadd.f32 %v1887, %v1950
  %v1952 = vpop.f32.mrf.mxu0
  %v1953 = vadd.f32 %v1887, %v1952
  %1954 = vdwg.mxu0
  %v1955 = vadd.f32 %v1946, %v1948
  %1956 = vadd.xlane.f32.xlu0 %v1955
  %v1957 = vpop.xlane.xlu0 %1956
  %v1958 = vrot.slane %v1957, 4
  %v1959 = vadd.f32 %v1957, %v1958
  %v1960 = vrot.slane %v1959, 2
  %v1961 = vadd.f32 %v1959, %v1960
  %v1962 = vrot.slane %v1961, 1
  %v1963 = vadd.f32 %v1961, %v1962
  %s1964 = vtos %v1963
  %v1965 = vrcp.pop 2048.0
  %v1966 = vmul.f32 2048.0, %v1965
  %v1967 = vsub.f32 1.0, %v1966
  %v1968 = vmul.f32 %v1965, %v1967
  %v1969 = vadd.f32 %v1965, %v1968
  %vm1970 = vweird.f32 %v1965
  %v1971 = vsel %vm1970, %v1965, %v1969
  %s1972 = vtos %v1971
  %s1973 = smul.f32 %s1964, %s1972
  %v1974 = vstv %s1973
  %v1975 = vsub.f32 %v1946, %v1974
  %v1976 = vsub.f32 %v1948, %v1974
  %v1977 = vmul.f32 %v1975, %v1975
  %v1978 = vmul.f32 %v1976, %v1976
  %v1979 = vadd.f32 %v1977, %v1978
  %1980 = vadd.xlane.f32.xlu0 %v1979
  %v1981 = vpop.xlane.xlu0 %1980
  %v1982 = vrot.slane %v1981, 4
  %v1983 = vadd.f32 %v1981, %v1982
  %v1984 = vrot.slane %v1983, 2
  %v1985 = vadd.f32 %v1983, %v1984
  %v1986 = vrot.slane %v1985, 1
  %v1987 = vadd.f32 %v1985, %v1986
  %s1988 = vtos %v1987
  %v1989 = vrcp.pop 2048.0
  %v1990 = vmul.f32 2048.0, %v1989
  %v1991 = vsub.f32 1.0, %v1990
  %v1992 = vmul.f32 %v1989, %v1991
  %v1993 = vadd.f32 %v1989, %v1992
  %vm1994 = vweird.f32 %v1989
  %v1995 = vsel %vm1994, %v1989, %v1993
  %s1996 = vtos %v1995
  %s1997 = smul.f32 %s1988, %s1996
  %s1998 = sadd.f32 %s1997, 1e-05
  %v1999 = vstv %s1998
  %v2000 = vrsqrt.pop %v1999
  %v2001 = vmul.f32 %v2000, %v1999
  %v2002 = vmul.f32 %v2001, %v2000
  %v2003 = vmul.f32 0.5, %v2002
  %v2004 = vsub.f32 1.5, %v2003
  %v2005 = vmul.f32 %v2000, %v2004
  %vm2006 = vweird.f32 %v1999
  %vm2007 = vweird.f32 %v2000
  %vm2008 = vmor %vm2006, %vm2007
  %v2009 = vsel %vm2008, %v2000, %v2005
  %s2010 = vtos %v2009
  %v2011 = vstv %s2010
  %v2012 = vmul.f32 %v1975, %v2011
  %v2013 = vmul.f32 %v1976, %v2011
  %v2014 = vperm.slane %v1863, 1
  %v2015 = vmul.f32 %v2012, %v2014
  %v2016 = vmul.f32 %v2013, %v2014
  %v2017 = vperm.slane %v1863, 2
  %v2018 = vadd.f32 %v2015, %v2017
  %v2019 = vadd.f32 %v2016, %v2017
  %vm2020 = vcmp.gt.f32.partialorder %v2018, 0.0
  %vm2021 = vcmp.gt.f32.partialorder %v2019, 0.0
  %v2022 = vperm.slane %v1863, 3
  %v2023 = vmul.f32 %v2022, %v2018
  %v2024 = vmul.f32 %v2022, %v2019
  %v2025 = vsel %vm2020, %v2018, %v2023
  %v2026 = vsel %vm2021, %v2019, %v2024
  %v2027 = vperm.slane %v27, 3
  %v2028 = vadd.f32 %v2025, %v2027
  %v2029 = vadd.f32 %v2026, %v2027
  %2030 = vrot.lane.b32.xlu0 %v2028, 64
  %v2031 = vpop.permute.xlu0 %2030
  %2032 = vrot.lane.b32.xlu0 %v2029, 64
  %v2033 = vpop.permute.xlu0 %2032
  %v2034 = vsel %vm1431, %v2031, 0.0
  %v2035 = vsel %vm1431, %v2033, 0.0
  %v2036 = vperm.slane %v1866, 2
  %v2037 = vmul.f32 %v2036, %v2028
  %v2038 = vmul.f32 %v2036, %v2029
  %v2039 = vperm.slane %v1866, 1
  %v2040 = vmul.f32 %v2039, %v2034
  %v2041 = vmul.f32 %v2039, %v2035
  %v2042 = vadd.f32 %v2037, %v2040
  %v2043 = vadd.f32 %v2038, %v2041
  %v2044 = vperm.slane %v1866, 5
  %v2045 = vmul.f32 %v2044, %v2028
  %v2046 = vmul.f32 %v2044, %v2029
  %v2047 = vperm.slane %v1866, 4
  %v2048 = vmul.f32 %v2047, %v2034
  %v2049 = vmul.f32 %v2047, %v2035
  %v2050 = vadd.f32 %v2045, %v2048
  %v2051 = vadd.f32 %v2046, %v2049
  %v2052 = vperm.slane %v1867, 0
  %v2053 = vmul.f32 %v2052, %v2028
  %v2054 = vmul.f32 %v2052, %v2029
  %v2055 = vperm.slane %v1866, 7
  %v2056 = vmul.f32 %v2055, %v2034
  %v2057 = vmul.f32 %v2055, %v2035
  %v2058 = vadd.f32 %v2053, %v2056
  %v2059 = vadd.f32 %v2054, %v2057
  %v2060 = vrot.slane %v2042, 7
  %v2061 = vrot.slane %v2043, 7
  %v2062 = vsel %vm264, %v2060, %v2061
  %v2063 = vsel %vm264, %v2061, %v2060
  %v2064 = vsel %vm269, %v2063, 0.0
  %v2065 = vsel %vm270, %v2062, 0.0
  %v2066 = vadd.f32 %v2050, %v2064
  %v2067 = vadd.f32 %v2051, %v2065
  %v2068 = vrot.slane %v2058, 1
  %v2069 = vrot.slane %v2059, 1
  %v2070 = vsel %vm277, %v2068, %v2069
  %v2071 = vsel %vm277, %v2069, %v2068
  %v2072 = vsel %vm282, %v2070, 0.0
  %v2073 = vsel %vm283, %v2071, 0.0
  %v2074 = vadd.f32 %v2066, %v2072
  %v2075 = vadd.f32 %v2067, %v2073
  %v2076 = vperm.slane %v1863, 4
  %v2077 = vadd.f32 %v2074, %v2076
  %v2078 = vadd.f32 %v2075, %v2076
  %v2079 = vadd.f32 %v2077, %v2078
  %2080 = vadd.xlane.f32.xlu0 %v2079
  %v2081 = vpop.xlane.xlu0 %2080
  %v2082 = vrot.slane %v2081, 4
  %v2083 = vadd.f32 %v2081, %v2082
  %v2084 = vrot.slane %v2083, 2
  %v2085 = vadd.f32 %v2083, %v2084
  %v2086 = vrot.slane %v2085, 1
  %v2087 = vadd.f32 %v2085, %v2086
  %s2088 = vtos %v2087
  %v2089 = vrcp.pop 2048.0
  %v2090 = vmul.f32 2048.0, %v2089
  %v2091 = vsub.f32 1.0, %v2090
  %v2092 = vmul.f32 %v2089, %v2091
  %v2093 = vadd.f32 %v2089, %v2092
  %vm2094 = vweird.f32 %v2089
  %v2095 = vsel %vm2094, %v2089, %v2093
  %s2096 = vtos %v2095
  %s2097 = smul.f32 %s2088, %s2096
  %v2098 = vstv %s2097
  %v2099 = vsub.f32 %v2077, %v2098
  %v2100 = vsub.f32 %v2078, %v2098
  %v2101 = vmul.f32 %v2099, %v2099
  %v2102 = vmul.f32 %v2100, %v2100
  %v2103 = vadd.f32 %v2101, %v2102
  %2104 = vadd.xlane.f32.xlu0 %v2103
  %v2105 = vpop.xlane.xlu0 %2104
  %v2106 = vrot.slane %v2105, 4
  %v2107 = vadd.f32 %v2105, %v2106
  %v2108 = vrot.slane %v2107, 2
  %v2109 = vadd.f32 %v2107, %v2108
  %v2110 = vrot.slane %v2109, 1
  %v2111 = vadd.f32 %v2109, %v2110
  %s2112 = vtos %v2111
  %v2113 = vrcp.pop 2048.0
  %v2114 = vmul.f32 2048.0, %v2113
  %v2115 = vsub.f32 1.0, %v2114
  %v2116 = vmul.f32 %v2113, %v2115
  %v2117 = vadd.f32 %v2113, %v2116
  %vm2118 = vweird.f32 %v2113
  %v2119 = vsel %vm2118, %v2113, %v2117
  %s2120 = vtos %v2119
  %s2121 = smul.f32 %s2112, %s2120
  %s2122 = sadd.f32 %s2121, 1e-05
  %v2123 = vstv %s2122
  %v2124 = vrsqrt.pop %v2123
  %v2125 = vmul.f32 %v2124, %v2123
  %v2126 = vmul.f32 %v2125, %v2124
  %v2127 = vmul.f32 0.5, %v2126
  %v2128 = vsub.f32 1.5, %v2127
  %v2129 = vmul.f32 %v2124, %v2128
  %vm2130 = vweird.f32 %v2123
  %vm2131 = vweird.f32 %v2124
  %vm2132 = vmor %vm2130, %vm2131
  %v2133 = vsel %vm2132, %v2124, %v2129
  %s2134 = vtos %v2133
  %v2135 = vstv %s2134
  %v2136 = vmul.f32 %v2099, %v2135
  %v2137 = vmul.f32 %v2100, %v2135
  %v2138 = vperm.slane %v1863, 5
  %v2139 = vmul.f32 %v2136, %v2138
  %v2140 = vmul.f32 %v2137, %v2138
  %v2141 = vperm.slane %v1863, 6
  %v2142 = vadd.f32 %v2139, %v2141
  %v2143 = vadd.f32 %v2140, %v2141
  %vm2144 = vcmp.gt.f32.partialorder %v2142, 0.0
  %vm2145 = vcmp.gt.f32.partialorder %v2143, 0.0
  %v2146 = vperm.slane %v1863, 7
  %v2147 = vmul.f32 %v2146, %v2142
  %v2148 = vmul.f32 %v2146, %v2143
  %v2149 = vsel %vm2144, %v2142, %v2147
  %v2150 = vsel %vm2145, %v2143, %v2148
  %v2151 = vadd.f32 %v1951, %v1953
  %2152 = vadd.xlane.f32.xlu0 %v2151
  %v2153 = vpop.xlane.xlu0 %2152
  %v2154 = vrot.slane %v2153, 4
  %v2155 = vadd.f32 %v2153, %v2154
  %v2156 = vrot.slane %v2155, 2
  %v2157 = vadd.f32 %v2155, %v2156
  %v2158 = vrot.slane %v2157, 1
  %v2159 = vadd.f32 %v2157, %v2158
  %s2160 = vtos %v2159
  %v2161 = vrcp.pop 2048.0
  %v2162 = vmul.f32 2048.0, %v2161
  %v2163 = vsub.f32 1.0, %v2162
  %v2164 = vmul.f32 %v2161, %v2163
  %v2165 = vadd.f32 %v2161, %v2164
  %vm2166 = vweird.f32 %v2161
  %v2167 = vsel %vm2166, %v2161, %v2165
  %s2168 = vtos %v2167
  %s2169 = smul.f32 %s2160, %s2168
  %v2170 = vstv %s2169
  %v2171 = vsub.f32 %v1951, %v2170
  %v2172 = vsub.f32 %v1953, %v2170
  %v2173 = vmul.f32 %v2171, %v2171
  %v2174 = vmul.f32 %v2172, %v2172
  %v2175 = vadd.f32 %v2173, %v2174
  %2176 = vadd.xlane.f32.xlu0 %v2175
  %v2177 = vpop.xlane.xlu0 %2176
  %v2178 = vrot.slane %v2177, 4
  %v2179 = vadd.f32 %v2177, %v2178
  %v2180 = vrot.slane %v2179, 2
  %v2181 = vadd.f32 %v2179, %v2180
  %v2182 = vrot.slane %v2181, 1
  %v2183 = vadd.f32 %v2181, %v2182
  %s2184 = vtos %v2183
  %v2185 = vrcp.pop 2048.0
  %v2186 = vmul.f32 2048.0, %v2185
  %v2187 = vsub.f32 1.0, %v2186
  %v2188 = vmul.f32 %v2185, %v2187
  %v2189 = vadd.f32 %v2185, %v2188
  %vm2190 = vweird.f32 %v2185
  %v2191 = vsel %vm2190, %v2185, %v2189
  %s2192 = vtos %v2191
  %s2193 = smul.f32 %s2184, %s2192
  %s2194 = sadd.f32 %s2193, 1e-05
  %v2195 = vstv %s2194
  %v2196 = vrsqrt.pop %v2195
  %v2197 = vmul.f32 %v2196, %v2195
  %v2198 = vmul.f32 %v2197, %v2196
  %v2199 = vmul.f32 0.5, %v2198
  %v2200 = vsub.f32 1.5, %v2199
  %v2201 = vmul.f32 %v2196, %v2200
  %vm2202 = vweird.f32 %v2195
  %vm2203 = vweird.f32 %v2196
  %vm2204 = vmor %vm2202, %vm2203
  %v2205 = vsel %vm2204, %v2196, %v2201
  %s2206 = vtos %v2205
  %v2207 = vstv %s2206
  %v2208 = vmul.f32 %v2171, %v2207
  %v2209 = vmul.f32 %v2172, %v2207
  %v2210 = vmul.f32 %v2208, %v2014
  %v2211 = vmul.f32 %v2209, %v2014
  %v2212 = vadd.f32 %v2210, %v2017
  %v2213 = vadd.f32 %v2211, %v2017
  %vm2214 = vcmp.gt.f32.partialorder %v2212, 0.0
  %vm2215 = vcmp.gt.f32.partialorder %v2213, 0.0
  %v2216 = vmul.f32 %v2022, %v2212
  %v2217 = vmul.f32 %v2022, %v2213
  %v2218 = vsel %vm2214, %v2212, %v2216
  %v2219 = vsel %vm2215, %v2213, %v2217
  %v2220 = vperm.slane %v28, 3
  %v2221 = vadd.f32 %v2218, %v2220
  %v2222 = vadd.f32 %v2219, %v2220
  %2223 = vrot.lane.b32.xlu0 %v2221, 64
  %v2224 = vpop.permute.xlu0 %2223
  %2225 = vrot.lane.b32.xlu0 %v2222, 64
  %v2226 = vpop.permute.xlu0 %2225
  %v2227 = vsel %vm1431, %v2224, 0.0
  %v2228 = vsel %vm1431, %v2226, 0.0
  %v2229 = vmul.f32 %v2036, %v2221
  %v2230 = vmul.f32 %v2036, %v2222
  %v2231 = vmul.f32 %v2039, %v2227
  %v2232 = vmul.f32 %v2039, %v2228
  %v2233 = vadd.f32 %v2229, %v2231
  %v2234 = vadd.f32 %v2230, %v2232
  %v2235 = vmul.f32 %v2044, %v2221
  %v2236 = vmul.f32 %v2044, %v2222
  %v2237 = vmul.f32 %v2047, %v2227
  %v2238 = vmul.f32 %v2047, %v2228
  %v2239 = vadd.f32 %v2235, %v2237
  %v2240 = vadd.f32 %v2236, %v2238
  %v2241 = vmul.f32 %v2052, %v2221
  %v2242 = vmul.f32 %v2052, %v2222
  %v2243 = vmul.f32 %v2055, %v2227
  %v2244 = vmul.f32 %v2055, %v2228
  %v2245 = vadd.f32 %v2241, %v2243
  %v2246 = vadd.f32 %v2242, %v2244
  %v2247 = vrot.slane %v2233, 7
  %v2248 = vrot.slane %v2234, 7
  %v2249 = vsel %vm264, %v2247, %v2248
  %v2250 = vsel %vm264, %v2248, %v2247
  %v2251 = vsel %vm269, %v2250, 0.0
  %v2252 = vsel %vm270, %v2249, 0.0
  %v2253 = vadd.f32 %v2239, %v2251
  %v2254 = vadd.f32 %v2240, %v2252
  %v2255 = vrot.slane %v2245, 1
  %v2256 = vrot.slane %v2246, 1
  %v2257 = vsel %vm277, %v2255, %v2256
  %v2258 = vsel %vm277, %v2256, %v2255
  %v2259 = vsel %vm282, %v2257, 0.0
  %v2260 = vsel %vm283, %v2258, 0.0
  %v2261 = vadd.f32 %v2253, %v2259
  %v2262 = vadd.f32 %v2254, %v2260
  %v2263 = vadd.f32 %v2261, %v2076
  %v2264 = vadd.f32 %v2262, %v2076
  %v2265 = vadd.f32 %v2263, %v2264
  %2266 = vadd.xlane.f32.xlu0 %v2265
  %v2267 = vpop.xlane.xlu0 %2266
  %v2268 = vrot.slane %v2267, 4
  %v2269 = vadd.f32 %v2267, %v2268
  %v2270 = vrot.slane %v2269, 2
  %v2271 = vadd.f32 %v2269, %v2270
  %v2272 = vrot.slane %v2271, 1
  %v2273 = vadd.f32 %v2271, %v2272
  %s2274 = vtos %v2273
  %v2275 = vrcp.pop 2048.0
  %v2276 = vmul.f32 2048.0, %v2275
  %v2277 = vsub.f32 1.0, %v2276
  %v2278 = vmul.f32 %v2275, %v2277
  %v2279 = vadd.f32 %v2275, %v2278
  %vm2280 = vweird.f32 %v2275
  %v2281 = vsel %vm2280, %v2275, %v2279
  %s2282 = vtos %v2281
  %s2283 = smul.f32 %s2274, %s2282
  %v2284 = vstv %s2283
  %v2285 = vsub.f32 %v2263, %v2284
  %v2286 = vsub.f32 %v2264, %v2284
  %v2287 = vmul.f32 %v2285, %v2285
  %v2288 = vmul.f32 %v2286, %v2286
  %v2289 = vadd.f32 %v2287, %v2288
  %2290 = vadd.xlane.f32.xlu0 %v2289
  %v2291 = vpop.xlane.xlu0 %2290
  %v2292 = vrot.slane %v2291, 4
  %v2293 = vadd.f32 %v2291, %v2292
  %v2294 = vrot.slane %v2293, 2
  %v2295 = vadd.f32 %v2293, %v2294
  %v2296 = vrot.slane %v2295, 1
  %v2297 = vadd.f32 %v2295, %v2296
  %s2298 = vtos %v2297
  %v2299 = vrcp.pop 2048.0
  %v2300 = vmul.f32 2048.0, %v2299
  %v2301 = vsub.f32 1.0, %v2300
  %v2302 = vmul.f32 %v2299, %v2301
  %v2303 = vadd.f32 %v2299, %v2302
  %vm2304 = vweird.f32 %v2299
  %v2305 = vsel %vm2304, %v2299, %v2303
  %s2306 = vtos %v2305
  %s2307 = smul.f32 %s2298, %s2306
  %s2308 = sadd.f32 %s2307, 1e-05
  %v2309 = vstv %s2308
  %v2310 = vrsqrt.pop %v2309
  %v2311 = vmul.f32 %v2310, %v2309
  %v2312 = vmul.f32 %v2311, %v2310
  %v2313 = vmul.f32 0.5, %v2312
  %v2314 = vsub.f32 1.5, %v2313
  %v2315 = vmul.f32 %v2310, %v2314
  %vm2316 = vweird.f32 %v2309
  %vm2317 = vweird.f32 %v2310
  %vm2318 = vmor %vm2316, %vm2317
  %v2319 = vsel %vm2318, %v2310, %v2315
  %s2320 = vtos %v2319
  %v2321 = vstv %s2320
  %v2322 = vmul.f32 %v2285, %v2321
  %v2323 = vmul.f32 %v2286, %v2321
  %v2324 = vmul.f32 %v2322, %v2138
  %v2325 = vmul.f32 %v2323, %v2138
  %v2326 = vadd.f32 %v2324, %v2141
  %v2327 = vadd.f32 %v2325, %v2141
  %vm2328 = vcmp.gt.f32.partialorder %v2326, 0.0
  %vm2329 = vcmp.gt.f32.partialorder %v2327, 0.0
  %v2330 = vmul.f32 %v2146, %v2326
  %v2331 = vmul.f32 %v2146, %v2327
  %v2332 = vsel %vm2328, %v2326, %v2330
  %v2333 = vsel %vm2329, %v2327, %v2331
  %v2334 = vpack.c.bf16 %v2150, %v2149
  %v2335 = vpack.c.bf16 %v2333, %v2332
  %s2336 = scalar_lea.vmem %s3, 192
  %v2337 = vld [vmem:[%s2336] sm:$0xf]
  %v2338 = vld [vmem:[%s2336 + $0x4] sm:$0xf]
  %v2339 = vld [vmem:[%s2336 + $0x8] sm:$0xf]
  %v2340 = vld [vmem:[%s2336 + $0xc] sm:$0xf]
  %v2341 = vld [vmem:[%s2336 + $0x10] sm:$0xf]
  %v2342 = vld [vmem:[%s2336 + $0x14] sm:$0xf]
  %v2343 = vld [vmem:[%s2336 + $0x18] sm:$0xf]
  %v2344 = vld [vmem:[%s2336 + $0x1c] sm:$0xf]
  %v2345 = vld [vmem:[%s2336 + $0x20] sm:$0xf]
  %v2346 = vld [vmem:[%s2336 + $0x24] sm:$0xf]
  %v2347 = vld [vmem:[%s2336 + $0x28] sm:$0xf]
  %v2348 = vld [vmem:[%s2336 + $0x2c] sm:$0xf]
  %v2349 = vld [vmem:[%s2336 + $0x30] sm:$0xf]
  %v2350 = vld [vmem:[%s2336 + $0x34] sm:$0xf]
  %v2351 = vld [vmem:[%s2336 + $0x38] sm:$0xf]
  %v2352 = vld [vmem:[%s2336 + $0x3c] sm:$0xf]
  %v2353 = vperm.slane %v1864, 0
  %v2370 = vunpack.c.l.b16 %v2337
  %v2371 = vunpack.c.l.b16 %v2338
  %v2372 = vunpack.c.l.b16 %v2339
  %v2373 = vunpack.c.l.b16 %v2340
  %v2374 = vunpack.c.l.b16 %v2341
  %v2375 = vunpack.c.l.b16 %v2342
  %v2376 = vunpack.c.l.b16 %v2343
  %v2377 = vunpack.c.l.b16 %v2344
  %v2378 = vunpack.c.l.b16 %v2345
  %v2379 = vunpack.c.l.b16 %v2346
  %v2380 = vunpack.c.l.b16 %v2347
  %v2381 = vunpack.c.l.b16 %v2348
  %v2382 = vunpack.c.l.b16 %v2349
  %v2383 = vunpack.c.l.b16 %v2350
  %v2384 = vunpack.c.l.b16 %v2351
  %v2385 = vunpack.c.l.b16 %v2352
  %v2386 = vpack.c.b16 %v2371, %v2370
  %v2387 = vpack.c.b16 %v2373, %v2372
  %v2388 = vpack.c.b16 %v2375, %v2374
  %v2389 = vpack.c.b16 %v2377, %v2376
  %v2390 = vpack.c.b16 %v2379, %v2378
  %v2391 = vpack.c.b16 %v2381, %v2380
  %v2392 = vpack.c.b16 %v2383, %v2382
  %v2393 = vpack.c.b16 %v2385, %v2384
  %2402 = vmatpush.bf16.msra.mxu0 %v2393
  %2403 = vmatpush.bf16.msra.mxu0 %v2392
  %2404 = vmatpush.bf16.msra.mxu0 %v2391
  %2405 = vmatpush.bf16.msra.mxu0 %v2390
  %2406 = vmatpush.bf16.msra.mxu0 %v2389
  %2407 = vmatpush.bf16.msra.mxu0 %v2388
  %2408 = vmatpush.bf16.msra.mxu0 %v2387
  %2409 = vmatpush.bf16.msra.mxu0 %v2386
  %2410 = vmatmul.bf16.gmra.mxu0 %v2334
  %v2411 = vpop.f32.mrf.mxu0
  %v2412 = vadd.f32 %v2353, %v2411
  %v2413 = vpop.f32.mrf.mxu0
  %v2414 = vadd.f32 %v2353, %v2413
  %2415 = vmatmul.bf16.gmra.mxu0 %v2335
  %v2416 = vpop.f32.mrf.mxu0
  %v2417 = vadd.f32 %v2353, %v2416
  %v2418 = vpop.f32.mrf.mxu0
  %v2419 = vadd.f32 %v2353, %v2418
  %2420 = vdwg.mxu0
  %v2421 = vadd.f32 %v2412, %v1858
  %v2422 = vadd.f32 %v2414, %v1859
  %v2423 = vadd.f32 %v2417, %v1860
  %v2424 = vadd.f32 %v2419, %v1861
  %s2425 = scalar_lea.vmem %s5, 64
  %v2426 = vld [vmem:[%s2425] sm:$0xff]
  %v2427 = vld [vmem:[%s2425 + $0x8] sm:$0x1]
  %s2428 = scalar_lea.vmem %s4, 64
  %v2429 = vld [vmem:[%s2428] sm:$0xff]
  %v2430 = vld [vmem:[%s2428 + $0x8] sm:$0x1]
  %v2431 = vpack.c.bf16 %v2422, %v2421
  %v2432 = vpack.c.bf16 %v2424, %v2423
  %s2433 = scalar_lea.vmem %s2, 256
  %v2434 = vld [vmem:[%s2433] sm:$0xf]
  %v2435 = vld [vmem:[%s2433 + $0x4] sm:$0xf]
  %v2436 = vld [vmem:[%s2433 + $0x8] sm:$0xf]
  %v2437 = vld [vmem:[%s2433 + $0xc] sm:$0xf]
  %v2438 = vld [vmem:[%s2433 + $0x10] sm:$0xf]
  %v2439 = vld [vmem:[%s2433 + $0x14] sm:$0xf]
  %v2440 = vld [vmem:[%s2433 + $0x18] sm:$0xf]
  %v2441 = vld [vmem:[%s2433 + $0x1c] sm:$0xf]
  %v2442 = vld [vmem:[%s2433 + $0x20] sm:$0xf]
  %v2443 = vld [vmem:[%s2433 + $0x24] sm:$0xf]
  %v2444 = vld [vmem:[%s2433 + $0x28] sm:$0xf]
  %v2445 = vld [vmem:[%s2433 + $0x2c] sm:$0xf]
  %v2446 = vld [vmem:[%s2433 + $0x30] sm:$0xf]
  %v2447 = vld [vmem:[%s2433 + $0x34] sm:$0xf]
  %v2448 = vld [vmem:[%s2433 + $0x38] sm:$0xf]
  %v2449 = vld [vmem:[%s2433 + $0x3c] sm:$0xf]
  %v2450 = vperm.slane %v2426, 0
  %v2467 = vunpack.c.l.b16 %v2434
  %v2468 = vunpack.c.l.b16 %v2435
  %v2469 = vunpack.c.l.b16 %v2436
  %v2470 = vunpack.c.l.b16 %v2437
  %v2471 = vunpack.c.l.b16 %v2438
  %v2472 = vunpack.c.l.b16 %v2439
  %v2473 = vunpack.c.l.b16 %v2440
  %v2474 = vunpack.c.l.b16 %v2441
  %v2475 = vunpack.c.l.b16 %v2442
  %v2476 = vunpack.c.l.b16 %v2443
  %v2477 = vunpack.c.l.b16 %v2444
  %v2478 = vunpack.c.l.b16 %v2445
  %v2479 = vunpack.c.l.b16 %v2446
  %v2480 = vunpack.c.l.b16 %v2447
  %v2481 = vunpack.c.l.b16 %v2448
  %v2482 = vunpack.c.l.b16 %v2449
  %v2483 = vpack.c.b16 %v2468, %v2467
  %v2484 = vpack.c.b16 %v2470, %v2469
  %v2485 = vpack.c.b16 %v2472, %v2471
  %v2486 = vpack.c.b16 %v2474, %v2473
  %v2487 = vpack.c.b16 %v2476, %v2475
  %v2488 = vpack.c.b16 %v2478, %v2477
  %v2489 = vpack.c.b16 %v2480, %v2479
  %v2490 = vpack.c.b16 %v2482, %v2481
  %2499 = vmatpush.bf16.msra.mxu0 %v2490
  %2500 = vmatpush.bf16.msra.mxu0 %v2489
  %2501 = vmatpush.bf16.msra.mxu0 %v2488
  %2502 = vmatpush.bf16.msra.mxu0 %v2487
  %2503 = vmatpush.bf16.msra.mxu0 %v2486
  %2504 = vmatpush.bf16.msra.mxu0 %v2485
  %2505 = vmatpush.bf16.msra.mxu0 %v2484
  %2506 = vmatpush.bf16.msra.mxu0 %v2483
  %2507 = vmatmul.bf16.gmra.mxu0 %v2431
  %v2508 = vpop.f32.mrf.mxu0
  %v2509 = vadd.f32 %v2450, %v2508
  %v2510 = vpop.f32.mrf.mxu0
  %v2511 = vadd.f32 %v2450, %v2510
  %2512 = vmatmul.bf16.gmra.mxu0 %v2432
  %v2513 = vpop.f32.mrf.mxu0
  %v2514 = vadd.f32 %v2450, %v2513
  %v2515 = vpop.f32.mrf.mxu0
  %v2516 = vadd.f32 %v2450, %v2515
  %2517 = vdwg.mxu0
  %v2518 = vadd.f32 %v2509, %v2511
  %2519 = vadd.xlane.f32.xlu0 %v2518
  %v2520 = vpop.xlane.xlu0 %2519
  %v2521 = vrot.slane %v2520, 4
  %v2522 = vadd.f32 %v2520, %v2521
  %v2523 = vrot.slane %v2522, 2
  %v2524 = vadd.f32 %v2522, %v2523
  %v2525 = vrot.slane %v2524, 1
  %v2526 = vadd.f32 %v2524, %v2525
  %s2527 = vtos %v2526
  %v2528 = vrcp.pop 2048.0
  %v2529 = vmul.f32 2048.0, %v2528
  %v2530 = vsub.f32 1.0, %v2529
  %v2531 = vmul.f32 %v2528, %v2530
  %v2532 = vadd.f32 %v2528, %v2531
  %vm2533 = vweird.f32 %v2528
  %v2534 = vsel %vm2533, %v2528, %v2532
  %s2535 = vtos %v2534
  %s2536 = smul.f32 %s2527, %s2535
  %v2537 = vstv %s2536
  %v2538 = vsub.f32 %v2509, %v2537
  %v2539 = vsub.f32 %v2511, %v2537
  %v2540 = vmul.f32 %v2538, %v2538
  %v2541 = vmul.f32 %v2539, %v2539
  %v2542 = vadd.f32 %v2540, %v2541
  %2543 = vadd.xlane.f32.xlu0 %v2542
  %v2544 = vpop.xlane.xlu0 %2543
  %v2545 = vrot.slane %v2544, 4
  %v2546 = vadd.f32 %v2544, %v2545
  %v2547 = vrot.slane %v2546, 2
  %v2548 = vadd.f32 %v2546, %v2547
  %v2549 = vrot.slane %v2548, 1
  %v2550 = vadd.f32 %v2548, %v2549
  %s2551 = vtos %v2550
  %v2552 = vrcp.pop 2048.0
  %v2553 = vmul.f32 2048.0, %v2552
  %v2554 = vsub.f32 1.0, %v2553
  %v2555 = vmul.f32 %v2552, %v2554
  %v2556 = vadd.f32 %v2552, %v2555
  %vm2557 = vweird.f32 %v2552
  %v2558 = vsel %vm2557, %v2552, %v2556
  %s2559 = vtos %v2558
  %s2560 = smul.f32 %s2551, %s2559
  %s2561 = sadd.f32 %s2560, 1e-05
  %v2562 = vstv %s2561
  %v2563 = vrsqrt.pop %v2562
  %v2564 = vmul.f32 %v2563, %v2562
  %v2565 = vmul.f32 %v2564, %v2563
  %v2566 = vmul.f32 0.5, %v2565
  %v2567 = vsub.f32 1.5, %v2566
  %v2568 = vmul.f32 %v2563, %v2567
  %vm2569 = vweird.f32 %v2562
  %vm2570 = vweird.f32 %v2563
  %vm2571 = vmor %vm2569, %vm2570
  %v2572 = vsel %vm2571, %v2563, %v2568
  %s2573 = vtos %v2572
  %v2574 = vstv %s2573
  %v2575 = vmul.f32 %v2538, %v2574
  %v2576 = vmul.f32 %v2539, %v2574
  %v2577 = vperm.slane %v2426, 1
  %v2578 = vmul.f32 %v2575, %v2577
  %v2579 = vmul.f32 %v2576, %v2577
  %v2580 = vperm.slane %v2426, 2
  %v2581 = vadd.f32 %v2578, %v2580
  %v2582 = vadd.f32 %v2579, %v2580
  %vm2583 = vcmp.gt.f32.partialorder %v2581, 0.0
  %vm2584 = vcmp.gt.f32.partialorder %v2582, 0.0
  %v2585 = vperm.slane %v2426, 3
  %v2586 = vmul.f32 %v2585, %v2581
  %v2587 = vmul.f32 %v2585, %v2582
  %v2588 = vsel %vm2583, %v2581, %v2586
  %v2589 = vsel %vm2584, %v2582, %v2587
  %v2590 = vperm.slane %v27, 4
  %v2591 = vadd.f32 %v2588, %v2590
  %v2592 = vadd.f32 %v2589, %v2590
  %v2593 = vperm.slane %v2429, 2
  %v2594 = vmul.f32 %v2593, %v2591
  %v2595 = vmul.f32 %v2593, %v2592
  %v2596 = vperm.slane %v2429, 5
  %v2597 = vmul.f32 %v2596, %v2591
  %v2598 = vmul.f32 %v2596, %v2592
  %v2599 = vperm.slane %v2430, 0
  %v2600 = vmul.f32 %v2599, %v2591
  %v2601 = vmul.f32 %v2599, %v2592
  %v2602 = vrot.slane %v2594, 7
  %v2603 = vrot.slane %v2595, 7
  %v2604 = vsel %vm264, %v2602, %v2603
  %v2605 = vsel %vm264, %v2603, %v2602
  %v2606 = vsel %vm269, %v2605, 0.0
  %v2607 = vsel %vm270, %v2604, 0.0
  %v2608 = vadd.f32 %v2597, %v2606
  %v2609 = vadd.f32 %v2598, %v2607
  %v2610 = vrot.slane %v2600, 1
  %v2611 = vrot.slane %v2601, 1
  %v2612 = vsel %vm277, %v2610, %v2611
  %v2613 = vsel %vm277, %v2611, %v2610
  %v2614 = vsel %vm282, %v2612, 0.0
  %v2615 = vsel %vm283, %v2613, 0.0
  %v2616 = vadd.f32 %v2608, %v2614
  %v2617 = vadd.f32 %v2609, %v2615
  %v2618 = vperm.slane %v2426, 4
  %v2619 = vadd.f32 %v2616, %v2618
  %v2620 = vadd.f32 %v2617, %v2618
  %v2621 = vadd.f32 %v2619, %v2620
  %2622 = vadd.xlane.f32.xlu0 %v2621
  %v2623 = vpop.xlane.xlu0 %2622
  %v2624 = vrot.slane %v2623, 4
  %v2625 = vadd.f32 %v2623, %v2624
  %v2626 = vrot.slane %v2625, 2
  %v2627 = vadd.f32 %v2625, %v2626
  %v2628 = vrot.slane %v2627, 1
  %v2629 = vadd.f32 %v2627, %v2628
  %s2630 = vtos %v2629
  %v2631 = vrcp.pop 2048.0
  %v2632 = vmul.f32 2048.0, %v2631
  %v2633 = vsub.f32 1.0, %v2632
  %v2634 = vmul.f32 %v2631, %v2633
  %v2635 = vadd.f32 %v2631, %v2634
  %vm2636 = vweird.f32 %v2631
  %v2637 = vsel %vm2636, %v2631, %v2635
  %s2638 = vtos %v2637
  %s2639 = smul.f32 %s2630, %s2638
  %v2640 = vstv %s2639
  %v2641 = vsub.f32 %v2619, %v2640
  %v2642 = vsub.f32 %v2620, %v2640
  %v2643 = vmul.f32 %v2641, %v2641
  %v2644 = vmul.f32 %v2642, %v2642
  %v2645 = vadd.f32 %v2643, %v2644
  %2646 = vadd.xlane.f32.xlu0 %v2645
  %v2647 = vpop.xlane.xlu0 %2646
  %v2648 = vrot.slane %v2647, 4
  %v2649 = vadd.f32 %v2647, %v2648
  %v2650 = vrot.slane %v2649, 2
  %v2651 = vadd.f32 %v2649, %v2650
  %v2652 = vrot.slane %v2651, 1
  %v2653 = vadd.f32 %v2651, %v2652
  %s2654 = vtos %v2653
  %v2655 = vrcp.pop 2048.0
  %v2656 = vmul.f32 2048.0, %v2655
  %v2657 = vsub.f32 1.0, %v2656
  %v2658 = vmul.f32 %v2655, %v2657
  %v2659 = vadd.f32 %v2655, %v2658
  %vm2660 = vweird.f32 %v2655
  %v2661 = vsel %vm2660, %v2655, %v2659
  %s2662 = vtos %v2661
  %s2663 = smul.f32 %s2654, %s2662
  %s2664 = sadd.f32 %s2663, 1e-05
  %v2665 = vstv %s2664
  %v2666 = vrsqrt.pop %v2665
  %v2667 = vmul.f32 %v2666, %v2665
  %v2668 = vmul.f32 %v2667, %v2666
  %v2669 = vmul.f32 0.5, %v2668
  %v2670 = vsub.f32 1.5, %v2669
  %v2671 = vmul.f32 %v2666, %v2670
  %vm2672 = vweird.f32 %v2665
  %vm2673 = vweird.f32 %v2666
  %vm2674 = vmor %vm2672, %vm2673
  %v2675 = vsel %vm2674, %v2666, %v2671
  %s2676 = vtos %v2675
  %v2677 = vstv %s2676
  %v2678 = vmul.f32 %v2641, %v2677
  %v2679 = vmul.f32 %v2642, %v2677
  %v2680 = vperm.slane %v2426, 5
  %v2681 = vmul.f32 %v2678, %v2680
  %v2682 = vmul.f32 %v2679, %v2680
  %v2683 = vperm.slane %v2426, 6
  %v2684 = vadd.f32 %v2681, %v2683
  %v2685 = vadd.f32 %v2682, %v2683
  %vm2686 = vcmp.gt.f32.partialorder %v2684, 0.0
  %vm2687 = vcmp.gt.f32.partialorder %v2685, 0.0
  %v2688 = vperm.slane %v2426, 7
  %v2689 = vmul.f32 %v2688, %v2684
  %v2690 = vmul.f32 %v2688, %v2685
  %v2691 = vsel %vm2686, %v2684, %v2689
  %v2692 = vsel %vm2687, %v2685, %v2690
  %v2693 = vadd.f32 %v2514, %v2516
  %2694 = vadd.xlane.f32.xlu0 %v2693
  %v2695 = vpop.xlane.xlu0 %2694
  %v2696 = vrot.slane %v2695, 4
  %v2697 = vadd.f32 %v2695, %v2696
  %v2698 = vrot.slane %v2697, 2
  %v2699 = vadd.f32 %v2697, %v2698
  %v2700 = vrot.slane %v2699, 1
  %v2701 = vadd.f32 %v2699, %v2700
  %s2702 = vtos %v2701
  %v2703 = vrcp.pop 2048.0
  %v2704 = vmul.f32 2048.0, %v2703
  %v2705 = vsub.f32 1.0, %v2704
  %v2706 = vmul.f32 %v2703, %v2705
  %v2707 = vadd.f32 %v2703, %v2706
  %vm2708 = vweird.f32 %v2703
  %v2709 = vsel %vm2708, %v2703, %v2707
  %s2710 = vtos %v2709
  %s2711 = smul.f32 %s2702, %s2710
  %v2712 = vstv %s2711
  %v2713 = vsub.f32 %v2514, %v2712
  %v2714 = vsub.f32 %v2516, %v2712
  %v2715 = vmul.f32 %v2713, %v2713
  %v2716 = vmul.f32 %v2714, %v2714
  %v2717 = vadd.f32 %v2715, %v2716
  %2718 = vadd.xlane.f32.xlu0 %v2717
  %v2719 = vpop.xlane.xlu0 %2718
  %v2720 = vrot.slane %v2719, 4
  %v2721 = vadd.f32 %v2719, %v2720
  %v2722 = vrot.slane %v2721, 2
  %v2723 = vadd.f32 %v2721, %v2722
  %v2724 = vrot.slane %v2723, 1
  %v2725 = vadd.f32 %v2723, %v2724
  %s2726 = vtos %v2725
  %v2727 = vrcp.pop 2048.0
  %v2728 = vmul.f32 2048.0, %v2727
  %v2729 = vsub.f32 1.0, %v2728
  %v2730 = vmul.f32 %v2727, %v2729
  %v2731 = vadd.f32 %v2727, %v2730
  %vm2732 = vweird.f32 %v2727
  %v2733 = vsel %vm2732, %v2727, %v2731
  %s2734 = vtos %v2733
  %s2735 = smul.f32 %s2726, %s2734
  %s2736 = sadd.f32 %s2735, 1e-05
  %v2737 = vstv %s2736
  %v2738 = vrsqrt.pop %v2737
  %v2739 = vmul.f32 %v2738, %v2737
  %v2740 = vmul.f32 %v2739, %v2738
  %v2741 = vmul.f32 0.5, %v2740
  %v2742 = vsub.f32 1.5, %v2741
  %v2743 = vmul.f32 %v2738, %v2742
  %vm2744 = vweird.f32 %v2737
  %vm2745 = vweird.f32 %v2738
  %vm2746 = vmor %vm2744, %vm2745
  %v2747 = vsel %vm2746, %v2738, %v2743
  %s2748 = vtos %v2747
  %v2749 = vstv %s2748
  %v2750 = vmul.f32 %v2713, %v2749
  %v2751 = vmul.f32 %v2714, %v2749
  %v2752 = vmul.f32 %v2750, %v2577
  %v2753 = vmul.f32 %v2751, %v2577
  %v2754 = vadd.f32 %v2752, %v2580
  %v2755 = vadd.f32 %v2753, %v2580
  %vm2756 = vcmp.gt.f32.partialorder %v2754, 0.0
  %vm2757 = vcmp.gt.f32.partialorder %v2755, 0.0
  %v2758 = vmul.f32 %v2585, %v2754
  %v2759 = vmul.f32 %v2585, %v2755
  %v2760 = vsel %vm2756, %v2754, %v2758
  %v2761 = vsel %vm2757, %v2755, %v2759
  %v2762 = vperm.slane %v28, 4
  %v2763 = vadd.f32 %v2760, %v2762
  %v2764 = vadd.f32 %v2761, %v2762
  %v2765 = vmul.f32 %v2593, %v2763
  %v2766 = vmul.f32 %v2593, %v2764
  %v2767 = vmul.f32 %v2596, %v2763
  %v2768 = vmul.f32 %v2596, %v2764
  %v2769 = vmul.f32 %v2599, %v2763
  %v2770 = vmul.f32 %v2599, %v2764
  %v2771 = vrot.slane %v2765, 7
  %v2772 = vrot.slane %v2766, 7
  %v2773 = vsel %vm264, %v2771, %v2772
  %v2774 = vsel %vm264, %v2772, %v2771
  %v2775 = vsel %vm269, %v2774, 0.0
  %v2776 = vsel %vm270, %v2773, 0.0
  %v2777 = vadd.f32 %v2767, %v2775
  %v2778 = vadd.f32 %v2768, %v2776
  %v2779 = vrot.slane %v2769, 1
  %v2780 = vrot.slane %v2770, 1
  %v2781 = vsel %vm277, %v2779, %v2780
  %v2782 = vsel %vm277, %v2780, %v2779
  %v2783 = vsel %vm282, %v2781, 0.0
  %v2784 = vsel %vm283, %v2782, 0.0
  %v2785 = vadd.f32 %v2777, %v2783
  %v2786 = vadd.f32 %v2778, %v2784
  %v2787 = vadd.f32 %v2785, %v2618
  %v2788 = vadd.f32 %v2786, %v2618
  %v2789 = vadd.f32 %v2787, %v2788
  %2790 = vadd.xlane.f32.xlu0 %v2789
  %v2791 = vpop.xlane.xlu0 %2790
  %v2792 = vrot.slane %v2791, 4
  %v2793 = vadd.f32 %v2791, %v2792
  %v2794 = vrot.slane %v2793, 2
  %v2795 = vadd.f32 %v2793, %v2794
  %v2796 = vrot.slane %v2795, 1
  %v2797 = vadd.f32 %v2795, %v2796
  %s2798 = vtos %v2797
  %v2799 = vrcp.pop 2048.0
  %v2800 = vmul.f32 2048.0, %v2799
  %v2801 = vsub.f32 1.0, %v2800
  %v2802 = vmul.f32 %v2799, %v2801
  %v2803 = vadd.f32 %v2799, %v2802
  %vm2804 = vweird.f32 %v2799
  %v2805 = vsel %vm2804, %v2799, %v2803
  %s2806 = vtos %v2805
  %s2807 = smul.f32 %s2798, %s2806
  %v2808 = vstv %s2807
  %v2809 = vsub.f32 %v2787, %v2808
  %v2810 = vsub.f32 %v2788, %v2808
  %v2811 = vmul.f32 %v2809, %v2809
  %v2812 = vmul.f32 %v2810, %v2810
  %v2813 = vadd.f32 %v2811, %v2812
  %2814 = vadd.xlane.f32.xlu0 %v2813
  %v2815 = vpop.xlane.xlu0 %2814
  %v2816 = vrot.slane %v2815, 4
  %v2817 = vadd.f32 %v2815, %v2816
  %v2818 = vrot.slane %v2817, 2
  %v2819 = vadd.f32 %v2817, %v2818
  %v2820 = vrot.slane %v2819, 1
  %v2821 = vadd.f32 %v2819, %v2820
  %s2822 = vtos %v2821
  %v2823 = vrcp.pop 2048.0
  %v2824 = vmul.f32 2048.0, %v2823
  %v2825 = vsub.f32 1.0, %v2824
  %v2826 = vmul.f32 %v2823, %v2825
  %v2827 = vadd.f32 %v2823, %v2826
  %vm2828 = vweird.f32 %v2823
  %v2829 = vsel %vm2828, %v2823, %v2827
  %s2830 = vtos %v2829
  %s2831 = smul.f32 %s2822, %s2830
  %s2832 = sadd.f32 %s2831, 1e-05
  %v2833 = vstv %s2832
  %v2834 = vrsqrt.pop %v2833
  %v2835 = vmul.f32 %v2834, %v2833
  %v2836 = vmul.f32 %v2835, %v2834
  %v2837 = vmul.f32 0.5, %v2836
  %v2838 = vsub.f32 1.5, %v2837
  %v2839 = vmul.f32 %v2834, %v2838
  %vm2840 = vweird.f32 %v2833
  %vm2841 = vweird.f32 %v2834
  %vm2842 = vmor %vm2840, %vm2841
  %v2843 = vsel %vm2842, %v2834, %v2839
  %s2844 = vtos %v2843
  %v2845 = vstv %s2844
  %v2846 = vmul.f32 %v2809, %v2845
  %v2847 = vmul.f32 %v2810, %v2845
  %v2848 = vmul.f32 %v2846, %v2680
  %v2849 = vmul.f32 %v2847, %v2680
  %v2850 = vadd.f32 %v2848, %v2683
  %v2851 = vadd.f32 %v2849, %v2683
  %vm2852 = vcmp.gt.f32.partialorder %v2850, 0.0
  %vm2853 = vcmp.gt.f32.partialorder %v2851, 0.0
  %v2854 = vmul.f32 %v2688, %v2850
  %v2855 = vmul.f32 %v2688, %v2851
  %v2856 = vsel %vm2852, %v2850, %v2854
  %v2857 = vsel %vm2853, %v2851, %v2855
  %v2858 = vpack.c.bf16 %v2692, %v2691
  %v2859 = vpack.c.bf16 %v2857, %v2856
  %s2860 = scalar_lea.vmem %s3, 256
  %v2861 = vld [vmem:[%s2860] sm:$0xf]
  %v2862 = vld [vmem:[%s2860 + $0x4] sm:$0xf]
  %v2863 = vld [vmem:[%s2860 + $0x8] sm:$0xf]
  %v2864 = vld [vmem:[%s2860 + $0xc] sm:$0xf]
  %v2865 = vld [vmem:[%s2860 + $0x10] sm:$0xf]
  %v2866 = vld [vmem:[%s2860 + $0x14] sm:$0xf]
  %v2867 = vld [vmem:[%s2860 + $0x18] sm:$0xf]
  %v2868 = vld [vmem:[%s2860 + $0x1c] sm:$0xf]
  %v2869 = vld [vmem:[%s2860 + $0x20] sm:$0xf]
  %v2870 = vld [vmem:[%s2860 + $0x24] sm:$0xf]
  %v2871 = vld [vmem:[%s2860 + $0x28] sm:$0xf]
  %v2872 = vld [vmem:[%s2860 + $0x2c] sm:$0xf]
  %v2873 = vld [vmem:[%s2860 + $0x30] sm:$0xf]
  %v2874 = vld [vmem:[%s2860 + $0x34] sm:$0xf]
  %v2875 = vld [vmem:[%s2860 + $0x38] sm:$0xf]
  %v2876 = vld [vmem:[%s2860 + $0x3c] sm:$0xf]
  %v2877 = vperm.slane %v2427, 0
  %v2894 = vunpack.c.l.b16 %v2861
  %v2895 = vunpack.c.l.b16 %v2862
  %v2896 = vunpack.c.l.b16 %v2863
  %v2897 = vunpack.c.l.b16 %v2864
  %v2898 = vunpack.c.l.b16 %v2865
  %v2899 = vunpack.c.l.b16 %v2866
  %v2900 = vunpack.c.l.b16 %v2867
  %v2901 = vunpack.c.l.b16 %v2868
  %v2902 = vunpack.c.l.b16 %v2869
  %v2903 = vunpack.c.l.b16 %v2870
  %v2904 = vunpack.c.l.b16 %v2871
  %v2905 = vunpack.c.l.b16 %v2872
  %v2906 = vunpack.c.l.b16 %v2873
  %v2907 = vunpack.c.l.b16 %v2874
  %v2908 = vunpack.c.l.b16 %v2875
  %v2909 = vunpack.c.l.b16 %v2876
  %v2910 = vpack.c.b16 %v2895, %v2894
  %v2911 = vpack.c.b16 %v2897, %v2896
  %v2912 = vpack.c.b16 %v2899, %v2898
  %v2913 = vpack.c.b16 %v2901, %v2900
  %v2914 = vpack.c.b16 %v2903, %v2902
  %v2915 = vpack.c.b16 %v2905, %v2904
  %v2916 = vpack.c.b16 %v2907, %v2906
  %v2917 = vpack.c.b16 %v2909, %v2908
  %2926 = vmatpush.bf16.msra.mxu0 %v2917
  %2927 = vmatpush.bf16.msra.mxu0 %v2916
  %2928 = vmatpush.bf16.msra.mxu0 %v2915
  %2929 = vmatpush.bf16.msra.mxu0 %v2914
  %2930 = vmatpush.bf16.msra.mxu0 %v2913
  %2931 = vmatpush.bf16.msra.mxu0 %v2912
  %2932 = vmatpush.bf16.msra.mxu0 %v2911
  %2933 = vmatpush.bf16.msra.mxu0 %v2910
  %2934 = vmatmul.bf16.gmra.mxu0 %v2858
  %v2935 = vpop.f32.mrf.mxu0
  %v2936 = vadd.f32 %v2877, %v2935
  %v2937 = vpop.f32.mrf.mxu0
  %v2938 = vadd.f32 %v2877, %v2937
  %2939 = vmatmul.bf16.gmra.mxu0 %v2859
  %v2940 = vpop.f32.mrf.mxu0
  %v2941 = vadd.f32 %v2877, %v2940
  %v2942 = vpop.f32.mrf.mxu0
  %v2943 = vadd.f32 %v2877, %v2942
  %2944 = vdwg.mxu0
  %v2945 = vadd.f32 %v2936, %v2421
  %v2946 = vadd.f32 %v2938, %v2422
  %v2947 = vadd.f32 %v2941, %v2423
  %v2948 = vadd.f32 %v2943, %v2424
  %s2949 = scalar_lea.vmem %s5, 80
  %v2950 = vld [vmem:[%s2949] sm:$0xff]
  %v2951 = vld [vmem:[%s2949 + $0x8] sm:$0x1]
  %s2952 = scalar_lea.vmem %s4, 80
  %v2953 = vld [vmem:[%s2952] sm:$0xff]
  %v2954 = vld [vmem:[%s2952 + $0x8] sm:$0x1]
  %v2955 = vpack.c.bf16 %v2946, %v2945
  %v2956 = vpack.c.bf16 %v2948, %v2947
  %s2957 = scalar_lea.vmem %s2, 320
  %v2958 = vld [vmem:[%s2957] sm:$0xf]
  %v2959 = vld [vmem:[%s2957 + $0x4] sm:$0xf]
  %v2960 = vld [vmem:[%s2957 + $0x8] sm:$0xf]
  %v2961 = vld [vmem:[%s2957 + $0xc] sm:$0xf]
  %v2962 = vld [vmem:[%s2957 + $0x10] sm:$0xf]
  %v2963 = vld [vmem:[%s2957 + $0x14] sm:$0xf]
  %v2964 = vld [vmem:[%s2957 + $0x18] sm:$0xf]
  %v2965 = vld [vmem:[%s2957 + $0x1c] sm:$0xf]
  %v2966 = vld [vmem:[%s2957 + $0x20] sm:$0xf]
  %v2967 = vld [vmem:[%s2957 + $0x24] sm:$0xf]
  %v2968 = vld [vmem:[%s2957 + $0x28] sm:$0xf]
  %v2969 = vld [vmem:[%s2957 + $0x2c] sm:$0xf]
  %v2970 = vld [vmem:[%s2957 + $0x30] sm:$0xf]
  %v2971 = vld [vmem:[%s2957 + $0x34] sm:$0xf]
  %v2972 = vld [vmem:[%s2957 + $0x38] sm:$0xf]
  %v2973 = vld [vmem:[%s2957 + $0x3c] sm:$0xf]
  %v2974 = vperm.slane %v2950, 0
  %v2991 = vunpack.c.l.b16 %v2958
  %v2992 = vunpack.c.l.b16 %v2959
  %v2993 = vunpack.c.l.b16 %v2960
  %v2994 = vunpack.c.l.b16 %v2961
  %v2995 = vunpack.c.l.b16 %v2962
  %v2996 = vunpack.c.l.b16 %v2963
  %v2997 = vunpack.c.l.b16 %v2964
  %v2998 = vunpack.c.l.b16 %v2965
  %v2999 = vunpack.c.l.b16 %v2966
  %v3000 = vunpack.c.l.b16 %v2967
  %v3001 = vunpack.c.l.b16 %v2968
  %v3002 = vunpack.c.l.b16 %v2969
  %v3003 = vunpack.c.l.b16 %v2970
  %v3004 = vunpack.c.l.b16 %v2971
  %v3005 = vunpack.c.l.b16 %v2972
  %v3006 = vunpack.c.l.b16 %v2973
  %v3007 = vpack.c.b16 %v2992, %v2991
  %v3008 = vpack.c.b16 %v2994, %v2993
  %v3009 = vpack.c.b16 %v2996, %v2995
  %v3010 = vpack.c.b16 %v2998, %v2997
  %v3011 = vpack.c.b16 %v3000, %v2999
  %v3012 = vpack.c.b16 %v3002, %v3001
  %v3013 = vpack.c.b16 %v3004, %v3003
  %v3014 = vpack.c.b16 %v3006, %v3005
  %3023 = vmatpush.bf16.msra.mxu0 %v3014
  %3024 = vmatpush.bf16.msra.mxu0 %v3013
  %3025 = vmatpush.bf16.msra.mxu0 %v3012
  %3026 = vmatpush.bf16.msra.mxu0 %v3011
  %3027 = vmatpush.bf16.msra.mxu0 %v3010
  %3028 = vmatpush.bf16.msra.mxu0 %v3009
  %3029 = vmatpush.bf16.msra.mxu0 %v3008
  %3030 = vmatpush.bf16.msra.mxu0 %v3007
  %3031 = vmatmul.bf16.gmra.mxu0 %v2955
  %v3032 = vpop.f32.mrf.mxu0
  %v3033 = vadd.f32 %v2974, %v3032
  %v3034 = vpop.f32.mrf.mxu0
  %v3035 = vadd.f32 %v2974, %v3034
  %3036 = vmatmul.bf16.gmra.mxu0 %v2956
  %v3037 = vpop.f32.mrf.mxu0
  %v3038 = vadd.f32 %v2974, %v3037
  %v3039 = vpop.f32.mrf.mxu0
  %v3040 = vadd.f32 %v2974, %v3039
  %3041 = vdwg.mxu0
  %v3042 = vadd.f32 %v3033, %v3035
  %3043 = vadd.xlane.f32.xlu0 %v3042
  %v3044 = vpop.xlane.xlu0 %3043
  %v3045 = vrot.slane %v3044, 4
  %v3046 = vadd.f32 %v3044, %v3045
  %v3047 = vrot.slane %v3046, 2
  %v3048 = vadd.f32 %v3046, %v3047
  %v3049 = vrot.slane %v3048, 1
  %v3050 = vadd.f32 %v3048, %v3049
  %s3051 = vtos %v3050
  %v3052 = vrcp.pop 2048.0
  %v3053 = vmul.f32 2048.0, %v3052
  %v3054 = vsub.f32 1.0, %v3053
  %v3055 = vmul.f32 %v3052, %v3054
  %v3056 = vadd.f32 %v3052, %v3055
  %vm3057 = vweird.f32 %v3052
  %v3058 = vsel %vm3057, %v3052, %v3056
  %s3059 = vtos %v3058
  %s3060 = smul.f32 %s3051, %s3059
  %v3061 = vstv %s3060
  %v3062 = vsub.f32 %v3033, %v3061
  %v3063 = vsub.f32 %v3035, %v3061
  %v3064 = vmul.f32 %v3062, %v3062
  %v3065 = vmul.f32 %v3063, %v3063
  %v3066 = vadd.f32 %v3064, %v3065
  %3067 = vadd.xlane.f32.xlu0 %v3066
  %v3068 = vpop.xlane.xlu0 %3067
  %v3069 = vrot.slane %v3068, 4
  %v3070 = vadd.f32 %v3068, %v3069
  %v3071 = vrot.slane %v3070, 2
  %v3072 = vadd.f32 %v3070, %v3071
  %v3073 = vrot.slane %v3072, 1
  %v3074 = vadd.f32 %v3072, %v3073
  %s3075 = vtos %v3074
  %v3076 = vrcp.pop 2048.0
  %v3077 = vmul.f32 2048.0, %v3076
  %v3078 = vsub.f32 1.0, %v3077
  %v3079 = vmul.f32 %v3076, %v3078
  %v3080 = vadd.f32 %v3076, %v3079
  %vm3081 = vweird.f32 %v3076
  %v3082 = vsel %vm3081, %v3076, %v3080
  %s3083 = vtos %v3082
  %s3084 = smul.f32 %s3075, %s3083
  %s3085 = sadd.f32 %s3084, 1e-05
  %v3086 = vstv %s3085
  %v3087 = vrsqrt.pop %v3086
  %v3088 = vmul.f32 %v3087, %v3086
  %v3089 = vmul.f32 %v3088, %v3087
  %v3090 = vmul.f32 0.5, %v3089
  %v3091 = vsub.f32 1.5, %v3090
  %v3092 = vmul.f32 %v3087, %v3091
  %vm3093 = vweird.f32 %v3086
  %vm3094 = vweird.f32 %v3087
  %vm3095 = vmor %vm3093, %vm3094
  %v3096 = vsel %vm3095, %v3087, %v3092
  %s3097 = vtos %v3096
  %v3098 = vstv %s3097
  %v3099 = vmul.f32 %v3062, %v3098
  %v3100 = vmul.f32 %v3063, %v3098
  %v3101 = vperm.slane %v2950, 1
  %v3102 = vmul.f32 %v3099, %v3101
  %v3103 = vmul.f32 %v3100, %v3101
  %v3104 = vperm.slane %v2950, 2
  %v3105 = vadd.f32 %v3102, %v3104
  %v3106 = vadd.f32 %v3103, %v3104
  %vm3107 = vcmp.gt.f32.partialorder %v3105, 0.0
  %vm3108 = vcmp.gt.f32.partialorder %v3106, 0.0
  %v3109 = vperm.slane %v2950, 3
  %v3110 = vmul.f32 %v3109, %v3105
  %v3111 = vmul.f32 %v3109, %v3106
  %v3112 = vsel %vm3107, %v3105, %v3110
  %v3113 = vsel %vm3108, %v3106, %v3111
  %v3114 = vperm.slane %v27, 5
  %v3115 = vadd.f32 %v3112, %v3114
  %v3116 = vadd.f32 %v3113, %v3114
  %v3117 = vperm.slane %v2953, 2
  %v3118 = vmul.f32 %v3117, %v3115
  %v3119 = vmul.f32 %v3117, %v3116
  %v3120 = vperm.slane %v2953, 5
  %v3121 = vmul.f32 %v3120, %v3115
  %v3122 = vmul.f32 %v3120, %v3116
  %v3123 = vperm.slane %v2954, 0
  %v3124 = vmul.f32 %v3123, %v3115
  %v3125 = vmul.f32 %v3123, %v3116
  %v3126 = vrot.slane %v3118, 7
  %v3127 = vrot.slane %v3119, 7
  %v3128 = vsel %vm264, %v3126, %v3127
  %v3129 = vsel %vm264, %v3127, %v3126
  %v3130 = vsel %vm269, %v3129, 0.0
  %v3131 = vsel %vm270, %v3128, 0.0
  %v3132 = vadd.f32 %v3121, %v3130
  %v3133 = vadd.f32 %v3122, %v3131
  %v3134 = vrot.slane %v3124, 1
  %v3135 = vrot.slane %v3125, 1
  %v3136 = vsel %vm277, %v3134, %v3135
  %v3137 = vsel %vm277, %v3135, %v3134
  %v3138 = vsel %vm282, %v3136, 0.0
  %v3139 = vsel %vm283, %v3137, 0.0
  %v3140 = vadd.f32 %v3132, %v3138
  %v3141 = vadd.f32 %v3133, %v3139
  %v3142 = vperm.slane %v2950, 4
  %v3143 = vadd.f32 %v3140, %v3142
  %v3144 = vadd.f32 %v3141, %v3142
  %v3145 = vadd.f32 %v3143, %v3144
  %3146 = vadd.xlane.f32.xlu0 %v3145
  %v3147 = vpop.xlane.xlu0 %3146
  %v3148 = vrot.slane %v3147, 4
  %v3149 = vadd.f32 %v3147, %v3148
  %v3150 = vrot.slane %v3149, 2
  %v3151 = vadd.f32 %v3149, %v3150
  %v3152 = vrot.slane %v3151, 1
  %v3153 = vadd.f32 %v3151, %v3152
  %s3154 = vtos %v3153
  %v3155 = vrcp.pop 2048.0
  %v3156 = vmul.f32 2048.0, %v3155
  %v3157 = vsub.f32 1.0, %v3156
  %v3158 = vmul.f32 %v3155, %v3157
  %v3159 = vadd.f32 %v3155, %v3158
  %vm3160 = vweird.f32 %v3155
  %v3161 = vsel %vm3160, %v3155, %v3159
  %s3162 = vtos %v3161
  %s3163 = smul.f32 %s3154, %s3162
  %v3164 = vstv %s3163
  %v3165 = vsub.f32 %v3143, %v3164
  %v3166 = vsub.f32 %v3144, %v3164
  %v3167 = vmul.f32 %v3165, %v3165
  %v3168 = vmul.f32 %v3166, %v3166
  %v3169 = vadd.f32 %v3167, %v3168
  %3170 = vadd.xlane.f32.xlu0 %v3169
  %v3171 = vpop.xlane.xlu0 %3170
  %v3172 = vrot.slane %v3171, 4
  %v3173 = vadd.f32 %v3171, %v3172
  %v3174 = vrot.slane %v3173, 2
  %v3175 = vadd.f32 %v3173, %v3174
  %v3176 = vrot.slane %v3175, 1
  %v3177 = vadd.f32 %v3175, %v3176
  %s3178 = vtos %v3177
  %v3179 = vrcp.pop 2048.0
  %v3180 = vmul.f32 2048.0, %v3179
  %v3181 = vsub.f32 1.0, %v3180
  %v3182 = vmul.f32 %v3179, %v3181
  %v3183 = vadd.f32 %v3179, %v3182
  %vm3184 = vweird.f32 %v3179
  %v3185 = vsel %vm3184, %v3179, %v3183
  %s3186 = vtos %v3185
  %s3187 = smul.f32 %s3178, %s3186
  %s3188 = sadd.f32 %s3187, 1e-05
  %v3189 = vstv %s3188
  %v3190 = vrsqrt.pop %v3189
  %v3191 = vmul.f32 %v3190, %v3189
  %v3192 = vmul.f32 %v3191, %v3190
  %v3193 = vmul.f32 0.5, %v3192
  %v3194 = vsub.f32 1.5, %v3193
  %v3195 = vmul.f32 %v3190, %v3194
  %vm3196 = vweird.f32 %v3189
  %vm3197 = vweird.f32 %v3190
  %vm3198 = vmor %vm3196, %vm3197
  %v3199 = vsel %vm3198, %v3190, %v3195
  %s3200 = vtos %v3199
  %v3201 = vstv %s3200
  %v3202 = vmul.f32 %v3165, %v3201
  %v3203 = vmul.f32 %v3166, %v3201
  %v3204 = vperm.slane %v2950, 5
  %v3205 = vmul.f32 %v3202, %v3204
  %v3206 = vmul.f32 %v3203, %v3204
  %v3207 = vperm.slane %v2950, 6
  %v3208 = vadd.f32 %v3205, %v3207
  %v3209 = vadd.f32 %v3206, %v3207
  %vm3210 = vcmp.gt.f32.partialorder %v3208, 0.0
  %vm3211 = vcmp.gt.f32.partialorder %v3209, 0.0
  %v3212 = vperm.slane %v2950, 7
  %v3213 = vmul.f32 %v3212, %v3208
  %v3214 = vmul.f32 %v3212, %v3209
  %v3215 = vsel %vm3210, %v3208, %v3213
  %v3216 = vsel %vm3211, %v3209, %v3214
  %v3217 = vadd.f32 %v3038, %v3040
  %3218 = vadd.xlane.f32.xlu0 %v3217
  %v3219 = vpop.xlane.xlu0 %3218
  %v3220 = vrot.slane %v3219, 4
  %v3221 = vadd.f32 %v3219, %v3220
  %v3222 = vrot.slane %v3221, 2
  %v3223 = vadd.f32 %v3221, %v3222
  %v3224 = vrot.slane %v3223, 1
  %v3225 = vadd.f32 %v3223, %v3224
  %s3226 = vtos %v3225
  %v3227 = vrcp.pop 2048.0
  %v3228 = vmul.f32 2048.0, %v3227
  %v3229 = vsub.f32 1.0, %v3228
  %v3230 = vmul.f32 %v3227, %v3229
  %v3231 = vadd.f32 %v3227, %v3230
  %vm3232 = vweird.f32 %v3227
  %v3233 = vsel %vm3232, %v3227, %v3231
  %s3234 = vtos %v3233
  %s3235 = smul.f32 %s3226, %s3234
  %v3236 = vstv %s3235
  %v3237 = vsub.f32 %v3038, %v3236
  %v3238 = vsub.f32 %v3040, %v3236
  %v3239 = vmul.f32 %v3237, %v3237
  %v3240 = vmul.f32 %v3238, %v3238
  %v3241 = vadd.f32 %v3239, %v3240
  %3242 = vadd.xlane.f32.xlu0 %v3241
  %v3243 = vpop.xlane.xlu0 %3242
  %v3244 = vrot.slane %v3243, 4
  %v3245 = vadd.f32 %v3243, %v3244
  %v3246 = vrot.slane %v3245, 2
  %v3247 = vadd.f32 %v3245, %v3246
  %v3248 = vrot.slane %v3247, 1
  %v3249 = vadd.f32 %v3247, %v3248
  %s3250 = vtos %v3249
  %v3251 = vrcp.pop 2048.0
  %v3252 = vmul.f32 2048.0, %v3251
  %v3253 = vsub.f32 1.0, %v3252
  %v3254 = vmul.f32 %v3251, %v3253
  %v3255 = vadd.f32 %v3251, %v3254
  %vm3256 = vweird.f32 %v3251
  %v3257 = vsel %vm3256, %v3251, %v3255
  %s3258 = vtos %v3257
  %s3259 = smul.f32 %s3250, %s3258
  %s3260 = sadd.f32 %s3259, 1e-05
  %v3261 = vstv %s3260
  %v3262 = vrsqrt.pop %v3261
  %v3263 = vmul.f32 %v3262, %v3261
  %v3264 = vmul.f32 %v3263, %v3262
  %v3265 = vmul.f32 0.5, %v3264
  %v3266 = vsub.f32 1.5, %v3265
  %v3267 = vmul.f32 %v3262, %v3266
  %vm3268 = vweird.f32 %v3261
  %vm3269 = vweird.f32 %v3262
  %vm3270 = vmor %vm3268, %vm3269
  %v3271 = vsel %vm3270, %v3262, %v3267
  %s3272 = vtos %v3271
  %v3273 = vstv %s3272
  %v3274 = vmul.f32 %v3237, %v3273
  %v3275 = vmul.f32 %v3238, %v3273
  %v3276 = vmul.f32 %v3274, %v3101
  %v3277 = vmul.f32 %v3275, %v3101
  %v3278 = vadd.f32 %v3276, %v3104
  %v3279 = vadd.f32 %v3277, %v3104
  %vm3280 = vcmp.gt.f32.partialorder %v3278, 0.0
  %vm3281 = vcmp.gt.f32.partialorder %v3279, 0.0
  %v3282 = vmul.f32 %v3109, %v3278
  %v3283 = vmul.f32 %v3109, %v3279
  %v3284 = vsel %vm3280, %v3278, %v3282
  %v3285 = vsel %vm3281, %v3279, %v3283
  %v3286 = vperm.slane %v28, 5
  %v3287 = vadd.f32 %v3284, %v3286
  %v3288 = vadd.f32 %v3285, %v3286
  %v3289 = vmul.f32 %v3117, %v3287
  %v3290 = vmul.f32 %v3117, %v3288
  %v3291 = vmul.f32 %v3120, %v3287
  %v3292 = vmul.f32 %v3120, %v3288
  %v3293 = vmul.f32 %v3123, %v3287
  %v3294 = vmul.f32 %v3123, %v3288
  %v3295 = vrot.slane %v3289, 7
  %v3296 = vrot.slane %v3290, 7
  %v3297 = vsel %vm264, %v3295, %v3296
  %v3298 = vsel %vm264, %v3296, %v3295
  %v3299 = vsel %vm269, %v3298, 0.0
  %v3300 = vsel %vm270, %v3297, 0.0
  %v3301 = vadd.f32 %v3291, %v3299
  %v3302 = vadd.f32 %v3292, %v3300
  %v3303 = vrot.slane %v3293, 1
  %v3304 = vrot.slane %v3294, 1
  %v3305 = vsel %vm277, %v3303, %v3304
  %v3306 = vsel %vm277, %v3304, %v3303
  %v3307 = vsel %vm282, %v3305, 0.0
  %v3308 = vsel %vm283, %v3306, 0.0
  %v3309 = vadd.f32 %v3301, %v3307
  %v3310 = vadd.f32 %v3302, %v3308
  %v3311 = vadd.f32 %v3309, %v3142
  %v3312 = vadd.f32 %v3310, %v3142
  %v3313 = vadd.f32 %v3311, %v3312
  %3314 = vadd.xlane.f32.xlu0 %v3313
  %v3315 = vpop.xlane.xlu0 %3314
  %v3316 = vrot.slane %v3315, 4
  %v3317 = vadd.f32 %v3315, %v3316
  %v3318 = vrot.slane %v3317, 2
  %v3319 = vadd.f32 %v3317, %v3318
  %v3320 = vrot.slane %v3319, 1
  %v3321 = vadd.f32 %v3319, %v3320
  %s3322 = vtos %v3321
  %v3323 = vrcp.pop 2048.0
  %v3324 = vmul.f32 2048.0, %v3323
  %v3325 = vsub.f32 1.0, %v3324
  %v3326 = vmul.f32 %v3323, %v3325
  %v3327 = vadd.f32 %v3323, %v3326
  %vm3328 = vweird.f32 %v3323
  %v3329 = vsel %vm3328, %v3323, %v3327
  %s3330 = vtos %v3329
  %s3331 = smul.f32 %s3322, %s3330
  %v3332 = vstv %s3331
  %v3333 = vsub.f32 %v3311, %v3332
  %v3334 = vsub.f32 %v3312, %v3332
  %v3335 = vmul.f32 %v3333, %v3333
  %v3336 = vmul.f32 %v3334, %v3334
  %v3337 = vadd.f32 %v3335, %v3336
  %3338 = vadd.xlane.f32.xlu0 %v3337
  %v3339 = vpop.xlane.xlu0 %3338
  %v3340 = vrot.slane %v3339, 4
  %v3341 = vadd.f32 %v3339, %v3340
  %v3342 = vrot.slane %v3341, 2
  %v3343 = vadd.f32 %v3341, %v3342
  %v3344 = vrot.slane %v3343, 1
  %v3345 = vadd.f32 %v3343, %v3344
  %s3346 = vtos %v3345
  %v3347 = vrcp.pop 2048.0
  %v3348 = vmul.f32 2048.0, %v3347
  %v3349 = vsub.f32 1.0, %v3348
  %v3350 = vmul.f32 %v3347, %v3349
  %v3351 = vadd.f32 %v3347, %v3350
  %vm3352 = vweird.f32 %v3347
  %v3353 = vsel %vm3352, %v3347, %v3351
  %s3354 = vtos %v3353
  %s3355 = smul.f32 %s3346, %s3354
  %s3356 = sadd.f32 %s3355, 1e-05
  %v3357 = vstv %s3356
  %v3358 = vrsqrt.pop %v3357
  %v3359 = vmul.f32 %v3358, %v3357
  %v3360 = vmul.f32 %v3359, %v3358
  %v3361 = vmul.f32 0.5, %v3360
  %v3362 = vsub.f32 1.5, %v3361
  %v3363 = vmul.f32 %v3358, %v3362
  %vm3364 = vweird.f32 %v3357
  %vm3365 = vweird.f32 %v3358
  %vm3366 = vmor %vm3364, %vm3365
  %v3367 = vsel %vm3366, %v3358, %v3363
  %s3368 = vtos %v3367
  %v3369 = vstv %s3368
  %v3370 = vmul.f32 %v3333, %v3369
  %v3371 = vmul.f32 %v3334, %v3369
  %v3372 = vmul.f32 %v3370, %v3204
  %v3373 = vmul.f32 %v3371, %v3204
  %v3374 = vadd.f32 %v3372, %v3207
  %v3375 = vadd.f32 %v3373, %v3207
  %vm3376 = vcmp.gt.f32.partialorder %v3374, 0.0
  %vm3377 = vcmp.gt.f32.partialorder %v3375, 0.0
  %v3378 = vmul.f32 %v3212, %v3374
  %v3379 = vmul.f32 %v3212, %v3375
  %v3380 = vsel %vm3376, %v3374, %v3378
  %v3381 = vsel %vm3377, %v3375, %v3379
  %v3382 = vpack.c.bf16 %v3216, %v3215
  %v3383 = vpack.c.bf16 %v3381, %v3380
  %s3384 = scalar_lea.vmem %s3, 320
  %v3385 = vld [vmem:[%s3384] sm:$0xf]
  %v3386 = vld [vmem:[%s3384 + $0x4] sm:$0xf]
  %v3387 = vld [vmem:[%s3384 + $0x8] sm:$0xf]
  %v3388 = vld [vmem:[%s3384 + $0xc] sm:$0xf]
  %v3389 = vld [vmem:[%s3384 + $0x10] sm:$0xf]
  %v3390 = vld [vmem:[%s3384 + $0x14] sm:$0xf]
  %v3391 = vld [vmem:[%s3384 + $0x18] sm:$0xf]
  %v3392 = vld [vmem:[%s3384 + $0x1c] sm:$0xf]
  %v3393 = vld [vmem:[%s3384 + $0x20] sm:$0xf]
  %v3394 = vld [vmem:[%s3384 + $0x24] sm:$0xf]
  %v3395 = vld [vmem:[%s3384 + $0x28] sm:$0xf]
  %v3396 = vld [vmem:[%s3384 + $0x2c] sm:$0xf]
  %v3397 = vld [vmem:[%s3384 + $0x30] sm:$0xf]
  %v3398 = vld [vmem:[%s3384 + $0x34] sm:$0xf]
  %v3399 = vld [vmem:[%s3384 + $0x38] sm:$0xf]
  %v3400 = vld [vmem:[%s3384 + $0x3c] sm:$0xf]
  %v3401 = vperm.slane %v2951, 0
  %v3418 = vunpack.c.l.b16 %v3385
  %v3419 = vunpack.c.l.b16 %v3386
  %v3420 = vunpack.c.l.b16 %v3387
  %v3421 = vunpack.c.l.b16 %v3388
  %v3422 = vunpack.c.l.b16 %v3389
  %v3423 = vunpack.c.l.b16 %v3390
  %v3424 = vunpack.c.l.b16 %v3391
  %v3425 = vunpack.c.l.b16 %v3392
  %v3426 = vunpack.c.l.b16 %v3393
  %v3427 = vunpack.c.l.b16 %v3394
  %v3428 = vunpack.c.l.b16 %v3395
  %v3429 = vunpack.c.l.b16 %v3396
  %v3430 = vunpack.c.l.b16 %v3397
  %v3431 = vunpack.c.l.b16 %v3398
  %v3432 = vunpack.c.l.b16 %v3399
  %v3433 = vunpack.c.l.b16 %v3400
  %v3434 = vpack.c.b16 %v3419, %v3418
  %v3435 = vpack.c.b16 %v3421, %v3420
  %v3436 = vpack.c.b16 %v3423, %v3422
  %v3437 = vpack.c.b16 %v3425, %v3424
  %v3438 = vpack.c.b16 %v3427, %v3426
  %v3439 = vpack.c.b16 %v3429, %v3428
  %v3440 = vpack.c.b16 %v3431, %v3430
  %v3441 = vpack.c.b16 %v3433, %v3432
  %3450 = vmatpush.bf16.msra.mxu0 %v3441
  %3451 = vmatpush.bf16.msra.mxu0 %v3440
  %3452 = vmatpush.bf16.msra.mxu0 %v3439
  %3453 = vmatpush.bf16.msra.mxu0 %v3438
  %3454 = vmatpush.bf16.msra.mxu0 %v3437
  %3455 = vmatpush.bf16.msra.mxu0 %v3436
  %3456 = vmatpush.bf16.msra.mxu0 %v3435
  %3457 = vmatpush.bf16.msra.mxu0 %v3434
  %3458 = vmatmul.bf16.gmra.mxu0 %v3382
  %v3459 = vpop.f32.mrf.mxu0
  %v3460 = vadd.f32 %v3401, %v3459
  %v3461 = vpop.f32.mrf.mxu0
  %v3462 = vadd.f32 %v3401, %v3461
  %3463 = vmatmul.bf16.gmra.mxu0 %v3383
  %v3464 = vpop.f32.mrf.mxu0
  %v3465 = vadd.f32 %v3401, %v3464
  %v3466 = vpop.f32.mrf.mxu0
  %v3467 = vadd.f32 %v3401, %v3466
  %3468 = vdwg.mxu0
  %v3469 = vadd.f32 %v3460, %v2945
  %v3470 = vadd.f32 %v3462, %v2946
  %v3471 = vadd.f32 %v3465, %v2947
  %v3472 = vadd.f32 %v3467, %v2948
  %3473 = vst [vmem:[%s6] sm:$0xff] %v3469
  %3474 = vst [vmem:[%s6 + $0x8] sm:$0xff] %v3470
  %3475 = vst [vmem:[%s6 + $0x10] sm:$0xff] %v3471
  %3476 = vst [vmem:[%s6 + $0x18] sm:$0xff] %v3472
  // Predicated region
  $region26: #{_tfcm_forward.1} parent=0 // pred_check
    _
  $region27: #{_tfcm_forward.1} parent=0 // pred_check_branch
    %3478 = sbr.rel (0) target = $region29
  $region28: #{_tfcm_forward.1} parent=0 // pred_region
    _
  $region29: #{_tfcm_forward.1} parent=0 // pred_fallthru
    _
  // Predicated region
  $region30: #{_tfcm_forward.1} parent=0 // pred_check
    _
  $region31: #{_tfcm_forward.1} parent=0 // pred_check_branch
    %3480 = sbr.rel (0) target = $region33
  $region32: #{_tfcm_forward.1} parent=0 // pred_region
    _
  $region33: #{_tfcm_forward.1} parent=0 // pred_fallthru
    _

</llo_original>
